<compile_context>
chip_gen: v7x
topology: tpu7x:2x2x1
jax: 0.10.0
libtpu: 0.0.40
codegen_flags: <defaults>
</compile_context>

<pallas_src>
import numpy as np
import jax
import jax.numpy as jnp
from jax import lax
from jax.experimental import pallas as pl
from jax.experimental.pallas import tpu as pltpu

HP = 64          # hidden size 50 padded to 64 so each gate occupies a 64-lane slot
G4 = 4 * HP      # packed gate width


def _round_up(x, m):
    return (x + m - 1) // m * m


# -----------------------------------------------------------------------------
# Fused kernel: one batch tile (BT samples) per grid step, time-major rows.
# Row layout for all conv/LSTM activations: row = t * BT + b, lanes = channels.
# -----------------------------------------------------------------------------
def _fused_forward_kernel(
    x1_ref,                            # (L, BT, 3)   conv1 im2col (time-major)
    w1_ref, b1_ref,                    # (3, 16), (1, 16)          conv1 (VPU)
    w2_ref, b2_ref,                    # (48, 32), (1, 32)         conv2 (K-fused)
    w3_ref, b3_ref,                    # (96, 64), (1, 64)         conv3 (K-fused)
    wih0_ref, whh0_ref, bg0_ref,       # (64, 256), (64, 256), (1, 256)
    wih1_ref, whh1_ref, bg1_ref,       # (64, 256), (64, 256), (1, 256)
    fc1w_ref, fc1b_ref,                # (64, 20), (1, 20)
    fc2w_ref, fc2b_ref,                # (20, C), (1, C)
    o_ref,                             # (BT, C) logits
    zih_ref,                           # scratch (T*BT, 256)  hoisted gate pre-acts
    hseq_ref,                          # scratch (T*BT, 64)   layer-0 hidden sequence
):
    L, BT, _ = x1_ref.shape
    T = L // 8
    f32 = jnp.float32
    cd = w2_ref.dtype                  # dot-operand dtype (f32 or bf16)

    def relu_pool(y, n_t):
        # y: (n_t*BT, C) time-major.  ReLU, then max over adjacent time pairs,
        # fully in-register (no scratch round trip, no strided reads).
        c = y.shape[-1]
        y = jnp.maximum(y, 0.0).reshape(n_t // 2, 2 * BT, c)
        p = jnp.maximum(y[:, :BT, :], y[:, BT:, :])
        return p.reshape((n_t // 2) * BT, c)

    def conv_k3(x, w_ref, b_ref):
        # 'same' conv, kernel 3, taps fused along K via lane concat (im2col).
        # Shifting by one time step == shifting by BT rows; the concatenated
        # zero rows provide the boundary padding (never mixes samples).
        m, cin = x.shape
        zrow = jnp.zeros((BT, cin), f32)
        left = jnp.concatenate([zrow, x[:m - BT, :]], axis=0)     # x[t-1]
        right = jnp.concatenate([x[BT:, :], zrow], axis=0)        # x[t+1]
        xcat = jnp.concatenate([left, x, right], axis=-1).astype(cd)
        return jnp.dot(xcat, w_ref[...], preferred_element_type=f32) + b_ref[...]

    # ---- conv1 (Cin = 1): 3 broadcast FMAs on the VPU --------------------------
    x1 = x1_ref[...].reshape(L * BT, 3)
    y1 = (x1[:, 0:1] * w1_ref[0:1, :]
          + x1[:, 1:2] * w1_ref[1:2, :]
          + x1[:, 2:3] * w1_ref[2:3, :]
          + b1_ref[...])
    p1 = relu_pool(y1, L)                                         # (L/2*BT, 16)

    # ---- conv2 / conv3 + ReLU + pool (one K-fused MXU dot each) ----------------
    p2 = relu_pool(conv_k3(p1, w2_ref, b2_ref), L // 2)           # (L/4*BT, 32)
    feat = relu_pool(conv_k3(p2, w3_ref, b3_ref), L // 4)         # (T*BT, 64)

    # ---- 2-layer LSTM, two-pass: hoisted input projections (bias folded in) ----
    zih_ref[...] = (jnp.dot(feat.astype(cd), wih0_ref[...],
                            preferred_element_type=f32) + bg0_ref[...])

    def gates(z, c_prev):
        i = jax.nn.sigmoid(z[:, 0 * HP:1 * HP])
        f = jax.nn.sigmoid(z[:, 1 * HP:2 * HP])
        g = jnp.tanh(z[:, 2 * HP:3 * HP])
        o = jax.nn.sigmoid(z[:, 3 * HP:4 * HP])
        c_new = f * c_prev + i * g
        return o * jnp.tanh(c_new), c_new

    zeros = jnp.zeros((BT, HP), f32)

    h, c = zeros, zeros
    for t in range(T):                 # layer 0; whh streamed from VMEM per step
        z = zih_ref[t * BT:(t + 1) * BT, :] + jnp.dot(
            h.astype(cd), whh0_ref[...], preferred_element_type=f32)
        h, c = gates(z, c)
        hseq_ref[t * BT:(t + 1) * BT, :] = h

    # layer-1 input projections in one dot over the whole h0 sequence (reuse zih).
    zih_ref[...] = (jnp.dot(hseq_ref[...].astype(cd), wih1_ref[...],
                            preferred_element_type=f32) + bg1_ref[...])

    h, c = zeros, zeros
    for t in range(T):                 # layer 1
        z = zih_ref[t * BT:(t + 1) * BT, :] + jnp.dot(
            h.astype(cd), whh1_ref[...], preferred_element_type=f32)
        h, c = gates(z, c)

    # ---- MLP head: fc1 + ReLU (+ dropout == identity in eval) + fc2 ------------
    hz = jnp.maximum(
        jnp.dot(h.astype(cd), fc1w_ref[...], preferred_element_type=f32)
        + fc1b_ref[...], 0.0)
    o_ref[...] = (jnp.dot(hz.astype(cd), fc2w_ref[...],
                          preferred_element_type=f32) + fc2b_ref[...])


# -----------------------------------------------------------------------------
# Parameter packing (plain JAX glue, runs outside the kernel)
# -----------------------------------------------------------------------------
def _pack_params(p, cd=jnp.float32):
    H = p["whh0"].shape[-1]
    f32 = jnp.float32

    def conv_w(w, dtype):                      # (Cout, Cin, 3) -> (3*Cin, Cout)
        co, ci, k = w.shape
        return jnp.transpose(w, (2, 1, 0)).reshape(k * ci, co).astype(dtype)

    w1 = conv_w(p["conv1_w"], f32)             # (3, 16)  VPU path stays f32
    b1 = p["conv1_b"].reshape(1, -1).astype(f32)
    w2 = conv_w(p["conv2_w"], cd)              # (48, 32)
    b2 = p["conv2_b"].reshape(1, -1).astype(f32)
    w3 = conv_w(p["conv3_w"], cd)              # (96, 64)
    b3 = p["conv3_b"].reshape(1, -1).astype(f32)

    def pack_gates(w, rows):                   # (4, in, H) -> (rows, 4*HP)
        _, din, hh = w.shape
        out = jnp.zeros((rows, G4), f32)
        for k in range(4):
            out = out.at[:din, k * HP:k * HP + hh].set(w[k])
        return out.astype(cd)

    def pack_bias(b):                          # (4, H) -> (1, 4*HP), kept f32
        out = jnp.zeros((1, G4), f32)
        for k in range(4):
            out = out.at[0, k * HP:k * HP + b.shape[1]].set(b[k])
        return out

    wih0 = pack_gates(p["wih0"], 64)           # conv3 output has exactly 64 channels
    whh0 = pack_gates(p["whh0"], HP)
    bg0 = pack_bias(p["b0"])
    wih1 = pack_gates(p["wih1"], HP)
    whh1 = pack_gates(p["whh1"], HP)
    bg1 = pack_bias(p["b1"])

    fc1w = (jnp.zeros((HP, p["fc1_w"].shape[0]), f32)
            .at[:H, :].set(p["fc1_w"].T).astype(cd))
    fc1b = p["fc1_b"].reshape(1, -1).astype(f32)
    fc2w = p["fc2_w"].T.astype(cd)
    fc2b = p["fc2_b"].reshape(1, -1).astype(f32)

    return (w1, b1, w2, b2, w3, b3, wih0, whh0, bg0, wih1, whh1, bg1,
            fc1w, fc1b, fc2w, fc2b)


def _vmem_block_bytes(shape, itemsize):
    s = [int(d) for d in shape]
    if len(s) == 1:
        s = [1] + s
    s[-1] = _round_up(s[-1], 128)
    s[-2] = _round_up(s[-2], 8)
    n = 1
    for d in s:
        n *= d
    return n * itemsize


def bearing_fault_detector_forward(x_ncl, p, *, compute_dtype=jnp.float32,
                                   block_b=None):
    """x_ncl: (B, 1, L) float32 (PyTorch NCW layout) -> (B, num_classes) logits."""
    B, cin, L = x_ncl.shape
    assert cin == 1 and L % 8 == 0
    NC = p["fc2_w"].shape[0]
    T = L // 8

    # Batch tile: multiple of 8, capped so per-stage row count stays modest.
    if block_b is None:
        block_b = max(8, min(128, (8192 // L) // 8 * 8))
    BT = max(8, min(_round_up(B, 8), block_b) // 8 * 8)
    B_pad = _round_up(B, BT)
    nb = B_pad // BT

    # Lane-dense input; build the conv1 im2col (exact 'same' padding) here.
    x = x_ncl[:, 0, :].astype(jnp.float32)                         # (B, L)
    if B_pad != B:
        x = jnp.pad(x, ((0, B_pad - B), (0, 0)))
    xp = jnp.pad(x, ((0, 0), (1, 1)))                              # (B_pad, L+2)
    x1 = jnp.stack([xp[:, :L], xp[:, 1:L + 1], xp[:, 2:L + 2]], axis=-1)
    x1 = jnp.transpose(x1, (1, 0, 2))                              # (L, B_pad, 3)

    args = _pack_params(p, compute_dtype)

    def const_spec(a):
        return pl.BlockSpec(a.shape, lambda i: (0,) * a.ndim)

    # Explicit VMEM budget (v7x physical VMEM is 64 MiB).
    est = (2 * _vmem_block_bytes((L, BT, 3), 4)
           + 2 * _vmem_block_bytes((BT, NC), 4)
           + sum(_vmem_block_bytes(a.shape, a.dtype.itemsize) for a in args)
           + _vmem_block_bytes((T * BT, G4), 4)
           + _vmem_block_bytes((T * BT, HP), 4))
    vmem_limit = int(min(64 << 20, max(32 << 20, 2 * est)))

    out = pl.pallas_call(
        _fused_forward_kernel,
        out_shape=jax.ShapeDtypeStruct((B_pad, NC), jnp.float32),
        grid=(nb,),
        in_specs=[pl.BlockSpec((L, BT, 3), lambda i: (0, i, 0))]
                 + [const_spec(a) for a in args],
        out_specs=pl.BlockSpec((BT, NC), lambda i: (i, 0)),
        scratch_shapes=[
            pltpu.VMEM((T * BT, G4), jnp.float32),   # hoisted gate pre-activations
            pltpu.VMEM((T * BT, HP), jnp.float32),   # layer-0 hidden sequence
        ],
        compiler_params=pltpu.CompilerParams(
            dimension_semantics=("parallel",),
            vmem_limit_bytes=vmem_limit,
        ),
    )(x1, *args)
    return out[:B]


# -----------------------------------------------------------------------------
# Deterministic params + pure-JAX reference for validation
# -----------------------------------------------------------------------------
def init_params(key, input_size=1, num_classes=4, hidden=50):
    keys = jax.random.split(key, 16)

    def u(k, shape, fan_in):
        bound = 1.0 / np.sqrt(fan_in)
        return jax.random.uniform(k, shape, jnp.float32, -bound, bound)

    H = hidden
    return {
        "conv1_w": u(keys[0], (16, input_size, 3), input_size * 3),
        "conv1_b": u(keys[1], (16,), input_size * 3),
        "conv2_w": u(keys[2], (32, 16, 3), 16 * 3),
        "conv2_b": u(keys[3], (32,), 16 * 3),
        "conv3_w": u(keys[4], (64, 32, 3), 32 * 3),
        "conv3_b": u(keys[5], (64,), 32 * 3),
        # LSTM weights in (4 gates, in_dim, H) layout; gate order i, f, g, o;
        # bias = b_ih + b_hh folded together (sum the two if importing torch weights).
        "wih0": u(keys[6], (4, 64, H), H),
        "whh0": u(keys[7], (4, H, H), H),
        "b0": u(keys[8], (4, H), H),
        "wih1": u(keys[9], (4, H, H), H),
        "whh1": u(keys[10], (4, H, H), H),
        "b1": u(keys[11], (4, H), H),
        "fc1_w": u(keys[12], (20, H), H),
        "fc1_b": u(keys[13], (20,), H),
        "fc2_w": u(keys[14], (num_classes, 20), 20),
        "fc2_b": u(keys[15], (num_classes,), 20),
    }


def ref_forward(x_ncl, p):
    def conv_relu_pool_ref(x, w, b):
        y = lax.conv_general_dilated(x, w, window_strides=(1,), padding=((1, 1),),
                                     dimension_numbers=("NCH", "OIH", "NCH"))
        y = jax.nn.relu(y + b[None, :, None])
        Bn, C, L = y.shape
        return jnp.max(y.reshape(Bn, C, L // 2, 2), axis=-1)

    x = conv_relu_pool_ref(x_ncl, p["conv1_w"], p["conv1_b"])
    x = conv_relu_pool_ref(x, p["conv2_w"], p["conv2_b"])
    x = conv_relu_pool_ref(x, p["conv3_w"], p["conv3_b"])
    x = jnp.transpose(x, (0, 2, 1))                    # (B, T, 64)
    B, T, _ = x.shape
    H = p["whh0"].shape[-1]

    def cell(x_t, h, c, wih, whh, b):
        i = jax.nn.sigmoid(x_t @ wih[0] + h @ whh[0] + b[0])
        f = jax.nn.sigmoid(x_t @ wih[1] + h @ whh[1] + b[1])
        g = jnp.tanh(x_t @ wih[2] + h @ whh[2] + b[2])
        o = jax.nn.sigmoid(x_t @ wih[3] + h @ whh[3] + b[3])
        c = f * c + i * g
        return o * jnp.tanh(c), c

    h0 = c0 = h1 = c1 = jnp.zeros((B, H), jnp.float32)
    for t in range(T):
        h0, c0 = cell(x[:, t, :], h0, c0, p["wih0"], p["whh0"], p["b0"])
        h1, c1 = cell(h0, h1, c1, p["wih1"], p["whh1"], p["b1"])
    z = jax.nn.relu(h1 @ p["fc1_w"].T + p["fc1_b"])
    return z @ p["fc2_w"].T + p["fc2_b"]


if __name__ == "__main__":
    # Small shapes consistent with the module; block_b=8 forces a 2-step grid
    # (batch tiles of 8, batch padded 12 -> 16) to exercise the batch tiling.
    B, input_size, seq_length, num_classes = 12, 1, 64, 4
    key = jax.random.PRNGKey(0)
    k_x, k_p = jax.random.split(key)

    x = jax.random.normal(k_x, (B, input_size, seq_length), jnp.float32)
    params = init_params(k_p, input_size=input_size, num_classes=num_classes)

    fwd = jax.jit(lambda xx, pp: bearing_fault_detector_forward(xx, pp, block_b=8))
    out = jax.block_until_ready(fwd(x, params))
    ref = jax.block_until_ready(ref_forward(x, params))

    assert out.shape == (B, num_classes)
    np.testing.assert_allclose(np.asarray(out), np.asarray(ref), rtol=2e-4, atol=2e-4)
    print("KERNEL_OK")
</pallas_src>

<mosaic_0001>
module attributes {stable_mosaic.version = 11 : i64} {
  func.func @_fused_forward_kernel(%arg0: i32, %arg1: memref<64x8x3xf32, #tpu.memory_space<vmem>>, %arg2: memref<3x16xf32, #tpu.memory_space<vmem>>, %arg3: memref<1x16xf32, #tpu.memory_space<vmem>>, %arg4: memref<48x32xf32, #tpu.memory_space<vmem>>, %arg5: memref<1x32xf32, #tpu.memory_space<vmem>>, %arg6: memref<96x64xf32, #tpu.memory_space<vmem>>, %arg7: memref<1x64xf32, #tpu.memory_space<vmem>>, %arg8: memref<64x256xf32, #tpu.memory_space<vmem>>, %arg9: memref<64x256xf32, #tpu.memory_space<vmem>>, %arg10: memref<1x256xf32, #tpu.memory_space<vmem>>, %arg11: memref<64x256xf32, #tpu.memory_space<vmem>>, %arg12: memref<64x256xf32, #tpu.memory_space<vmem>>, %arg13: memref<1x256xf32, #tpu.memory_space<vmem>>, %arg14: memref<64x20xf32, #tpu.memory_space<vmem>>, %arg15: memref<1x20xf32, #tpu.memory_space<vmem>>, %arg16: memref<20x4xf32, #tpu.memory_space<vmem>>, %arg17: memref<1x4xf32, #tpu.memory_space<vmem>>, %arg18: memref<8x4xf32, #tpu.memory_space<vmem>>, %arg19: memref<64x256xf32, #tpu.memory_space<vmem>>, %arg20: memref<64x64xf32, #tpu.memory_space<vmem>>) attributes {dimension_semantics = [#tpu.dimension_semantics<parallel>], iteration_bounds = array<i64: 2>, scalar_prefetch = 0 : i64, scratch_operands = 2 : i64, tpu.core_type = #tpu.core_type<tc>, window_params = [{transform_indices = @transform_0, window_bounds = array<i64: 64, 8, 3>}, {pipeline_mode = #tpu.pipeline_mode<synchronous>, transform_indices = @transform_1, window_bounds = array<i64: 3, 16>}, {pipeline_mode = #tpu.pipeline_mode<synchronous>, transform_indices = @transform_2, window_bounds = array<i64: 1, 16>}, {pipeline_mode = #tpu.pipeline_mode<synchronous>, transform_indices = @transform_3, window_bounds = array<i64: 48, 32>}, {pipeline_mode = #tpu.pipeline_mode<synchronous>, transform_indices = @transform_4, window_bounds = array<i64: 1, 32>}, {pipeline_mode = #tpu.pipeline_mode<synchronous>, transform_indices = @transform_5, window_bounds = array<i64: 96, 64>}, {pipeline_mode = #tpu.pipeline_mode<synchronous>, transform_indices = @transform_6, window_bounds = array<i64: 1, 64>}, {pipeline_mode = #tpu.pipeline_mode<synchronous>, transform_indices = @transform_7, window_bounds = array<i64: 64, 256>}, {pipeline_mode = #tpu.pipeline_mode<synchronous>, transform_indices = @transform_8, window_bounds = array<i64: 64, 256>}, {pipeline_mode = #tpu.pipeline_mode<synchronous>, transform_indices = @transform_9, window_bounds = array<i64: 1, 256>}, {pipeline_mode = #tpu.pipeline_mode<synchronous>, transform_indices = @transform_10, window_bounds = array<i64: 64, 256>}, {pipeline_mode = #tpu.pipeline_mode<synchronous>, transform_indices = @transform_11, window_bounds = array<i64: 64, 256>}, {pipeline_mode = #tpu.pipeline_mode<synchronous>, transform_indices = @transform_12, window_bounds = array<i64: 1, 256>}, {pipeline_mode = #tpu.pipeline_mode<synchronous>, transform_indices = @transform_13, window_bounds = array<i64: 64, 20>}, {pipeline_mode = #tpu.pipeline_mode<synchronous>, transform_indices = @transform_14, window_bounds = array<i64: 1, 20>}, {pipeline_mode = #tpu.pipeline_mode<synchronous>, transform_indices = @transform_15, window_bounds = array<i64: 20, 4>}, {pipeline_mode = #tpu.pipeline_mode<synchronous>, transform_indices = @transform_16, window_bounds = array<i64: 1, 4>}, {transform_indices = @transform_17, window_bounds = array<i64: 8, 4>}]} {
    %c0 = arith.constant 0 : index
    %c0_0 = arith.constant 0 : index
    %c0_1 = arith.constant 0 : index
    %0 = vector.load %arg1[%c0, %c0_0, %c0_1] : memref<64x8x3xf32, #tpu.memory_space<vmem>>, vector<64x8x3xf32>
    %1 = vector.shape_cast %0 : vector<64x8x3xf32> to vector<512x3xf32>
    %2 = vector.extract_strided_slice %1 {offsets = [0, 0], sizes = [512, 1], strides = [1, 1]} : vector<512x3xf32> to vector<512x1xf32>
    %c0_2 = arith.constant 0 : index
    %c0_3 = arith.constant 0 : index
    %3 = vector.load %arg2[%c0_2, %c0_3] : memref<3x16xf32, #tpu.memory_space<vmem>>, vector<1x16xf32>
    %4 = vector.broadcast %2 : vector<512x1xf32> to vector<512x16xf32>
    %5 = vector.broadcast %3 : vector<1x16xf32> to vector<512x16xf32>
    %6 = arith.mulf %4, %5 : vector<512x16xf32>
    %7 = vector.extract_strided_slice %1 {offsets = [0, 1], sizes = [512, 1], strides = [1, 1]} : vector<512x3xf32> to vector<512x1xf32>
    %c1 = arith.constant 1 : index
    %c0_4 = arith.constant 0 : index
    %8 = vector.load %arg2[%c1, %c0_4] : memref<3x16xf32, #tpu.memory_space<vmem>>, vector<1x16xf32>
    %9 = vector.broadcast %7 : vector<512x1xf32> to vector<512x16xf32>
    %10 = vector.broadcast %8 : vector<1x16xf32> to vector<512x16xf32>
    %11 = arith.mulf %9, %10 : vector<512x16xf32>
    %12 = arith.addf %6, %11 : vector<512x16xf32>
    %13 = vector.extract_strided_slice %1 {offsets = [0, 2], sizes = [512, 1], strides = [1, 1]} : vector<512x3xf32> to vector<512x1xf32>
    %c2 = arith.constant 2 : index
    %c0_5 = arith.constant 0 : index
    %14 = vector.load %arg2[%c2, %c0_5] : memref<3x16xf32, #tpu.memory_space<vmem>>, vector<1x16xf32>
    %15 = vector.broadcast %13 : vector<512x1xf32> to vector<512x16xf32>
    %16 = vector.broadcast %14 : vector<1x16xf32> to vector<512x16xf32>
    %17 = arith.mulf %15, %16 : vector<512x16xf32>
    %18 = arith.addf %12, %17 : vector<512x16xf32>
    %c0_6 = arith.constant 0 : index
    %c0_7 = arith.constant 0 : index
    %19 = vector.load %arg3[%c0_6, %c0_7] : memref<1x16xf32, #tpu.memory_space<vmem>>, vector<1x16xf32>
    %20 = vector.broadcast %19 : vector<1x16xf32> to vector<512x16xf32>
    %21 = arith.addf %18, %20 : vector<512x16xf32>
    %cst = arith.constant 0.000000e+00 : f32
    %22 = vector.broadcast %cst : f32 to vector<512x16xf32>
    %23 = arith.maximumf %21, %22 : vector<512x16xf32>
    %24 = vector.shape_cast %23 : vector<512x16xf32> to vector<32x16x16xf32>
    %25 = vector.extract_strided_slice %24 {offsets = [0, 0, 0], sizes = [32, 8, 16], strides = [1, 1, 1]} : vector<32x16x16xf32> to vector<32x8x16xf32>
    %26 = vector.extract_strided_slice %24 {offsets = [0, 8, 0], sizes = [32, 8, 16], strides = [1, 1, 1]} : vector<32x16x16xf32> to vector<32x8x16xf32>
    %27 = arith.maximumf %25, %26 : vector<32x8x16xf32>
    %28 = vector.shape_cast %27 : vector<32x8x16xf32> to vector<256x16xf32>
    %cst_8 = arith.constant 0.000000e+00 : f32
    %29 = vector.broadcast %cst_8 : f32 to vector<8x16xf32>
    %30 = vector.extract_strided_slice %28 {offsets = [0, 0], sizes = [248, 16], strides = [1, 1]} : vector<256x16xf32> to vector<248x16xf32>
    %31 = tpu.concatenate %29, %30 in 0 : vector<8x16xf32>, vector<248x16xf32> -> vector<256x16xf32>
    %32 = vector.extract_strided_slice %28 {offsets = [8, 0], sizes = [248, 16], strides = [1, 1]} : vector<256x16xf32> to vector<248x16xf32>
    %33 = tpu.concatenate %32, %29 in 0 : vector<248x16xf32>, vector<8x16xf32> -> vector<256x16xf32>
    %34 = tpu.concatenate %31, %28, %33 in 1 : vector<256x16xf32>, vector<256x16xf32>, vector<256x16xf32> -> vector<256x48xf32>
    %c0_9 = arith.constant 0 : index
    %c0_10 = arith.constant 0 : index
    %35 = vector.load %arg4[%c0_9, %c0_10] : memref<48x32xf32, #tpu.memory_space<vmem>>, vector<48x32xf32>
    %cst_11 = arith.constant dense<0.000000e+00> : vector<256x32xf32>
    %36 = tpu.matmul %34, %35, %cst_11 {dimension_numbers = #tpu.dot_dimension_numbers<[1], [0], [0], [1], [0, 0, 1, 1], [], []>} : vector<256x48xf32>, vector<48x32xf32>, vector<256x32xf32> -> vector<256x32xf32>
    %c0_12 = arith.constant 0 : index
    %c0_13 = arith.constant 0 : index
    %37 = vector.load %arg5[%c0_12, %c0_13] : memref<1x32xf32, #tpu.memory_space<vmem>>, vector<1x32xf32>
    %38 = vector.broadcast %37 : vector<1x32xf32> to vector<256x32xf32>
    %39 = arith.addf %36, %38 : vector<256x32xf32>
    %cst_14 = arith.constant 0.000000e+00 : f32
    %40 = vector.broadcast %cst_14 : f32 to vector<256x32xf32>
    %41 = arith.maximumf %39, %40 : vector<256x32xf32>
    %42 = vector.shape_cast %41 : vector<256x32xf32> to vector<16x16x32xf32>
    %43 = vector.extract_strided_slice %42 {offsets = [0, 0, 0], sizes = [16, 8, 32], strides = [1, 1, 1]} : vector<16x16x32xf32> to vector<16x8x32xf32>
    %44 = vector.extract_strided_slice %42 {offsets = [0, 8, 0], sizes = [16, 8, 32], strides = [1, 1, 1]} : vector<16x16x32xf32> to vector<16x8x32xf32>
    %45 = arith.maximumf %43, %44 : vector<16x8x32xf32>
    %46 = vector.shape_cast %45 : vector<16x8x32xf32> to vector<128x32xf32>
    %cst_15 = arith.constant 0.000000e+00 : f32
    %47 = vector.broadcast %cst_15 : f32 to vector<8x32xf32>
    %48 = vector.extract_strided_slice %46 {offsets = [0, 0], sizes = [120, 32], strides = [1, 1]} : vector<128x32xf32> to vector<120x32xf32>
    %49 = tpu.concatenate %47, %48 in 0 : vector<8x32xf32>, vector<120x32xf32> -> vector<128x32xf32>
    %50 = vector.extract_strided_slice %46 {offsets = [8, 0], sizes = [120, 32], strides = [1, 1]} : vector<128x32xf32> to vector<120x32xf32>
    %51 = tpu.concatenate %50, %47 in 0 : vector<120x32xf32>, vector<8x32xf32> -> vector<128x32xf32>
    %52 = tpu.concatenate %49, %46, %51 in 1 : vector<128x32xf32>, vector<128x32xf32>, vector<128x32xf32> -> vector<128x96xf32>
    %c0_16 = arith.constant 0 : index
    %c0_17 = arith.constant 0 : index
    %53 = vector.load %arg6[%c0_16, %c0_17] : memref<96x64xf32, #tpu.memory_space<vmem>>, vector<96x64xf32>
    %cst_18 = arith.constant dense<0.000000e+00> : vector<128x64xf32>
    %54 = tpu.matmul %52, %53, %cst_18 {dimension_numbers = #tpu.dot_dimension_numbers<[1], [0], [0], [1], [0, 0, 1, 1], [], []>} : vector<128x96xf32>, vector<96x64xf32>, vector<128x64xf32> -> vector<128x64xf32>
    %c0_19 = arith.constant 0 : index
    %c0_20 = arith.constant 0 : index
    %55 = vector.load %arg7[%c0_19, %c0_20] : memref<1x64xf32, #tpu.memory_space<vmem>>, vector<1x64xf32>
    %56 = vector.broadcast %55 : vector<1x64xf32> to vector<128x64xf32>
    %57 = arith.addf %54, %56 : vector<128x64xf32>
    %cst_21 = arith.constant 0.000000e+00 : f32
    %58 = vector.broadcast %cst_21 : f32 to vector<128x64xf32>
    %59 = arith.maximumf %57, %58 : vector<128x64xf32>
    %60 = vector.shape_cast %59 : vector<128x64xf32> to vector<8x16x64xf32>
    %61 = vector.extract_strided_slice %60 {offsets = [0, 0, 0], sizes = [8, 8, 64], strides = [1, 1, 1]} : vector<8x16x64xf32> to vector<8x8x64xf32>
    %62 = vector.extract_strided_slice %60 {offsets = [0, 8, 0], sizes = [8, 8, 64], strides = [1, 1, 1]} : vector<8x16x64xf32> to vector<8x8x64xf32>
    %63 = arith.maximumf %61, %62 : vector<8x8x64xf32>
    %64 = vector.shape_cast %63 : vector<8x8x64xf32> to vector<64x64xf32>
    %c0_22 = arith.constant 0 : index
    %c0_23 = arith.constant 0 : index
    %65 = vector.load %arg8[%c0_22, %c0_23] : memref<64x256xf32, #tpu.memory_space<vmem>>, vector<64x256xf32>
    %cst_24 = arith.constant dense<0.000000e+00> : vector<64x256xf32>
    %66 = tpu.matmul %64, %65, %cst_24 {dimension_numbers = #tpu.dot_dimension_numbers<[1], [0], [0], [1], [0, 0, 1, 1], [], []>} : vector<64x64xf32>, vector<64x256xf32>, vector<64x256xf32> -> vector<64x256xf32>
    %c0_25 = arith.constant 0 : index
    %c0_26 = arith.constant 0 : index
    %67 = vector.load %arg10[%c0_25, %c0_26] : memref<1x256xf32, #tpu.memory_space<vmem>>, vector<1x256xf32>
    %68 = vector.broadcast %67 : vector<1x256xf32> to vector<64x256xf32>
    %69 = arith.addf %66, %68 : vector<64x256xf32>
    %c0_27 = arith.constant 0 : index
    %c0_28 = arith.constant 0 : index
    %70 = vector.load %arg19[%c0_27, %c0_28] : memref<64x256xf32, #tpu.memory_space<vmem>>, vector<64x256xf32>
    tpu.vector_store %arg19[%c0_27, %c0_28], %69 {strides = array<i32>} : memref<64x256xf32, #tpu.memory_space<vmem>>, vector<64x256xf32>,
    %cst_29 = arith.constant 0.000000e+00 : f32
    %71 = vector.broadcast %cst_29 : f32 to vector<8x64xf32>
    %c0_30 = arith.constant 0 : index
    %c0_31 = arith.constant 0 : index
    %72 = vector.load %arg19[%c0_30, %c0_31] : memref<64x256xf32, #tpu.memory_space<vmem>>, vector<8x256xf32>
    %c0_32 = arith.constant 0 : index
    %c0_33 = arith.constant 0 : index
    %73 = vector.load %arg9[%c0_32, %c0_33] : memref<64x256xf32, #tpu.memory_space<vmem>>, vector<64x256xf32>
    %cst_34 = arith.constant dense<0.000000e+00> : vector<8x256xf32>
    %74 = tpu.matmul %71, %73, %cst_34 {dimension_numbers = #tpu.dot_dimension_numbers<[1], [0], [0], [1], [0, 0, 1, 1], [], []>} : vector<8x64xf32>, vector<64x256xf32>, vector<8x256xf32> -> vector<8x256xf32>
    %75 = arith.addf %72, %74 : vector<8x256xf32>
    %76 = vector.extract_strided_slice %75 {offsets = [0, 0], sizes = [8, 64], strides = [1, 1]} : vector<8x256xf32> to vector<8x64xf32>
    %77 = arith.negf %76 : vector<8x64xf32>
    %78 = math.exp %77 : vector<8x64xf32>
    %cst_35 = arith.constant 1.000000e+00 : f32
    %79 = vector.broadcast %cst_35 : f32 to vector<8x64xf32>
    %80 = arith.addf %79, %78 : vector<8x64xf32>
    %81 = arith.divf %79, %80 : vector<8x64xf32>
    %82 = vector.extract_strided_slice %75 {offsets = [0, 64], sizes = [8, 64], strides = [1, 1]} : vector<8x256xf32> to vector<8x64xf32>
    %83 = arith.negf %82 : vector<8x64xf32>
    %84 = math.exp %83 : vector<8x64xf32>
    %cst_36 = arith.constant 1.000000e+00 : f32
    %85 = vector.broadcast %cst_36 : f32 to vector<8x64xf32>
    %86 = arith.addf %85, %84 : vector<8x64xf32>
    %87 = arith.divf %85, %86 : vector<8x64xf32>
    %88 = vector.extract_strided_slice %75 {offsets = [0, 128], sizes = [8, 64], strides = [1, 1]} : vector<8x256xf32> to vector<8x64xf32>
    %89 = math.tanh %88 : vector<8x64xf32>
    %90 = vector.extract_strided_slice %75 {offsets = [0, 192], sizes = [8, 64], strides = [1, 1]} : vector<8x256xf32> to vector<8x64xf32>
    %91 = arith.negf %90 : vector<8x64xf32>
    %92 = math.exp %91 : vector<8x64xf32>
    %cst_37 = arith.constant 1.000000e+00 : f32
    %93 = vector.broadcast %cst_37 : f32 to vector<8x64xf32>
    %94 = arith.addf %93, %92 : vector<8x64xf32>
    %95 = arith.divf %93, %94 : vector<8x64xf32>
    %96 = arith.mulf %87, %71 : vector<8x64xf32>
    %97 = arith.mulf %81, %89 : vector<8x64xf32>
    %98 = arith.addf %96, %97 : vector<8x64xf32>
    %99 = math.tanh %98 : vector<8x64xf32>
    %100 = arith.mulf %95, %99 : vector<8x64xf32>
    %c0_38 = arith.constant 0 : index
    %c0_39 = arith.constant 0 : index
    %101 = vector.load %arg20[%c0_38, %c0_39] : memref<64x64xf32, #tpu.memory_space<vmem>>, vector<8x64xf32>
    tpu.vector_store %arg20[%c0_38, %c0_39], %100 {strides = array<i32>} : memref<64x64xf32, #tpu.memory_space<vmem>>, vector<8x64xf32>,
    %c8 = arith.constant 8 : index
    %c0_40 = arith.constant 0 : index
    %102 = vector.load %arg19[%c8, %c0_40] : memref<64x256xf32, #tpu.memory_space<vmem>>, vector<8x256xf32>
    %c0_41 = arith.constant 0 : index
    %c0_42 = arith.constant 0 : index
    %103 = vector.load %arg9[%c0_41, %c0_42] : memref<64x256xf32, #tpu.memory_space<vmem>>, vector<64x256xf32>
    %cst_43 = arith.constant dense<0.000000e+00> : vector<8x256xf32>
    %104 = tpu.matmul %100, %103, %cst_43 {dimension_numbers = #tpu.dot_dimension_numbers<[1], [0], [0], [1], [0, 0, 1, 1], [], []>} : vector<8x64xf32>, vector<64x256xf32>, vector<8x256xf32> -> vector<8x256xf32>
    %105 = arith.addf %102, %104 : vector<8x256xf32>
    %106 = vector.extract_strided_slice %105 {offsets = [0, 0], sizes = [8, 64], strides = [1, 1]} : vector<8x256xf32> to vector<8x64xf32>
    %107 = arith.negf %106 : vector<8x64xf32>
    %108 = math.exp %107 : vector<8x64xf32>
    %cst_44 = arith.constant 1.000000e+00 : f32
    %109 = vector.broadcast %cst_44 : f32 to vector<8x64xf32>
    %110 = arith.addf %109, %108 : vector<8x64xf32>
    %111 = arith.divf %109, %110 : vector<8x64xf32>
    %112 = vector.extract_strided_slice %105 {offsets = [0, 64], sizes = [8, 64], strides = [1, 1]} : vector<8x256xf32> to vector<8x64xf32>
    %113 = arith.negf %112 : vector<8x64xf32>
    %114 = math.exp %113 : vector<8x64xf32>
    %cst_45 = arith.constant 1.000000e+00 : f32
    %115 = vector.broadcast %cst_45 : f32 to vector<8x64xf32>
    %116 = arith.addf %115, %114 : vector<8x64xf32>
    %117 = arith.divf %115, %116 : vector<8x64xf32>
    %118 = vector.extract_strided_slice %105 {offsets = [0, 128], sizes = [8, 64], strides = [1, 1]} : vector<8x256xf32> to vector<8x64xf32>
    %119 = math.tanh %118 : vector<8x64xf32>
    %120 = vector.extract_strided_slice %105 {offsets = [0, 192], sizes = [8, 64], strides = [1, 1]} : vector<8x256xf32> to vector<8x64xf32>
    %121 = arith.negf %120 : vector<8x64xf32>
    %122 = math.exp %121 : vector<8x64xf32>
    %cst_46 = arith.constant 1.000000e+00 : f32
    %123 = vector.broadcast %cst_46 : f32 to vector<8x64xf32>
    %124 = arith.addf %123, %122 : vector<8x64xf32>
    %125 = arith.divf %123, %124 : vector<8x64xf32>
    %126 = arith.mulf %117, %98 : vector<8x64xf32>
    %127 = arith.mulf %111, %119 : vector<8x64xf32>
    %128 = arith.addf %126, %127 : vector<8x64xf32>
    %129 = math.tanh %128 : vector<8x64xf32>
    %130 = arith.mulf %125, %129 : vector<8x64xf32>
    %c8_47 = arith.constant 8 : index
    %c0_48 = arith.constant 0 : index
    %131 = vector.load %arg20[%c8_47, %c0_48] : memref<64x64xf32, #tpu.memory_space<vmem>>, vector<8x64xf32>
    tpu.vector_store %arg20[%c8_47, %c0_48], %130 {strides = array<i32>} : memref<64x64xf32, #tpu.memory_space<vmem>>, vector<8x64xf32>,
    %c16 = arith.constant 16 : index
    %c0_49 = arith.constant 0 : index
    %132 = vector.load %arg19[%c16, %c0_49] : memref<64x256xf32, #tpu.memory_space<vmem>>, vector<8x256xf32>
    %c0_50 = arith.constant 0 : index
    %c0_51 = arith.constant 0 : index
    %133 = vector.load %arg9[%c0_50, %c0_51] : memref<64x256xf32, #tpu.memory_space<vmem>>, vector<64x256xf32>
    %cst_52 = arith.constant dense<0.000000e+00> : vector<8x256xf32>
    %134 = tpu.matmul %130, %133, %cst_52 {dimension_numbers = #tpu.dot_dimension_numbers<[1], [0], [0], [1], [0, 0, 1, 1], [], []>} : vector<8x64xf32>, vector<64x256xf32>, vector<8x256xf32> -> vector<8x256xf32>
    %135 = arith.addf %132, %134 : vector<8x256xf32>
    %136 = vector.extract_strided_slice %135 {offsets = [0, 0], sizes = [8, 64], strides = [1, 1]} : vector<8x256xf32> to vector<8x64xf32>
    %137 = arith.negf %136 : vector<8x64xf32>
    %138 = math.exp %137 : vector<8x64xf32>
    %cst_53 = arith.constant 1.000000e+00 : f32
    %139 = vector.broadcast %cst_53 : f32 to vector<8x64xf32>
    %140 = arith.addf %139, %138 : vector<8x64xf32>
    %141 = arith.divf %139, %140 : vector<8x64xf32>
    %142 = vector.extract_strided_slice %135 {offsets = [0, 64], sizes = [8, 64], strides = [1, 1]} : vector<8x256xf32> to vector<8x64xf32>
    %143 = arith.negf %142 : vector<8x64xf32>
    %144 = math.exp %143 : vector<8x64xf32>
    %cst_54 = arith.constant 1.000000e+00 : f32
    %145 = vector.broadcast %cst_54 : f32 to vector<8x64xf32>
    %146 = arith.addf %145, %144 : vector<8x64xf32>
    %147 = arith.divf %145, %146 : vector<8x64xf32>
    %148 = vector.extract_strided_slice %135 {offsets = [0, 128], sizes = [8, 64], strides = [1, 1]} : vector<8x256xf32> to vector<8x64xf32>
    %149 = math.tanh %148 : vector<8x64xf32>
    %150 = vector.extract_strided_slice %135 {offsets = [0, 192], sizes = [8, 64], strides = [1, 1]} : vector<8x256xf32> to vector<8x64xf32>
    %151 = arith.negf %150 : vector<8x64xf32>
    %152 = math.exp %151 : vector<8x64xf32>
    %cst_55 = arith.constant 1.000000e+00 : f32
    %153 = vector.broadcast %cst_55 : f32 to vector<8x64xf32>
    %154 = arith.addf %153, %152 : vector<8x64xf32>
    %155 = arith.divf %153, %154 : vector<8x64xf32>
    %156 = arith.mulf %147, %128 : vector<8x64xf32>
    %157 = arith.mulf %141, %149 : vector<8x64xf32>
    %158 = arith.addf %156, %157 : vector<8x64xf32>
    %159 = math.tanh %158 : vector<8x64xf32>
    %160 = arith.mulf %155, %159 : vector<8x64xf32>
    %c16_56 = arith.constant 16 : index
    %c0_57 = arith.constant 0 : index
    %161 = vector.load %arg20[%c16_56, %c0_57] : memref<64x64xf32, #tpu.memory_space<vmem>>, vector<8x64xf32>
    tpu.vector_store %arg20[%c16_56, %c0_57], %160 {strides = array<i32>} : memref<64x64xf32, #tpu.memory_space<vmem>>, vector<8x64xf32>,
    %c24 = arith.constant 24 : index
    %c0_58 = arith.constant 0 : index
    %162 = vector.load %arg19[%c24, %c0_58] : memref<64x256xf32, #tpu.memory_space<vmem>>, vector<8x256xf32>
    %c0_59 = arith.constant 0 : index
    %c0_60 = arith.constant 0 : index
    %163 = vector.load %arg9[%c0_59, %c0_60] : memref<64x256xf32, #tpu.memory_space<vmem>>, vector<64x256xf32>
    %cst_61 = arith.constant dense<0.000000e+00> : vector<8x256xf32>
    %164 = tpu.matmul %160, %163, %cst_61 {dimension_numbers = #tpu.dot_dimension_numbers<[1], [0], [0], [1], [0, 0, 1, 1], [], []>} : vector<8x64xf32>, vector<64x256xf32>, vector<8x256xf32> -> vector<8x256xf32>
    %165 = arith.addf %162, %164 : vector<8x256xf32>
    %166 = vector.extract_strided_slice %165 {offsets = [0, 0], sizes = [8, 64], strides = [1, 1]} : vector<8x256xf32> to vector<8x64xf32>
    %167 = arith.negf %166 : vector<8x64xf32>
    %168 = math.exp %167 : vector<8x64xf32>
    %cst_62 = arith.constant 1.000000e+00 : f32
    %169 = vector.broadcast %cst_62 : f32 to vector<8x64xf32>
    %170 = arith.addf %169, %168 : vector<8x64xf32>
    %171 = arith.divf %169, %170 : vector<8x64xf32>
    %172 = vector.extract_strided_slice %165 {offsets = [0, 64], sizes = [8, 64], strides = [1, 1]} : vector<8x256xf32> to vector<8x64xf32>
    %173 = arith.negf %172 : vector<8x64xf32>
    %174 = math.exp %173 : vector<8x64xf32>
    %cst_63 = arith.constant 1.000000e+00 : f32
    %175 = vector.broadcast %cst_63 : f32 to vector<8x64xf32>
    %176 = arith.addf %175, %174 : vector<8x64xf32>
    %177 = arith.divf %175, %176 : vector<8x64xf32>
    %178 = vector.extract_strided_slice %165 {offsets = [0, 128], sizes = [8, 64], strides = [1, 1]} : vector<8x256xf32> to vector<8x64xf32>
    %179 = math.tanh %178 : vector<8x64xf32>
    %180 = vector.extract_strided_slice %165 {offsets = [0, 192], sizes = [8, 64], strides = [1, 1]} : vector<8x256xf32> to vector<8x64xf32>
    %181 = arith.negf %180 : vector<8x64xf32>
    %182 = math.exp %181 : vector<8x64xf32>
    %cst_64 = arith.constant 1.000000e+00 : f32
    %183 = vector.broadcast %cst_64 : f32 to vector<8x64xf32>
    %184 = arith.addf %183, %182 : vector<8x64xf32>
    %185 = arith.divf %183, %184 : vector<8x64xf32>
    %186 = arith.mulf %177, %158 : vector<8x64xf32>
    %187 = arith.mulf %171, %179 : vector<8x64xf32>
    %188 = arith.addf %186, %187 : vector<8x64xf32>
    %189 = math.tanh %188 : vector<8x64xf32>
    %190 = arith.mulf %185, %189 : vector<8x64xf32>
    %c24_65 = arith.constant 24 : index
    %c0_66 = arith.constant 0 : index
    %191 = vector.load %arg20[%c24_65, %c0_66] : memref<64x64xf32, #tpu.memory_space<vmem>>, vector<8x64xf32>
    tpu.vector_store %arg20[%c24_65, %c0_66], %190 {strides = array<i32>} : memref<64x64xf32, #tpu.memory_space<vmem>>, vector<8x64xf32>,
    %c32 = arith.constant 32 : index
    %c0_67 = arith.constant 0 : index
    %192 = vector.load %arg19[%c32, %c0_67] : memref<64x256xf32, #tpu.memory_space<vmem>>, vector<8x256xf32>
    %c0_68 = arith.constant 0 : index
    %c0_69 = arith.constant 0 : index
    %193 = vector.load %arg9[%c0_68, %c0_69] : memref<64x256xf32, #tpu.memory_space<vmem>>, vector<64x256xf32>
    %cst_70 = arith.constant dense<0.000000e+00> : vector<8x256xf32>
    %194 = tpu.matmul %190, %193, %cst_70 {dimension_numbers = #tpu.dot_dimension_numbers<[1], [0], [0], [1], [0, 0, 1, 1], [], []>} : vector<8x64xf32>, vector<64x256xf32>, vector<8x256xf32> -> vector<8x256xf32>
    %195 = arith.addf %192, %194 : vector<8x256xf32>
    %196 = vector.extract_strided_slice %195 {offsets = [0, 0], sizes = [8, 64], strides = [1, 1]} : vector<8x256xf32> to vector<8x64xf32>
    %197 = arith.negf %196 : vector<8x64xf32>
    %198 = math.exp %197 : vector<8x64xf32>
    %cst_71 = arith.constant 1.000000e+00 : f32
    %199 = vector.broadcast %cst_71 : f32 to vector<8x64xf32>
    %200 = arith.addf %199, %198 : vector<8x64xf32>
    %201 = arith.divf %199, %200 : vector<8x64xf32>
    %202 = vector.extract_strided_slice %195 {offsets = [0, 64], sizes = [8, 64], strides = [1, 1]} : vector<8x256xf32> to vector<8x64xf32>
    %203 = arith.negf %202 : vector<8x64xf32>
    %204 = math.exp %203 : vector<8x64xf32>
    %cst_72 = arith.constant 1.000000e+00 : f32
    %205 = vector.broadcast %cst_72 : f32 to vector<8x64xf32>
    %206 = arith.addf %205, %204 : vector<8x64xf32>
    %207 = arith.divf %205, %206 : vector<8x64xf32>
    %208 = vector.extract_strided_slice %195 {offsets = [0, 128], sizes = [8, 64], strides = [1, 1]} : vector<8x256xf32> to vector<8x64xf32>
    %209 = math.tanh %208 : vector<8x64xf32>
    %210 = vector.extract_strided_slice %195 {offsets = [0, 192], sizes = [8, 64], strides = [1, 1]} : vector<8x256xf32> to vector<8x64xf32>
    %211 = arith.negf %210 : vector<8x64xf32>
    %212 = math.exp %211 : vector<8x64xf32>
    %cst_73 = arith.constant 1.000000e+00 : f32
    %213 = vector.broadcast %cst_73 : f32 to vector<8x64xf32>
    %214 = arith.addf %213, %212 : vector<8x64xf32>
    %215 = arith.divf %213, %214 : vector<8x64xf32>
    %216 = arith.mulf %207, %188 : vector<8x64xf32>
    %217 = arith.mulf %201, %209 : vector<8x64xf32>
    %218 = arith.addf %216, %217 : vector<8x64xf32>
    %219 = math.tanh %218 : vector<8x64xf32>
    %220 = arith.mulf %215, %219 : vector<8x64xf32>
    %c32_74 = arith.constant 32 : index
    %c0_75 = arith.constant 0 : index
    %221 = vector.load %arg20[%c32_74, %c0_75] : memref<64x64xf32, #tpu.memory_space<vmem>>, vector<8x64xf32>
    tpu.vector_store %arg20[%c32_74, %c0_75], %220 {strides = array<i32>} : memref<64x64xf32, #tpu.memory_space<vmem>>, vector<8x64xf32>,
    %c40 = arith.constant 40 : index
    %c0_76 = arith.constant 0 : index
    %222 = vector.load %arg19[%c40, %c0_76] : memref<64x256xf32, #tpu.memory_space<vmem>>, vector<8x256xf32>
    %c0_77 = arith.constant 0 : index
    %c0_78 = arith.constant 0 : index
    %223 = vector.load %arg9[%c0_77, %c0_78] : memref<64x256xf32, #tpu.memory_space<vmem>>, vector<64x256xf32>
    %cst_79 = arith.constant dense<0.000000e+00> : vector<8x256xf32>
    %224 = tpu.matmul %220, %223, %cst_79 {dimension_numbers = #tpu.dot_dimension_numbers<[1], [0], [0], [1], [0, 0, 1, 1], [], []>} : vector<8x64xf32>, vector<64x256xf32>, vector<8x256xf32> -> vector<8x256xf32>
    %225 = arith.addf %222, %224 : vector<8x256xf32>
    %226 = vector.extract_strided_slice %225 {offsets = [0, 0], sizes = [8, 64], strides = [1, 1]} : vector<8x256xf32> to vector<8x64xf32>
    %227 = arith.negf %226 : vector<8x64xf32>
    %228 = math.exp %227 : vector<8x64xf32>
    %cst_80 = arith.constant 1.000000e+00 : f32
    %229 = vector.broadcast %cst_80 : f32 to vector<8x64xf32>
    %230 = arith.addf %229, %228 : vector<8x64xf32>
    %231 = arith.divf %229, %230 : vector<8x64xf32>
    %232 = vector.extract_strided_slice %225 {offsets = [0, 64], sizes = [8, 64], strides = [1, 1]} : vector<8x256xf32> to vector<8x64xf32>
    %233 = arith.negf %232 : vector<8x64xf32>
    %234 = math.exp %233 : vector<8x64xf32>
    %cst_81 = arith.constant 1.000000e+00 : f32
    %235 = vector.broadcast %cst_81 : f32 to vector<8x64xf32>
    %236 = arith.addf %235, %234 : vector<8x64xf32>
    %237 = arith.divf %235, %236 : vector<8x64xf32>
    %238 = vector.extract_strided_slice %225 {offsets = [0, 128], sizes = [8, 64], strides = [1, 1]} : vector<8x256xf32> to vector<8x64xf32>
    %239 = math.tanh %238 : vector<8x64xf32>
    %240 = vector.extract_strided_slice %225 {offsets = [0, 192], sizes = [8, 64], strides = [1, 1]} : vector<8x256xf32> to vector<8x64xf32>
    %241 = arith.negf %240 : vector<8x64xf32>
    %242 = math.exp %241 : vector<8x64xf32>
    %cst_82 = arith.constant 1.000000e+00 : f32
    %243 = vector.broadcast %cst_82 : f32 to vector<8x64xf32>
    %244 = arith.addf %243, %242 : vector<8x64xf32>
    %245 = arith.divf %243, %244 : vector<8x64xf32>
    %246 = arith.mulf %237, %218 : vector<8x64xf32>
    %247 = arith.mulf %231, %239 : vector<8x64xf32>
    %248 = arith.addf %246, %247 : vector<8x64xf32>
    %249 = math.tanh %248 : vector<8x64xf32>
    %250 = arith.mulf %245, %249 : vector<8x64xf32>
    %c40_83 = arith.constant 40 : index
    %c0_84 = arith.constant 0 : index
    %251 = vector.load %arg20[%c40_83, %c0_84] : memref<64x64xf32, #tpu.memory_space<vmem>>, vector<8x64xf32>
    tpu.vector_store %arg20[%c40_83, %c0_84], %250 {strides = array<i32>} : memref<64x64xf32, #tpu.memory_space<vmem>>, vector<8x64xf32>,
    %c48 = arith.constant 48 : index
    %c0_85 = arith.constant 0 : index
    %252 = vector.load %arg19[%c48, %c0_85] : memref<64x256xf32, #tpu.memory_space<vmem>>, vector<8x256xf32>
    %c0_86 = arith.constant 0 : index
    %c0_87 = arith.constant 0 : index
    %253 = vector.load %arg9[%c0_86, %c0_87] : memref<64x256xf32, #tpu.memory_space<vmem>>, vector<64x256xf32>
    %cst_88 = arith.constant dense<0.000000e+00> : vector<8x256xf32>
    %254 = tpu.matmul %250, %253, %cst_88 {dimension_numbers = #tpu.dot_dimension_numbers<[1], [0], [0], [1], [0, 0, 1, 1], [], []>} : vector<8x64xf32>, vector<64x256xf32>, vector<8x256xf32> -> vector<8x256xf32>
    %255 = arith.addf %252, %254 : vector<8x256xf32>
    %256 = vector.extract_strided_slice %255 {offsets = [0, 0], sizes = [8, 64], strides = [1, 1]} : vector<8x256xf32> to vector<8x64xf32>
    %257 = arith.negf %256 : vector<8x64xf32>
    %258 = math.exp %257 : vector<8x64xf32>
    %cst_89 = arith.constant 1.000000e+00 : f32
    %259 = vector.broadcast %cst_89 : f32 to vector<8x64xf32>
    %260 = arith.addf %259, %258 : vector<8x64xf32>
    %261 = arith.divf %259, %260 : vector<8x64xf32>
    %262 = vector.extract_strided_slice %255 {offsets = [0, 64], sizes = [8, 64], strides = [1, 1]} : vector<8x256xf32> to vector<8x64xf32>
    %263 = arith.negf %262 : vector<8x64xf32>
    %264 = math.exp %263 : vector<8x64xf32>
    %cst_90 = arith.constant 1.000000e+00 : f32
    %265 = vector.broadcast %cst_90 : f32 to vector<8x64xf32>
    %266 = arith.addf %265, %264 : vector<8x64xf32>
    %267 = arith.divf %265, %266 : vector<8x64xf32>
    %268 = vector.extract_strided_slice %255 {offsets = [0, 128], sizes = [8, 64], strides = [1, 1]} : vector<8x256xf32> to vector<8x64xf32>
    %269 = math.tanh %268 : vector<8x64xf32>
    %270 = vector.extract_strided_slice %255 {offsets = [0, 192], sizes = [8, 64], strides = [1, 1]} : vector<8x256xf32> to vector<8x64xf32>
    %271 = arith.negf %270 : vector<8x64xf32>
    %272 = math.exp %271 : vector<8x64xf32>
    %cst_91 = arith.constant 1.000000e+00 : f32
    %273 = vector.broadcast %cst_91 : f32 to vector<8x64xf32>
    %274 = arith.addf %273, %272 : vector<8x64xf32>
    %275 = arith.divf %273, %274 : vector<8x64xf32>
    %276 = arith.mulf %267, %248 : vector<8x64xf32>
    %277 = arith.mulf %261, %269 : vector<8x64xf32>
    %278 = arith.addf %276, %277 : vector<8x64xf32>
    %279 = math.tanh %278 : vector<8x64xf32>
    %280 = arith.mulf %275, %279 : vector<8x64xf32>
    %c48_92 = arith.constant 48 : index
    %c0_93 = arith.constant 0 : index
    %281 = vector.load %arg20[%c48_92, %c0_93] : memref<64x64xf32, #tpu.memory_space<vmem>>, vector<8x64xf32>
    tpu.vector_store %arg20[%c48_92, %c0_93], %280 {strides = array<i32>} : memref<64x64xf32, #tpu.memory_space<vmem>>, vector<8x64xf32>,
    %c56 = arith.constant 56 : index
    %c0_94 = arith.constant 0 : index
    %282 = vector.load %arg19[%c56, %c0_94] : memref<64x256xf32, #tpu.memory_space<vmem>>, vector<8x256xf32>
    %c0_95 = arith.constant 0 : index
    %c0_96 = arith.constant 0 : index
    %283 = vector.load %arg9[%c0_95, %c0_96] : memref<64x256xf32, #tpu.memory_space<vmem>>, vector<64x256xf32>
    %cst_97 = arith.constant dense<0.000000e+00> : vector<8x256xf32>
    %284 = tpu.matmul %280, %283, %cst_97 {dimension_numbers = #tpu.dot_dimension_numbers<[1], [0], [0], [1], [0, 0, 1, 1], [], []>} : vector<8x64xf32>, vector<64x256xf32>, vector<8x256xf32> -> vector<8x256xf32>
    %285 = arith.addf %282, %284 : vector<8x256xf32>
    %286 = vector.extract_strided_slice %285 {offsets = [0, 0], sizes = [8, 64], strides = [1, 1]} : vector<8x256xf32> to vector<8x64xf32>
    %287 = arith.negf %286 : vector<8x64xf32>
    %288 = math.exp %287 : vector<8x64xf32>
    %cst_98 = arith.constant 1.000000e+00 : f32
    %289 = vector.broadcast %cst_98 : f32 to vector<8x64xf32>
    %290 = arith.addf %289, %288 : vector<8x64xf32>
    %291 = arith.divf %289, %290 : vector<8x64xf32>
    %292 = vector.extract_strided_slice %285 {offsets = [0, 64], sizes = [8, 64], strides = [1, 1]} : vector<8x256xf32> to vector<8x64xf32>
    %293 = arith.negf %292 : vector<8x64xf32>
    %294 = math.exp %293 : vector<8x64xf32>
    %cst_99 = arith.constant 1.000000e+00 : f32
    %295 = vector.broadcast %cst_99 : f32 to vector<8x64xf32>
    %296 = arith.addf %295, %294 : vector<8x64xf32>
    %297 = arith.divf %295, %296 : vector<8x64xf32>
    %298 = vector.extract_strided_slice %285 {offsets = [0, 128], sizes = [8, 64], strides = [1, 1]} : vector<8x256xf32> to vector<8x64xf32>
    %299 = math.tanh %298 : vector<8x64xf32>
    %300 = vector.extract_strided_slice %285 {offsets = [0, 192], sizes = [8, 64], strides = [1, 1]} : vector<8x256xf32> to vector<8x64xf32>
    %301 = arith.negf %300 : vector<8x64xf32>
    %302 = math.exp %301 : vector<8x64xf32>
    %cst_100 = arith.constant 1.000000e+00 : f32
    %303 = vector.broadcast %cst_100 : f32 to vector<8x64xf32>
    %304 = arith.addf %303, %302 : vector<8x64xf32>
    %305 = arith.divf %303, %304 : vector<8x64xf32>
    %306 = arith.mulf %297, %278 : vector<8x64xf32>
    %307 = arith.mulf %291, %299 : vector<8x64xf32>
    %308 = arith.addf %306, %307 : vector<8x64xf32>
    %309 = math.tanh %308 : vector<8x64xf32>
    %310 = arith.mulf %305, %309 : vector<8x64xf32>
    %c56_101 = arith.constant 56 : index
    %c0_102 = arith.constant 0 : index
    %311 = vector.load %arg20[%c56_101, %c0_102] : memref<64x64xf32, #tpu.memory_space<vmem>>, vector<8x64xf32>
    tpu.vector_store %arg20[%c56_101, %c0_102], %310 {strides = array<i32>} : memref<64x64xf32, #tpu.memory_space<vmem>>, vector<8x64xf32>,
    %c0_103 = arith.constant 0 : index
    %c0_104 = arith.constant 0 : index
    %312 = vector.load %arg20[%c0_103, %c0_104] : memref<64x64xf32, #tpu.memory_space<vmem>>, vector<64x64xf32>
    %c0_105 = arith.constant 0 : index
    %c0_106 = arith.constant 0 : index
    %313 = vector.load %arg11[%c0_105, %c0_106] : memref<64x256xf32, #tpu.memory_space<vmem>>, vector<64x256xf32>
    %cst_107 = arith.constant dense<0.000000e+00> : vector<64x256xf32>
    %314 = tpu.matmul %312, %313, %cst_107 {dimension_numbers = #tpu.dot_dimension_numbers<[1], [0], [0], [1], [0, 0, 1, 1], [], []>} : vector<64x64xf32>, vector<64x256xf32>, vector<64x256xf32> -> vector<64x256xf32>
    %c0_108 = arith.constant 0 : index
    %c0_109 = arith.constant 0 : index
    %315 = vector.load %arg13[%c0_108, %c0_109] : memref<1x256xf32, #tpu.memory_space<vmem>>, vector<1x256xf32>
    %316 = vector.broadcast %315 : vector<1x256xf32> to vector<64x256xf32>
    %317 = arith.addf %314, %316 : vector<64x256xf32>
    %c0_110 = arith.constant 0 : index
    %c0_111 = arith.constant 0 : index
    %318 = vector.load %arg19[%c0_110, %c0_111] : memref<64x256xf32, #tpu.memory_space<vmem>>, vector<64x256xf32>
    tpu.vector_store %arg19[%c0_110, %c0_111], %317 {strides = array<i32>} : memref<64x256xf32, #tpu.memory_space<vmem>>, vector<64x256xf32>,
    %c0_112 = arith.constant 0 : index
    %c0_113 = arith.constant 0 : index
    %319 = vector.load %arg19[%c0_112, %c0_113] : memref<64x256xf32, #tpu.memory_space<vmem>>, vector<8x256xf32>
    %c0_114 = arith.constant 0 : index
    %c0_115 = arith.constant 0 : index
    %320 = vector.load %arg12[%c0_114, %c0_115] : memref<64x256xf32, #tpu.memory_space<vmem>>, vector<64x256xf32>
    %cst_116 = arith.constant dense<0.000000e+00> : vector<8x256xf32>
    %321 = tpu.matmul %71, %320, %cst_116 {dimension_numbers = #tpu.dot_dimension_numbers<[1], [0], [0], [1], [0, 0, 1, 1], [], []>} : vector<8x64xf32>, vector<64x256xf32>, vector<8x256xf32> -> vector<8x256xf32>
    %322 = arith.addf %319, %321 : vector<8x256xf32>
    %323 = vector.extract_strided_slice %322 {offsets = [0, 0], sizes = [8, 64], strides = [1, 1]} : vector<8x256xf32> to vector<8x64xf32>
    %324 = arith.negf %323 : vector<8x64xf32>
    %325 = math.exp %324 : vector<8x64xf32>
    %cst_117 = arith.constant 1.000000e+00 : f32
    %326 = vector.broadcast %cst_117 : f32 to vector<8x64xf32>
    %327 = arith.addf %326, %325 : vector<8x64xf32>
    %328 = arith.divf %326, %327 : vector<8x64xf32>
    %329 = vector.extract_strided_slice %322 {offsets = [0, 64], sizes = [8, 64], strides = [1, 1]} : vector<8x256xf32> to vector<8x64xf32>
    %330 = arith.negf %329 : vector<8x64xf32>
    %331 = math.exp %330 : vector<8x64xf32>
    %cst_118 = arith.constant 1.000000e+00 : f32
    %332 = vector.broadcast %cst_118 : f32 to vector<8x64xf32>
    %333 = arith.addf %332, %331 : vector<8x64xf32>
    %334 = arith.divf %332, %333 : vector<8x64xf32>
    %335 = vector.extract_strided_slice %322 {offsets = [0, 128], sizes = [8, 64], strides = [1, 1]} : vector<8x256xf32> to vector<8x64xf32>
    %336 = math.tanh %335 : vector<8x64xf32>
    %337 = vector.extract_strided_slice %322 {offsets = [0, 192], sizes = [8, 64], strides = [1, 1]} : vector<8x256xf32> to vector<8x64xf32>
    %338 = arith.negf %337 : vector<8x64xf32>
    %339 = math.exp %338 : vector<8x64xf32>
    %cst_119 = arith.constant 1.000000e+00 : f32
    %340 = vector.broadcast %cst_119 : f32 to vector<8x64xf32>
    %341 = arith.addf %340, %339 : vector<8x64xf32>
    %342 = arith.divf %340, %341 : vector<8x64xf32>
    %343 = arith.mulf %334, %71 : vector<8x64xf32>
    %344 = arith.mulf %328, %336 : vector<8x64xf32>
    %345 = arith.addf %343, %344 : vector<8x64xf32>
    %346 = math.tanh %345 : vector<8x64xf32>
    %347 = arith.mulf %342, %346 : vector<8x64xf32>
    %c8_120 = arith.constant 8 : index
    %c0_121 = arith.constant 0 : index
    %348 = vector.load %arg19[%c8_120, %c0_121] : memref<64x256xf32, #tpu.memory_space<vmem>>, vector<8x256xf32>
    %c0_122 = arith.constant 0 : index
    %c0_123 = arith.constant 0 : index
    %349 = vector.load %arg12[%c0_122, %c0_123] : memref<64x256xf32, #tpu.memory_space<vmem>>, vector<64x256xf32>
    %cst_124 = arith.constant dense<0.000000e+00> : vector<8x256xf32>
    %350 = tpu.matmul %347, %349, %cst_124 {dimension_numbers = #tpu.dot_dimension_numbers<[1], [0], [0], [1], [0, 0, 1, 1], [], []>} : vector<8x64xf32>, vector<64x256xf32>, vector<8x256xf32> -> vector<8x256xf32>
    %351 = arith.addf %348, %350 : vector<8x256xf32>
    %352 = vector.extract_strided_slice %351 {offsets = [0, 0], sizes = [8, 64], strides = [1, 1]} : vector<8x256xf32> to vector<8x64xf32>
    %353 = arith.negf %352 : vector<8x64xf32>
    %354 = math.exp %353 : vector<8x64xf32>
    %cst_125 = arith.constant 1.000000e+00 : f32
    %355 = vector.broadcast %cst_125 : f32 to vector<8x64xf32>
    %356 = arith.addf %355, %354 : vector<8x64xf32>
    %357 = arith.divf %355, %356 : vector<8x64xf32>
    %358 = vector.extract_strided_slice %351 {offsets = [0, 64], sizes = [8, 64], strides = [1, 1]} : vector<8x256xf32> to vector<8x64xf32>
    %359 = arith.negf %358 : vector<8x64xf32>
    %360 = math.exp %359 : vector<8x64xf32>
    %cst_126 = arith.constant 1.000000e+00 : f32
    %361 = vector.broadcast %cst_126 : f32 to vector<8x64xf32>
    %362 = arith.addf %361, %360 : vector<8x64xf32>
    %363 = arith.divf %361, %362 : vector<8x64xf32>
    %364 = vector.extract_strided_slice %351 {offsets = [0, 128], sizes = [8, 64], strides = [1, 1]} : vector<8x256xf32> to vector<8x64xf32>
    %365 = math.tanh %364 : vector<8x64xf32>
    %366 = vector.extract_strided_slice %351 {offsets = [0, 192], sizes = [8, 64], strides = [1, 1]} : vector<8x256xf32> to vector<8x64xf32>
    %367 = arith.negf %366 : vector<8x64xf32>
    %368 = math.exp %367 : vector<8x64xf32>
    %cst_127 = arith.constant 1.000000e+00 : f32
    %369 = vector.broadcast %cst_127 : f32 to vector<8x64xf32>
    %370 = arith.addf %369, %368 : vector<8x64xf32>
    %371 = arith.divf %369, %370 : vector<8x64xf32>
    %372 = arith.mulf %363, %345 : vector<8x64xf32>
    %373 = arith.mulf %357, %365 : vector<8x64xf32>
    %374 = arith.addf %372, %373 : vector<8x64xf32>
    %375 = math.tanh %374 : vector<8x64xf32>
    %376 = arith.mulf %371, %375 : vector<8x64xf32>
    %c16_128 = arith.constant 16 : index
    %c0_129 = arith.constant 0 : index
    %377 = vector.load %arg19[%c16_128, %c0_129] : memref<64x256xf32, #tpu.memory_space<vmem>>, vector<8x256xf32>
    %c0_130 = arith.constant 0 : index
    %c0_131 = arith.constant 0 : index
    %378 = vector.load %arg12[%c0_130, %c0_131] : memref<64x256xf32, #tpu.memory_space<vmem>>, vector<64x256xf32>
    %cst_132 = arith.constant dense<0.000000e+00> : vector<8x256xf32>
    %379 = tpu.matmul %376, %378, %cst_132 {dimension_numbers = #tpu.dot_dimension_numbers<[1], [0], [0], [1], [0, 0, 1, 1], [], []>} : vector<8x64xf32>, vector<64x256xf32>, vector<8x256xf32> -> vector<8x256xf32>
    %380 = arith.addf %377, %379 : vector<8x256xf32>
    %381 = vector.extract_strided_slice %380 {offsets = [0, 0], sizes = [8, 64], strides = [1, 1]} : vector<8x256xf32> to vector<8x64xf32>
    %382 = arith.negf %381 : vector<8x64xf32>
    %383 = math.exp %382 : vector<8x64xf32>
    %cst_133 = arith.constant 1.000000e+00 : f32
    %384 = vector.broadcast %cst_133 : f32 to vector<8x64xf32>
    %385 = arith.addf %384, %383 : vector<8x64xf32>
    %386 = arith.divf %384, %385 : vector<8x64xf32>
    %387 = vector.extract_strided_slice %380 {offsets = [0, 64], sizes = [8, 64], strides = [1, 1]} : vector<8x256xf32> to vector<8x64xf32>
    %388 = arith.negf %387 : vector<8x64xf32>
    %389 = math.exp %388 : vector<8x64xf32>
    %cst_134 = arith.constant 1.000000e+00 : f32
    %390 = vector.broadcast %cst_134 : f32 to vector<8x64xf32>
    %391 = arith.addf %390, %389 : vector<8x64xf32>
    %392 = arith.divf %390, %391 : vector<8x64xf32>
    %393 = vector.extract_strided_slice %380 {offsets = [0, 128], sizes = [8, 64], strides = [1, 1]} : vector<8x256xf32> to vector<8x64xf32>
    %394 = math.tanh %393 : vector<8x64xf32>
    %395 = vector.extract_strided_slice %380 {offsets = [0, 192], sizes = [8, 64], strides = [1, 1]} : vector<8x256xf32> to vector<8x64xf32>
    %396 = arith.negf %395 : vector<8x64xf32>
    %397 = math.exp %396 : vector<8x64xf32>
    %cst_135 = arith.constant 1.000000e+00 : f32
    %398 = vector.broadcast %cst_135 : f32 to vector<8x64xf32>
    %399 = arith.addf %398, %397 : vector<8x64xf32>
    %400 = arith.divf %398, %399 : vector<8x64xf32>
    %401 = arith.mulf %392, %374 : vector<8x64xf32>
    %402 = arith.mulf %386, %394 : vector<8x64xf32>
    %403 = arith.addf %401, %402 : vector<8x64xf32>
    %404 = math.tanh %403 : vector<8x64xf32>
    %405 = arith.mulf %400, %404 : vector<8x64xf32>
    %c24_136 = arith.constant 24 : index
    %c0_137 = arith.constant 0 : index
    %406 = vector.load %arg19[%c24_136, %c0_137] : memref<64x256xf32, #tpu.memory_space<vmem>>, vector<8x256xf32>
    %c0_138 = arith.constant 0 : index
    %c0_139 = arith.constant 0 : index
    %407 = vector.load %arg12[%c0_138, %c0_139] : memref<64x256xf32, #tpu.memory_space<vmem>>, vector<64x256xf32>
    %cst_140 = arith.constant dense<0.000000e+00> : vector<8x256xf32>
    %408 = tpu.matmul %405, %407, %cst_140 {dimension_numbers = #tpu.dot_dimension_numbers<[1], [0], [0], [1], [0, 0, 1, 1], [], []>} : vector<8x64xf32>, vector<64x256xf32>, vector<8x256xf32> -> vector<8x256xf32>
    %409 = arith.addf %406, %408 : vector<8x256xf32>
    %410 = vector.extract_strided_slice %409 {offsets = [0, 0], sizes = [8, 64], strides = [1, 1]} : vector<8x256xf32> to vector<8x64xf32>
    %411 = arith.negf %410 : vector<8x64xf32>
    %412 = math.exp %411 : vector<8x64xf32>
    %cst_141 = arith.constant 1.000000e+00 : f32
    %413 = vector.broadcast %cst_141 : f32 to vector<8x64xf32>
    %414 = arith.addf %413, %412 : vector<8x64xf32>
    %415 = arith.divf %413, %414 : vector<8x64xf32>
    %416 = vector.extract_strided_slice %409 {offsets = [0, 64], sizes = [8, 64], strides = [1, 1]} : vector<8x256xf32> to vector<8x64xf32>
    %417 = arith.negf %416 : vector<8x64xf32>
    %418 = math.exp %417 : vector<8x64xf32>
    %cst_142 = arith.constant 1.000000e+00 : f32
    %419 = vector.broadcast %cst_142 : f32 to vector<8x64xf32>
    %420 = arith.addf %419, %418 : vector<8x64xf32>
    %421 = arith.divf %419, %420 : vector<8x64xf32>
    %422 = vector.extract_strided_slice %409 {offsets = [0, 128], sizes = [8, 64], strides = [1, 1]} : vector<8x256xf32> to vector<8x64xf32>
    %423 = math.tanh %422 : vector<8x64xf32>
    %424 = vector.extract_strided_slice %409 {offsets = [0, 192], sizes = [8, 64], strides = [1, 1]} : vector<8x256xf32> to vector<8x64xf32>
    %425 = arith.negf %424 : vector<8x64xf32>
    %426 = math.exp %425 : vector<8x64xf32>
    %cst_143 = arith.constant 1.000000e+00 : f32
    %427 = vector.broadcast %cst_143 : f32 to vector<8x64xf32>
    %428 = arith.addf %427, %426 : vector<8x64xf32>
    %429 = arith.divf %427, %428 : vector<8x64xf32>
    %430 = arith.mulf %421, %403 : vector<8x64xf32>
    %431 = arith.mulf %415, %423 : vector<8x64xf32>
    %432 = arith.addf %430, %431 : vector<8x64xf32>
    %433 = math.tanh %432 : vector<8x64xf32>
    %434 = arith.mulf %429, %433 : vector<8x64xf32>
    %c32_144 = arith.constant 32 : index
    %c0_145 = arith.constant 0 : index
    %435 = vector.load %arg19[%c32_144, %c0_145] : memref<64x256xf32, #tpu.memory_space<vmem>>, vector<8x256xf32>
    %c0_146 = arith.constant 0 : index
    %c0_147 = arith.constant 0 : index
    %436 = vector.load %arg12[%c0_146, %c0_147] : memref<64x256xf32, #tpu.memory_space<vmem>>, vector<64x256xf32>
    %cst_148 = arith.constant dense<0.000000e+00> : vector<8x256xf32>
    %437 = tpu.matmul %434, %436, %cst_148 {dimension_numbers = #tpu.dot_dimension_numbers<[1], [0], [0], [1], [0, 0, 1, 1], [], []>} : vector<8x64xf32>, vector<64x256xf32>, vector<8x256xf32> -> vector<8x256xf32>
    %438 = arith.addf %435, %437 : vector<8x256xf32>
    %439 = vector.extract_strided_slice %438 {offsets = [0, 0], sizes = [8, 64], strides = [1, 1]} : vector<8x256xf32> to vector<8x64xf32>
    %440 = arith.negf %439 : vector<8x64xf32>
    %441 = math.exp %440 : vector<8x64xf32>
    %cst_149 = arith.constant 1.000000e+00 : f32
    %442 = vector.broadcast %cst_149 : f32 to vector<8x64xf32>
    %443 = arith.addf %442, %441 : vector<8x64xf32>
    %444 = arith.divf %442, %443 : vector<8x64xf32>
    %445 = vector.extract_strided_slice %438 {offsets = [0, 64], sizes = [8, 64], strides = [1, 1]} : vector<8x256xf32> to vector<8x64xf32>
    %446 = arith.negf %445 : vector<8x64xf32>
    %447 = math.exp %446 : vector<8x64xf32>
    %cst_150 = arith.constant 1.000000e+00 : f32
    %448 = vector.broadcast %cst_150 : f32 to vector<8x64xf32>
    %449 = arith.addf %448, %447 : vector<8x64xf32>
    %450 = arith.divf %448, %449 : vector<8x64xf32>
    %451 = vector.extract_strided_slice %438 {offsets = [0, 128], sizes = [8, 64], strides = [1, 1]} : vector<8x256xf32> to vector<8x64xf32>
    %452 = math.tanh %451 : vector<8x64xf32>
    %453 = vector.extract_strided_slice %438 {offsets = [0, 192], sizes = [8, 64], strides = [1, 1]} : vector<8x256xf32> to vector<8x64xf32>
    %454 = arith.negf %453 : vector<8x64xf32>
    %455 = math.exp %454 : vector<8x64xf32>
    %cst_151 = arith.constant 1.000000e+00 : f32
    %456 = vector.broadcast %cst_151 : f32 to vector<8x64xf32>
    %457 = arith.addf %456, %455 : vector<8x64xf32>
    %458 = arith.divf %456, %457 : vector<8x64xf32>
    %459 = arith.mulf %450, %432 : vector<8x64xf32>
    %460 = arith.mulf %444, %452 : vector<8x64xf32>
    %461 = arith.addf %459, %460 : vector<8x64xf32>
    %462 = math.tanh %461 : vector<8x64xf32>
    %463 = arith.mulf %458, %462 : vector<8x64xf32>
    %c40_152 = arith.constant 40 : index
    %c0_153 = arith.constant 0 : index
    %464 = vector.load %arg19[%c40_152, %c0_153] : memref<64x256xf32, #tpu.memory_space<vmem>>, vector<8x256xf32>
    %c0_154 = arith.constant 0 : index
    %c0_155 = arith.constant 0 : index
    %465 = vector.load %arg12[%c0_154, %c0_155] : memref<64x256xf32, #tpu.memory_space<vmem>>, vector<64x256xf32>
    %cst_156 = arith.constant dense<0.000000e+00> : vector<8x256xf32>
    %466 = tpu.matmul %463, %465, %cst_156 {dimension_numbers = #tpu.dot_dimension_numbers<[1], [0], [0], [1], [0, 0, 1, 1], [], []>} : vector<8x64xf32>, vector<64x256xf32>, vector<8x256xf32> -> vector<8x256xf32>
    %467 = arith.addf %464, %466 : vector<8x256xf32>
    %468 = vector.extract_strided_slice %467 {offsets = [0, 0], sizes = [8, 64], strides = [1, 1]} : vector<8x256xf32> to vector<8x64xf32>
    %469 = arith.negf %468 : vector<8x64xf32>
    %470 = math.exp %469 : vector<8x64xf32>
    %cst_157 = arith.constant 1.000000e+00 : f32
    %471 = vector.broadcast %cst_157 : f32 to vector<8x64xf32>
    %472 = arith.addf %471, %470 : vector<8x64xf32>
    %473 = arith.divf %471, %472 : vector<8x64xf32>
    %474 = vector.extract_strided_slice %467 {offsets = [0, 64], sizes = [8, 64], strides = [1, 1]} : vector<8x256xf32> to vector<8x64xf32>
    %475 = arith.negf %474 : vector<8x64xf32>
    %476 = math.exp %475 : vector<8x64xf32>
    %cst_158 = arith.constant 1.000000e+00 : f32
    %477 = vector.broadcast %cst_158 : f32 to vector<8x64xf32>
    %478 = arith.addf %477, %476 : vector<8x64xf32>
    %479 = arith.divf %477, %478 : vector<8x64xf32>
    %480 = vector.extract_strided_slice %467 {offsets = [0, 128], sizes = [8, 64], strides = [1, 1]} : vector<8x256xf32> to vector<8x64xf32>
    %481 = math.tanh %480 : vector<8x64xf32>
    %482 = vector.extract_strided_slice %467 {offsets = [0, 192], sizes = [8, 64], strides = [1, 1]} : vector<8x256xf32> to vector<8x64xf32>
    %483 = arith.negf %482 : vector<8x64xf32>
    %484 = math.exp %483 : vector<8x64xf32>
    %cst_159 = arith.constant 1.000000e+00 : f32
    %485 = vector.broadcast %cst_159 : f32 to vector<8x64xf32>
    %486 = arith.addf %485, %484 : vector<8x64xf32>
    %487 = arith.divf %485, %486 : vector<8x64xf32>
    %488 = arith.mulf %479, %461 : vector<8x64xf32>
    %489 = arith.mulf %473, %481 : vector<8x64xf32>
    %490 = arith.addf %488, %489 : vector<8x64xf32>
    %491 = math.tanh %490 : vector<8x64xf32>
    %492 = arith.mulf %487, %491 : vector<8x64xf32>
    %c48_160 = arith.constant 48 : index
    %c0_161 = arith.constant 0 : index
    %493 = vector.load %arg19[%c48_160, %c0_161] : memref<64x256xf32, #tpu.memory_space<vmem>>, vector<8x256xf32>
    %c0_162 = arith.constant 0 : index
    %c0_163 = arith.constant 0 : index
    %494 = vector.load %arg12[%c0_162, %c0_163] : memref<64x256xf32, #tpu.memory_space<vmem>>, vector<64x256xf32>
    %cst_164 = arith.constant dense<0.000000e+00> : vector<8x256xf32>
    %495 = tpu.matmul %492, %494, %cst_164 {dimension_numbers = #tpu.dot_dimension_numbers<[1], [0], [0], [1], [0, 0, 1, 1], [], []>} : vector<8x64xf32>, vector<64x256xf32>, vector<8x256xf32> -> vector<8x256xf32>
    %496 = arith.addf %493, %495 : vector<8x256xf32>
    %497 = vector.extract_strided_slice %496 {offsets = [0, 0], sizes = [8, 64], strides = [1, 1]} : vector<8x256xf32> to vector<8x64xf32>
    %498 = arith.negf %497 : vector<8x64xf32>
    %499 = math.exp %498 : vector<8x64xf32>
    %cst_165 = arith.constant 1.000000e+00 : f32
    %500 = vector.broadcast %cst_165 : f32 to vector<8x64xf32>
    %501 = arith.addf %500, %499 : vector<8x64xf32>
    %502 = arith.divf %500, %501 : vector<8x64xf32>
    %503 = vector.extract_strided_slice %496 {offsets = [0, 64], sizes = [8, 64], strides = [1, 1]} : vector<8x256xf32> to vector<8x64xf32>
    %504 = arith.negf %503 : vector<8x64xf32>
    %505 = math.exp %504 : vector<8x64xf32>
    %cst_166 = arith.constant 1.000000e+00 : f32
    %506 = vector.broadcast %cst_166 : f32 to vector<8x64xf32>
    %507 = arith.addf %506, %505 : vector<8x64xf32>
    %508 = arith.divf %506, %507 : vector<8x64xf32>
    %509 = vector.extract_strided_slice %496 {offsets = [0, 128], sizes = [8, 64], strides = [1, 1]} : vector<8x256xf32> to vector<8x64xf32>
    %510 = math.tanh %509 : vector<8x64xf32>
    %511 = vector.extract_strided_slice %496 {offsets = [0, 192], sizes = [8, 64], strides = [1, 1]} : vector<8x256xf32> to vector<8x64xf32>
    %512 = arith.negf %511 : vector<8x64xf32>
    %513 = math.exp %512 : vector<8x64xf32>
    %cst_167 = arith.constant 1.000000e+00 : f32
    %514 = vector.broadcast %cst_167 : f32 to vector<8x64xf32>
    %515 = arith.addf %514, %513 : vector<8x64xf32>
    %516 = arith.divf %514, %515 : vector<8x64xf32>
    %517 = arith.mulf %508, %490 : vector<8x64xf32>
    %518 = arith.mulf %502, %510 : vector<8x64xf32>
    %519 = arith.addf %517, %518 : vector<8x64xf32>
    %520 = math.tanh %519 : vector<8x64xf32>
    %521 = arith.mulf %516, %520 : vector<8x64xf32>
    %c56_168 = arith.constant 56 : index
    %c0_169 = arith.constant 0 : index
    %522 = vector.load %arg19[%c56_168, %c0_169] : memref<64x256xf32, #tpu.memory_space<vmem>>, vector<8x256xf32>
    %c0_170 = arith.constant 0 : index
    %c0_171 = arith.constant 0 : index
    %523 = vector.load %arg12[%c0_170, %c0_171] : memref<64x256xf32, #tpu.memory_space<vmem>>, vector<64x256xf32>
    %cst_172 = arith.constant dense<0.000000e+00> : vector<8x256xf32>
    %524 = tpu.matmul %521, %523, %cst_172 {dimension_numbers = #tpu.dot_dimension_numbers<[1], [0], [0], [1], [0, 0, 1, 1], [], []>} : vector<8x64xf32>, vector<64x256xf32>, vector<8x256xf32> -> vector<8x256xf32>
    %525 = arith.addf %522, %524 : vector<8x256xf32>
    %526 = vector.extract_strided_slice %525 {offsets = [0, 0], sizes = [8, 64], strides = [1, 1]} : vector<8x256xf32> to vector<8x64xf32>
    %527 = arith.negf %526 : vector<8x64xf32>
    %528 = math.exp %527 : vector<8x64xf32>
    %cst_173 = arith.constant 1.000000e+00 : f32
    %529 = vector.broadcast %cst_173 : f32 to vector<8x64xf32>
    %530 = arith.addf %529, %528 : vector<8x64xf32>
    %531 = arith.divf %529, %530 : vector<8x64xf32>
    %532 = vector.extract_strided_slice %525 {offsets = [0, 64], sizes = [8, 64], strides = [1, 1]} : vector<8x256xf32> to vector<8x64xf32>
    %533 = arith.negf %532 : vector<8x64xf32>
    %534 = math.exp %533 : vector<8x64xf32>
    %cst_174 = arith.constant 1.000000e+00 : f32
    %535 = vector.broadcast %cst_174 : f32 to vector<8x64xf32>
    %536 = arith.addf %535, %534 : vector<8x64xf32>
    %537 = arith.divf %535, %536 : vector<8x64xf32>
    %538 = vector.extract_strided_slice %525 {offsets = [0, 128], sizes = [8, 64], strides = [1, 1]} : vector<8x256xf32> to vector<8x64xf32>
    %539 = math.tanh %538 : vector<8x64xf32>
    %540 = vector.extract_strided_slice %525 {offsets = [0, 192], sizes = [8, 64], strides = [1, 1]} : vector<8x256xf32> to vector<8x64xf32>
    %541 = arith.negf %540 : vector<8x64xf32>
    %542 = math.exp %541 : vector<8x64xf32>
    %cst_175 = arith.constant 1.000000e+00 : f32
    %543 = vector.broadcast %cst_175 : f32 to vector<8x64xf32>
    %544 = arith.addf %543, %542 : vector<8x64xf32>
    %545 = arith.divf %543, %544 : vector<8x64xf32>
    %546 = arith.mulf %537, %519 : vector<8x64xf32>
    %547 = arith.mulf %531, %539 : vector<8x64xf32>
    %548 = arith.addf %546, %547 : vector<8x64xf32>
    %549 = math.tanh %548 : vector<8x64xf32>
    %550 = arith.mulf %545, %549 : vector<8x64xf32>
    %c0_176 = arith.constant 0 : index
    %c0_177 = arith.constant 0 : index
    %551 = vector.load %arg14[%c0_176, %c0_177] : memref<64x20xf32, #tpu.memory_space<vmem>>, vector<64x20xf32>
    %cst_178 = arith.constant dense<0.000000e+00> : vector<8x20xf32>
    %552 = tpu.matmul %550, %551, %cst_178 {dimension_numbers = #tpu.dot_dimension_numbers<[1], [0], [0], [1], [0, 0, 1, 1], [], []>} : vector<8x64xf32>, vector<64x20xf32>, vector<8x20xf32> -> vector<8x20xf32>
    %c0_179 = arith.constant 0 : index
    %c0_180 = arith.constant 0 : index
    %553 = vector.load %arg15[%c0_179, %c0_180] : memref<1x20xf32, #tpu.memory_space<vmem>>, vector<1x20xf32>
    %554 = vector.broadcast %553 : vector<1x20xf32> to vector<8x20xf32>
    %555 = arith.addf %552, %554 : vector<8x20xf32>
    %cst_181 = arith.constant 0.000000e+00 : f32
    %556 = vector.broadcast %cst_181 : f32 to vector<8x20xf32>
    %557 = arith.maximumf %555, %556 : vector<8x20xf32>
    %c0_182 = arith.constant 0 : index
    %c0_183 = arith.constant 0 : index
    %558 = vector.load %arg16[%c0_182, %c0_183] : memref<20x4xf32, #tpu.memory_space<vmem>>, vector<20x4xf32>
    %cst_184 = arith.constant dense<0.000000e+00> : vector<8x4xf32>
    %559 = tpu.matmul %557, %558, %cst_184 {dimension_numbers = #tpu.dot_dimension_numbers<[1], [0], [0], [1], [0, 0, 1, 1], [], []>} : vector<8x20xf32>, vector<20x4xf32>, vector<8x4xf32> -> vector<8x4xf32>
    %c0_185 = arith.constant 0 : index
    %c0_186 = arith.constant 0 : index
    %560 = vector.load %arg17[%c0_185, %c0_186] : memref<1x4xf32, #tpu.memory_space<vmem>>, vector<1x4xf32>
    %561 = vector.broadcast %560 : vector<1x4xf32> to vector<8x4xf32>
    %562 = arith.addf %559, %561 : vector<8x4xf32>
    %c0_187 = arith.constant 0 : index
    %c0_188 = arith.constant 0 : index
    %563 = vector.load %arg18[%c0_187, %c0_188] : memref<8x4xf32, #tpu.memory_space<vmem>>, vector<8x4xf32>
    tpu.vector_store %arg18[%c0_187, %c0_188], %562 {strides = array<i32>} : memref<8x4xf32, #tpu.memory_space<vmem>>, vector<8x4xf32>,
    return
  }
  func.func @transform_0(%arg0: i32) -> (i32, i32, i32) {
    %c0_i32 = arith.constant 0 : i32
    %c0_i32_0 = arith.constant 0 : i32
    %c0_i32_1 = arith.constant 0 : i32
    return %c0_i32, %arg0, %c0_i32_0 : i32, i32, i32
  }
  func.func @transform_1(%arg0: i32) -> (i32, i32) {
    %c0_i32 = arith.constant 0 : i32
    %c0_i32_0 = arith.constant 0 : i32
    %c0_i32_1 = arith.constant 0 : i32
    return %c0_i32, %c0_i32_0 : i32, i32
  }
  func.func @transform_2(%arg0: i32) -> (i32, i32) {
    %c0_i32 = arith.constant 0 : i32
    %c0_i32_0 = arith.constant 0 : i32
    %c0_i32_1 = arith.constant 0 : i32
    return %c0_i32, %c0_i32_0 : i32, i32
  }
  func.func @transform_3(%arg0: i32) -> (i32, i32) {
    %c0_i32 = arith.constant 0 : i32
    %c0_i32_0 = arith.constant 0 : i32
    %c0_i32_1 = arith.constant 0 : i32
    return %c0_i32, %c0_i32_0 : i32, i32
  }
  func.func @transform_4(%arg0: i32) -> (i32, i32) {
    %c0_i32 = arith.constant 0 : i32
    %c0_i32_0 = arith.constant 0 : i32
    %c0_i32_1 = arith.constant 0 : i32
    return %c0_i32, %c0_i32_0 : i32, i32
  }
  func.func @transform_5(%arg0: i32) -> (i32, i32) {
    %c0_i32 = arith.constant 0 : i32
    %c0_i32_0 = arith.constant 0 : i32
    %c0_i32_1 = arith.constant 0 : i32
    return %c0_i32, %c0_i32_0 : i32, i32
  }
  func.func @transform_6(%arg0: i32) -> (i32, i32) {
    %c0_i32 = arith.constant 0 : i32
    %c0_i32_0 = arith.constant 0 : i32
    %c0_i32_1 = arith.constant 0 : i32
    return %c0_i32, %c0_i32_0 : i32, i32
  }
  func.func @transform_7(%arg0: i32) -> (i32, i32) {
    %c0_i32 = arith.constant 0 : i32
    %c0_i32_0 = arith.constant 0 : i32
    %c0_i32_1 = arith.constant 0 : i32
    return %c0_i32, %c0_i32_0 : i32, i32
  }
  func.func @transform_8(%arg0: i32) -> (i32, i32) {
    %c0_i32 = arith.constant 0 : i32
    %c0_i32_0 = arith.constant 0 : i32
    %c0_i32_1 = arith.constant 0 : i32
    return %c0_i32, %c0_i32_0 : i32, i32
  }
  func.func @transform_9(%arg0: i32) -> (i32, i32) {
    %c0_i32 = arith.constant 0 : i32
    %c0_i32_0 = arith.constant 0 : i32
    %c0_i32_1 = arith.constant 0 : i32
    return %c0_i32, %c0_i32_0 : i32, i32
  }
  func.func @transform_10(%arg0: i32) -> (i32, i32) {
    %c0_i32 = arith.constant 0 : i32
    %c0_i32_0 = arith.constant 0 : i32
    %c0_i32_1 = arith.constant 0 : i32
    return %c0_i32, %c0_i32_0 : i32, i32
  }
  func.func @transform_11(%arg0: i32) -> (i32, i32) {
    %c0_i32 = arith.constant 0 : i32
    %c0_i32_0 = arith.constant 0 : i32
    %c0_i32_1 = arith.constant 0 : i32
    return %c0_i32, %c0_i32_0 : i32, i32
  }
  func.func @transform_12(%arg0: i32) -> (i32, i32) {
    %c0_i32 = arith.constant 0 : i32
    %c0_i32_0 = arith.constant 0 : i32
    %c0_i32_1 = arith.constant 0 : i32
    return %c0_i32, %c0_i32_0 : i32, i32
  }
  func.func @transform_13(%arg0: i32) -> (i32, i32) {
    %c0_i32 = arith.constant 0 : i32
    %c0_i32_0 = arith.constant 0 : i32
    %c0_i32_1 = arith.constant 0 : i32
    return %c0_i32, %c0_i32_0 : i32, i32
  }
  func.func @transform_14(%arg0: i32) -> (i32, i32) {
    %c0_i32 = arith.constant 0 : i32
    %c0_i32_0 = arith.constant 0 : i32
    %c0_i32_1 = arith.constant 0 : i32
    return %c0_i32, %c0_i32_0 : i32, i32
  }
  func.func @transform_15(%arg0: i32) -> (i32, i32) {
    %c0_i32 = arith.constant 0 : i32
    %c0_i32_0 = arith.constant 0 : i32
    %c0_i32_1 = arith.constant 0 : i32
    return %c0_i32, %c0_i32_0 : i32, i32
  }
  func.func @transform_16(%arg0: i32) -> (i32, i32) {
    %c0_i32 = arith.constant 0 : i32
    %c0_i32_0 = arith.constant 0 : i32
    %c0_i32_1 = arith.constant 0 : i32
    return %c0_i32, %c0_i32_0 : i32, i32
  }
  func.func @transform_17(%arg0: i32) -> (i32, i32) {
    %c0_i32 = arith.constant 0 : i32
    %c0_i32_0 = arith.constant 0 : i32
    return %arg0, %c0_i32 : i32, i32
  }
}

</mosaic_0001>

<llo_original>
// kernel: _lambda_.1
$region0: #{_lambda_.1}
  #allocation0 [shape = 'u32[]', space=smem, size = 0x4, offset = 0x4, fixed_abs, tag = 'smem constant byte address 0x4 - core index']
  #allocation1 [shape = 'u32[144,128]{1,0:T(1,128)}', space=vmem, size = 0x12000, scoped, tag = 'internal scratch']
  #allocation2 [shape = 'f32[64,256]{1,0:T(8,128)}', space=vmem, size = 0x10000, scoped, tag = 'scratch operand']
  #allocation3 [shape = 'f32[64,64]{1,0:T(8,128)}', space=vmem, size = 0x8000, scoped, tag = 'scratch operand']
  %s0 = inlined_call_operand.vmem [shape: f32[64,16,3], index: 0, kind: input, shape index: {}]
  %s1 = inlined_call_operand.vmem [shape: f32[3,16], index: 1, kind: input, shape index: {}]
  %s2 = inlined_call_operand.vmem [shape: f32[1,16], index: 2, kind: input, shape index: {}]
  %s3 = inlined_call_operand.vmem [shape: f32[48,32], index: 3, kind: input, shape index: {}]
  %s4 = inlined_call_operand.vmem [shape: f32[1,32], index: 4, kind: input, shape index: {}]
  %s5 = inlined_call_operand.vmem [shape: f32[96,64], index: 5, kind: input, shape index: {}]
  %s6 = inlined_call_operand.vmem [shape: f32[1,64], index: 6, kind: input, shape index: {}]
  %s7 = inlined_call_operand.vmem [shape: f32[64,256], index: 7, kind: input, shape index: {}]
  %s8 = inlined_call_operand.vmem [shape: f32[64,256], index: 8, kind: input, shape index: {}]
  %s9 = inlined_call_operand.vmem [shape: f32[1,256], index: 9, kind: input, shape index: {}]
  %s10 = inlined_call_operand.vmem [shape: f32[64,256], index: 10, kind: input, shape index: {}]
  %s11 = inlined_call_operand.vmem [shape: f32[64,256], index: 11, kind: input, shape index: {}]
  %s12 = inlined_call_operand.vmem [shape: f32[1,256], index: 12, kind: input, shape index: {}]
  %s13 = inlined_call_operand.vmem [shape: f32[64,20], index: 13, kind: input, shape index: {}]
  %s14 = inlined_call_operand.vmem [shape: f32[1,20], index: 14, kind: input, shape index: {}]
  %s15 = inlined_call_operand.vmem [shape: f32[20,4], index: 15, kind: input, shape index: {}]
  %s16 = inlined_call_operand.vmem [shape: f32[1,4], index: 16, kind: input, shape index: {}]
  %s17 = inlined_call_operand.vmem [shape: f32[16,4], index: 17, kind: output, shape index: {}]
  %s18 = sld [smem:[#allocation0]]
  $region139: #{_lambda_.1} parent=0
    _
  %s20 = ssub.s32 1, %s18
  %s21 = scalar_select 0, %s20, %s18
  $region1: #{_lambda_.1} parent=0
    #allocation4 [shape = 'u8[524288]{0}', space=vmem, size = 0x80000, scoped, tag = 'input window, operand 0']
    loop: start=0, step=1, limit=4
    $region2: #{_lambda_.1} parent=1 // loop_pre_header
      _
    $region3: #{_lambda_.1} parent=1 // loop_header
      %s23 = sphi 0, %s27
      %p24 = scmp.ge.s32.totalorder %s23, 4
      %s33 = sphi 0, %s35
      %s36 = sphi 0, %s33
      %s37 = sphi 0, %s36
      %s53 = sphi 0, %s37
      %s57 = sphi 0, %s57
      %s59 = sphi 0, %s57
      %s60 = sphi 0, %s59
      %s74 = sphi 0, %s60
      %s78 = sphi 0, %s78
      %s80 = sphi 0, %s78
      %s81 = sphi 0, %s80
      %s95 = sphi 0, %s81
      %s99 = sphi 0, %s99
      %s101 = sphi 0, %s99
      %s102 = sphi 0, %s101
      %s116 = sphi 0, %s102
      %s120 = sphi 0, %s120
      %s122 = sphi 0, %s120
      %s123 = sphi 0, %s122
      %s137 = sphi 0, %s123
      %s141 = sphi 0, %s141
      %s143 = sphi 0, %s141
      %s144 = sphi 0, %s143
      %s158 = sphi 0, %s144
      %s162 = sphi 0, %s162
      %s164 = sphi 0, %s162
      %s165 = sphi 0, %s164
      %s179 = sphi 0, %s165
      %s183 = sphi 0, %s183
      %s185 = sphi 0, %s183
      %s186 = sphi 0, %s185
      %s200 = sphi 0, %s186
      %s204 = sphi 0, %s204
      %s206 = sphi 0, %s204
      %s207 = sphi 0, %s206
      %s221 = sphi 0, %s207
      %s225 = sphi 0, %s225
      %s227 = sphi 0, %s225
      %s228 = sphi 0, %s227
      %s242 = sphi 0, %s228
      %s246 = sphi 0, %s246
      %s248 = sphi 0, %s246
      %s249 = sphi 0, %s248
      %s263 = sphi 0, %s249
      %s267 = sphi 0, %s267
      %s269 = sphi 0, %s267
      %s270 = sphi 0, %s269
      %s284 = sphi 0, %s270
      %s288 = sphi 0, %s288
      %s290 = sphi 0, %s288
      %s291 = sphi 0, %s290
      %s305 = sphi 0, %s291
      %s309 = sphi 0, %s309
      %s311 = sphi 0, %s309
      %s312 = sphi 0, %s311
      %s326 = sphi 0, %s312
      %s330 = sphi 0, %s330
      %s332 = sphi 0, %s330
      %s333 = sphi 0, %s332
      %s347 = sphi 0, %s333
      %s351 = sphi 0, %s351
      %s353 = sphi 0, %s351
      %s354 = sphi 0, %s353
      %s368 = sphi 0, %s354
      %s372 = sphi 0, %s372
      %s374 = sphi 0, %s372
      %s375 = sphi 0, %s374
      %s389 = sphi 0, %s375
      %s395 = sphi 0, %s397
      %s398 = sphi 0, %s395
      %s399 = sphi 0, %s398
      %s415 = sphi 0, %s399
    $region4: #{_lambda_.1} parent=1 // loop_header_branch
      %26 = sbr.rel (%p24) target = $region8
    $region5: #{_lambda_.1} parent=1 // loop_body
      %s28 = ssub.s32 %s23, 1
      %s29 = ssub.s32 %s23, 2
      %s30 = sadd.s32 %s23, 1
      %s31 = ssub.s32 %s23, %s30
      %p32 = scmp.eq.s32.totalorder %s31, 0
      %s34 = sadd.s32 %s33, 1
      %s35 = scalar_select %p32, %s33, %s34
      %p38 = pneg %p32
      %p39 = scmp.eq.s32.totalorder %s23, 1
      %p40 = por %p38, %p39
      %p41 = scmp.ne.s32.totalorder %s33, %s36
      %p42 = scmp.eq.s32.totalorder %s23, 0
      %p43 = por %p41, %p42
      %p44 = scmp.ne.s32.totalorder %s33, %s36
      %p45 = scmp.eq.s32.totalorder %s28, 1
      %p46 = por %p44, %p45
      %p47 = scmp.ne.s32.totalorder %s36, %s37
      %p48 = scmp.eq.s32.totalorder %s28, 0
      %p49 = por %p47, %p48
      %p50 = scmp.ne.s32.totalorder %s36, %s37
      %p51 = scmp.eq.s32.totalorder %s29, 1
      %p52 = por %p50, %p51
      %p54 = scmp.ne.s32.totalorder %s37, %s53
      %p55 = scmp.eq.s32.totalorder %s29, 0
      %p56 = por %p54, %p55
      %s58 = sadd.s32 %s57, 1
      %p61 = scmp.eq.s32.totalorder %s23, 1
      %p62 = scmp.ne.s32.totalorder %s57, %s59
      %p63 = scmp.eq.s32.totalorder %s23, 0
      %p64 = por %p62, %p63
      %p65 = scmp.ne.s32.totalorder %s57, %s59
      %p66 = scmp.eq.s32.totalorder %s28, 1
      %p67 = por %p65, %p66
      %p68 = scmp.ne.s32.totalorder %s59, %s60
      %p69 = scmp.eq.s32.totalorder %s28, 0
      %p70 = por %p68, %p69
      %p71 = scmp.ne.s32.totalorder %s59, %s60
      %p72 = scmp.eq.s32.totalorder %s29, 1
      %p73 = por %p71, %p72
      %p75 = scmp.ne.s32.totalorder %s60, %s74
      %p76 = scmp.eq.s32.totalorder %s29, 0
      %p77 = por %p75, %p76
      %s79 = sadd.s32 %s78, 1
      %p82 = scmp.eq.s32.totalorder %s23, 1
      %p83 = scmp.ne.s32.totalorder %s78, %s80
      %p84 = scmp.eq.s32.totalorder %s23, 0
      %p85 = por %p83, %p84
      %p86 = scmp.ne.s32.totalorder %s78, %s80
      %p87 = scmp.eq.s32.totalorder %s28, 1
      %p88 = por %p86, %p87
      %p89 = scmp.ne.s32.totalorder %s80, %s81
      %p90 = scmp.eq.s32.totalorder %s28, 0
      %p91 = por %p89, %p90
      %p92 = scmp.ne.s32.totalorder %s80, %s81
      %p93 = scmp.eq.s32.totalorder %s29, 1
      %p94 = por %p92, %p93
      %p96 = scmp.ne.s32.totalorder %s81, %s95
      %p97 = scmp.eq.s32.totalorder %s29, 0
      %p98 = por %p96, %p97
      %s100 = sadd.s32 %s99, 1
      %p103 = scmp.eq.s32.totalorder %s23, 1
      %p104 = scmp.ne.s32.totalorder %s99, %s101
      %p105 = scmp.eq.s32.totalorder %s23, 0
      %p106 = por %p104, %p105
      %p107 = scmp.ne.s32.totalorder %s99, %s101
      %p108 = scmp.eq.s32.totalorder %s28, 1
      %p109 = por %p107, %p108
      %p110 = scmp.ne.s32.totalorder %s101, %s102
      %p111 = scmp.eq.s32.totalorder %s28, 0
      %p112 = por %p110, %p111
      %p113 = scmp.ne.s32.totalorder %s101, %s102
      %p114 = scmp.eq.s32.totalorder %s29, 1
      %p115 = por %p113, %p114
      %p117 = scmp.ne.s32.totalorder %s102, %s116
      %p118 = scmp.eq.s32.totalorder %s29, 0
      %p119 = por %p117, %p118
      %s121 = sadd.s32 %s120, 1
      %p124 = scmp.eq.s32.totalorder %s23, 1
      %p125 = scmp.ne.s32.totalorder %s120, %s122
      %p126 = scmp.eq.s32.totalorder %s23, 0
      %p127 = por %p125, %p126
      %p128 = scmp.ne.s32.totalorder %s120, %s122
      %p129 = scmp.eq.s32.totalorder %s28, 1
      %p130 = por %p128, %p129
      %p131 = scmp.ne.s32.totalorder %s122, %s123
      %p132 = scmp.eq.s32.totalorder %s28, 0
      %p133 = por %p131, %p132
      %p134 = scmp.ne.s32.totalorder %s122, %s123
      %p135 = scmp.eq.s32.totalorder %s29, 1
      %p136 = por %p134, %p135
      %p138 = scmp.ne.s32.totalorder %s123, %s137
      %p139 = scmp.eq.s32.totalorder %s29, 0
      %p140 = por %p138, %p139
      %s142 = sadd.s32 %s141, 1
      %p145 = scmp.eq.s32.totalorder %s23, 1
      %p146 = scmp.ne.s32.totalorder %s141, %s143
      %p147 = scmp.eq.s32.totalorder %s23, 0
      %p148 = por %p146, %p147
      %p149 = scmp.ne.s32.totalorder %s141, %s143
      %p150 = scmp.eq.s32.totalorder %s28, 1
      %p151 = por %p149, %p150
      %p152 = scmp.ne.s32.totalorder %s143, %s144
      %p153 = scmp.eq.s32.totalorder %s28, 0
      %p154 = por %p152, %p153
      %p155 = scmp.ne.s32.totalorder %s143, %s144
      %p156 = scmp.eq.s32.totalorder %s29, 1
      %p157 = por %p155, %p156
      %p159 = scmp.ne.s32.totalorder %s144, %s158
      %p160 = scmp.eq.s32.totalorder %s29, 0
      %p161 = por %p159, %p160
      %s163 = sadd.s32 %s162, 1
      %p166 = scmp.eq.s32.totalorder %s23, 1
      %p167 = scmp.ne.s32.totalorder %s162, %s164
      %p168 = scmp.eq.s32.totalorder %s23, 0
      %p169 = por %p167, %p168
      %p170 = scmp.ne.s32.totalorder %s162, %s164
      %p171 = scmp.eq.s32.totalorder %s28, 1
      %p172 = por %p170, %p171
      %p173 = scmp.ne.s32.totalorder %s164, %s165
      %p174 = scmp.eq.s32.totalorder %s28, 0
      %p175 = por %p173, %p174
      %p176 = scmp.ne.s32.totalorder %s164, %s165
      %p177 = scmp.eq.s32.totalorder %s29, 1
      %p178 = por %p176, %p177
      %p180 = scmp.ne.s32.totalorder %s165, %s179
      %p181 = scmp.eq.s32.totalorder %s29, 0
      %p182 = por %p180, %p181
      %s184 = sadd.s32 %s183, 1
      %p187 = scmp.eq.s32.totalorder %s23, 1
      %p188 = scmp.ne.s32.totalorder %s183, %s185
      %p189 = scmp.eq.s32.totalorder %s23, 0
      %p190 = por %p188, %p189
      %p191 = scmp.ne.s32.totalorder %s183, %s185
      %p192 = scmp.eq.s32.totalorder %s28, 1
      %p193 = por %p191, %p192
      %p194 = scmp.ne.s32.totalorder %s185, %s186
      %p195 = scmp.eq.s32.totalorder %s28, 0
      %p196 = por %p194, %p195
      %p197 = scmp.ne.s32.totalorder %s185, %s186
      %p198 = scmp.eq.s32.totalorder %s29, 1
      %p199 = por %p197, %p198
      %p201 = scmp.ne.s32.totalorder %s186, %s200
      %p202 = scmp.eq.s32.totalorder %s29, 0
      %p203 = por %p201, %p202
      %s205 = sadd.s32 %s204, 1
      %p208 = scmp.eq.s32.totalorder %s23, 1
      %p209 = scmp.ne.s32.totalorder %s204, %s206
      %p210 = scmp.eq.s32.totalorder %s23, 0
      %p211 = por %p209, %p210
      %p212 = scmp.ne.s32.totalorder %s204, %s206
      %p213 = scmp.eq.s32.totalorder %s28, 1
      %p214 = por %p212, %p213
      %p215 = scmp.ne.s32.totalorder %s206, %s207
      %p216 = scmp.eq.s32.totalorder %s28, 0
      %p217 = por %p215, %p216
      %p218 = scmp.ne.s32.totalorder %s206, %s207
      %p219 = scmp.eq.s32.totalorder %s29, 1
      %p220 = por %p218, %p219
      %p222 = scmp.ne.s32.totalorder %s207, %s221
      %p223 = scmp.eq.s32.totalorder %s29, 0
      %p224 = por %p222, %p223
      %s226 = sadd.s32 %s225, 1
      %p229 = scmp.eq.s32.totalorder %s23, 1
      %p230 = scmp.ne.s32.totalorder %s225, %s227
      %p231 = scmp.eq.s32.totalorder %s23, 0
      %p232 = por %p230, %p231
      %p233 = scmp.ne.s32.totalorder %s225, %s227
      %p234 = scmp.eq.s32.totalorder %s28, 1
      %p235 = por %p233, %p234
      %p236 = scmp.ne.s32.totalorder %s227, %s228
      %p237 = scmp.eq.s32.totalorder %s28, 0
      %p238 = por %p236, %p237
      %p239 = scmp.ne.s32.totalorder %s227, %s228
      %p240 = scmp.eq.s32.totalorder %s29, 1
      %p241 = por %p239, %p240
      %p243 = scmp.ne.s32.totalorder %s228, %s242
      %p244 = scmp.eq.s32.totalorder %s29, 0
      %p245 = por %p243, %p244
      %s247 = sadd.s32 %s246, 1
      %p250 = scmp.eq.s32.totalorder %s23, 1
      %p251 = scmp.ne.s32.totalorder %s246, %s248
      %p252 = scmp.eq.s32.totalorder %s23, 0
      %p253 = por %p251, %p252
      %p254 = scmp.ne.s32.totalorder %s246, %s248
      %p255 = scmp.eq.s32.totalorder %s28, 1
      %p256 = por %p254, %p255
      %p257 = scmp.ne.s32.totalorder %s248, %s249
      %p258 = scmp.eq.s32.totalorder %s28, 0
      %p259 = por %p257, %p258
      %p260 = scmp.ne.s32.totalorder %s248, %s249
      %p261 = scmp.eq.s32.totalorder %s29, 1
      %p262 = por %p260, %p261
      %p264 = scmp.ne.s32.totalorder %s249, %s263
      %p265 = scmp.eq.s32.totalorder %s29, 0
      %p266 = por %p264, %p265
      %s268 = sadd.s32 %s267, 1
      %p271 = scmp.eq.s32.totalorder %s23, 1
      %p272 = scmp.ne.s32.totalorder %s267, %s269
      %p273 = scmp.eq.s32.totalorder %s23, 0
      %p274 = por %p272, %p273
      %p275 = scmp.ne.s32.totalorder %s267, %s269
      %p276 = scmp.eq.s32.totalorder %s28, 1
      %p277 = por %p275, %p276
      %p278 = scmp.ne.s32.totalorder %s269, %s270
      %p279 = scmp.eq.s32.totalorder %s28, 0
      %p280 = por %p278, %p279
      %p281 = scmp.ne.s32.totalorder %s269, %s270
      %p282 = scmp.eq.s32.totalorder %s29, 1
      %p283 = por %p281, %p282
      %p285 = scmp.ne.s32.totalorder %s270, %s284
      %p286 = scmp.eq.s32.totalorder %s29, 0
      %p287 = por %p285, %p286
      %s289 = sadd.s32 %s288, 1
      %p292 = scmp.eq.s32.totalorder %s23, 1
      %p293 = scmp.ne.s32.totalorder %s288, %s290
      %p294 = scmp.eq.s32.totalorder %s23, 0
      %p295 = por %p293, %p294
      %p296 = scmp.ne.s32.totalorder %s288, %s290
      %p297 = scmp.eq.s32.totalorder %s28, 1
      %p298 = por %p296, %p297
      %p299 = scmp.ne.s32.totalorder %s290, %s291
      %p300 = scmp.eq.s32.totalorder %s28, 0
      %p301 = por %p299, %p300
      %p302 = scmp.ne.s32.totalorder %s290, %s291
      %p303 = scmp.eq.s32.totalorder %s29, 1
      %p304 = por %p302, %p303
      %p306 = scmp.ne.s32.totalorder %s291, %s305
      %p307 = scmp.eq.s32.totalorder %s29, 0
      %p308 = por %p306, %p307
      %s310 = sadd.s32 %s309, 1
      %p313 = scmp.eq.s32.totalorder %s23, 1
      %p314 = scmp.ne.s32.totalorder %s309, %s311
      %p315 = scmp.eq.s32.totalorder %s23, 0
      %p316 = por %p314, %p315
      %p317 = scmp.ne.s32.totalorder %s309, %s311
      %p318 = scmp.eq.s32.totalorder %s28, 1
      %p319 = por %p317, %p318
      %p320 = scmp.ne.s32.totalorder %s311, %s312
      %p321 = scmp.eq.s32.totalorder %s28, 0
      %p322 = por %p320, %p321
      %p323 = scmp.ne.s32.totalorder %s311, %s312
      %p324 = scmp.eq.s32.totalorder %s29, 1
      %p325 = por %p323, %p324
      %p327 = scmp.ne.s32.totalorder %s312, %s326
      %p328 = scmp.eq.s32.totalorder %s29, 0
      %p329 = por %p327, %p328
      %s331 = sadd.s32 %s330, 1
      %p334 = scmp.eq.s32.totalorder %s23, 1
      %p335 = scmp.ne.s32.totalorder %s330, %s332
      %p336 = scmp.eq.s32.totalorder %s23, 0
      %p337 = por %p335, %p336
      %p338 = scmp.ne.s32.totalorder %s330, %s332
      %p339 = scmp.eq.s32.totalorder %s28, 1
      %p340 = por %p338, %p339
      %p341 = scmp.ne.s32.totalorder %s332, %s333
      %p342 = scmp.eq.s32.totalorder %s28, 0
      %p343 = por %p341, %p342
      %p344 = scmp.ne.s32.totalorder %s332, %s333
      %p345 = scmp.eq.s32.totalorder %s29, 1
      %p346 = por %p344, %p345
      %p348 = scmp.ne.s32.totalorder %s333, %s347
      %p349 = scmp.eq.s32.totalorder %s29, 0
      %p350 = por %p348, %p349
      %s352 = sadd.s32 %s351, 1
      %p355 = scmp.eq.s32.totalorder %s23, 1
      %p356 = scmp.ne.s32.totalorder %s351, %s353
      %p357 = scmp.eq.s32.totalorder %s23, 0
      %p358 = por %p356, %p357
      %p359 = scmp.ne.s32.totalorder %s351, %s353
      %p360 = scmp.eq.s32.totalorder %s28, 1
      %p361 = por %p359, %p360
      %p362 = scmp.ne.s32.totalorder %s353, %s354
      %p363 = scmp.eq.s32.totalorder %s28, 0
      %p364 = por %p362, %p363
      %p365 = scmp.ne.s32.totalorder %s353, %s354
      %p366 = scmp.eq.s32.totalorder %s29, 1
      %p367 = por %p365, %p366
      %p369 = scmp.ne.s32.totalorder %s354, %s368
      %p370 = scmp.eq.s32.totalorder %s29, 0
      %p371 = por %p369, %p370
      %s373 = sadd.s32 %s372, 1
      %p376 = scmp.eq.s32.totalorder %s23, 1
      %p377 = scmp.ne.s32.totalorder %s372, %s374
      %p378 = scmp.eq.s32.totalorder %s23, 0
      %p379 = por %p377, %p378
      %p380 = scmp.ne.s32.totalorder %s372, %s374
      %p381 = scmp.eq.s32.totalorder %s28, 1
      %p382 = por %p380, %p381
      %p383 = scmp.ne.s32.totalorder %s374, %s375
      %p384 = scmp.eq.s32.totalorder %s28, 0
      %p385 = por %p383, %p384
      %p386 = scmp.ne.s32.totalorder %s374, %s375
      %p387 = scmp.eq.s32.totalorder %s29, 1
      %p388 = por %p386, %p387
      %p390 = scmp.ne.s32.totalorder %s375, %s389
      %p391 = scmp.eq.s32.totalorder %s29, 0
      %p392 = por %p390, %p391
      %s393 = ssub.s32 %s23, %s30
      %p394 = scmp.eq.s32.totalorder %s393, 0
      %s396 = sadd.s32 %s395, 1
      %s397 = scalar_select %p394, %s395, %s396
      %p400 = pneg %p394
      %p401 = scmp.eq.s32.totalorder %s23, 1
      %p402 = por %p400, %p401
      %p403 = scmp.ne.s32.totalorder %s395, %s398
      %p404 = scmp.eq.s32.totalorder %s23, 0
      %p405 = por %p403, %p404
      %p406 = scmp.ne.s32.totalorder %s395, %s398
      %p407 = scmp.eq.s32.totalorder %s28, 1
      %p408 = por %p406, %p407
      %p409 = scmp.ne.s32.totalorder %s398, %s399
      %p410 = scmp.eq.s32.totalorder %s28, 0
      %p411 = por %p409, %p410
      %p412 = scmp.ne.s32.totalorder %s398, %s399
      %p413 = scmp.eq.s32.totalorder %s29, 1
      %p414 = por %p412, %p413
      %p416 = scmp.ne.s32.totalorder %s399, %s415
      %p417 = scmp.eq.s32.totalorder %s29, 0
      %p418 = por %p416, %p417
      %p419 = scmp.le.s32.totalorder 1, %s23
      %p420 = scmp.lt.s32.totalorder %s23, 3
      %p421 = pnand %p419, %p420
      %p422 = pneg %p421
      // Predicated region
      $region9: #{_lambda_.1} parent=5 // pred_check
        _
      $region10: #{_lambda_.1} parent=5 // pred_check_branch
        %424 = sbr.rel (%p421) target = $region12
      $region11: #{_lambda_.1} parent=5 // pred_region
        %s425 = ssub.s32 %s23, 1
        // Predicated region
        $region13: #{_lambda_.1} parent=11 // pred_check
          %p426 = pneg %p70
        $region14: #{_lambda_.1} parent=11 // pred_check_branch
          %428 = sbr.rel (%p426) target = $region16
        $region15: #{_lambda_.1} parent=11 // pred_region
          _
        $region16: #{_lambda_.1} parent=11 // pred_fallthru
          _
        // Predicated region
        $region17: #{_lambda_.1} parent=11 // pred_check
          %p429 = pneg %p91
        $region18: #{_lambda_.1} parent=11 // pred_check_branch
          %431 = sbr.rel (%p429) target = $region20
        $region19: #{_lambda_.1} parent=11 // pred_region
          _
        $region20: #{_lambda_.1} parent=11 // pred_fallthru
          _
        // Predicated region
        $region21: #{_lambda_.1} parent=11 // pred_check
          %p432 = pneg %p112
        $region22: #{_lambda_.1} parent=11 // pred_check_branch
          %434 = sbr.rel (%p432) target = $region24
        $region23: #{_lambda_.1} parent=11 // pred_region
          _
        $region24: #{_lambda_.1} parent=11 // pred_fallthru
          _
        // Predicated region
        $region25: #{_lambda_.1} parent=11 // pred_check
          %p435 = pneg %p133
        $region26: #{_lambda_.1} parent=11 // pred_check_branch
          %437 = sbr.rel (%p435) target = $region28
        $region27: #{_lambda_.1} parent=11 // pred_region
          _
        $region28: #{_lambda_.1} parent=11 // pred_fallthru
          _
        // Predicated region
        $region29: #{_lambda_.1} parent=11 // pred_check
          %p438 = pneg %p154
        $region30: #{_lambda_.1} parent=11 // pred_check_branch
          %440 = sbr.rel (%p438) target = $region32
        $region31: #{_lambda_.1} parent=11 // pred_region
          _
        $region32: #{_lambda_.1} parent=11 // pred_fallthru
          _
        // Predicated region
        $region33: #{_lambda_.1} parent=11 // pred_check
          %p441 = pneg %p175
        $region34: #{_lambda_.1} parent=11 // pred_check_branch
          %443 = sbr.rel (%p441) target = $region36
        $region35: #{_lambda_.1} parent=11 // pred_region
          _
        $region36: #{_lambda_.1} parent=11 // pred_fallthru
          _
        // Predicated region
        $region37: #{_lambda_.1} parent=11 // pred_check
          %p444 = pneg %p196
        $region38: #{_lambda_.1} parent=11 // pred_check_branch
          %446 = sbr.rel (%p444) target = $region40
        $region39: #{_lambda_.1} parent=11 // pred_region
          _
        $region40: #{_lambda_.1} parent=11 // pred_fallthru
          _
        // Predicated region
        $region41: #{_lambda_.1} parent=11 // pred_check
          %p447 = pneg %p217
        $region42: #{_lambda_.1} parent=11 // pred_check_branch
          %449 = sbr.rel (%p447) target = $region44
        $region43: #{_lambda_.1} parent=11 // pred_region
          _
        $region44: #{_lambda_.1} parent=11 // pred_fallthru
          _
        // Predicated region
        $region45: #{_lambda_.1} parent=11 // pred_check
          %p450 = pneg %p238
        $region46: #{_lambda_.1} parent=11 // pred_check_branch
          %452 = sbr.rel (%p450) target = $region48
        $region47: #{_lambda_.1} parent=11 // pred_region
          _
        $region48: #{_lambda_.1} parent=11 // pred_fallthru
          _
        // Predicated region
        $region49: #{_lambda_.1} parent=11 // pred_check
          %p453 = pneg %p259
        $region50: #{_lambda_.1} parent=11 // pred_check_branch
          %455 = sbr.rel (%p453) target = $region52
        $region51: #{_lambda_.1} parent=11 // pred_region
          _
        $region52: #{_lambda_.1} parent=11 // pred_fallthru
          _
        // Predicated region
        $region53: #{_lambda_.1} parent=11 // pred_check
          %p456 = pneg %p280
        $region54: #{_lambda_.1} parent=11 // pred_check_branch
          %458 = sbr.rel (%p456) target = $region56
        $region55: #{_lambda_.1} parent=11 // pred_region
          _
        $region56: #{_lambda_.1} parent=11 // pred_fallthru
          _
        // Predicated region
        $region57: #{_lambda_.1} parent=11 // pred_check
          %p459 = pneg %p301
        $region58: #{_lambda_.1} parent=11 // pred_check_branch
          %461 = sbr.rel (%p459) target = $region60
        $region59: #{_lambda_.1} parent=11 // pred_region
          _
        $region60: #{_lambda_.1} parent=11 // pred_fallthru
          _
        // Predicated region
        $region61: #{_lambda_.1} parent=11 // pred_check
          %p462 = pneg %p322
        $region62: #{_lambda_.1} parent=11 // pred_check_branch
          %464 = sbr.rel (%p462) target = $region64
        $region63: #{_lambda_.1} parent=11 // pred_region
          _
        $region64: #{_lambda_.1} parent=11 // pred_fallthru
          _
        // Predicated region
        $region65: #{_lambda_.1} parent=11 // pred_check
          %p465 = pneg %p343
        $region66: #{_lambda_.1} parent=11 // pred_check_branch
          %467 = sbr.rel (%p465) target = $region68
        $region67: #{_lambda_.1} parent=11 // pred_region
          _
        $region68: #{_lambda_.1} parent=11 // pred_fallthru
          _
        // Predicated region
        $region69: #{_lambda_.1} parent=11 // pred_check
          %p468 = pneg %p364
        $region70: #{_lambda_.1} parent=11 // pred_check_branch
          %470 = sbr.rel (%p468) target = $region72
        $region71: #{_lambda_.1} parent=11 // pred_region
          _
        $region72: #{_lambda_.1} parent=11 // pred_fallthru
          _
        // Predicated region
        $region73: #{_lambda_.1} parent=11 // pred_check
          %p471 = pneg %p385
        $region74: #{_lambda_.1} parent=11 // pred_check_branch
          %473 = sbr.rel (%p471) target = $region76
        $region75: #{_lambda_.1} parent=11 // pred_region
          _
        $region76: #{_lambda_.1} parent=11 // pred_fallthru
          _
      $region12: #{_lambda_.1} parent=5 // pred_fallthru
        _
      %p474 = scmp.lt.s32.totalorder %s23, 2
      // Predicated region
      $region77: #{_lambda_.1} parent=5 // pred_check
        %p475 = pneg %p474
      $region78: #{_lambda_.1} parent=5 // pred_check_branch
        %477 = sbr.rel (%p475) target = $region80
      $region79: #{_lambda_.1} parent=5 // pred_region
        // Predicated region
        $region81: #{_lambda_.1} parent=79 // pred_check
          %p478 = pneg %p43
        $region82: #{_lambda_.1} parent=79 // pred_check_branch
          %480 = sbr.rel (%p478) target = $region84
        $region83: #{_lambda_.1} parent=79 // pred_region
          %s481 = sand.u32 %s33, 1
          %s482 = sand.u32 %s33, 1
          %s483 = smul.addr %s482, 512
          %s484 = scalar_lea.vmem [#allocation4], %s483
          %s485 = smul.addr %s23, 8
          %s486 = scalar_lea.vmem %s0, %s485
          // Predicated region
          $region85: #{_lambda_.1} parent=83 // pred_check
            _
          $region86: #{_lambda_.1} parent=83 // pred_check_branch
            %488 = sbr.rel (0) target = $region88
          $region87: #{_lambda_.1} parent=83 // pred_region
            // Predicated region
            $region89: #{_lambda_.1} parent=87 // pred_check
              _
            $region90: #{_lambda_.1} parent=87 // pred_check_branch
              %490 = sbr.rel (0) target = $region92
            $region91: #{_lambda_.1} parent=87 // pred_region
              // Predicated region
              $region104: #{_lambda_.1} parent=91 // pred_check
                _
              $region105: #{_lambda_.1} parent=91 // pred_check_branch
                %631 = sbr.rel (0) target = $region107
              $region106: #{_lambda_.1} parent=91 // pred_region
                loop: start=0, step=1, limit=1
                $region108: #{_lambda_.1} parent=106 // loop_pre_header
                  _
                $region109: #{_lambda_.1} parent=106 // loop_header
                  %s633 = sphi 0, %s637
                  %p634 = scmp.ge.s32.totalorder %s633, 1
                  %s638 = sphi %s486, %s486
                  %s639 = sphi %s484, %s484
                $region110: #{_lambda_.1} parent=106 // loop_header_branch
                  %636 = sbr.rel (%p634) target = $region114
                $region111: #{_lambda_.1} parent=106 // loop_body
                  %v640 = vld [vmem:[%s638] sm:$0xff]
                  %641 = vst [vmem:[%s639] sm:$0xff] %v640
                  %v642 = vld [vmem:[%s638 + $0x10] sm:$0xff]
                  %643 = vst [vmem:[%s639 + $0x8] sm:$0xff] %v642
                  %v644 = vld [vmem:[%s638 + $0x20] sm:$0xff]
                  %645 = vst [vmem:[%s639 + $0x10] sm:$0xff] %v644
                  %v646 = vld [vmem:[%s638 + $0x30] sm:$0xff]
                  %647 = vst [vmem:[%s639 + $0x18] sm:$0xff] %v646
                  %v648 = vld [vmem:[%s638 + $0x40] sm:$0xff]
                  %649 = vst [vmem:[%s639 + $0x20] sm:$0xff] %v648
                  %v650 = vld [vmem:[%s638 + $0x50] sm:$0xff]
                  %651 = vst [vmem:[%s639 + $0x28] sm:$0xff] %v650
                  %v652 = vld [vmem:[%s638 + $0x60] sm:$0xff]
                  %653 = vst [vmem:[%s639 + $0x30] sm:$0xff] %v652
                  %v654 = vld [vmem:[%s638 + $0x70] sm:$0xff]
                  %655 = vst [vmem:[%s639 + $0x38] sm:$0xff] %v654
                  %v656 = vld [vmem:[%s638 + $0x80] sm:$0xff]
                  %657 = vst [vmem:[%s639 + $0x40] sm:$0xff] %v656
                  %v658 = vld [vmem:[%s638 + $0x90] sm:$0xff]
                  %659 = vst [vmem:[%s639 + $0x48] sm:$0xff] %v658
                  %v660 = vld [vmem:[%s638 + $0xa0] sm:$0xff]
                  %661 = vst [vmem:[%s639 + $0x50] sm:$0xff] %v660
                  %v662 = vld [vmem:[%s638 + $0xb0] sm:$0xff]
                  %663 = vst [vmem:[%s639 + $0x58] sm:$0xff] %v662
                  %v664 = vld [vmem:[%s638 + $0xc0] sm:$0xff]
                  %665 = vst [vmem:[%s639 + $0x60] sm:$0xff] %v664
                  %v666 = vld [vmem:[%s638 + $0xd0] sm:$0xff]
                  %667 = vst [vmem:[%s639 + $0x68] sm:$0xff] %v666
                  %v668 = vld [vmem:[%s638 + $0xe0] sm:$0xff]
                  %669 = vst [vmem:[%s639 + $0x70] sm:$0xff] %v668
                  %v670 = vld [vmem:[%s638 + $0xf0] sm:$0xff]
                  %671 = vst [vmem:[%s639 + $0x78] sm:$0xff] %v670
                  %v672 = vld [vmem:[%s638 + $0x100] sm:$0xff]
                  %673 = vst [vmem:[%s639 + $0x80] sm:$0xff] %v672
                  %v674 = vld [vmem:[%s638 + $0x110] sm:$0xff]
                  %675 = vst [vmem:[%s639 + $0x88] sm:$0xff] %v674
                  %v676 = vld [vmem:[%s638 + $0x120] sm:$0xff]
                  %677 = vst [vmem:[%s639 + $0x90] sm:$0xff] %v676
                  %v678 = vld [vmem:[%s638 + $0x130] sm:$0xff]
                  %679 = vst [vmem:[%s639 + $0x98] sm:$0xff] %v678
                  %v680 = vld [vmem:[%s638 + $0x140] sm:$0xff]
                  %681 = vst [vmem:[%s639 + $0xa0] sm:$0xff] %v680
                  %v682 = vld [vmem:[%s638 + $0x150] sm:$0xff]
                  %683 = vst [vmem:[%s639 + $0xa8] sm:$0xff] %v682
                  %v684 = vld [vmem:[%s638 + $0x160] sm:$0xff]
                  %685 = vst [vmem:[%s639 + $0xb0] sm:$0xff] %v684
                  %v686 = vld [vmem:[%s638 + $0x170] sm:$0xff]
                  %687 = vst [vmem:[%s639 + $0xb8] sm:$0xff] %v686
                  %v688 = vld [vmem:[%s638 + $0x180] sm:$0xff]
                  %689 = vst [vmem:[%s639 + $0xc0] sm:$0xff] %v688
                  %v690 = vld [vmem:[%s638 + $0x190] sm:$0xff]
                  %691 = vst [vmem:[%s639 + $0xc8] sm:$0xff] %v690
                  %v692 = vld [vmem:[%s638 + $0x1a0] sm:$0xff]
                  %693 = vst [vmem:[%s639 + $0xd0] sm:$0xff] %v692
                  %v694 = vld [vmem:[%s638 + $0x1b0] sm:$0xff]
                  %695 = vst [vmem:[%s639 + $0xd8] sm:$0xff] %v694
                  %v696 = vld [vmem:[%s638 + $0x1c0] sm:$0xff]
                  %697 = vst [vmem:[%s639 + $0xe0] sm:$0xff] %v696
                  %v698 = vld [vmem:[%s638 + $0x1d0] sm:$0xff]
                  %699 = vst [vmem:[%s639 + $0xe8] sm:$0xff] %v698
                  %v700 = vld [vmem:[%s638 + $0x1e0] sm:$0xff]
                  %701 = vst [vmem:[%s639 + $0xf0] sm:$0xff] %v700
                  %v702 = vld [vmem:[%s638 + $0x1f0] sm:$0xff]
                  %703 = vst [vmem:[%s639 + $0xf8] sm:$0xff] %v702
                  %v704 = vld [vmem:[%s638 + $0x200] sm:$0xff]
                  %705 = vst [vmem:[%s639 + $0x100] sm:$0xff] %v704
                  %v706 = vld [vmem:[%s638 + $0x210] sm:$0xff]
                  %707 = vst [vmem:[%s639 + $0x108] sm:$0xff] %v706
                  %v708 = vld [vmem:[%s638 + $0x220] sm:$0xff]
                  %709 = vst [vmem:[%s639 + $0x110] sm:$0xff] %v708
                  %v710 = vld [vmem:[%s638 + $0x230] sm:$0xff]
                  %711 = vst [vmem:[%s639 + $0x118] sm:$0xff] %v710
                  %v712 = vld [vmem:[%s638 + $0x240] sm:$0xff]
                  %713 = vst [vmem:[%s639 + $0x120] sm:$0xff] %v712
                  %v714 = vld [vmem:[%s638 + $0x250] sm:$0xff]
                  %715 = vst [vmem:[%s639 + $0x128] sm:$0xff] %v714
                  %v716 = vld [vmem:[%s638 + $0x260] sm:$0xff]
                  %717 = vst [vmem:[%s639 + $0x130] sm:$0xff] %v716
                  %v718 = vld [vmem:[%s638 + $0x270] sm:$0xff]
                  %719 = vst [vmem:[%s639 + $0x138] sm:$0xff] %v718
                  %v720 = vld [vmem:[%s638 + $0x280] sm:$0xff]
                  %721 = vst [vmem:[%s639 + $0x140] sm:$0xff] %v720
                  %v722 = vld [vmem:[%s638 + $0x290] sm:$0xff]
                  %723 = vst [vmem:[%s639 + $0x148] sm:$0xff] %v722
                  %v724 = vld [vmem:[%s638 + $0x2a0] sm:$0xff]
                  %725 = vst [vmem:[%s639 + $0x150] sm:$0xff] %v724
                  %v726 = vld [vmem:[%s638 + $0x2b0] sm:$0xff]
                  %727 = vst [vmem:[%s639 + $0x158] sm:$0xff] %v726
                  %v728 = vld [vmem:[%s638 + $0x2c0] sm:$0xff]
                  %729 = vst [vmem:[%s639 + $0x160] sm:$0xff] %v728
                  %v730 = vld [vmem:[%s638 + $0x2d0] sm:$0xff]
                  %731 = vst [vmem:[%s639 + $0x168] sm:$0xff] %v730
                  %v732 = vld [vmem:[%s638 + $0x2e0] sm:$0xff]
                  %733 = vst [vmem:[%s639 + $0x170] sm:$0xff] %v732
                  %v734 = vld [vmem:[%s638 + $0x2f0] sm:$0xff]
                  %735 = vst [vmem:[%s639 + $0x178] sm:$0xff] %v734
                  %v736 = vld [vmem:[%s638 + $0x300] sm:$0xff]
                  %737 = vst [vmem:[%s639 + $0x180] sm:$0xff] %v736
                  %v738 = vld [vmem:[%s638 + $0x310] sm:$0xff]
                  %739 = vst [vmem:[%s639 + $0x188] sm:$0xff] %v738
                  %v740 = vld [vmem:[%s638 + $0x320] sm:$0xff]
                  %741 = vst [vmem:[%s639 + $0x190] sm:$0xff] %v740
                  %v742 = vld [vmem:[%s638 + $0x330] sm:$0xff]
                  %743 = vst [vmem:[%s639 + $0x198] sm:$0xff] %v742
                  %v744 = vld [vmem:[%s638 + $0x340] sm:$0xff]
                  %745 = vst [vmem:[%s639 + $0x1a0] sm:$0xff] %v744
                  %v746 = vld [vmem:[%s638 + $0x350] sm:$0xff]
                  %747 = vst [vmem:[%s639 + $0x1a8] sm:$0xff] %v746
                  %v748 = vld [vmem:[%s638 + $0x360] sm:$0xff]
                  %749 = vst [vmem:[%s639 + $0x1b0] sm:$0xff] %v748
                  %v750 = vld [vmem:[%s638 + $0x370] sm:$0xff]
                  %751 = vst [vmem:[%s639 + $0x1b8] sm:$0xff] %v750
                  %v752 = vld [vmem:[%s638 + $0x380] sm:$0xff]
                  %753 = vst [vmem:[%s639 + $0x1c0] sm:$0xff] %v752
                  %v754 = vld [vmem:[%s638 + $0x390] sm:$0xff]
                  %755 = vst [vmem:[%s639 + $0x1c8] sm:$0xff] %v754
                  %v756 = vld [vmem:[%s638 + $0x3a0] sm:$0xff]
                  %757 = vst [vmem:[%s639 + $0x1d0] sm:$0xff] %v756
                  %v758 = vld [vmem:[%s638 + $0x3b0] sm:$0xff]
                  %759 = vst [vmem:[%s639 + $0x1d8] sm:$0xff] %v758
                  %v760 = vld [vmem:[%s638 + $0x3c0] sm:$0xff]
                  %761 = vst [vmem:[%s639 + $0x1e0] sm:$0xff] %v760
                  %v762 = vld [vmem:[%s638 + $0x3d0] sm:$0xff]
                  %763 = vst [vmem:[%s639 + $0x1e8] sm:$0xff] %v762
                  %v764 = vld [vmem:[%s638 + $0x3e0] sm:$0xff]
                  %765 = vst [vmem:[%s639 + $0x1f0] sm:$0xff] %v764
                  %v766 = vld [vmem:[%s638 + $0x3f0] sm:$0xff]
                  %767 = vst [vmem:[%s639 + $0x1f8] sm:$0xff] %v766
                $region112: #{_lambda_.1} parent=106 // loop_footer
                  %s637 = sadd.s32 1, %s633
                $region113: #{_lambda_.1} parent=106 // loop_footer_branch
                  %632 = sbr.rel target = $region109
                $region114: #{_lambda_.1} parent=106 // loop_exit
                  _
              $region107: #{_lambda_.1} parent=91 // pred_fallthru
                _
              // Predicated region
              $region115: #{_lambda_.1} parent=91 // pred_check
                _
              $region116: #{_lambda_.1} parent=91 // pred_check_branch
                %769 = sbr.rel target = $region118
              $region117: #{_lambda_.1} parent=91 // pred_region
                _
              $region118: #{_lambda_.1} parent=91 // pred_fallthru
                _
            $region92: #{_lambda_.1} parent=87 // pred_fallthru
              _
            // Predicated region
            $region93: #{_lambda_.1} parent=87 // pred_check
              _
            $region94: #{_lambda_.1} parent=87 // pred_check_branch
              %492 = sbr.rel target = $region96
            $region95: #{_lambda_.1} parent=87 // pred_region
              loop: start=0, step=1, limit=1
              $region97: #{_lambda_.1} parent=95 // loop_pre_header
                _
              $region98: #{_lambda_.1} parent=95 // loop_header
                %s495 = sphi 0, %s499
                %p496 = scmp.ge.s32.totalorder %s495, 1
                %s500 = sphi %s486, %s486
                %s501 = sphi %s484, %s484
              $region99: #{_lambda_.1} parent=95 // loop_header_branch
                %498 = sbr.rel (%p496) target = $region103
              $region100: #{_lambda_.1} parent=95 // loop_body
                %v502 = vld [vmem:[%s500] sm:$0xff]
                %503 = vst [vmem:[%s501] sm:$0xff] %v502
                %v504 = vld [vmem:[%s500 + $0x10] sm:$0xff]
                %505 = vst [vmem:[%s501 + $0x8] sm:$0xff] %v504
                %v506 = vld [vmem:[%s500 + $0x20] sm:$0xff]
                %507 = vst [vmem:[%s501 + $0x10] sm:$0xff] %v506
                %v508 = vld [vmem:[%s500 + $0x30] sm:$0xff]
                %509 = vst [vmem:[%s501 + $0x18] sm:$0xff] %v508
                %v510 = vld [vmem:[%s500 + $0x40] sm:$0xff]
                %511 = vst [vmem:[%s501 + $0x20] sm:$0xff] %v510
                %v512 = vld [vmem:[%s500 + $0x50] sm:$0xff]
                %513 = vst [vmem:[%s501 + $0x28] sm:$0xff] %v512
                %v514 = vld [vmem:[%s500 + $0x60] sm:$0xff]
                %515 = vst [vmem:[%s501 + $0x30] sm:$0xff] %v514
                %v516 = vld [vmem:[%s500 + $0x70] sm:$0xff]
                %517 = vst [vmem:[%s501 + $0x38] sm:$0xff] %v516
                %v518 = vld [vmem:[%s500 + $0x80] sm:$0xff]
                %519 = vst [vmem:[%s501 + $0x40] sm:$0xff] %v518
                %v520 = vld [vmem:[%s500 + $0x90] sm:$0xff]
                %521 = vst [vmem:[%s501 + $0x48] sm:$0xff] %v520
                %v522 = vld [vmem:[%s500 + $0xa0] sm:$0xff]
                %523 = vst [vmem:[%s501 + $0x50] sm:$0xff] %v522
                %v524 = vld [vmem:[%s500 + $0xb0] sm:$0xff]
                %525 = vst [vmem:[%s501 + $0x58] sm:$0xff] %v524
                %v526 = vld [vmem:[%s500 + $0xc0] sm:$0xff]
                %527 = vst [vmem:[%s501 + $0x60] sm:$0xff] %v526
                %v528 = vld [vmem:[%s500 + $0xd0] sm:$0xff]
                %529 = vst [vmem:[%s501 + $0x68] sm:$0xff] %v528
                %v530 = vld [vmem:[%s500 + $0xe0] sm:$0xff]
                %531 = vst [vmem:[%s501 + $0x70] sm:$0xff] %v530
                %v532 = vld [vmem:[%s500 + $0xf0] sm:$0xff]
                %533 = vst [vmem:[%s501 + $0x78] sm:$0xff] %v532
                %v534 = vld [vmem:[%s500 + $0x100] sm:$0xff]
                %535 = vst [vmem:[%s501 + $0x80] sm:$0xff] %v534
                %v536 = vld [vmem:[%s500 + $0x110] sm:$0xff]
                %537 = vst [vmem:[%s501 + $0x88] sm:$0xff] %v536
                %v538 = vld [vmem:[%s500 + $0x120] sm:$0xff]
                %539 = vst [vmem:[%s501 + $0x90] sm:$0xff] %v538
                %v540 = vld [vmem:[%s500 + $0x130] sm:$0xff]
                %541 = vst [vmem:[%s501 + $0x98] sm:$0xff] %v540
                %v542 = vld [vmem:[%s500 + $0x140] sm:$0xff]
                %543 = vst [vmem:[%s501 + $0xa0] sm:$0xff] %v542
                %v544 = vld [vmem:[%s500 + $0x150] sm:$0xff]
                %545 = vst [vmem:[%s501 + $0xa8] sm:$0xff] %v544
                %v546 = vld [vmem:[%s500 + $0x160] sm:$0xff]
                %547 = vst [vmem:[%s501 + $0xb0] sm:$0xff] %v546
                %v548 = vld [vmem:[%s500 + $0x170] sm:$0xff]
                %549 = vst [vmem:[%s501 + $0xb8] sm:$0xff] %v548
                %v550 = vld [vmem:[%s500 + $0x180] sm:$0xff]
                %551 = vst [vmem:[%s501 + $0xc0] sm:$0xff] %v550
                %v552 = vld [vmem:[%s500 + $0x190] sm:$0xff]
                %553 = vst [vmem:[%s501 + $0xc8] sm:$0xff] %v552
                %v554 = vld [vmem:[%s500 + $0x1a0] sm:$0xff]
                %555 = vst [vmem:[%s501 + $0xd0] sm:$0xff] %v554
                %v556 = vld [vmem:[%s500 + $0x1b0] sm:$0xff]
                %557 = vst [vmem:[%s501 + $0xd8] sm:$0xff] %v556
                %v558 = vld [vmem:[%s500 + $0x1c0] sm:$0xff]
                %559 = vst [vmem:[%s501 + $0xe0] sm:$0xff] %v558
                %v560 = vld [vmem:[%s500 + $0x1d0] sm:$0xff]
                %561 = vst [vmem:[%s501 + $0xe8] sm:$0xff] %v560
                %v562 = vld [vmem:[%s500 + $0x1e0] sm:$0xff]
                %563 = vst [vmem:[%s501 + $0xf0] sm:$0xff] %v562
                %v564 = vld [vmem:[%s500 + $0x1f0] sm:$0xff]
                %565 = vst [vmem:[%s501 + $0xf8] sm:$0xff] %v564
                %v566 = vld [vmem:[%s500 + $0x200] sm:$0xff]
                %567 = vst [vmem:[%s501 + $0x100] sm:$0xff] %v566
                %v568 = vld [vmem:[%s500 + $0x210] sm:$0xff]
                %569 = vst [vmem:[%s501 + $0x108] sm:$0xff] %v568
                %v570 = vld [vmem:[%s500 + $0x220] sm:$0xff]
                %571 = vst [vmem:[%s501 + $0x110] sm:$0xff] %v570
                %v572 = vld [vmem:[%s500 + $0x230] sm:$0xff]
                %573 = vst [vmem:[%s501 + $0x118] sm:$0xff] %v572
                %v574 = vld [vmem:[%s500 + $0x240] sm:$0xff]
                %575 = vst [vmem:[%s501 + $0x120] sm:$0xff] %v574
                %v576 = vld [vmem:[%s500 + $0x250] sm:$0xff]
                %577 = vst [vmem:[%s501 + $0x128] sm:$0xff] %v576
                %v578 = vld [vmem:[%s500 + $0x260] sm:$0xff]
                %579 = vst [vmem:[%s501 + $0x130] sm:$0xff] %v578
                %v580 = vld [vmem:[%s500 + $0x270] sm:$0xff]
                %581 = vst [vmem:[%s501 + $0x138] sm:$0xff] %v580
                %v582 = vld [vmem:[%s500 + $0x280] sm:$0xff]
                %583 = vst [vmem:[%s501 + $0x140] sm:$0xff] %v582
                %v584 = vld [vmem:[%s500 + $0x290] sm:$0xff]
                %585 = vst [vmem:[%s501 + $0x148] sm:$0xff] %v584
                %v586 = vld [vmem:[%s500 + $0x2a0] sm:$0xff]
                %587 = vst [vmem:[%s501 + $0x150] sm:$0xff] %v586
                %v588 = vld [vmem:[%s500 + $0x2b0] sm:$0xff]
                %589 = vst [vmem:[%s501 + $0x158] sm:$0xff] %v588
                %v590 = vld [vmem:[%s500 + $0x2c0] sm:$0xff]
                %591 = vst [vmem:[%s501 + $0x160] sm:$0xff] %v590
                %v592 = vld [vmem:[%s500 + $0x2d0] sm:$0xff]
                %593 = vst [vmem:[%s501 + $0x168] sm:$0xff] %v592
                %v594 = vld [vmem:[%s500 + $0x2e0] sm:$0xff]
                %595 = vst [vmem:[%s501 + $0x170] sm:$0xff] %v594
                %v596 = vld [vmem:[%s500 + $0x2f0] sm:$0xff]
                %597 = vst [vmem:[%s501 + $0x178] sm:$0xff] %v596
                %v598 = vld [vmem:[%s500 + $0x300] sm:$0xff]
                %599 = vst [vmem:[%s501 + $0x180] sm:$0xff] %v598
                %v600 = vld [vmem:[%s500 + $0x310] sm:$0xff]
                %601 = vst [vmem:[%s501 + $0x188] sm:$0xff] %v600
                %v602 = vld [vmem:[%s500 + $0x320] sm:$0xff]
                %603 = vst [vmem:[%s501 + $0x190] sm:$0xff] %v602
                %v604 = vld [vmem:[%s500 + $0x330] sm:$0xff]
                %605 = vst [vmem:[%s501 + $0x198] sm:$0xff] %v604
                %v606 = vld [vmem:[%s500 + $0x340] sm:$0xff]
                %607 = vst [vmem:[%s501 + $0x1a0] sm:$0xff] %v606
                %v608 = vld [vmem:[%s500 + $0x350] sm:$0xff]
                %609 = vst [vmem:[%s501 + $0x1a8] sm:$0xff] %v608
                %v610 = vld [vmem:[%s500 + $0x360] sm:$0xff]
                %611 = vst [vmem:[%s501 + $0x1b0] sm:$0xff] %v610
                %v612 = vld [vmem:[%s500 + $0x370] sm:$0xff]
                %613 = vst [vmem:[%s501 + $0x1b8] sm:$0xff] %v612
                %v614 = vld [vmem:[%s500 + $0x380] sm:$0xff]
                %615 = vst [vmem:[%s501 + $0x1c0] sm:$0xff] %v614
                %v616 = vld [vmem:[%s500 + $0x390] sm:$0xff]
                %617 = vst [vmem:[%s501 + $0x1c8] sm:$0xff] %v616
                %v618 = vld [vmem:[%s500 + $0x3a0] sm:$0xff]
                %619 = vst [vmem:[%s501 + $0x1d0] sm:$0xff] %v618
                %v620 = vld [vmem:[%s500 + $0x3b0] sm:$0xff]
                %621 = vst [vmem:[%s501 + $0x1d8] sm:$0xff] %v620
                %v622 = vld [vmem:[%s500 + $0x3c0] sm:$0xff]
                %623 = vst [vmem:[%s501 + $0x1e0] sm:$0xff] %v622
                %v624 = vld [vmem:[%s500 + $0x3d0] sm:$0xff]
                %625 = vst [vmem:[%s501 + $0x1e8] sm:$0xff] %v624
                %v626 = vld [vmem:[%s500 + $0x3e0] sm:$0xff]
                %627 = vst [vmem:[%s501 + $0x1f0] sm:$0xff] %v626
                %v628 = vld [vmem:[%s500 + $0x3f0] sm:$0xff]
                %629 = vst [vmem:[%s501 + $0x1f8] sm:$0xff] %v628
              $region101: #{_lambda_.1} parent=95 // loop_footer
                %s499 = sadd.s32 1, %s495
              $region102: #{_lambda_.1} parent=95 // loop_footer_branch
                %494 = sbr.rel target = $region98
              $region103: #{_lambda_.1} parent=95 // loop_exit
                _
            $region96: #{_lambda_.1} parent=87 // pred_fallthru
              _
          $region88: #{_lambda_.1} parent=83 // pred_fallthru
            _
          %770 = vnop
        $region84: #{_lambda_.1} parent=79 // pred_fallthru
          _
      $region80: #{_lambda_.1} parent=5 // pred_fallthru
        _
      %p771 = scmp.le.s32.totalorder 1, %s23
      %p772 = scmp.lt.s32.totalorder %s23, 3
      %p773 = pnand %p771, %p772
      %p774 = pneg %p773
      // Predicated region
      $region119: #{_lambda_.1} parent=5 // pred_check
        _
      $region120: #{_lambda_.1} parent=5 // pred_check_branch
        %776 = sbr.rel (%p773) target = $region122
      $region121: #{_lambda_.1} parent=5 // pred_region
        %s777 = ssub.s32 %s23, 1
        %s778 = sand.u32 %s36, 1
        %s779 = sand.u32 %s36, 1
        %s780 = smul.addr %s779, 512
        %s781 = scalar_lea.vmem [#allocation4], %s780
        // Predicated region
        $region123: #{_lambda_.1} parent=121 // pred_check
          %p782 = pneg %p49
        $region124: #{_lambda_.1} parent=121 // pred_check_branch
          %784 = sbr.rel (%p782) target = $region126
        $region125: #{_lambda_.1} parent=121 // pred_region
          _
        $region126: #{_lambda_.1} parent=121 // pred_fallthru
          _
        %s785 = sand.u32 %s36, 1
        %s786 = sand.u32 %s36, 1
        %s787 = smul.addr %s786, 512
        %s788 = scalar_lea.vmem [#allocation4], %s787
        %p789 = pneg %p49
        %p790 = pneg %p46
        %p791 = pneg %p70
        %p792 = pneg %p67
        %p793 = pneg %p91
        %p794 = pneg %p88
        %p795 = pneg %p112
        %p796 = pneg %p109
        %p797 = pneg %p133
        %p798 = pneg %p130
        %p799 = pneg %p154
        %p800 = pneg %p151
        %p801 = pneg %p175
        %p802 = pneg %p172
        %p803 = pneg %p196
        %p804 = pneg %p193
        %p805 = pneg %p217
        %p806 = pneg %p214
        %p807 = pneg %p238
        %p808 = pneg %p235
        %p809 = pneg %p259
        %p810 = pneg %p256
        %p811 = pneg %p280
        %p812 = pneg %p277
        %p813 = pneg %p301
        %p814 = pneg %p298
        %p815 = pneg %p322
        %p816 = pneg %p319
        %p817 = pneg %p343
        %p818 = pneg %p340
        %p819 = pneg %p364
        %p820 = pneg %p361
        %p821 = pneg %p385
        %p822 = pneg %p382
        %p823 = pneg %p411
        %p824 = pneg %p408
        %p825 = scmp.lt.s32.totalorder %s28, 1
        %s826 = scalar_select %p825, %s28, 1
        %s827 = smul.addr %s826, 8
        %s828 = scalar_lea.vmem %s17, %s827
        %p829 = scmp.lt.s32.totalorder %s28, 1
        %s830 = scalar_select %p829, %s28, 1
        %s831 = smul.addr %s830, 8
        %s832 = scalar_lea.vmem %s17, %s831
        %v833 = vld [vmem:[%s781] sm:$0xff]
        %v834 = vld [vmem:[%s781 + $0x8] sm:$0xff]
        %v835 = vld [vmem:[%s781 + $0x10] sm:$0xff]
        %v836 = vld [vmem:[%s781 + $0x18] sm:$0xff]
        %v837 = vld [vmem:[%s781 + $0x20] sm:$0xff]
        %v838 = vld [vmem:[%s781 + $0x28] sm:$0xff]
        %v839 = vld [vmem:[%s781 + $0x30] sm:$0xff]
        %v840 = vld [vmem:[%s781 + $0x38] sm:$0xff]
        %v841 = vld [vmem:[%s781 + $0x40] sm:$0xff]
        %v842 = vld [vmem:[%s781 + $0x48] sm:$0xff]
        %v843 = vld [vmem:[%s781 + $0x50] sm:$0xff]
        %v844 = vld [vmem:[%s781 + $0x58] sm:$0xff]
        %v845 = vld [vmem:[%s781 + $0x60] sm:$0xff]
        %v846 = vld [vmem:[%s781 + $0x68] sm:$0xff]
        %v847 = vld [vmem:[%s781 + $0x70] sm:$0xff]
        %v848 = vld [vmem:[%s781 + $0x78] sm:$0xff]
        %v849 = vld [vmem:[%s781 + $0x80] sm:$0xff]
        %v850 = vld [vmem:[%s781 + $0x88] sm:$0xff]
        %v851 = vld [vmem:[%s781 + $0x90] sm:$0xff]
        %v852 = vld [vmem:[%s781 + $0x98] sm:$0xff]
        %v853 = vld [vmem:[%s781 + $0xa0] sm:$0xff]
        %v854 = vld [vmem:[%s781 + $0xa8] sm:$0xff]
        %v855 = vld [vmem:[%s781 + $0xb0] sm:$0xff]
        %v856 = vld [vmem:[%s781 + $0xb8] sm:$0xff]
        %v857 = vld [vmem:[%s781 + $0xc0] sm:$0xff]
        %v858 = vld [vmem:[%s781 + $0xc8] sm:$0xff]
        %v859 = vld [vmem:[%s781 + $0xd0] sm:$0xff]
        %v860 = vld [vmem:[%s781 + $0xd8] sm:$0xff]
        %v861 = vld [vmem:[%s781 + $0xe0] sm:$0xff]
        %v862 = vld [vmem:[%s781 + $0xe8] sm:$0xff]
        %v863 = vld [vmem:[%s781 + $0xf0] sm:$0xff]
        %v864 = vld [vmem:[%s781 + $0xf8] sm:$0xff]
        %v865 = vld [vmem:[%s781 + $0x100] sm:$0xff]
        %v866 = vld [vmem:[%s781 + $0x108] sm:$0xff]
        %v867 = vld [vmem:[%s781 + $0x110] sm:$0xff]
        %v868 = vld [vmem:[%s781 + $0x118] sm:$0xff]
        %v869 = vld [vmem:[%s781 + $0x120] sm:$0xff]
        %v870 = vld [vmem:[%s781 + $0x128] sm:$0xff]
        %v871 = vld [vmem:[%s781 + $0x130] sm:$0xff]
        %v872 = vld [vmem:[%s781 + $0x138] sm:$0xff]
        %v873 = vld [vmem:[%s781 + $0x140] sm:$0xff]
        %v874 = vld [vmem:[%s781 + $0x148] sm:$0xff]
        %v875 = vld [vmem:[%s781 + $0x150] sm:$0xff]
        %v876 = vld [vmem:[%s781 + $0x158] sm:$0xff]
        %v877 = vld [vmem:[%s781 + $0x160] sm:$0xff]
        %v878 = vld [vmem:[%s781 + $0x168] sm:$0xff]
        %v879 = vld [vmem:[%s781 + $0x170] sm:$0xff]
        %v880 = vld [vmem:[%s781 + $0x178] sm:$0xff]
        %v881 = vld [vmem:[%s781 + $0x180] sm:$0xff]
        %v882 = vld [vmem:[%s781 + $0x188] sm:$0xff]
        %v883 = vld [vmem:[%s781 + $0x190] sm:$0xff]
        %v884 = vld [vmem:[%s781 + $0x198] sm:$0xff]
        %v885 = vld [vmem:[%s781 + $0x1a0] sm:$0xff]
        %v886 = vld [vmem:[%s781 + $0x1a8] sm:$0xff]
        %v887 = vld [vmem:[%s781 + $0x1b0] sm:$0xff]
        %v888 = vld [vmem:[%s781 + $0x1b8] sm:$0xff]
        %v889 = vld [vmem:[%s781 + $0x1c0] sm:$0xff]
        %v890 = vld [vmem:[%s781 + $0x1c8] sm:$0xff]
        %v891 = vld [vmem:[%s781 + $0x1d0] sm:$0xff]
        %v892 = vld [vmem:[%s781 + $0x1d8] sm:$0xff]
        %v893 = vld [vmem:[%s781 + $0x1e0] sm:$0xff]
        %v894 = vld [vmem:[%s781 + $0x1e8] sm:$0xff]
        %v895 = vld [vmem:[%s781 + $0x1f0] sm:$0xff]
        %v896 = vld [vmem:[%s781 + $0x1f8] sm:$0xff]
        %v897 = vld [vmem:[%s1] sm:$0x1]
        %899 = vset.pattern.permute.xlu0 0
        %900 = vperm.xlu0 %899, %v833
        %v901 = vpop.permute.xlu0 %900
        %904 = vset.pattern.permute.xlu0 0
        %905 = vperm.xlu0 %904, %v834
        %v906 = vpop.permute.xlu0 %905
        %909 = vset.pattern.permute.xlu0 0
        %910 = vperm.xlu0 %909, %v835
        %v911 = vpop.permute.xlu0 %910
        %914 = vset.pattern.permute.xlu0 0
        %915 = vperm.xlu0 %914, %v836
        %v916 = vpop.permute.xlu0 %915
        %919 = vset.pattern.permute.xlu0 0
        %920 = vperm.xlu0 %919, %v837
        %v921 = vpop.permute.xlu0 %920
        %924 = vset.pattern.permute.xlu0 0
        %925 = vperm.xlu0 %924, %v838
        %v926 = vpop.permute.xlu0 %925
        %929 = vset.pattern.permute.xlu0 0
        %930 = vperm.xlu0 %929, %v839
        %v931 = vpop.permute.xlu0 %930
        %934 = vset.pattern.permute.xlu0 0
        %935 = vperm.xlu0 %934, %v840
        %v936 = vpop.permute.xlu0 %935
        %939 = vset.pattern.permute.xlu0 0
        %940 = vperm.xlu0 %939, %v841
        %v941 = vpop.permute.xlu0 %940
        %944 = vset.pattern.permute.xlu0 0
        %945 = vperm.xlu0 %944, %v842
        %v946 = vpop.permute.xlu0 %945
        %949 = vset.pattern.permute.xlu0 0
        %950 = vperm.xlu0 %949, %v843
        %v951 = vpop.permute.xlu0 %950
        %954 = vset.pattern.permute.xlu0 0
        %955 = vperm.xlu0 %954, %v844
        %v956 = vpop.permute.xlu0 %955
        %959 = vset.pattern.permute.xlu0 0
        %960 = vperm.xlu0 %959, %v845
        %v961 = vpop.permute.xlu0 %960
        %964 = vset.pattern.permute.xlu0 0
        %965 = vperm.xlu0 %964, %v846
        %v966 = vpop.permute.xlu0 %965
        %969 = vset.pattern.permute.xlu0 0
        %970 = vperm.xlu0 %969, %v847
        %v971 = vpop.permute.xlu0 %970
        %974 = vset.pattern.permute.xlu0 0
        %975 = vperm.xlu0 %974, %v848
        %v976 = vpop.permute.xlu0 %975
        %979 = vset.pattern.permute.xlu0 0
        %980 = vperm.xlu0 %979, %v849
        %v981 = vpop.permute.xlu0 %980
        %984 = vset.pattern.permute.xlu0 0
        %985 = vperm.xlu0 %984, %v850
        %v986 = vpop.permute.xlu0 %985
        %989 = vset.pattern.permute.xlu0 0
        %990 = vperm.xlu0 %989, %v851
        %v991 = vpop.permute.xlu0 %990
        %994 = vset.pattern.permute.xlu0 0
        %995 = vperm.xlu0 %994, %v852
        %v996 = vpop.permute.xlu0 %995
        %999 = vset.pattern.permute.xlu0 0
        %1000 = vperm.xlu0 %999, %v853
        %v1001 = vpop.permute.xlu0 %1000
        %1004 = vset.pattern.permute.xlu0 0
        %1005 = vperm.xlu0 %1004, %v854
        %v1006 = vpop.permute.xlu0 %1005
        %1009 = vset.pattern.permute.xlu0 0
        %1010 = vperm.xlu0 %1009, %v855
        %v1011 = vpop.permute.xlu0 %1010
        %1014 = vset.pattern.permute.xlu0 0
        %1015 = vperm.xlu0 %1014, %v856
        %v1016 = vpop.permute.xlu0 %1015
        %1019 = vset.pattern.permute.xlu0 0
        %1020 = vperm.xlu0 %1019, %v857
        %v1021 = vpop.permute.xlu0 %1020
        %1024 = vset.pattern.permute.xlu0 0
        %1025 = vperm.xlu0 %1024, %v858
        %v1026 = vpop.permute.xlu0 %1025
        %1029 = vset.pattern.permute.xlu0 0
        %1030 = vperm.xlu0 %1029, %v859
        %v1031 = vpop.permute.xlu0 %1030
        %1034 = vset.pattern.permute.xlu0 0
        %1035 = vperm.xlu0 %1034, %v860
        %v1036 = vpop.permute.xlu0 %1035
        %1039 = vset.pattern.permute.xlu0 0
        %1040 = vperm.xlu0 %1039, %v861
        %v1041 = vpop.permute.xlu0 %1040
        %1044 = vset.pattern.permute.xlu0 0
        %1045 = vperm.xlu0 %1044, %v862
        %v1046 = vpop.permute.xlu0 %1045
        %1049 = vset.pattern.permute.xlu0 0
        %1050 = vperm.xlu0 %1049, %v863
        %v1051 = vpop.permute.xlu0 %1050
        %1054 = vset.pattern.permute.xlu0 0
        %1055 = vperm.xlu0 %1054, %v864
        %v1056 = vpop.permute.xlu0 %1055
        %1059 = vset.pattern.permute.xlu0 0
        %1060 = vperm.xlu0 %1059, %v865
        %v1061 = vpop.permute.xlu0 %1060
        %1064 = vset.pattern.permute.xlu0 0
        %1065 = vperm.xlu0 %1064, %v866
        %v1066 = vpop.permute.xlu0 %1065
        %1069 = vset.pattern.permute.xlu0 0
        %1070 = vperm.xlu0 %1069, %v867
        %v1071 = vpop.permute.xlu0 %1070
        %1074 = vset.pattern.permute.xlu0 0
        %1075 = vperm.xlu0 %1074, %v868
        %v1076 = vpop.permute.xlu0 %1075
        %1079 = vset.pattern.permute.xlu0 0
        %1080 = vperm.xlu0 %1079, %v869
        %v1081 = vpop.permute.xlu0 %1080
        %1084 = vset.pattern.permute.xlu0 0
        %1085 = vperm.xlu0 %1084, %v870
        %v1086 = vpop.permute.xlu0 %1085
        %1089 = vset.pattern.permute.xlu0 0
        %1090 = vperm.xlu0 %1089, %v871
        %v1091 = vpop.permute.xlu0 %1090
        %1094 = vset.pattern.permute.xlu0 0
        %1095 = vperm.xlu0 %1094, %v872
        %v1096 = vpop.permute.xlu0 %1095
        %1099 = vset.pattern.permute.xlu0 0
        %1100 = vperm.xlu0 %1099, %v873
        %v1101 = vpop.permute.xlu0 %1100
        %1104 = vset.pattern.permute.xlu0 0
        %1105 = vperm.xlu0 %1104, %v874
        %v1106 = vpop.permute.xlu0 %1105
        %1109 = vset.pattern.permute.xlu0 0
        %1110 = vperm.xlu0 %1109, %v875
        %v1111 = vpop.permute.xlu0 %1110
        %1114 = vset.pattern.permute.xlu0 0
        %1115 = vperm.xlu0 %1114, %v876
        %v1116 = vpop.permute.xlu0 %1115
        %1119 = vset.pattern.permute.xlu0 0
        %1120 = vperm.xlu0 %1119, %v877
        %v1121 = vpop.permute.xlu0 %1120
        %1124 = vset.pattern.permute.xlu0 0
        %1125 = vperm.xlu0 %1124, %v878
        %v1126 = vpop.permute.xlu0 %1125
        %1129 = vset.pattern.permute.xlu0 0
        %1130 = vperm.xlu0 %1129, %v879
        %v1131 = vpop.permute.xlu0 %1130
        %1134 = vset.pattern.permute.xlu0 0
        %1135 = vperm.xlu0 %1134, %v880
        %v1136 = vpop.permute.xlu0 %1135
        %1139 = vset.pattern.permute.xlu0 0
        %1140 = vperm.xlu0 %1139, %v881
        %v1141 = vpop.permute.xlu0 %1140
        %1144 = vset.pattern.permute.xlu0 0
        %1145 = vperm.xlu0 %1144, %v882
        %v1146 = vpop.permute.xlu0 %1145
        %1149 = vset.pattern.permute.xlu0 0
        %1150 = vperm.xlu0 %1149, %v883
        %v1151 = vpop.permute.xlu0 %1150
        %1154 = vset.pattern.permute.xlu0 0
        %1155 = vperm.xlu0 %1154, %v884
        %v1156 = vpop.permute.xlu0 %1155
        %1159 = vset.pattern.permute.xlu0 0
        %1160 = vperm.xlu0 %1159, %v885
        %v1161 = vpop.permute.xlu0 %1160
        %1164 = vset.pattern.permute.xlu0 0
        %1165 = vperm.xlu0 %1164, %v886
        %v1166 = vpop.permute.xlu0 %1165
        %1169 = vset.pattern.permute.xlu0 0
        %1170 = vperm.xlu0 %1169, %v887
        %v1171 = vpop.permute.xlu0 %1170
        %1174 = vset.pattern.permute.xlu0 0
        %1175 = vperm.xlu0 %1174, %v888
        %v1176 = vpop.permute.xlu0 %1175
        %1179 = vset.pattern.permute.xlu0 0
        %1180 = vperm.xlu0 %1179, %v889
        %v1181 = vpop.permute.xlu0 %1180
        %1184 = vset.pattern.permute.xlu0 0
        %1185 = vperm.xlu0 %1184, %v890
        %v1186 = vpop.permute.xlu0 %1185
        %1189 = vset.pattern.permute.xlu0 0
        %1190 = vperm.xlu0 %1189, %v891
        %v1191 = vpop.permute.xlu0 %1190
        %1194 = vset.pattern.permute.xlu0 0
        %1195 = vperm.xlu0 %1194, %v892
        %v1196 = vpop.permute.xlu0 %1195
        %1199 = vset.pattern.permute.xlu0 0
        %1200 = vperm.xlu0 %1199, %v893
        %v1201 = vpop.permute.xlu0 %1200
        %1204 = vset.pattern.permute.xlu0 0
        %1205 = vperm.xlu0 %1204, %v894
        %v1206 = vpop.permute.xlu0 %1205
        %1209 = vset.pattern.permute.xlu0 0
        %1210 = vperm.xlu0 %1209, %v895
        %v1211 = vpop.permute.xlu0 %1210
        %1214 = vset.pattern.permute.xlu0 0
        %1215 = vperm.xlu0 %1214, %v896
        %v1216 = vpop.permute.xlu0 %1215
        %v1218 = vlaneseq
        %v1219 = vshrl.u32 %v1218, 7
        %v1220 = vsub.s32 0, %v1219
        %v1221 = vrot.slane %v897, %v1220
        %v1222 = vmul.f32 %v901, %v1221
        %v1223 = vmul.f32 %v906, %v1221
        %v1224 = vmul.f32 %v911, %v1221
        %v1225 = vmul.f32 %v916, %v1221
        %v1226 = vmul.f32 %v921, %v1221
        %v1227 = vmul.f32 %v926, %v1221
        %v1228 = vmul.f32 %v931, %v1221
        %v1229 = vmul.f32 %v936, %v1221
        %v1230 = vmul.f32 %v941, %v1221
        %v1231 = vmul.f32 %v946, %v1221
        %v1232 = vmul.f32 %v951, %v1221
        %v1233 = vmul.f32 %v956, %v1221
        %v1234 = vmul.f32 %v961, %v1221
        %v1235 = vmul.f32 %v966, %v1221
        %v1236 = vmul.f32 %v971, %v1221
        %v1237 = vmul.f32 %v976, %v1221
        %v1238 = vmul.f32 %v981, %v1221
        %v1239 = vmul.f32 %v986, %v1221
        %v1240 = vmul.f32 %v991, %v1221
        %v1241 = vmul.f32 %v996, %v1221
        %v1242 = vmul.f32 %v1001, %v1221
        %v1243 = vmul.f32 %v1006, %v1221
        %v1244 = vmul.f32 %v1011, %v1221
        %v1245 = vmul.f32 %v1016, %v1221
        %v1246 = vmul.f32 %v1021, %v1221
        %v1247 = vmul.f32 %v1026, %v1221
        %v1248 = vmul.f32 %v1031, %v1221
        %v1249 = vmul.f32 %v1036, %v1221
        %v1250 = vmul.f32 %v1041, %v1221
        %v1251 = vmul.f32 %v1046, %v1221
        %v1252 = vmul.f32 %v1051, %v1221
        %v1253 = vmul.f32 %v1056, %v1221
        %v1254 = vmul.f32 %v1061, %v1221
        %v1255 = vmul.f32 %v1066, %v1221
        %v1256 = vmul.f32 %v1071, %v1221
        %v1257 = vmul.f32 %v1076, %v1221
        %v1258 = vmul.f32 %v1081, %v1221
        %v1259 = vmul.f32 %v1086, %v1221
        %v1260 = vmul.f32 %v1091, %v1221
        %v1261 = vmul.f32 %v1096, %v1221
        %v1262 = vmul.f32 %v1101, %v1221
        %v1263 = vmul.f32 %v1106, %v1221
        %v1264 = vmul.f32 %v1111, %v1221
        %v1265 = vmul.f32 %v1116, %v1221
        %v1266 = vmul.f32 %v1121, %v1221
        %v1267 = vmul.f32 %v1126, %v1221
        %v1268 = vmul.f32 %v1131, %v1221
        %v1269 = vmul.f32 %v1136, %v1221
        %v1270 = vmul.f32 %v1141, %v1221
        %v1271 = vmul.f32 %v1146, %v1221
        %v1272 = vmul.f32 %v1151, %v1221
        %v1273 = vmul.f32 %v1156, %v1221
        %v1274 = vmul.f32 %v1161, %v1221
        %v1275 = vmul.f32 %v1166, %v1221
        %v1276 = vmul.f32 %v1171, %v1221
        %v1277 = vmul.f32 %v1176, %v1221
        %v1278 = vmul.f32 %v1181, %v1221
        %v1279 = vmul.f32 %v1186, %v1221
        %v1280 = vmul.f32 %v1191, %v1221
        %v1281 = vmul.f32 %v1196, %v1221
        %v1282 = vmul.f32 %v1201, %v1221
        %v1283 = vmul.f32 %v1206, %v1221
        %v1284 = vmul.f32 %v1211, %v1221
        %v1285 = vmul.f32 %v1216, %v1221
        %v1286 = vld [vmem:[%s1 + $0x1] sm:$0x1]
        %1287 = vset.pattern.permute.xlu0 1
        %1288 = vperm.xlu0 %1287, %v833
        %v1289 = vpop.permute.xlu0 %1288
        %1291 = vset.pattern.permute.xlu0 1
        %1292 = vperm.xlu0 %1291, %v834
        %v1293 = vpop.permute.xlu0 %1292
        %1295 = vset.pattern.permute.xlu0 1
        %1296 = vperm.xlu0 %1295, %v835
        %v1297 = vpop.permute.xlu0 %1296
        %1299 = vset.pattern.permute.xlu0 1
        %1300 = vperm.xlu0 %1299, %v836
        %v1301 = vpop.permute.xlu0 %1300
        %1303 = vset.pattern.permute.xlu0 1
        %1304 = vperm.xlu0 %1303, %v837
        %v1305 = vpop.permute.xlu0 %1304
        %1307 = vset.pattern.permute.xlu0 1
        %1308 = vperm.xlu0 %1307, %v838
        %v1309 = vpop.permute.xlu0 %1308
        %1311 = vset.pattern.permute.xlu0 1
        %1312 = vperm.xlu0 %1311, %v839
        %v1313 = vpop.permute.xlu0 %1312
        %1315 = vset.pattern.permute.xlu0 1
        %1316 = vperm.xlu0 %1315, %v840
        %v1317 = vpop.permute.xlu0 %1316
        %1319 = vset.pattern.permute.xlu0 1
        %1320 = vperm.xlu0 %1319, %v841
        %v1321 = vpop.permute.xlu0 %1320
        %1323 = vset.pattern.permute.xlu0 1
        %1324 = vperm.xlu0 %1323, %v842
        %v1325 = vpop.permute.xlu0 %1324
        %1327 = vset.pattern.permute.xlu0 1
        %1328 = vperm.xlu0 %1327, %v843
        %v1329 = vpop.permute.xlu0 %1328
        %1331 = vset.pattern.permute.xlu0 1
        %1332 = vperm.xlu0 %1331, %v844
        %v1333 = vpop.permute.xlu0 %1332
        %1335 = vset.pattern.permute.xlu0 1
        %1336 = vperm.xlu0 %1335, %v845
        %v1337 = vpop.permute.xlu0 %1336
        %1339 = vset.pattern.permute.xlu0 1
        %1340 = vperm.xlu0 %1339, %v846
        %v1341 = vpop.permute.xlu0 %1340
        %1343 = vset.pattern.permute.xlu0 1
        %1344 = vperm.xlu0 %1343, %v847
        %v1345 = vpop.permute.xlu0 %1344
        %1347 = vset.pattern.permute.xlu0 1
        %1348 = vperm.xlu0 %1347, %v848
        %v1349 = vpop.permute.xlu0 %1348
        %1351 = vset.pattern.permute.xlu0 1
        %1352 = vperm.xlu0 %1351, %v849
        %v1353 = vpop.permute.xlu0 %1352
        %1355 = vset.pattern.permute.xlu0 1
        %1356 = vperm.xlu0 %1355, %v850
        %v1357 = vpop.permute.xlu0 %1356
        %1359 = vset.pattern.permute.xlu0 1
        %1360 = vperm.xlu0 %1359, %v851
        %v1361 = vpop.permute.xlu0 %1360
        %1363 = vset.pattern.permute.xlu0 1
        %1364 = vperm.xlu0 %1363, %v852
        %v1365 = vpop.permute.xlu0 %1364
        %1367 = vset.pattern.permute.xlu0 1
        %1368 = vperm.xlu0 %1367, %v853
        %v1369 = vpop.permute.xlu0 %1368
        %1371 = vset.pattern.permute.xlu0 1
        %1372 = vperm.xlu0 %1371, %v854
        %v1373 = vpop.permute.xlu0 %1372
        %1375 = vset.pattern.permute.xlu0 1
        %1376 = vperm.xlu0 %1375, %v855
        %v1377 = vpop.permute.xlu0 %1376
        %1379 = vset.pattern.permute.xlu0 1
        %1380 = vperm.xlu0 %1379, %v856
        %v1381 = vpop.permute.xlu0 %1380
        %1383 = vset.pattern.permute.xlu0 1
        %1384 = vperm.xlu0 %1383, %v857
        %v1385 = vpop.permute.xlu0 %1384
        %1387 = vset.pattern.permute.xlu0 1
        %1388 = vperm.xlu0 %1387, %v858
        %v1389 = vpop.permute.xlu0 %1388
        %1391 = vset.pattern.permute.xlu0 1
        %1392 = vperm.xlu0 %1391, %v859
        %v1393 = vpop.permute.xlu0 %1392
        %1395 = vset.pattern.permute.xlu0 1
        %1396 = vperm.xlu0 %1395, %v860
        %v1397 = vpop.permute.xlu0 %1396
        %1399 = vset.pattern.permute.xlu0 1
        %1400 = vperm.xlu0 %1399, %v861
        %v1401 = vpop.permute.xlu0 %1400
        %1403 = vset.pattern.permute.xlu0 1
        %1404 = vperm.xlu0 %1403, %v862
        %v1405 = vpop.permute.xlu0 %1404
        %1407 = vset.pattern.permute.xlu0 1
        %1408 = vperm.xlu0 %1407, %v863
        %v1409 = vpop.permute.xlu0 %1408
        %1411 = vset.pattern.permute.xlu0 1
        %1412 = vperm.xlu0 %1411, %v864
        %v1413 = vpop.permute.xlu0 %1412
        %1415 = vset.pattern.permute.xlu0 1
        %1416 = vperm.xlu0 %1415, %v865
        %v1417 = vpop.permute.xlu0 %1416
        %1419 = vset.pattern.permute.xlu0 1
        %1420 = vperm.xlu0 %1419, %v866
        %v1421 = vpop.permute.xlu0 %1420
        %1423 = vset.pattern.permute.xlu0 1
        %1424 = vperm.xlu0 %1423, %v867
        %v1425 = vpop.permute.xlu0 %1424
        %1427 = vset.pattern.permute.xlu0 1
        %1428 = vperm.xlu0 %1427, %v868
        %v1429 = vpop.permute.xlu0 %1428
        %1431 = vset.pattern.permute.xlu0 1
        %1432 = vperm.xlu0 %1431, %v869
        %v1433 = vpop.permute.xlu0 %1432
        %1435 = vset.pattern.permute.xlu0 1
        %1436 = vperm.xlu0 %1435, %v870
        %v1437 = vpop.permute.xlu0 %1436
        %1439 = vset.pattern.permute.xlu0 1
        %1440 = vperm.xlu0 %1439, %v871
        %v1441 = vpop.permute.xlu0 %1440
        %1443 = vset.pattern.permute.xlu0 1
        %1444 = vperm.xlu0 %1443, %v872
        %v1445 = vpop.permute.xlu0 %1444
        %1447 = vset.pattern.permute.xlu0 1
        %1448 = vperm.xlu0 %1447, %v873
        %v1449 = vpop.permute.xlu0 %1448
        %1451 = vset.pattern.permute.xlu0 1
        %1452 = vperm.xlu0 %1451, %v874
        %v1453 = vpop.permute.xlu0 %1452
        %1455 = vset.pattern.permute.xlu0 1
        %1456 = vperm.xlu0 %1455, %v875
        %v1457 = vpop.permute.xlu0 %1456
        %1459 = vset.pattern.permute.xlu0 1
        %1460 = vperm.xlu0 %1459, %v876
        %v1461 = vpop.permute.xlu0 %1460
        %1463 = vset.pattern.permute.xlu0 1
        %1464 = vperm.xlu0 %1463, %v877
        %v1465 = vpop.permute.xlu0 %1464
        %1467 = vset.pattern.permute.xlu0 1
        %1468 = vperm.xlu0 %1467, %v878
        %v1469 = vpop.permute.xlu0 %1468
        %1471 = vset.pattern.permute.xlu0 1
        %1472 = vperm.xlu0 %1471, %v879
        %v1473 = vpop.permute.xlu0 %1472
        %1475 = vset.pattern.permute.xlu0 1
        %1476 = vperm.xlu0 %1475, %v880
        %v1477 = vpop.permute.xlu0 %1476
        %1479 = vset.pattern.permute.xlu0 1
        %1480 = vperm.xlu0 %1479, %v881
        %v1481 = vpop.permute.xlu0 %1480
        %1483 = vset.pattern.permute.xlu0 1
        %1484 = vperm.xlu0 %1483, %v882
        %v1485 = vpop.permute.xlu0 %1484
        %1487 = vset.pattern.permute.xlu0 1
        %1488 = vperm.xlu0 %1487, %v883
        %v1489 = vpop.permute.xlu0 %1488
        %1491 = vset.pattern.permute.xlu0 1
        %1492 = vperm.xlu0 %1491, %v884
        %v1493 = vpop.permute.xlu0 %1492
        %1495 = vset.pattern.permute.xlu0 1
        %1496 = vperm.xlu0 %1495, %v885
        %v1497 = vpop.permute.xlu0 %1496
        %1499 = vset.pattern.permute.xlu0 1
        %1500 = vperm.xlu0 %1499, %v886
        %v1501 = vpop.permute.xlu0 %1500
        %1503 = vset.pattern.permute.xlu0 1
        %1504 = vperm.xlu0 %1503, %v887
        %v1505 = vpop.permute.xlu0 %1504
        %1507 = vset.pattern.permute.xlu0 1
        %1508 = vperm.xlu0 %1507, %v888
        %v1509 = vpop.permute.xlu0 %1508
        %1511 = vset.pattern.permute.xlu0 1
        %1512 = vperm.xlu0 %1511, %v889
        %v1513 = vpop.permute.xlu0 %1512
        %1515 = vset.pattern.permute.xlu0 1
        %1516 = vperm.xlu0 %1515, %v890
        %v1517 = vpop.permute.xlu0 %1516
        %1519 = vset.pattern.permute.xlu0 1
        %1520 = vperm.xlu0 %1519, %v891
        %v1521 = vpop.permute.xlu0 %1520
        %1523 = vset.pattern.permute.xlu0 1
        %1524 = vperm.xlu0 %1523, %v892
        %v1525 = vpop.permute.xlu0 %1524
        %1527 = vset.pattern.permute.xlu0 1
        %1528 = vperm.xlu0 %1527, %v893
        %v1529 = vpop.permute.xlu0 %1528
        %1531 = vset.pattern.permute.xlu0 1
        %1532 = vperm.xlu0 %1531, %v894
        %v1533 = vpop.permute.xlu0 %1532
        %1535 = vset.pattern.permute.xlu0 1
        %1536 = vperm.xlu0 %1535, %v895
        %v1537 = vpop.permute.xlu0 %1536
        %1539 = vset.pattern.permute.xlu0 1
        %1540 = vperm.xlu0 %1539, %v896
        %v1541 = vpop.permute.xlu0 %1540
        %v1543 = vlaneseq
        %v1544 = vshrl.u32 %v1543, 7
        %v1545 = vsub.s32 0, %v1544
        %v1546 = vrot.slane %v1286, %v1545
        %v1547 = vmul.f32 %v1289, %v1546
        %v1548 = vmul.f32 %v1293, %v1546
        %v1549 = vmul.f32 %v1297, %v1546
        %v1550 = vmul.f32 %v1301, %v1546
        %v1551 = vmul.f32 %v1305, %v1546
        %v1552 = vmul.f32 %v1309, %v1546
        %v1553 = vmul.f32 %v1313, %v1546
        %v1554 = vmul.f32 %v1317, %v1546
        %v1555 = vmul.f32 %v1321, %v1546
        %v1556 = vmul.f32 %v1325, %v1546
        %v1557 = vmul.f32 %v1329, %v1546
        %v1558 = vmul.f32 %v1333, %v1546
        %v1559 = vmul.f32 %v1337, %v1546
        %v1560 = vmul.f32 %v1341, %v1546
        %v1561 = vmul.f32 %v1345, %v1546
        %v1562 = vmul.f32 %v1349, %v1546
        %v1563 = vmul.f32 %v1353, %v1546
        %v1564 = vmul.f32 %v1357, %v1546
        %v1565 = vmul.f32 %v1361, %v1546
        %v1566 = vmul.f32 %v1365, %v1546
        %v1567 = vmul.f32 %v1369, %v1546
        %v1568 = vmul.f32 %v1373, %v1546
        %v1569 = vmul.f32 %v1377, %v1546
        %v1570 = vmul.f32 %v1381, %v1546
        %v1571 = vmul.f32 %v1385, %v1546
        %v1572 = vmul.f32 %v1389, %v1546
        %v1573 = vmul.f32 %v1393, %v1546
        %v1574 = vmul.f32 %v1397, %v1546
        %v1575 = vmul.f32 %v1401, %v1546
        %v1576 = vmul.f32 %v1405, %v1546
        %v1577 = vmul.f32 %v1409, %v1546
        %v1578 = vmul.f32 %v1413, %v1546
        %v1579 = vmul.f32 %v1417, %v1546
        %v1580 = vmul.f32 %v1421, %v1546
        %v1581 = vmul.f32 %v1425, %v1546
        %v1582 = vmul.f32 %v1429, %v1546
        %v1583 = vmul.f32 %v1433, %v1546
        %v1584 = vmul.f32 %v1437, %v1546
        %v1585 = vmul.f32 %v1441, %v1546
        %v1586 = vmul.f32 %v1445, %v1546
        %v1587 = vmul.f32 %v1449, %v1546
        %v1588 = vmul.f32 %v1453, %v1546
        %v1589 = vmul.f32 %v1457, %v1546
        %v1590 = vmul.f32 %v1461, %v1546
        %v1591 = vmul.f32 %v1465, %v1546
        %v1592 = vmul.f32 %v1469, %v1546
        %v1593 = vmul.f32 %v1473, %v1546
        %v1594 = vmul.f32 %v1477, %v1546
        %v1595 = vmul.f32 %v1481, %v1546
        %v1596 = vmul.f32 %v1485, %v1546
        %v1597 = vmul.f32 %v1489, %v1546
        %v1598 = vmul.f32 %v1493, %v1546
        %v1599 = vmul.f32 %v1497, %v1546
        %v1600 = vmul.f32 %v1501, %v1546
        %v1601 = vmul.f32 %v1505, %v1546
        %v1602 = vmul.f32 %v1509, %v1546
        %v1603 = vmul.f32 %v1513, %v1546
        %v1604 = vmul.f32 %v1517, %v1546
        %v1605 = vmul.f32 %v1521, %v1546
        %v1606 = vmul.f32 %v1525, %v1546
        %v1607 = vmul.f32 %v1529, %v1546
        %v1608 = vmul.f32 %v1533, %v1546
        %v1609 = vmul.f32 %v1537, %v1546
        %v1610 = vmul.f32 %v1541, %v1546
        %v1611 = vadd.f32 %v1222, %v1547
        %v1612 = vadd.f32 %v1223, %v1548
        %v1613 = vadd.f32 %v1224, %v1549
        %v1614 = vadd.f32 %v1225, %v1550
        %v1615 = vadd.f32 %v1226, %v1551
        %v1616 = vadd.f32 %v1227, %v1552
        %v1617 = vadd.f32 %v1228, %v1553
        %v1618 = vadd.f32 %v1229, %v1554
        %v1619 = vadd.f32 %v1230, %v1555
        %v1620 = vadd.f32 %v1231, %v1556
        %v1621 = vadd.f32 %v1232, %v1557
        %v1622 = vadd.f32 %v1233, %v1558
        %v1623 = vadd.f32 %v1234, %v1559
        %v1624 = vadd.f32 %v1235, %v1560
        %v1625 = vadd.f32 %v1236, %v1561
        %v1626 = vadd.f32 %v1237, %v1562
        %v1627 = vadd.f32 %v1238, %v1563
        %v1628 = vadd.f32 %v1239, %v1564
        %v1629 = vadd.f32 %v1240, %v1565
        %v1630 = vadd.f32 %v1241, %v1566
        %v1631 = vadd.f32 %v1242, %v1567
        %v1632 = vadd.f32 %v1243, %v1568
        %v1633 = vadd.f32 %v1244, %v1569
        %v1634 = vadd.f32 %v1245, %v1570
        %v1635 = vadd.f32 %v1246, %v1571
        %v1636 = vadd.f32 %v1247, %v1572
        %v1637 = vadd.f32 %v1248, %v1573
        %v1638 = vadd.f32 %v1249, %v1574
        %v1639 = vadd.f32 %v1250, %v1575
        %v1640 = vadd.f32 %v1251, %v1576
        %v1641 = vadd.f32 %v1252, %v1577
        %v1642 = vadd.f32 %v1253, %v1578
        %v1643 = vadd.f32 %v1254, %v1579
        %v1644 = vadd.f32 %v1255, %v1580
        %v1645 = vadd.f32 %v1256, %v1581
        %v1646 = vadd.f32 %v1257, %v1582
        %v1647 = vadd.f32 %v1258, %v1583
        %v1648 = vadd.f32 %v1259, %v1584
        %v1649 = vadd.f32 %v1260, %v1585
        %v1650 = vadd.f32 %v1261, %v1586
        %v1651 = vadd.f32 %v1262, %v1587
        %v1652 = vadd.f32 %v1263, %v1588
        %v1653 = vadd.f32 %v1264, %v1589
        %v1654 = vadd.f32 %v1265, %v1590
        %v1655 = vadd.f32 %v1266, %v1591
        %v1656 = vadd.f32 %v1267, %v1592
        %v1657 = vadd.f32 %v1268, %v1593
        %v1658 = vadd.f32 %v1269, %v1594
        %v1659 = vadd.f32 %v1270, %v1595
        %v1660 = vadd.f32 %v1271, %v1596
        %v1661 = vadd.f32 %v1272, %v1597
        %v1662 = vadd.f32 %v1273, %v1598
        %v1663 = vadd.f32 %v1274, %v1599
        %v1664 = vadd.f32 %v1275, %v1600
        %v1665 = vadd.f32 %v1276, %v1601
        %v1666 = vadd.f32 %v1277, %v1602
        %v1667 = vadd.f32 %v1278, %v1603
        %v1668 = vadd.f32 %v1279, %v1604
        %v1669 = vadd.f32 %v1280, %v1605
        %v1670 = vadd.f32 %v1281, %v1606
        %v1671 = vadd.f32 %v1282, %v1607
        %v1672 = vadd.f32 %v1283, %v1608
        %v1673 = vadd.f32 %v1284, %v1609
        %v1674 = vadd.f32 %v1285, %v1610
        %v1675 = vld [vmem:[%s1 + $0x2] sm:$0x1]
        %1676 = vset.pattern.permute.xlu0 2
        %1677 = vperm.xlu0 %1676, %v833
        %v1678 = vpop.permute.xlu0 %1677
        %1680 = vset.pattern.permute.xlu0 2
        %1681 = vperm.xlu0 %1680, %v834
        %v1682 = vpop.permute.xlu0 %1681
        %1684 = vset.pattern.permute.xlu0 2
        %1685 = vperm.xlu0 %1684, %v835
        %v1686 = vpop.permute.xlu0 %1685
        %1688 = vset.pattern.permute.xlu0 2
        %1689 = vperm.xlu0 %1688, %v836
        %v1690 = vpop.permute.xlu0 %1689
        %1692 = vset.pattern.permute.xlu0 2
        %1693 = vperm.xlu0 %1692, %v837
        %v1694 = vpop.permute.xlu0 %1693
        %1696 = vset.pattern.permute.xlu0 2
        %1697 = vperm.xlu0 %1696, %v838
        %v1698 = vpop.permute.xlu0 %1697
        %1700 = vset.pattern.permute.xlu0 2
        %1701 = vperm.xlu0 %1700, %v839
        %v1702 = vpop.permute.xlu0 %1701
        %1704 = vset.pattern.permute.xlu0 2
        %1705 = vperm.xlu0 %1704, %v840
        %v1706 = vpop.permute.xlu0 %1705
        %1708 = vset.pattern.permute.xlu0 2
        %1709 = vperm.xlu0 %1708, %v841
        %v1710 = vpop.permute.xlu0 %1709
        %1712 = vset.pattern.permute.xlu0 2
        %1713 = vperm.xlu0 %1712, %v842
        %v1714 = vpop.permute.xlu0 %1713
        %1716 = vset.pattern.permute.xlu0 2
        %1717 = vperm.xlu0 %1716, %v843
        %v1718 = vpop.permute.xlu0 %1717
        %1720 = vset.pattern.permute.xlu0 2
        %1721 = vperm.xlu0 %1720, %v844
        %v1722 = vpop.permute.xlu0 %1721
        %1724 = vset.pattern.permute.xlu0 2
        %1725 = vperm.xlu0 %1724, %v845
        %v1726 = vpop.permute.xlu0 %1725
        %1728 = vset.pattern.permute.xlu0 2
        %1729 = vperm.xlu0 %1728, %v846
        %v1730 = vpop.permute.xlu0 %1729
        %1732 = vset.pattern.permute.xlu0 2
        %1733 = vperm.xlu0 %1732, %v847
        %v1734 = vpop.permute.xlu0 %1733
        %1736 = vset.pattern.permute.xlu0 2
        %1737 = vperm.xlu0 %1736, %v848
        %v1738 = vpop.permute.xlu0 %1737
        %1740 = vset.pattern.permute.xlu0 2
        %1741 = vperm.xlu0 %1740, %v849
        %v1742 = vpop.permute.xlu0 %1741
        %1744 = vset.pattern.permute.xlu0 2
        %1745 = vperm.xlu0 %1744, %v850
        %v1746 = vpop.permute.xlu0 %1745
        %1748 = vset.pattern.permute.xlu0 2
        %1749 = vperm.xlu0 %1748, %v851
        %v1750 = vpop.permute.xlu0 %1749
        %1752 = vset.pattern.permute.xlu0 2
        %1753 = vperm.xlu0 %1752, %v852
        %v1754 = vpop.permute.xlu0 %1753
        %1756 = vset.pattern.permute.xlu0 2
        %1757 = vperm.xlu0 %1756, %v853
        %v1758 = vpop.permute.xlu0 %1757
        %1760 = vset.pattern.permute.xlu0 2
        %1761 = vperm.xlu0 %1760, %v854
        %v1762 = vpop.permute.xlu0 %1761
        %1764 = vset.pattern.permute.xlu0 2
        %1765 = vperm.xlu0 %1764, %v855
        %v1766 = vpop.permute.xlu0 %1765
        %1768 = vset.pattern.permute.xlu0 2
        %1769 = vperm.xlu0 %1768, %v856
        %v1770 = vpop.permute.xlu0 %1769
        %1772 = vset.pattern.permute.xlu0 2
        %1773 = vperm.xlu0 %1772, %v857
        %v1774 = vpop.permute.xlu0 %1773
        %1776 = vset.pattern.permute.xlu0 2
        %1777 = vperm.xlu0 %1776, %v858
        %v1778 = vpop.permute.xlu0 %1777
        %1780 = vset.pattern.permute.xlu0 2
        %1781 = vperm.xlu0 %1780, %v859
        %v1782 = vpop.permute.xlu0 %1781
        %1784 = vset.pattern.permute.xlu0 2
        %1785 = vperm.xlu0 %1784, %v860
        %v1786 = vpop.permute.xlu0 %1785
        %1788 = vset.pattern.permute.xlu0 2
        %1789 = vperm.xlu0 %1788, %v861
        %v1790 = vpop.permute.xlu0 %1789
        %1792 = vset.pattern.permute.xlu0 2
        %1793 = vperm.xlu0 %1792, %v862
        %v1794 = vpop.permute.xlu0 %1793
        %1796 = vset.pattern.permute.xlu0 2
        %1797 = vperm.xlu0 %1796, %v863
        %v1798 = vpop.permute.xlu0 %1797
        %1800 = vset.pattern.permute.xlu0 2
        %1801 = vperm.xlu0 %1800, %v864
        %v1802 = vpop.permute.xlu0 %1801
        %1804 = vset.pattern.permute.xlu0 2
        %1805 = vperm.xlu0 %1804, %v865
        %v1806 = vpop.permute.xlu0 %1805
        %1808 = vset.pattern.permute.xlu0 2
        %1809 = vperm.xlu0 %1808, %v866
        %v1810 = vpop.permute.xlu0 %1809
        %1812 = vset.pattern.permute.xlu0 2
        %1813 = vperm.xlu0 %1812, %v867
        %v1814 = vpop.permute.xlu0 %1813
        %1816 = vset.pattern.permute.xlu0 2
        %1817 = vperm.xlu0 %1816, %v868
        %v1818 = vpop.permute.xlu0 %1817
        %1820 = vset.pattern.permute.xlu0 2
        %1821 = vperm.xlu0 %1820, %v869
        %v1822 = vpop.permute.xlu0 %1821
        %1824 = vset.pattern.permute.xlu0 2
        %1825 = vperm.xlu0 %1824, %v870
        %v1826 = vpop.permute.xlu0 %1825
        %1828 = vset.pattern.permute.xlu0 2
        %1829 = vperm.xlu0 %1828, %v871
        %v1830 = vpop.permute.xlu0 %1829
        %1832 = vset.pattern.permute.xlu0 2
        %1833 = vperm.xlu0 %1832, %v872
        %v1834 = vpop.permute.xlu0 %1833
        %1836 = vset.pattern.permute.xlu0 2
        %1837 = vperm.xlu0 %1836, %v873
        %v1838 = vpop.permute.xlu0 %1837
        %1840 = vset.pattern.permute.xlu0 2
        %1841 = vperm.xlu0 %1840, %v874
        %v1842 = vpop.permute.xlu0 %1841
        %1844 = vset.pattern.permute.xlu0 2
        %1845 = vperm.xlu0 %1844, %v875
        %v1846 = vpop.permute.xlu0 %1845
        %1848 = vset.pattern.permute.xlu0 2
        %1849 = vperm.xlu0 %1848, %v876
        %v1850 = vpop.permute.xlu0 %1849
        %1852 = vset.pattern.permute.xlu0 2
        %1853 = vperm.xlu0 %1852, %v877
        %v1854 = vpop.permute.xlu0 %1853
        %1856 = vset.pattern.permute.xlu0 2
        %1857 = vperm.xlu0 %1856, %v878
        %v1858 = vpop.permute.xlu0 %1857
        %1860 = vset.pattern.permute.xlu0 2
        %1861 = vperm.xlu0 %1860, %v879
        %v1862 = vpop.permute.xlu0 %1861
        %1864 = vset.pattern.permute.xlu0 2
        %1865 = vperm.xlu0 %1864, %v880
        %v1866 = vpop.permute.xlu0 %1865
        %1868 = vset.pattern.permute.xlu0 2
        %1869 = vperm.xlu0 %1868, %v881
        %v1870 = vpop.permute.xlu0 %1869
        %1872 = vset.pattern.permute.xlu0 2
        %1873 = vperm.xlu0 %1872, %v882
        %v1874 = vpop.permute.xlu0 %1873
        %1876 = vset.pattern.permute.xlu0 2
        %1877 = vperm.xlu0 %1876, %v883
        %v1878 = vpop.permute.xlu0 %1877
        %1880 = vset.pattern.permute.xlu0 2
        %1881 = vperm.xlu0 %1880, %v884
        %v1882 = vpop.permute.xlu0 %1881
        %1884 = vset.pattern.permute.xlu0 2
        %1885 = vperm.xlu0 %1884, %v885
        %v1886 = vpop.permute.xlu0 %1885
        %1888 = vset.pattern.permute.xlu0 2
        %1889 = vperm.xlu0 %1888, %v886
        %v1890 = vpop.permute.xlu0 %1889
        %1892 = vset.pattern.permute.xlu0 2
        %1893 = vperm.xlu0 %1892, %v887
        %v1894 = vpop.permute.xlu0 %1893
        %1896 = vset.pattern.permute.xlu0 2
        %1897 = vperm.xlu0 %1896, %v888
        %v1898 = vpop.permute.xlu0 %1897
        %1900 = vset.pattern.permute.xlu0 2
        %1901 = vperm.xlu0 %1900, %v889
        %v1902 = vpop.permute.xlu0 %1901
        %1904 = vset.pattern.permute.xlu0 2
        %1905 = vperm.xlu0 %1904, %v890
        %v1906 = vpop.permute.xlu0 %1905
        %1908 = vset.pattern.permute.xlu0 2
        %1909 = vperm.xlu0 %1908, %v891
        %v1910 = vpop.permute.xlu0 %1909
        %1912 = vset.pattern.permute.xlu0 2
        %1913 = vperm.xlu0 %1912, %v892
        %v1914 = vpop.permute.xlu0 %1913
        %1916 = vset.pattern.permute.xlu0 2
        %1917 = vperm.xlu0 %1916, %v893
        %v1918 = vpop.permute.xlu0 %1917
        %1920 = vset.pattern.permute.xlu0 2
        %1921 = vperm.xlu0 %1920, %v894
        %v1922 = vpop.permute.xlu0 %1921
        %1924 = vset.pattern.permute.xlu0 2
        %1925 = vperm.xlu0 %1924, %v895
        %v1926 = vpop.permute.xlu0 %1925
        %1928 = vset.pattern.permute.xlu0 2
        %1929 = vperm.xlu0 %1928, %v896
        %v1930 = vpop.permute.xlu0 %1929
        %v1932 = vlaneseq
        %v1933 = vshrl.u32 %v1932, 7
        %v1934 = vsub.s32 0, %v1933
        %v1935 = vrot.slane %v1675, %v1934
        %v1936 = vmul.f32 %v1678, %v1935
        %v1937 = vmul.f32 %v1682, %v1935
        %v1938 = vmul.f32 %v1686, %v1935
        %v1939 = vmul.f32 %v1690, %v1935
        %v1940 = vmul.f32 %v1694, %v1935
        %v1941 = vmul.f32 %v1698, %v1935
        %v1942 = vmul.f32 %v1702, %v1935
        %v1943 = vmul.f32 %v1706, %v1935
        %v1944 = vmul.f32 %v1710, %v1935
        %v1945 = vmul.f32 %v1714, %v1935
        %v1946 = vmul.f32 %v1718, %v1935
        %v1947 = vmul.f32 %v1722, %v1935
        %v1948 = vmul.f32 %v1726, %v1935
        %v1949 = vmul.f32 %v1730, %v1935
        %v1950 = vmul.f32 %v1734, %v1935
        %v1951 = vmul.f32 %v1738, %v1935
        %v1952 = vmul.f32 %v1742, %v1935
        %v1953 = vmul.f32 %v1746, %v1935
        %v1954 = vmul.f32 %v1750, %v1935
        %v1955 = vmul.f32 %v1754, %v1935
        %v1956 = vmul.f32 %v1758, %v1935
        %v1957 = vmul.f32 %v1762, %v1935
        %v1958 = vmul.f32 %v1766, %v1935
        %v1959 = vmul.f32 %v1770, %v1935
        %v1960 = vmul.f32 %v1774, %v1935
        %v1961 = vmul.f32 %v1778, %v1935
        %v1962 = vmul.f32 %v1782, %v1935
        %v1963 = vmul.f32 %v1786, %v1935
        %v1964 = vmul.f32 %v1790, %v1935
        %v1965 = vmul.f32 %v1794, %v1935
        %v1966 = vmul.f32 %v1798, %v1935
        %v1967 = vmul.f32 %v1802, %v1935
        %v1968 = vmul.f32 %v1806, %v1935
        %v1969 = vmul.f32 %v1810, %v1935
        %v1970 = vmul.f32 %v1814, %v1935
        %v1971 = vmul.f32 %v1818, %v1935
        %v1972 = vmul.f32 %v1822, %v1935
        %v1973 = vmul.f32 %v1826, %v1935
        %v1974 = vmul.f32 %v1830, %v1935
        %v1975 = vmul.f32 %v1834, %v1935
        %v1976 = vmul.f32 %v1838, %v1935
        %v1977 = vmul.f32 %v1842, %v1935
        %v1978 = vmul.f32 %v1846, %v1935
        %v1979 = vmul.f32 %v1850, %v1935
        %v1980 = vmul.f32 %v1854, %v1935
        %v1981 = vmul.f32 %v1858, %v1935
        %v1982 = vmul.f32 %v1862, %v1935
        %v1983 = vmul.f32 %v1866, %v1935
        %v1984 = vmul.f32 %v1870, %v1935
        %v1985 = vmul.f32 %v1874, %v1935
        %v1986 = vmul.f32 %v1878, %v1935
        %v1987 = vmul.f32 %v1882, %v1935
        %v1988 = vmul.f32 %v1886, %v1935
        %v1989 = vmul.f32 %v1890, %v1935
        %v1990 = vmul.f32 %v1894, %v1935
        %v1991 = vmul.f32 %v1898, %v1935
        %v1992 = vmul.f32 %v1902, %v1935
        %v1993 = vmul.f32 %v1906, %v1935
        %v1994 = vmul.f32 %v1910, %v1935
        %v1995 = vmul.f32 %v1914, %v1935
        %v1996 = vmul.f32 %v1918, %v1935
        %v1997 = vmul.f32 %v1922, %v1935
        %v1998 = vmul.f32 %v1926, %v1935
        %v1999 = vmul.f32 %v1930, %v1935
        %v2000 = vadd.f32 %v1611, %v1936
        %v2001 = vadd.f32 %v1612, %v1937
        %v2002 = vadd.f32 %v1613, %v1938
        %v2003 = vadd.f32 %v1614, %v1939
        %v2004 = vadd.f32 %v1615, %v1940
        %v2005 = vadd.f32 %v1616, %v1941
        %v2006 = vadd.f32 %v1617, %v1942
        %v2007 = vadd.f32 %v1618, %v1943
        %v2008 = vadd.f32 %v1619, %v1944
        %v2009 = vadd.f32 %v1620, %v1945
        %v2010 = vadd.f32 %v1621, %v1946
        %v2011 = vadd.f32 %v1622, %v1947
        %v2012 = vadd.f32 %v1623, %v1948
        %v2013 = vadd.f32 %v1624, %v1949
        %v2014 = vadd.f32 %v1625, %v1950
        %v2015 = vadd.f32 %v1626, %v1951
        %v2016 = vadd.f32 %v1627, %v1952
        %v2017 = vadd.f32 %v1628, %v1953
        %v2018 = vadd.f32 %v1629, %v1954
        %v2019 = vadd.f32 %v1630, %v1955
        %v2020 = vadd.f32 %v1631, %v1956
        %v2021 = vadd.f32 %v1632, %v1957
        %v2022 = vadd.f32 %v1633, %v1958
        %v2023 = vadd.f32 %v1634, %v1959
        %v2024 = vadd.f32 %v1635, %v1960
        %v2025 = vadd.f32 %v1636, %v1961
        %v2026 = vadd.f32 %v1637, %v1962
        %v2027 = vadd.f32 %v1638, %v1963
        %v2028 = vadd.f32 %v1639, %v1964
        %v2029 = vadd.f32 %v1640, %v1965
        %v2030 = vadd.f32 %v1641, %v1966
        %v2031 = vadd.f32 %v1642, %v1967
        %v2032 = vadd.f32 %v1643, %v1968
        %v2033 = vadd.f32 %v1644, %v1969
        %v2034 = vadd.f32 %v1645, %v1970
        %v2035 = vadd.f32 %v1646, %v1971
        %v2036 = vadd.f32 %v1647, %v1972
        %v2037 = vadd.f32 %v1648, %v1973
        %v2038 = vadd.f32 %v1649, %v1974
        %v2039 = vadd.f32 %v1650, %v1975
        %v2040 = vadd.f32 %v1651, %v1976
        %v2041 = vadd.f32 %v1652, %v1977
        %v2042 = vadd.f32 %v1653, %v1978
        %v2043 = vadd.f32 %v1654, %v1979
        %v2044 = vadd.f32 %v1655, %v1980
        %v2045 = vadd.f32 %v1656, %v1981
        %v2046 = vadd.f32 %v1657, %v1982
        %v2047 = vadd.f32 %v1658, %v1983
        %v2048 = vadd.f32 %v1659, %v1984
        %v2049 = vadd.f32 %v1660, %v1985
        %v2050 = vadd.f32 %v1661, %v1986
        %v2051 = vadd.f32 %v1662, %v1987
        %v2052 = vadd.f32 %v1663, %v1988
        %v2053 = vadd.f32 %v1664, %v1989
        %v2054 = vadd.f32 %v1665, %v1990
        %v2055 = vadd.f32 %v1666, %v1991
        %v2056 = vadd.f32 %v1667, %v1992
        %v2057 = vadd.f32 %v1668, %v1993
        %v2058 = vadd.f32 %v1669, %v1994
        %v2059 = vadd.f32 %v1670, %v1995
        %v2060 = vadd.f32 %v1671, %v1996
        %v2061 = vadd.f32 %v1672, %v1997
        %v2062 = vadd.f32 %v1673, %v1998
        %v2063 = vadd.f32 %v1674, %v1999
        %v2064 = vld [vmem:[%s2] sm:$0x1]
        %v2066 = vlaneseq
        %v2067 = vshrl.u32 %v2066, 7
        %v2068 = vsub.s32 0, %v2067
        %v2069 = vrot.slane %v2064, %v2068
        %v2071 = vadd.f32 %v2000, %v2069
        %v2072 = vadd.f32 %v2001, %v2069
        %v2073 = vadd.f32 %v2002, %v2069
        %v2074 = vadd.f32 %v2003, %v2069
        %v2075 = vadd.f32 %v2004, %v2069
        %v2076 = vadd.f32 %v2005, %v2069
        %v2077 = vadd.f32 %v2006, %v2069
        %v2078 = vadd.f32 %v2007, %v2069
        %v2079 = vadd.f32 %v2008, %v2069
        %v2080 = vadd.f32 %v2009, %v2069
        %v2081 = vadd.f32 %v2010, %v2069
        %v2082 = vadd.f32 %v2011, %v2069
        %v2083 = vadd.f32 %v2012, %v2069
        %v2084 = vadd.f32 %v2013, %v2069
        %v2085 = vadd.f32 %v2014, %v2069
        %v2086 = vadd.f32 %v2015, %v2069
        %v2087 = vadd.f32 %v2016, %v2069
        %v2088 = vadd.f32 %v2017, %v2069
        %v2089 = vadd.f32 %v2018, %v2069
        %v2090 = vadd.f32 %v2019, %v2069
        %v2091 = vadd.f32 %v2020, %v2069
        %v2092 = vadd.f32 %v2021, %v2069
        %v2093 = vadd.f32 %v2022, %v2069
        %v2094 = vadd.f32 %v2023, %v2069
        %v2095 = vadd.f32 %v2024, %v2069
        %v2096 = vadd.f32 %v2025, %v2069
        %v2097 = vadd.f32 %v2026, %v2069
        %v2098 = vadd.f32 %v2027, %v2069
        %v2099 = vadd.f32 %v2028, %v2069
        %v2100 = vadd.f32 %v2029, %v2069
        %v2101 = vadd.f32 %v2030, %v2069
        %v2102 = vadd.f32 %v2031, %v2069
        %v2103 = vadd.f32 %v2032, %v2069
        %v2104 = vadd.f32 %v2033, %v2069
        %v2105 = vadd.f32 %v2034, %v2069
        %v2106 = vadd.f32 %v2035, %v2069
        %v2107 = vadd.f32 %v2036, %v2069
        %v2108 = vadd.f32 %v2037, %v2069
        %v2109 = vadd.f32 %v2038, %v2069
        %v2110 = vadd.f32 %v2039, %v2069
        %v2111 = vadd.f32 %v2040, %v2069
        %v2112 = vadd.f32 %v2041, %v2069
        %v2113 = vadd.f32 %v2042, %v2069
        %v2114 = vadd.f32 %v2043, %v2069
        %v2115 = vadd.f32 %v2044, %v2069
        %v2116 = vadd.f32 %v2045, %v2069
        %v2117 = vadd.f32 %v2046, %v2069
        %v2118 = vadd.f32 %v2047, %v2069
        %v2119 = vadd.f32 %v2048, %v2069
        %v2120 = vadd.f32 %v2049, %v2069
        %v2121 = vadd.f32 %v2050, %v2069
        %v2122 = vadd.f32 %v2051, %v2069
        %v2123 = vadd.f32 %v2052, %v2069
        %v2124 = vadd.f32 %v2053, %v2069
        %v2125 = vadd.f32 %v2054, %v2069
        %v2126 = vadd.f32 %v2055, %v2069
        %v2127 = vadd.f32 %v2056, %v2069
        %v2128 = vadd.f32 %v2057, %v2069
        %v2129 = vadd.f32 %v2058, %v2069
        %v2130 = vadd.f32 %v2059, %v2069
        %v2131 = vadd.f32 %v2060, %v2069
        %v2132 = vadd.f32 %v2061, %v2069
        %v2133 = vadd.f32 %v2062, %v2069
        %v2134 = vadd.f32 %v2063, %v2069
        %v2135 = vmax.f32 %v2071, 0.0
        %v2136 = vmax.f32 %v2072, 0.0
        %v2137 = vmax.f32 %v2073, 0.0
        %v2138 = vmax.f32 %v2074, 0.0
        %v2139 = vmax.f32 %v2075, 0.0
        %v2140 = vmax.f32 %v2076, 0.0
        %v2141 = vmax.f32 %v2077, 0.0
        %v2142 = vmax.f32 %v2078, 0.0
        %v2143 = vmax.f32 %v2079, 0.0
        %v2144 = vmax.f32 %v2080, 0.0
        %v2145 = vmax.f32 %v2081, 0.0
        %v2146 = vmax.f32 %v2082, 0.0
        %v2147 = vmax.f32 %v2083, 0.0
        %v2148 = vmax.f32 %v2084, 0.0
        %v2149 = vmax.f32 %v2085, 0.0
        %v2150 = vmax.f32 %v2086, 0.0
        %v2151 = vmax.f32 %v2087, 0.0
        %v2152 = vmax.f32 %v2088, 0.0
        %v2153 = vmax.f32 %v2089, 0.0
        %v2154 = vmax.f32 %v2090, 0.0
        %v2155 = vmax.f32 %v2091, 0.0
        %v2156 = vmax.f32 %v2092, 0.0
        %v2157 = vmax.f32 %v2093, 0.0
        %v2158 = vmax.f32 %v2094, 0.0
        %v2159 = vmax.f32 %v2095, 0.0
        %v2160 = vmax.f32 %v2096, 0.0
        %v2161 = vmax.f32 %v2097, 0.0
        %v2162 = vmax.f32 %v2098, 0.0
        %v2163 = vmax.f32 %v2099, 0.0
        %v2164 = vmax.f32 %v2100, 0.0
        %v2165 = vmax.f32 %v2101, 0.0
        %v2166 = vmax.f32 %v2102, 0.0
        %v2167 = vmax.f32 %v2103, 0.0
        %v2168 = vmax.f32 %v2104, 0.0
        %v2169 = vmax.f32 %v2105, 0.0
        %v2170 = vmax.f32 %v2106, 0.0
        %v2171 = vmax.f32 %v2107, 0.0
        %v2172 = vmax.f32 %v2108, 0.0
        %v2173 = vmax.f32 %v2109, 0.0
        %v2174 = vmax.f32 %v2110, 0.0
        %v2175 = vmax.f32 %v2111, 0.0
        %v2176 = vmax.f32 %v2112, 0.0
        %v2177 = vmax.f32 %v2113, 0.0
        %v2178 = vmax.f32 %v2114, 0.0
        %v2179 = vmax.f32 %v2115, 0.0
        %v2180 = vmax.f32 %v2116, 0.0
        %v2181 = vmax.f32 %v2117, 0.0
        %v2182 = vmax.f32 %v2118, 0.0
        %v2183 = vmax.f32 %v2119, 0.0
        %v2184 = vmax.f32 %v2120, 0.0
        %v2185 = vmax.f32 %v2121, 0.0
        %v2186 = vmax.f32 %v2122, 0.0
        %v2187 = vmax.f32 %v2123, 0.0
        %v2188 = vmax.f32 %v2124, 0.0
        %v2189 = vmax.f32 %v2125, 0.0
        %v2190 = vmax.f32 %v2126, 0.0
        %v2191 = vmax.f32 %v2127, 0.0
        %v2192 = vmax.f32 %v2128, 0.0
        %v2193 = vmax.f32 %v2129, 0.0
        %v2194 = vmax.f32 %v2130, 0.0
        %v2195 = vmax.f32 %v2131, 0.0
        %v2196 = vmax.f32 %v2132, 0.0
        %v2197 = vmax.f32 %v2133, 0.0
        %v2198 = vmax.f32 %v2134, 0.0
        %v2199 = vmax.f32 %v2135, %v2136
        %v2200 = vmax.f32 %v2137, %v2138
        %v2201 = vmax.f32 %v2139, %v2140
        %v2202 = vmax.f32 %v2141, %v2142
        %v2203 = vmax.f32 %v2143, %v2144
        %v2204 = vmax.f32 %v2145, %v2146
        %v2205 = vmax.f32 %v2147, %v2148
        %v2206 = vmax.f32 %v2149, %v2150
        %v2207 = vmax.f32 %v2151, %v2152
        %v2208 = vmax.f32 %v2153, %v2154
        %v2209 = vmax.f32 %v2155, %v2156
        %v2210 = vmax.f32 %v2157, %v2158
        %v2211 = vmax.f32 %v2159, %v2160
        %v2212 = vmax.f32 %v2161, %v2162
        %v2213 = vmax.f32 %v2163, %v2164
        %v2214 = vmax.f32 %v2165, %v2166
        %v2215 = vmax.f32 %v2167, %v2168
        %v2216 = vmax.f32 %v2169, %v2170
        %v2217 = vmax.f32 %v2171, %v2172
        %v2218 = vmax.f32 %v2173, %v2174
        %v2219 = vmax.f32 %v2175, %v2176
        %v2220 = vmax.f32 %v2177, %v2178
        %v2221 = vmax.f32 %v2179, %v2180
        %v2222 = vmax.f32 %v2181, %v2182
        %v2223 = vmax.f32 %v2183, %v2184
        %v2224 = vmax.f32 %v2185, %v2186
        %v2225 = vmax.f32 %v2187, %v2188
        %v2226 = vmax.f32 %v2189, %v2190
        %v2227 = vmax.f32 %v2191, %v2192
        %v2228 = vmax.f32 %v2193, %v2194
        %v2229 = vmax.f32 %v2195, %v2196
        %v2230 = vmax.f32 %v2197, %v2198
        %2263 = vrot.lane.b32.xlu0 %v2199, 16
        %v2264 = vpop.permute.xlu0 %2263
        %2265 = vrot.lane.b32.xlu0 %v2200, 16
        %v2266 = vpop.permute.xlu0 %2265
        %2267 = vrot.lane.b32.xlu0 %v2201, 16
        %v2268 = vpop.permute.xlu0 %2267
        %2269 = vrot.lane.b32.xlu0 %v2202, 16
        %v2270 = vpop.permute.xlu0 %2269
        %2271 = vrot.lane.b32.xlu0 %v2203, 16
        %v2272 = vpop.permute.xlu0 %2271
        %2273 = vrot.lane.b32.xlu0 %v2204, 16
        %v2274 = vpop.permute.xlu0 %2273
        %2275 = vrot.lane.b32.xlu0 %v2205, 16
        %v2276 = vpop.permute.xlu0 %2275
        %2277 = vrot.lane.b32.xlu0 %v2206, 16
        %v2278 = vpop.permute.xlu0 %2277
        %2279 = vrot.lane.b32.xlu0 %v2207, 16
        %v2280 = vpop.permute.xlu0 %2279
        %2281 = vrot.lane.b32.xlu0 %v2208, 16
        %v2282 = vpop.permute.xlu0 %2281
        %2283 = vrot.lane.b32.xlu0 %v2209, 16
        %v2284 = vpop.permute.xlu0 %2283
        %2285 = vrot.lane.b32.xlu0 %v2210, 16
        %v2286 = vpop.permute.xlu0 %2285
        %2287 = vrot.lane.b32.xlu0 %v2211, 16
        %v2288 = vpop.permute.xlu0 %2287
        %2289 = vrot.lane.b32.xlu0 %v2212, 16
        %v2290 = vpop.permute.xlu0 %2289
        %2291 = vrot.lane.b32.xlu0 %v2213, 16
        %v2292 = vpop.permute.xlu0 %2291
        %2293 = vrot.lane.b32.xlu0 %v2214, 16
        %v2294 = vpop.permute.xlu0 %2293
        %2295 = vrot.lane.b32.xlu0 %v2215, 16
        %v2296 = vpop.permute.xlu0 %2295
        %2297 = vrot.lane.b32.xlu0 %v2216, 16
        %v2298 = vpop.permute.xlu0 %2297
        %2299 = vrot.lane.b32.xlu0 %v2217, 16
        %v2300 = vpop.permute.xlu0 %2299
        %2301 = vrot.lane.b32.xlu0 %v2218, 16
        %v2302 = vpop.permute.xlu0 %2301
        %2303 = vrot.lane.b32.xlu0 %v2219, 16
        %v2304 = vpop.permute.xlu0 %2303
        %2305 = vrot.lane.b32.xlu0 %v2220, 16
        %v2306 = vpop.permute.xlu0 %2305
        %2307 = vrot.lane.b32.xlu0 %v2221, 16
        %v2308 = vpop.permute.xlu0 %2307
        %2309 = vrot.lane.b32.xlu0 %v2222, 16
        %v2310 = vpop.permute.xlu0 %2309
        %2311 = vrot.lane.b32.xlu0 %v2223, 16
        %v2312 = vpop.permute.xlu0 %2311
        %2313 = vrot.lane.b32.xlu0 %v2224, 16
        %v2314 = vpop.permute.xlu0 %2313
        %2315 = vrot.lane.b32.xlu0 %v2225, 16
        %v2316 = vpop.permute.xlu0 %2315
        %2317 = vrot.lane.b32.xlu0 %v2226, 16
        %v2318 = vpop.permute.xlu0 %2317
        %2319 = vrot.lane.b32.xlu0 %v2227, 16
        %v2320 = vpop.permute.xlu0 %2319
        %2321 = vrot.lane.b32.xlu0 %v2228, 16
        %v2322 = vpop.permute.xlu0 %2321
        %2323 = vrot.lane.b32.xlu0 %v2229, 16
        %v2324 = vpop.permute.xlu0 %2323
        %2325 = vrot.lane.b32.xlu0 %v2230, 16
        %v2326 = vpop.permute.xlu0 %2325
        %2360 = vrot.lane.b32.xlu0 %v2200, 32
        %v2361 = vpop.permute.xlu0 %2360
        %2362 = vrot.lane.b32.xlu0 %v2201, 32
        %v2363 = vpop.permute.xlu0 %2362
        %2364 = vrot.lane.b32.xlu0 %v2202, 32
        %v2365 = vpop.permute.xlu0 %2364
        %2366 = vrot.lane.b32.xlu0 %v2203, 32
        %v2367 = vpop.permute.xlu0 %2366
        %2368 = vrot.lane.b32.xlu0 %v2204, 32
        %v2369 = vpop.permute.xlu0 %2368
        %2370 = vrot.lane.b32.xlu0 %v2205, 32
        %v2371 = vpop.permute.xlu0 %2370
        %2372 = vrot.lane.b32.xlu0 %v2206, 32
        %v2373 = vpop.permute.xlu0 %2372
        %2374 = vrot.lane.b32.xlu0 %v2207, 32
        %v2375 = vpop.permute.xlu0 %2374
        %2376 = vrot.lane.b32.xlu0 %v2208, 32
        %v2377 = vpop.permute.xlu0 %2376
        %2378 = vrot.lane.b32.xlu0 %v2209, 32
        %v2379 = vpop.permute.xlu0 %2378
        %2380 = vrot.lane.b32.xlu0 %v2210, 32
        %v2381 = vpop.permute.xlu0 %2380
        %2382 = vrot.lane.b32.xlu0 %v2211, 32
        %v2383 = vpop.permute.xlu0 %2382
        %2384 = vrot.lane.b32.xlu0 %v2212, 32
        %v2385 = vpop.permute.xlu0 %2384
        %2386 = vrot.lane.b32.xlu0 %v2213, 32
        %v2387 = vpop.permute.xlu0 %2386
        %2388 = vrot.lane.b32.xlu0 %v2214, 32
        %v2389 = vpop.permute.xlu0 %2388
        %2390 = vrot.lane.b32.xlu0 %v2215, 32
        %v2391 = vpop.permute.xlu0 %2390
        %2392 = vrot.lane.b32.xlu0 %v2216, 32
        %v2393 = vpop.permute.xlu0 %2392
        %2394 = vrot.lane.b32.xlu0 %v2217, 32
        %v2395 = vpop.permute.xlu0 %2394
        %2396 = vrot.lane.b32.xlu0 %v2218, 32
        %v2397 = vpop.permute.xlu0 %2396
        %2398 = vrot.lane.b32.xlu0 %v2219, 32
        %v2399 = vpop.permute.xlu0 %2398
        %2400 = vrot.lane.b32.xlu0 %v2220, 32
        %v2401 = vpop.permute.xlu0 %2400
        %2402 = vrot.lane.b32.xlu0 %v2221, 32
        %v2403 = vpop.permute.xlu0 %2402
        %2404 = vrot.lane.b32.xlu0 %v2222, 32
        %v2405 = vpop.permute.xlu0 %2404
        %2406 = vrot.lane.b32.xlu0 %v2223, 32
        %v2407 = vpop.permute.xlu0 %2406
        %2408 = vrot.lane.b32.xlu0 %v2224, 32
        %v2409 = vpop.permute.xlu0 %2408
        %2410 = vrot.lane.b32.xlu0 %v2225, 32
        %v2411 = vpop.permute.xlu0 %2410
        %2412 = vrot.lane.b32.xlu0 %v2226, 32
        %v2413 = vpop.permute.xlu0 %2412
        %2414 = vrot.lane.b32.xlu0 %v2227, 32
        %v2415 = vpop.permute.xlu0 %2414
        %2416 = vrot.lane.b32.xlu0 %v2228, 32
        %v2417 = vpop.permute.xlu0 %2416
        %2418 = vrot.lane.b32.xlu0 %v2229, 32
        %v2419 = vpop.permute.xlu0 %2418
        %2420 = vrot.lane.b32.xlu0 %v2230, 32
        %v2421 = vpop.permute.xlu0 %2420
        %2422 = vrot.lane.b32.xlu0 0.0, 32
        %v2423 = vpop.permute.xlu0 %2422
        %vm2456 = vcmask 130048
        %v2457 = vsel %vm2456, 0.0, %v2264
        %v2458 = vsel %vm2456, %v2199, %v2266
        %v2459 = vsel %vm2456, %v2200, %v2268
        %v2460 = vsel %vm2456, %v2201, %v2270
        %v2461 = vsel %vm2456, %v2202, %v2272
        %v2462 = vsel %vm2456, %v2203, %v2274
        %v2463 = vsel %vm2456, %v2204, %v2276
        %v2464 = vsel %vm2456, %v2205, %v2278
        %v2465 = vsel %vm2456, %v2206, %v2280
        %v2466 = vsel %vm2456, %v2207, %v2282
        %v2467 = vsel %vm2456, %v2208, %v2284
        %v2468 = vsel %vm2456, %v2209, %v2286
        %v2469 = vsel %vm2456, %v2210, %v2288
        %v2470 = vsel %vm2456, %v2211, %v2290
        %v2471 = vsel %vm2456, %v2212, %v2292
        %v2472 = vsel %vm2456, %v2213, %v2294
        %v2473 = vsel %vm2456, %v2214, %v2296
        %v2474 = vsel %vm2456, %v2215, %v2298
        %v2475 = vsel %vm2456, %v2216, %v2300
        %v2476 = vsel %vm2456, %v2217, %v2302
        %v2477 = vsel %vm2456, %v2218, %v2304
        %v2478 = vsel %vm2456, %v2219, %v2306
        %v2479 = vsel %vm2456, %v2220, %v2308
        %v2480 = vsel %vm2456, %v2221, %v2310
        %v2481 = vsel %vm2456, %v2222, %v2312
        %v2482 = vsel %vm2456, %v2223, %v2314
        %v2483 = vsel %vm2456, %v2224, %v2316
        %v2484 = vsel %vm2456, %v2225, %v2318
        %v2485 = vsel %vm2456, %v2226, %v2320
        %v2486 = vsel %vm2456, %v2227, %v2322
        %v2487 = vsel %vm2456, %v2228, %v2324
        %v2488 = vsel %vm2456, %v2229, %v2326
        %vm2489 = vcmask 261120
        %v2490 = vsel %vm2489, %v2457, %v2361
        %v2491 = vsel %vm2489, %v2458, %v2363
        %v2492 = vsel %vm2489, %v2459, %v2365
        %v2493 = vsel %vm2489, %v2460, %v2367
        %v2494 = vsel %vm2489, %v2461, %v2369
        %v2495 = vsel %vm2489, %v2462, %v2371
        %v2496 = vsel %vm2489, %v2463, %v2373
        %v2497 = vsel %vm2489, %v2464, %v2375
        %v2498 = vsel %vm2489, %v2465, %v2377
        %v2499 = vsel %vm2489, %v2466, %v2379
        %v2500 = vsel %vm2489, %v2467, %v2381
        %v2501 = vsel %vm2489, %v2468, %v2383
        %v2502 = vsel %vm2489, %v2469, %v2385
        %v2503 = vsel %vm2489, %v2470, %v2387
        %v2504 = vsel %vm2489, %v2471, %v2389
        %v2505 = vsel %vm2489, %v2472, %v2391
        %v2506 = vsel %vm2489, %v2473, %v2393
        %v2507 = vsel %vm2489, %v2474, %v2395
        %v2508 = vsel %vm2489, %v2475, %v2397
        %v2509 = vsel %vm2489, %v2476, %v2399
        %v2510 = vsel %vm2489, %v2477, %v2401
        %v2511 = vsel %vm2489, %v2478, %v2403
        %v2512 = vsel %vm2489, %v2479, %v2405
        %v2513 = vsel %vm2489, %v2480, %v2407
        %v2514 = vsel %vm2489, %v2481, %v2409
        %v2515 = vsel %vm2489, %v2482, %v2411
        %v2516 = vsel %vm2489, %v2483, %v2413
        %v2517 = vsel %vm2489, %v2484, %v2415
        %v2518 = vsel %vm2489, %v2485, %v2417
        %v2519 = vsel %vm2489, %v2486, %v2419
        %v2520 = vsel %vm2489, %v2487, %v2421
        %v2521 = vsel %vm2489, %v2488, %v2423
        %v2522 = vld [vmem:[%s3] sm:$0xff]
        %v2523 = vld [vmem:[%s3 + $0x8] sm:$0xff]
        %v2524 = vld [vmem:[%s3 + $0x10] sm:$0xff]
        %v2525 = vld [vmem:[%s3 + $0x18] sm:$0xff]
        %v2526 = vld [vmem:[%s3 + $0x20] sm:$0xff]
        %v2527 = vld [vmem:[%s3 + $0x28] sm:$0xff]
        %v2528 = vld [vmem:[%s4] sm:$0x1]
        %v2530 = vlaneseq
        %v2531 = vshrl.u32 %v2530, 7
        %v2532 = vsub.s32 0, %v2531
        %v2533 = vrot.slane %v2528, %v2532
        %vm2535 = vcmask 392192
        %v2537 = vsel %vm2535, %v2490, 0
        %v2540 = vsel %vm2535, %v2491, 0
        %v2543 = vsel %vm2535, %v2492, 0
        %v2546 = vsel %vm2535, %v2493, 0
        %v2549 = vsel %vm2535, %v2494, 0
        %v2552 = vsel %vm2535, %v2495, 0
        %v2555 = vsel %vm2535, %v2496, 0
        %v2558 = vsel %vm2535, %v2497, 0
        %v2561 = vsel %vm2535, %v2498, 0
        %v2564 = vsel %vm2535, %v2499, 0
        %v2567 = vsel %vm2535, %v2500, 0
        %v2570 = vsel %vm2535, %v2501, 0
        %v2573 = vsel %vm2535, %v2502, 0
        %v2576 = vsel %vm2535, %v2503, 0
        %v2579 = vsel %vm2535, %v2504, 0
        %v2582 = vsel %vm2535, %v2505, 0
        %v2585 = vsel %vm2535, %v2506, 0
        %v2588 = vsel %vm2535, %v2507, 0
        %v2591 = vsel %vm2535, %v2508, 0
        %v2594 = vsel %vm2535, %v2509, 0
        %v2597 = vsel %vm2535, %v2510, 0
        %v2600 = vsel %vm2535, %v2511, 0
        %v2603 = vsel %vm2535, %v2512, 0
        %v2606 = vsel %vm2535, %v2513, 0
        %v2609 = vsel %vm2535, %v2514, 0
        %v2612 = vsel %vm2535, %v2515, 0
        %v2615 = vsel %vm2535, %v2516, 0
        %v2618 = vsel %vm2535, %v2517, 0
        %v2621 = vsel %vm2535, %v2518, 0
        %v2624 = vsel %vm2535, %v2519, 0
        %v2627 = vsel %vm2535, %v2520, 0
        %v2630 = vsel %vm2535, %v2521, 0
        %2632 = vmatprep.subr.mxu0 0.0
        %2633 = vmatpush1.msra.mxu0 %v2522
        %2634 = vmatprep.subr.mxu0 0.0
        %2635 = vmatpush1.msra.mxu0 %v2523
        %2636 = vmatprep.subr.mxu0 0.0
        %2637 = vmatpush1.msra.mxu0 %v2524
        %2638 = vmatprep.subr.mxu0 0.0
        %2639 = vmatpush1.msra.mxu0 %v2525
        %2640 = vmatprep.subr.mxu0 0.0
        %2641 = vmatpush1.msra.mxu0 %v2526
        %2642 = vmatprep.subr.mxu0 0.0
        %2643 = vmatpush1.msra.mxu0 %v2527
        %2644 = vmatprep.subr.mxu0 0.0
        %2645 = vmatpush1.msra.mxu0 0.0
        %2646 = vmatprep.subr.mxu0 0.0
        %2647 = vmatpush1.msra.mxu0 0.0
        %2648 = vmatprep.subr.mxu0 0.0
        %2649 = vmatpush1.msra.mxu0 0.0
        %2650 = vmatprep.subr.mxu0 0.0
        %2651 = vmatpush1.msra.mxu0 0.0
        %2652 = vmatprep.subr.mxu0 0.0
        %2653 = vmatpush1.msra.mxu0 0.0
        %2654 = vmatprep.subr.mxu0 0.0
        %2655 = vmatpush1.msra.mxu0 0.0
        %2656 = vmatprep.subr.mxu0 0.0
        %2657 = vmatpush1.msra.mxu0 0.0
        %2658 = vmatprep.subr.mxu0 0.0
        %2659 = vmatpush1.msra.mxu0 0.0
        %2660 = vmatprep.subr.mxu0 0.0
        %2661 = vmatpush1.msra.mxu0 0.0
        %2662 = vmatprep.subr.mxu0 0.0
        %2663 = vmatpush1.msra.mxu0 0.0
        %2664 = vmatprep.subr.mxu0 0.0
        %2665 = vmatpush1.msra.mxu0 0.0
        %2666 = vmatprep.subr.mxu0 0.0
        %2667 = vmatpush1.msra.mxu0 0.0
        %2668 = vmatprep.subr.mxu0 0.0
        %2669 = vmatpush1.msra.mxu0 0.0
        %2670 = vmatprep.subr.mxu0 0.0
        %2671 = vmatpush1.msra.mxu0 0.0
        %2672 = vmatprep.subr.mxu0 0.0
        %2673 = vmatpush1.msra.mxu0 0.0
        %2674 = vmatprep.subr.mxu0 0.0
        %2675 = vmatpush1.msra.mxu0 0.0
        %2676 = vmatprep.subr.mxu0 0.0
        %2677 = vmatpush1.msra.mxu0 0.0
        %2678 = vmatprep.subr.mxu0 0.0
        %2679 = vmatpush1.msra.mxu0 0.0
        %2680 = vmatprep.subr.mxu0 0.0
        %2681 = vmatpush1.msra.mxu0 0.0
        %2682 = vmatprep.subr.mxu0 0.0
        %2683 = vmatpush1.msra.mxu0 0.0
        %2684 = vmatprep.subr.mxu0 0.0
        %2685 = vmatpush1.msra.mxu0 0.0
        %2686 = vmatprep.subr.mxu0 0.0
        %2687 = vmatpush1.msra.mxu0 0.0
        %2688 = vmatprep.subr.mxu0 0.0
        %2689 = vmatpush1.msra.mxu0 0.0
        %2690 = vmatprep.subr.mxu0 0.0
        %2691 = vmatpush1.msra.mxu0 0.0
        %2692 = vmatprep.subr.mxu0 0.0
        %2693 = vmatpush1.msra.mxu0 0.0
        %2694 = vmatprep.subr.mxu0 0.0
        %2695 = vmatpush1.msra.mxu0 0.0
        %2696 = vmatprep.mubr.f32.mxu0 0.0
        %2697 = vmatmul.mubr.f32.gmra.mrb[0].mxu0 %v2537
        %v2698 = vpop.f32.mrb[0].mxu0
        %v2699 = vadd.f32 %v2533, %v2698
        %v2700 = vpop.f32.mrb[0].mxu0
        %2701 = vmatprep.mubr.f32.mxu0 0.0
        %2702 = vmatmul.mubr.f32.gmra.mrb[0].mxu0 %v2540
        %v2703 = vpop.f32.mrb[0].mxu0
        %v2704 = vadd.f32 %v2533, %v2703
        %v2705 = vpop.f32.mrb[0].mxu0
        %2706 = vmatprep.mubr.f32.mxu0 0.0
        %2707 = vmatmul.mubr.f32.gmra.mrb[0].mxu0 %v2543
        %v2708 = vpop.f32.mrb[0].mxu0
        %v2709 = vadd.f32 %v2533, %v2708
        %v2710 = vpop.f32.mrb[0].mxu0
        %2711 = vmatprep.mubr.f32.mxu0 0.0
        %2712 = vmatmul.mubr.f32.gmra.mrb[0].mxu0 %v2546
        %v2713 = vpop.f32.mrb[0].mxu0
        %v2714 = vadd.f32 %v2533, %v2713
        %v2715 = vpop.f32.mrb[0].mxu0
        %2716 = vmatprep.mubr.f32.mxu0 0.0
        %2717 = vmatmul.mubr.f32.gmra.mrb[0].mxu0 %v2549
        %v2718 = vpop.f32.mrb[0].mxu0
        %v2719 = vadd.f32 %v2533, %v2718
        %v2720 = vpop.f32.mrb[0].mxu0
        %2721 = vmatprep.mubr.f32.mxu0 0.0
        %2722 = vmatmul.mubr.f32.gmra.mrb[0].mxu0 %v2552
        %v2723 = vpop.f32.mrb[0].mxu0
        %v2724 = vadd.f32 %v2533, %v2723
        %v2725 = vpop.f32.mrb[0].mxu0
        %2726 = vmatprep.mubr.f32.mxu0 0.0
        %2727 = vmatmul.mubr.f32.gmra.mrb[0].mxu0 %v2555
        %v2728 = vpop.f32.mrb[0].mxu0
        %v2729 = vadd.f32 %v2533, %v2728
        %v2730 = vpop.f32.mrb[0].mxu0
        %2731 = vmatprep.mubr.f32.mxu0 0.0
        %2732 = vmatmul.mubr.f32.gmra.mrb[0].mxu0 %v2558
        %v2733 = vpop.f32.mrb[0].mxu0
        %v2734 = vadd.f32 %v2533, %v2733
        %v2735 = vpop.f32.mrb[0].mxu0
        %2736 = vmatprep.mubr.f32.mxu0 0.0
        %2737 = vmatmul.mubr.f32.gmra.mrb[0].mxu0 %v2561
        %v2738 = vpop.f32.mrb[0].mxu0
        %v2739 = vadd.f32 %v2533, %v2738
        %v2740 = vpop.f32.mrb[0].mxu0
        %2741 = vmatprep.mubr.f32.mxu0 0.0
        %2742 = vmatmul.mubr.f32.gmra.mrb[0].mxu0 %v2564
        %v2743 = vpop.f32.mrb[0].mxu0
        %v2744 = vadd.f32 %v2533, %v2743
        %v2745 = vpop.f32.mrb[0].mxu0
        %2746 = vmatprep.mubr.f32.mxu0 0.0
        %2747 = vmatmul.mubr.f32.gmra.mrb[0].mxu0 %v2567
        %v2748 = vpop.f32.mrb[0].mxu0
        %v2749 = vadd.f32 %v2533, %v2748
        %v2750 = vpop.f32.mrb[0].mxu0
        %2751 = vmatprep.mubr.f32.mxu0 0.0
        %2752 = vmatmul.mubr.f32.gmra.mrb[0].mxu0 %v2570
        %v2753 = vpop.f32.mrb[0].mxu0
        %v2754 = vadd.f32 %v2533, %v2753
        %v2755 = vpop.f32.mrb[0].mxu0
        %2756 = vmatprep.mubr.f32.mxu0 0.0
        %2757 = vmatmul.mubr.f32.gmra.mrb[0].mxu0 %v2573
        %v2758 = vpop.f32.mrb[0].mxu0
        %v2759 = vadd.f32 %v2533, %v2758
        %v2760 = vpop.f32.mrb[0].mxu0
        %2761 = vmatprep.mubr.f32.mxu0 0.0
        %2762 = vmatmul.mubr.f32.gmra.mrb[0].mxu0 %v2576
        %v2763 = vpop.f32.mrb[0].mxu0
        %v2764 = vadd.f32 %v2533, %v2763
        %v2765 = vpop.f32.mrb[0].mxu0
        %2766 = vmatprep.mubr.f32.mxu0 0.0
        %2767 = vmatmul.mubr.f32.gmra.mrb[0].mxu0 %v2579
        %v2768 = vpop.f32.mrb[0].mxu0
        %v2769 = vadd.f32 %v2533, %v2768
        %v2770 = vpop.f32.mrb[0].mxu0
        %2771 = vmatprep.mubr.f32.mxu0 0.0
        %2772 = vmatmul.mubr.f32.gmra.mrb[0].mxu0 %v2582
        %v2773 = vpop.f32.mrb[0].mxu0
        %v2774 = vadd.f32 %v2533, %v2773
        %v2775 = vpop.f32.mrb[0].mxu0
        %2776 = vmatprep.mubr.f32.mxu0 0.0
        %2777 = vmatmul.mubr.f32.gmra.mrb[0].mxu0 %v2585
        %v2778 = vpop.f32.mrb[0].mxu0
        %v2779 = vadd.f32 %v2533, %v2778
        %v2780 = vpop.f32.mrb[0].mxu0
        %2781 = vmatprep.mubr.f32.mxu0 0.0
        %2782 = vmatmul.mubr.f32.gmra.mrb[0].mxu0 %v2588
        %v2783 = vpop.f32.mrb[0].mxu0
        %v2784 = vadd.f32 %v2533, %v2783
        %v2785 = vpop.f32.mrb[0].mxu0
        %2786 = vmatprep.mubr.f32.mxu0 0.0
        %2787 = vmatmul.mubr.f32.gmra.mrb[0].mxu0 %v2591
        %v2788 = vpop.f32.mrb[0].mxu0
        %v2789 = vadd.f32 %v2533, %v2788
        %v2790 = vpop.f32.mrb[0].mxu0
        %2791 = vmatprep.mubr.f32.mxu0 0.0
        %2792 = vmatmul.mubr.f32.gmra.mrb[0].mxu0 %v2594
        %v2793 = vpop.f32.mrb[0].mxu0
        %v2794 = vadd.f32 %v2533, %v2793
        %v2795 = vpop.f32.mrb[0].mxu0
        %2796 = vmatprep.mubr.f32.mxu0 0.0
        %2797 = vmatmul.mubr.f32.gmra.mrb[0].mxu0 %v2597
        %v2798 = vpop.f32.mrb[0].mxu0
        %v2799 = vadd.f32 %v2533, %v2798
        %v2800 = vpop.f32.mrb[0].mxu0
        %2801 = vmatprep.mubr.f32.mxu0 0.0
        %2802 = vmatmul.mubr.f32.gmra.mrb[0].mxu0 %v2600
        %v2803 = vpop.f32.mrb[0].mxu0
        %v2804 = vadd.f32 %v2533, %v2803
        %v2805 = vpop.f32.mrb[0].mxu0
        %2806 = vmatprep.mubr.f32.mxu0 0.0
        %2807 = vmatmul.mubr.f32.gmra.mrb[0].mxu0 %v2603
        %v2808 = vpop.f32.mrb[0].mxu0
        %v2809 = vadd.f32 %v2533, %v2808
        %v2810 = vpop.f32.mrb[0].mxu0
        %2811 = vmatprep.mubr.f32.mxu0 0.0
        %2812 = vmatmul.mubr.f32.gmra.mrb[0].mxu0 %v2606
        %v2813 = vpop.f32.mrb[0].mxu0
        %v2814 = vadd.f32 %v2533, %v2813
        %v2815 = vpop.f32.mrb[0].mxu0
        %2816 = vmatprep.mubr.f32.mxu0 0.0
        %2817 = vmatmul.mubr.f32.gmra.mrb[0].mxu0 %v2609
        %v2818 = vpop.f32.mrb[0].mxu0
        %v2819 = vadd.f32 %v2533, %v2818
        %v2820 = vpop.f32.mrb[0].mxu0
        %2821 = vmatprep.mubr.f32.mxu0 0.0
        %2822 = vmatmul.mubr.f32.gmra.mrb[0].mxu0 %v2612
        %v2823 = vpop.f32.mrb[0].mxu0
        %v2824 = vadd.f32 %v2533, %v2823
        %v2825 = vpop.f32.mrb[0].mxu0
        %2826 = vmatprep.mubr.f32.mxu0 0.0
        %2827 = vmatmul.mubr.f32.gmra.mrb[0].mxu0 %v2615
        %v2828 = vpop.f32.mrb[0].mxu0
        %v2829 = vadd.f32 %v2533, %v2828
        %v2830 = vpop.f32.mrb[0].mxu0
        %2831 = vmatprep.mubr.f32.mxu0 0.0
        %2832 = vmatmul.mubr.f32.gmra.mrb[0].mxu0 %v2618
        %v2833 = vpop.f32.mrb[0].mxu0
        %v2834 = vadd.f32 %v2533, %v2833
        %v2835 = vpop.f32.mrb[0].mxu0
        %2836 = vmatprep.mubr.f32.mxu0 0.0
        %2837 = vmatmul.mubr.f32.gmra.mrb[0].mxu0 %v2621
        %v2838 = vpop.f32.mrb[0].mxu0
        %v2839 = vadd.f32 %v2533, %v2838
        %v2840 = vpop.f32.mrb[0].mxu0
        %2841 = vmatprep.mubr.f32.mxu0 0.0
        %2842 = vmatmul.mubr.f32.gmra.mrb[0].mxu0 %v2624
        %v2843 = vpop.f32.mrb[0].mxu0
        %v2844 = vadd.f32 %v2533, %v2843
        %v2845 = vpop.f32.mrb[0].mxu0
        %2846 = vmatprep.mubr.f32.mxu0 0.0
        %2847 = vmatmul.mubr.f32.gmra.mrb[0].mxu0 %v2627
        %v2848 = vpop.f32.mrb[0].mxu0
        %v2849 = vadd.f32 %v2533, %v2848
        %v2850 = vpop.f32.mrb[0].mxu0
        %2851 = vmatprep.mubr.f32.mxu0 0.0
        %2852 = vmatmul.mubr.f32.gmra.mrb[0].mxu0 %v2630
        %v2853 = vpop.f32.mrb[0].mxu0
        %v2854 = vadd.f32 %v2533, %v2853
        %v2855 = vpop.f32.mrb[0].mxu0
        %2856 = vdwg.mxu0
        %v2857 = vmax.f32 %v2699, 0.0
        %v2858 = vmax.f32 %v2704, 0.0
        %v2859 = vmax.f32 %v2709, 0.0
        %v2860 = vmax.f32 %v2714, 0.0
        %v2861 = vmax.f32 %v2719, 0.0
        %v2862 = vmax.f32 %v2724, 0.0
        %v2863 = vmax.f32 %v2729, 0.0
        %v2864 = vmax.f32 %v2734, 0.0
        %v2865 = vmax.f32 %v2739, 0.0
        %v2866 = vmax.f32 %v2744, 0.0
        %v2867 = vmax.f32 %v2749, 0.0
        %v2868 = vmax.f32 %v2754, 0.0
        %v2869 = vmax.f32 %v2759, 0.0
        %v2870 = vmax.f32 %v2764, 0.0
        %v2871 = vmax.f32 %v2769, 0.0
        %v2872 = vmax.f32 %v2774, 0.0
        %v2873 = vmax.f32 %v2779, 0.0
        %v2874 = vmax.f32 %v2784, 0.0
        %v2875 = vmax.f32 %v2789, 0.0
        %v2876 = vmax.f32 %v2794, 0.0
        %v2877 = vmax.f32 %v2799, 0.0
        %v2878 = vmax.f32 %v2804, 0.0
        %v2879 = vmax.f32 %v2809, 0.0
        %v2880 = vmax.f32 %v2814, 0.0
        %v2881 = vmax.f32 %v2819, 0.0
        %v2882 = vmax.f32 %v2824, 0.0
        %v2883 = vmax.f32 %v2829, 0.0
        %v2884 = vmax.f32 %v2834, 0.0
        %v2885 = vmax.f32 %v2839, 0.0
        %v2886 = vmax.f32 %v2844, 0.0
        %v2887 = vmax.f32 %v2849, 0.0
        %v2888 = vmax.f32 %v2854, 0.0
        %v2889 = vmax.f32 %v2857, %v2858
        %v2890 = vmax.f32 %v2859, %v2860
        %v2891 = vmax.f32 %v2861, %v2862
        %v2892 = vmax.f32 %v2863, %v2864
        %v2893 = vmax.f32 %v2865, %v2866
        %v2894 = vmax.f32 %v2867, %v2868
        %v2895 = vmax.f32 %v2869, %v2870
        %v2896 = vmax.f32 %v2871, %v2872
        %v2897 = vmax.f32 %v2873, %v2874
        %v2898 = vmax.f32 %v2875, %v2876
        %v2899 = vmax.f32 %v2877, %v2878
        %v2900 = vmax.f32 %v2879, %v2880
        %v2901 = vmax.f32 %v2881, %v2882
        %v2902 = vmax.f32 %v2883, %v2884
        %v2903 = vmax.f32 %v2885, %v2886
        %v2904 = vmax.f32 %v2887, %v2888
        %2921 = vrot.lane.b32.xlu0 %v2889, 32
        %v2922 = vpop.permute.xlu0 %2921
        %2923 = vrot.lane.b32.xlu0 %v2890, 32
        %v2924 = vpop.permute.xlu0 %2923
        %2925 = vrot.lane.b32.xlu0 %v2891, 32
        %v2926 = vpop.permute.xlu0 %2925
        %2927 = vrot.lane.b32.xlu0 %v2892, 32
        %v2928 = vpop.permute.xlu0 %2927
        %2929 = vrot.lane.b32.xlu0 %v2893, 32
        %v2930 = vpop.permute.xlu0 %2929
        %2931 = vrot.lane.b32.xlu0 %v2894, 32
        %v2932 = vpop.permute.xlu0 %2931
        %2933 = vrot.lane.b32.xlu0 %v2895, 32
        %v2934 = vpop.permute.xlu0 %2933
        %2935 = vrot.lane.b32.xlu0 %v2896, 32
        %v2936 = vpop.permute.xlu0 %2935
        %2937 = vrot.lane.b32.xlu0 %v2897, 32
        %v2938 = vpop.permute.xlu0 %2937
        %2939 = vrot.lane.b32.xlu0 %v2898, 32
        %v2940 = vpop.permute.xlu0 %2939
        %2941 = vrot.lane.b32.xlu0 %v2899, 32
        %v2942 = vpop.permute.xlu0 %2941
        %2943 = vrot.lane.b32.xlu0 %v2900, 32
        %v2944 = vpop.permute.xlu0 %2943
        %2945 = vrot.lane.b32.xlu0 %v2901, 32
        %v2946 = vpop.permute.xlu0 %2945
        %2947 = vrot.lane.b32.xlu0 %v2902, 32
        %v2948 = vpop.permute.xlu0 %2947
        %2949 = vrot.lane.b32.xlu0 %v2903, 32
        %v2950 = vpop.permute.xlu0 %2949
        %2951 = vrot.lane.b32.xlu0 %v2904, 32
        %v2952 = vpop.permute.xlu0 %2951
        %2969 = vrot.lane.b32.xlu0 %v2890, 64
        %v2970 = vpop.permute.xlu0 %2969
        %2971 = vrot.lane.b32.xlu0 %v2891, 64
        %v2972 = vpop.permute.xlu0 %2971
        %2973 = vrot.lane.b32.xlu0 %v2892, 64
        %v2974 = vpop.permute.xlu0 %2973
        %2975 = vrot.lane.b32.xlu0 %v2893, 64
        %v2976 = vpop.permute.xlu0 %2975
        %2977 = vrot.lane.b32.xlu0 %v2894, 64
        %v2978 = vpop.permute.xlu0 %2977
        %2979 = vrot.lane.b32.xlu0 %v2895, 64
        %v2980 = vpop.permute.xlu0 %2979
        %2981 = vrot.lane.b32.xlu0 %v2896, 64
        %v2982 = vpop.permute.xlu0 %2981
        %2983 = vrot.lane.b32.xlu0 %v2897, 64
        %v2984 = vpop.permute.xlu0 %2983
        %2985 = vrot.lane.b32.xlu0 %v2898, 64
        %v2986 = vpop.permute.xlu0 %2985
        %2987 = vrot.lane.b32.xlu0 %v2899, 64
        %v2988 = vpop.permute.xlu0 %2987
        %2989 = vrot.lane.b32.xlu0 %v2900, 64
        %v2990 = vpop.permute.xlu0 %2989
        %2991 = vrot.lane.b32.xlu0 %v2901, 64
        %v2992 = vpop.permute.xlu0 %2991
        %2993 = vrot.lane.b32.xlu0 %v2902, 64
        %v2994 = vpop.permute.xlu0 %2993
        %2995 = vrot.lane.b32.xlu0 %v2903, 64
        %v2996 = vpop.permute.xlu0 %2995
        %2997 = vrot.lane.b32.xlu0 %v2904, 64
        %v2998 = vpop.permute.xlu0 %2997
        %2999 = vrot.lane.b32.xlu0 0.0, 64
        %v3000 = vpop.permute.xlu0 %2999
        %v3017 = vsel %vm2489, 0.0, %v2922
        %v3018 = vsel %vm2489, %v2889, %v2924
        %v3019 = vsel %vm2489, %v2890, %v2926
        %v3020 = vsel %vm2489, %v2891, %v2928
        %v3021 = vsel %vm2489, %v2892, %v2930
        %v3022 = vsel %vm2489, %v2893, %v2932
        %v3023 = vsel %vm2489, %v2894, %v2934
        %v3024 = vsel %vm2489, %v2895, %v2936
        %v3025 = vsel %vm2489, %v2896, %v2938
        %v3026 = vsel %vm2489, %v2897, %v2940
        %v3027 = vsel %vm2489, %v2898, %v2942
        %v3028 = vsel %vm2489, %v2899, %v2944
        %v3029 = vsel %vm2489, %v2900, %v2946
        %v3030 = vsel %vm2489, %v2901, %v2948
        %v3031 = vsel %vm2489, %v2902, %v2950
        %v3032 = vsel %vm2489, %v2903, %v2952
        %vm3033 = vcmask 523264
        %v3034 = vsel %vm3033, %v3017, %v2970
        %v3035 = vsel %vm3033, %v3018, %v2972
        %v3036 = vsel %vm3033, %v3019, %v2974
        %v3037 = vsel %vm3033, %v3020, %v2976
        %v3038 = vsel %vm3033, %v3021, %v2978
        %v3039 = vsel %vm3033, %v3022, %v2980
        %v3040 = vsel %vm3033, %v3023, %v2982
        %v3041 = vsel %vm3033, %v3024, %v2984
        %v3042 = vsel %vm3033, %v3025, %v2986
        %v3043 = vsel %vm3033, %v3026, %v2988
        %v3044 = vsel %vm3033, %v3027, %v2990
        %v3045 = vsel %vm3033, %v3028, %v2992
        %v3046 = vsel %vm3033, %v3029, %v2994
        %v3047 = vsel %vm3033, %v3030, %v2996
        %v3048 = vsel %vm3033, %v3031, %v2998
        %v3049 = vsel %vm3033, %v3032, %v3000
        %v3050 = vld [vmem:[%s5] sm:$0xff]
        %v3051 = vld [vmem:[%s5 + $0x8] sm:$0xff]
        %v3052 = vld [vmem:[%s5 + $0x10] sm:$0xff]
        %v3053 = vld [vmem:[%s5 + $0x18] sm:$0xff]
        %v3054 = vld [vmem:[%s5 + $0x20] sm:$0xff]
        %v3055 = vld [vmem:[%s5 + $0x28] sm:$0xff]
        %v3056 = vld [vmem:[%s5 + $0x30] sm:$0xff]
        %v3057 = vld [vmem:[%s5 + $0x38] sm:$0xff]
        %v3058 = vld [vmem:[%s5 + $0x40] sm:$0xff]
        %v3059 = vld [vmem:[%s5 + $0x48] sm:$0xff]
        %v3060 = vld [vmem:[%s5 + $0x50] sm:$0xff]
        %v3061 = vld [vmem:[%s5 + $0x58] sm:$0xff]
        %v3062 = vld [vmem:[%s6] sm:$0x1]
        %v3064 = vlaneseq
        %v3065 = vshrl.u32 %v3064, 7
        %v3066 = vsub.s32 0, %v3065
        %v3067 = vrot.slane %v3062, %v3066
        %vm3069 = vcmask 785408
        %v3071 = vsel %vm3069, %v3034, 0
        %v3074 = vsel %vm3069, %v3035, 0
        %v3077 = vsel %vm3069, %v3036, 0
        %v3080 = vsel %vm3069, %v3037, 0
        %v3083 = vsel %vm3069, %v3038, 0
        %v3086 = vsel %vm3069, %v3039, 0
        %v3089 = vsel %vm3069, %v3040, 0
        %v3092 = vsel %vm3069, %v3041, 0
        %v3095 = vsel %vm3069, %v3042, 0
        %v3098 = vsel %vm3069, %v3043, 0
        %v3101 = vsel %vm3069, %v3044, 0
        %v3104 = vsel %vm3069, %v3045, 0
        %v3107 = vsel %vm3069, %v3046, 0
        %v3110 = vsel %vm3069, %v3047, 0
        %v3113 = vsel %vm3069, %v3048, 0
        %v3116 = vsel %vm3069, %v3049, 0
        %3118 = vmatprep.subr.mxu0 0.0
        %3119 = vmatpush1.msra.mxu0 %v3050
        %3120 = vmatprep.subr.mxu0 0.0
        %3121 = vmatpush1.msra.mxu0 %v3051
        %3122 = vmatprep.subr.mxu0 0.0
        %3123 = vmatpush1.msra.mxu0 %v3052
        %3124 = vmatprep.subr.mxu0 0.0
        %3125 = vmatpush1.msra.mxu0 %v3053
        %3126 = vmatprep.subr.mxu0 0.0
        %3127 = vmatpush1.msra.mxu0 %v3054
        %3128 = vmatprep.subr.mxu0 0.0
        %3129 = vmatpush1.msra.mxu0 %v3055
        %3130 = vmatprep.subr.mxu0 0.0
        %3131 = vmatpush1.msra.mxu0 %v3056
        %3132 = vmatprep.subr.mxu0 0.0
        %3133 = vmatpush1.msra.mxu0 %v3057
        %3134 = vmatprep.subr.mxu0 0.0
        %3135 = vmatpush1.msra.mxu0 %v3058
        %3136 = vmatprep.subr.mxu0 0.0
        %3137 = vmatpush1.msra.mxu0 %v3059
        %3138 = vmatprep.subr.mxu0 0.0
        %3139 = vmatpush1.msra.mxu0 %v3060
        %3140 = vmatprep.subr.mxu0 0.0
        %3141 = vmatpush1.msra.mxu0 %v3061
        %3142 = vmatprep.subr.mxu0 0.0
        %3143 = vmatpush1.msra.mxu0 0.0
        %3144 = vmatprep.subr.mxu0 0.0
        %3145 = vmatpush1.msra.mxu0 0.0
        %3146 = vmatprep.subr.mxu0 0.0
        %3147 = vmatpush1.msra.mxu0 0.0
        %3148 = vmatprep.subr.mxu0 0.0
        %3149 = vmatpush1.msra.mxu0 0.0
        %3150 = vmatprep.subr.mxu0 0.0
        %3151 = vmatpush1.msra.mxu0 0.0
        %3152 = vmatprep.subr.mxu0 0.0
        %3153 = vmatpush1.msra.mxu0 0.0
        %3154 = vmatprep.subr.mxu0 0.0
        %3155 = vmatpush1.msra.mxu0 0.0
        %3156 = vmatprep.subr.mxu0 0.0
        %3157 = vmatpush1.msra.mxu0 0.0
        %3158 = vmatprep.subr.mxu0 0.0
        %3159 = vmatpush1.msra.mxu0 0.0
        %3160 = vmatprep.subr.mxu0 0.0
        %3161 = vmatpush1.msra.mxu0 0.0
        %3162 = vmatprep.subr.mxu0 0.0
        %3163 = vmatpush1.msra.mxu0 0.0
        %3164 = vmatprep.subr.mxu0 0.0
        %3165 = vmatpush1.msra.mxu0 0.0
        %3166 = vmatprep.subr.mxu0 0.0
        %3167 = vmatpush1.msra.mxu0 0.0
        %3168 = vmatprep.subr.mxu0 0.0
        %3169 = vmatpush1.msra.mxu0 0.0
        %3170 = vmatprep.subr.mxu0 0.0
        %3171 = vmatpush1.msra.mxu0 0.0
        %3172 = vmatprep.subr.mxu0 0.0
        %3173 = vmatpush1.msra.mxu0 0.0
        %3174 = vmatprep.subr.mxu0 0.0
        %3175 = vmatpush1.msra.mxu0 0.0
        %3176 = vmatprep.subr.mxu0 0.0
        %3177 = vmatpush1.msra.mxu0 0.0
        %3178 = vmatprep.subr.mxu0 0.0
        %3179 = vmatpush1.msra.mxu0 0.0
        %3180 = vmatprep.subr.mxu0 0.0
        %3181 = vmatpush1.msra.mxu0 0.0
        %3182 = vmatprep.mubr.f32.mxu0 0.0
        %3183 = vmatmul.mubr.f32.gmra.mrb[0].mxu0 %v3071
        %v3184 = vpop.f32.mrb[0].mxu0
        %v3185 = vadd.f32 %v3067, %v3184
        %v3186 = vpop.f32.mrb[0].mxu0
        %3187 = vmatprep.mubr.f32.mxu0 0.0
        %3188 = vmatmul.mubr.f32.gmra.mrb[0].mxu0 %v3074
        %v3189 = vpop.f32.mrb[0].mxu0
        %v3190 = vadd.f32 %v3067, %v3189
        %v3191 = vpop.f32.mrb[0].mxu0
        %3192 = vmatprep.mubr.f32.mxu0 0.0
        %3193 = vmatmul.mubr.f32.gmra.mrb[0].mxu0 %v3077
        %v3194 = vpop.f32.mrb[0].mxu0
        %v3195 = vadd.f32 %v3067, %v3194
        %v3196 = vpop.f32.mrb[0].mxu0
        %3197 = vmatprep.mubr.f32.mxu0 0.0
        %3198 = vmatmul.mubr.f32.gmra.mrb[0].mxu0 %v3080
        %v3199 = vpop.f32.mrb[0].mxu0
        %v3200 = vadd.f32 %v3067, %v3199
        %v3201 = vpop.f32.mrb[0].mxu0
        %3202 = vmatprep.mubr.f32.mxu0 0.0
        %3203 = vmatmul.mubr.f32.gmra.mrb[0].mxu0 %v3083
        %v3204 = vpop.f32.mrb[0].mxu0
        %v3205 = vadd.f32 %v3067, %v3204
        %v3206 = vpop.f32.mrb[0].mxu0
        %3207 = vmatprep.mubr.f32.mxu0 0.0
        %3208 = vmatmul.mubr.f32.gmra.mrb[0].mxu0 %v3086
        %v3209 = vpop.f32.mrb[0].mxu0
        %v3210 = vadd.f32 %v3067, %v3209
        %v3211 = vpop.f32.mrb[0].mxu0
        %3212 = vmatprep.mubr.f32.mxu0 0.0
        %3213 = vmatmul.mubr.f32.gmra.mrb[0].mxu0 %v3089
        %v3214 = vpop.f32.mrb[0].mxu0
        %v3215 = vadd.f32 %v3067, %v3214
        %v3216 = vpop.f32.mrb[0].mxu0
        %3217 = vmatprep.mubr.f32.mxu0 0.0
        %3218 = vmatmul.mubr.f32.gmra.mrb[0].mxu0 %v3092
        %v3219 = vpop.f32.mrb[0].mxu0
        %v3220 = vadd.f32 %v3067, %v3219
        %v3221 = vpop.f32.mrb[0].mxu0
        %3222 = vmatprep.mubr.f32.mxu0 0.0
        %3223 = vmatmul.mubr.f32.gmra.mrb[0].mxu0 %v3095
        %v3224 = vpop.f32.mrb[0].mxu0
        %v3225 = vadd.f32 %v3067, %v3224
        %v3226 = vpop.f32.mrb[0].mxu0
        %3227 = vmatprep.mubr.f32.mxu0 0.0
        %3228 = vmatmul.mubr.f32.gmra.mrb[0].mxu0 %v3098
        %v3229 = vpop.f32.mrb[0].mxu0
        %v3230 = vadd.f32 %v3067, %v3229
        %v3231 = vpop.f32.mrb[0].mxu0
        %3232 = vmatprep.mubr.f32.mxu0 0.0
        %3233 = vmatmul.mubr.f32.gmra.mrb[0].mxu0 %v3101
        %v3234 = vpop.f32.mrb[0].mxu0
        %v3235 = vadd.f32 %v3067, %v3234
        %v3236 = vpop.f32.mrb[0].mxu0
        %3237 = vmatprep.mubr.f32.mxu0 0.0
        %3238 = vmatmul.mubr.f32.gmra.mrb[0].mxu0 %v3104
        %v3239 = vpop.f32.mrb[0].mxu0
        %v3240 = vadd.f32 %v3067, %v3239
        %v3241 = vpop.f32.mrb[0].mxu0
        %3242 = vmatprep.mubr.f32.mxu0 0.0
        %3243 = vmatmul.mubr.f32.gmra.mrb[0].mxu0 %v3107
        %v3244 = vpop.f32.mrb[0].mxu0
        %v3245 = vadd.f32 %v3067, %v3244
        %v3246 = vpop.f32.mrb[0].mxu0
        %3247 = vmatprep.mubr.f32.mxu0 0.0
        %3248 = vmatmul.mubr.f32.gmra.mrb[0].mxu0 %v3110
        %v3249 = vpop.f32.mrb[0].mxu0
        %v3250 = vadd.f32 %v3067, %v3249
        %v3251 = vpop.f32.mrb[0].mxu0
        %3252 = vmatprep.mubr.f32.mxu0 0.0
        %3253 = vmatmul.mubr.f32.gmra.mrb[0].mxu0 %v3113
        %v3254 = vpop.f32.mrb[0].mxu0
        %v3255 = vadd.f32 %v3067, %v3254
        %v3256 = vpop.f32.mrb[0].mxu0
        %3257 = vmatprep.mubr.f32.mxu0 0.0
        %3258 = vmatmul.mubr.f32.gmra.mrb[0].mxu0 %v3116
        %v3259 = vpop.f32.mrb[0].mxu0
        %v3260 = vadd.f32 %v3067, %v3259
        %v3261 = vpop.f32.mrb[0].mxu0
        %3262 = vdwg.mxu0
        %v3263 = vmax.f32 %v3185, 0.0
        %v3264 = vmax.f32 %v3190, 0.0
        %v3265 = vmax.f32 %v3195, 0.0
        %v3266 = vmax.f32 %v3200, 0.0
        %v3267 = vmax.f32 %v3205, 0.0
        %v3268 = vmax.f32 %v3210, 0.0
        %v3269 = vmax.f32 %v3215, 0.0
        %v3270 = vmax.f32 %v3220, 0.0
        %v3271 = vmax.f32 %v3225, 0.0
        %v3272 = vmax.f32 %v3230, 0.0
        %v3273 = vmax.f32 %v3235, 0.0
        %v3274 = vmax.f32 %v3240, 0.0
        %v3275 = vmax.f32 %v3245, 0.0
        %v3276 = vmax.f32 %v3250, 0.0
        %v3277 = vmax.f32 %v3255, 0.0
        %v3278 = vmax.f32 %v3260, 0.0
        %v3279 = vmax.f32 %v3263, %v3264
        %v3280 = vmax.f32 %v3265, %v3266
        %v3281 = vmax.f32 %v3267, %v3268
        %v3282 = vmax.f32 %v3269, %v3270
        %v3283 = vmax.f32 %v3271, %v3272
        %v3284 = vmax.f32 %v3273, %v3274
        %v3285 = vmax.f32 %v3275, %v3276
        %v3286 = vmax.f32 %v3277, %v3278
        %v3287 = vld [vmem:[%s7] sm:$0xff]
        %v3288 = vld [vmem:[%s7 + $0x8] sm:$0xff]
        %v3289 = vld [vmem:[%s7 + $0x10] sm:$0xff]
        %v3290 = vld [vmem:[%s7 + $0x18] sm:$0xff]
        %v3291 = vld [vmem:[%s7 + $0x20] sm:$0xff]
        %v3292 = vld [vmem:[%s7 + $0x28] sm:$0xff]
        %v3293 = vld [vmem:[%s7 + $0x30] sm:$0xff]
        %v3294 = vld [vmem:[%s7 + $0x38] sm:$0xff]
        %v3295 = vld [vmem:[%s7 + $0x40] sm:$0xff]
        %v3296 = vld [vmem:[%s7 + $0x48] sm:$0xff]
        %v3297 = vld [vmem:[%s7 + $0x50] sm:$0xff]
        %v3298 = vld [vmem:[%s7 + $0x58] sm:$0xff]
        %v3299 = vld [vmem:[%s7 + $0x60] sm:$0xff]
        %v3300 = vld [vmem:[%s7 + $0x68] sm:$0xff]
        %v3301 = vld [vmem:[%s7 + $0x70] sm:$0xff]
        %v3302 = vld [vmem:[%s7 + $0x78] sm:$0xff]
        %v3303 = vld [vmem:[%s9] sm:$0x3]
        %v3305 = vlaneseq
        %v3306 = vshrl.u32 %v3305, 7
        %v3307 = vsub.s32 0, %v3306
        %v3308 = vrot.slane %v3303, %v3307
        %v3309 = vlaneseq
        %v3310 = vshrl.u32 %v3309, 7
        %v3311 = vsub.s32 1, %v3310
        %v3312 = vrot.slane %v3303, %v3311
        %v3316 = vsel %vm3033, %v3279, 0
        %v3319 = vsel %vm3033, %v3280, 0
        %v3322 = vsel %vm3033, %v3281, 0
        %v3325 = vsel %vm3033, %v3282, 0
        %v3328 = vsel %vm3033, %v3283, 0
        %v3331 = vsel %vm3033, %v3284, 0
        %v3334 = vsel %vm3033, %v3285, 0
        %v3337 = vsel %vm3033, %v3286, 0
        %3339 = vmatprep.subr.mxu0 %v3288
        %3340 = vmatpush1.msra.mxu0 %v3287
        %3341 = vmatprep.subr.mxu0 %v3290
        %3342 = vmatpush1.msra.mxu0 %v3289
        %3343 = vmatprep.subr.mxu0 %v3292
        %3344 = vmatpush1.msra.mxu0 %v3291
        %3345 = vmatprep.subr.mxu0 %v3294
        %3346 = vmatpush1.msra.mxu0 %v3293
        %3347 = vmatprep.subr.mxu0 %v3296
        %3348 = vmatpush1.msra.mxu0 %v3295
        %3349 = vmatprep.subr.mxu0 %v3298
        %3350 = vmatpush1.msra.mxu0 %v3297
        %3351 = vmatprep.subr.mxu0 %v3300
        %3352 = vmatpush1.msra.mxu0 %v3299
        %3353 = vmatprep.subr.mxu0 %v3302
        %3354 = vmatpush1.msra.mxu0 %v3301
        %3355 = vmatprep.subr.mxu0 0.0
        %3356 = vmatpush1.msra.mxu0 0.0
        %3357 = vmatprep.subr.mxu0 0.0
        %3358 = vmatpush1.msra.mxu0 0.0
        %3359 = vmatprep.subr.mxu0 0.0
        %3360 = vmatpush1.msra.mxu0 0.0
        %3361 = vmatprep.subr.mxu0 0.0
        %3362 = vmatpush1.msra.mxu0 0.0
        %3363 = vmatprep.subr.mxu0 0.0
        %3364 = vmatpush1.msra.mxu0 0.0
        %3365 = vmatprep.subr.mxu0 0.0
        %3366 = vmatpush1.msra.mxu0 0.0
        %3367 = vmatprep.subr.mxu0 0.0
        %3368 = vmatpush1.msra.mxu0 0.0
        %3369 = vmatprep.subr.mxu0 0.0
        %3370 = vmatpush1.msra.mxu0 0.0
        %3371 = vmatprep.subr.mxu0 0.0
        %3372 = vmatpush1.msra.mxu0 0.0
        %3373 = vmatprep.subr.mxu0 0.0
        %3374 = vmatpush1.msra.mxu0 0.0
        %3375 = vmatprep.subr.mxu0 0.0
        %3376 = vmatpush1.msra.mxu0 0.0
        %3377 = vmatprep.subr.mxu0 0.0
        %3378 = vmatpush1.msra.mxu0 0.0
        %3379 = vmatprep.subr.mxu0 0.0
        %3380 = vmatpush1.msra.mxu0 0.0
        %3381 = vmatprep.subr.mxu0 0.0
        %3382 = vmatpush1.msra.mxu0 0.0
        %3383 = vmatprep.subr.mxu0 0.0
        %3384 = vmatpush1.msra.mxu0 0.0
        %3385 = vmatprep.subr.mxu0 0.0
        %3386 = vmatpush1.msra.mxu0 0.0
        %3387 = vmatprep.subr.mxu0 0.0
        %3388 = vmatpush1.msra.mxu0 0.0
        %3389 = vmatprep.subr.mxu0 0.0
        %3390 = vmatpush1.msra.mxu0 0.0
        %3391 = vmatprep.subr.mxu0 0.0
        %3392 = vmatpush1.msra.mxu0 0.0
        %3393 = vmatprep.subr.mxu0 0.0
        %3394 = vmatpush1.msra.mxu0 0.0
        %3395 = vmatprep.subr.mxu0 0.0
        %3396 = vmatpush1.msra.mxu0 0.0
        %3397 = vmatprep.subr.mxu0 0.0
        %3398 = vmatpush1.msra.mxu0 0.0
        %3399 = vmatprep.subr.mxu0 0.0
        %3400 = vmatpush1.msra.mxu0 0.0
        %3401 = vmatprep.subr.mxu0 0.0
        %3402 = vmatpush1.msra.mxu0 0.0
        %3403 = vmatprep.mubr.f32.mxu0 0.0
        %3404 = vmatmul.mubr.f32.gmra.mrb[0].mxu0 %v3316
        %v3405 = vpop.f32.mrb[0].mxu0
        %v3406 = vadd.f32 %v3308, %v3405
        %v3407 = vpop.f32.mrb[0].mxu0
        %v3408 = vadd.f32 %v3312, %v3407
        %3409 = vmatprep.mubr.f32.mxu0 0.0
        %3410 = vmatmul.mubr.f32.gmra.mrb[0].mxu0 %v3319
        %v3411 = vpop.f32.mrb[0].mxu0
        %v3412 = vadd.f32 %v3308, %v3411
        %v3413 = vpop.f32.mrb[0].mxu0
        %v3414 = vadd.f32 %v3312, %v3413
        %3415 = vmatprep.mubr.f32.mxu0 0.0
        %3416 = vmatmul.mubr.f32.gmra.mrb[0].mxu0 %v3322
        %v3417 = vpop.f32.mrb[0].mxu0
        %v3418 = vadd.f32 %v3308, %v3417
        %v3419 = vpop.f32.mrb[0].mxu0
        %v3420 = vadd.f32 %v3312, %v3419
        %3421 = vmatprep.mubr.f32.mxu0 0.0
        %3422 = vmatmul.mubr.f32.gmra.mrb[0].mxu0 %v3325
        %v3423 = vpop.f32.mrb[0].mxu0
        %v3424 = vadd.f32 %v3308, %v3423
        %v3425 = vpop.f32.mrb[0].mxu0
        %v3426 = vadd.f32 %v3312, %v3425
        %3427 = vmatprep.mubr.f32.mxu0 0.0
        %3428 = vmatmul.mubr.f32.gmra.mrb[0].mxu0 %v3328
        %v3429 = vpop.f32.mrb[0].mxu0
        %v3430 = vadd.f32 %v3308, %v3429
        %v3431 = vpop.f32.mrb[0].mxu0
        %v3432 = vadd.f32 %v3312, %v3431
        %3433 = vmatprep.mubr.f32.mxu0 0.0
        %3434 = vmatmul.mubr.f32.gmra.mrb[0].mxu0 %v3331
        %v3435 = vpop.f32.mrb[0].mxu0
        %v3436 = vadd.f32 %v3308, %v3435
        %v3437 = vpop.f32.mrb[0].mxu0
        %v3438 = vadd.f32 %v3312, %v3437
        %3439 = vmatprep.mubr.f32.mxu0 0.0
        %3440 = vmatmul.mubr.f32.gmra.mrb[0].mxu0 %v3334
        %v3441 = vpop.f32.mrb[0].mxu0
        %v3442 = vadd.f32 %v3308, %v3441
        %v3443 = vpop.f32.mrb[0].mxu0
        %v3444 = vadd.f32 %v3312, %v3443
        %3445 = vmatprep.mubr.f32.mxu0 0.0
        %3446 = vmatmul.mubr.f32.gmra.mrb[0].mxu0 %v3337
        %v3447 = vpop.f32.mrb[0].mxu0
        %v3448 = vadd.f32 %v3308, %v3447
        %v3449 = vpop.f32.mrb[0].mxu0
        %v3450 = vadd.f32 %v3312, %v3449
        %3451 = vdwg.mxu0
        %3452 = vst [vmem:[#allocation2] sm:$0xff] %v3406
        %3453 = vst [vmem:[#allocation2 + $0x8] sm:$0xff] %v3408
        %3454 = vst [vmem:[#allocation2 + $0x10] sm:$0xff] %v3412
        %3455 = vst [vmem:[#allocation2 + $0x18] sm:$0xff] %v3414
        %3456 = vst [vmem:[#allocation2 + $0x20] sm:$0xff] %v3418
        %3457 = vst [vmem:[#allocation2 + $0x28] sm:$0xff] %v3420
        %3458 = vst [vmem:[#allocation2 + $0x30] sm:$0xff] %v3424
        %3459 = vst [vmem:[#allocation2 + $0x38] sm:$0xff] %v3426
        %3460 = vst [vmem:[#allocation2 + $0x40] sm:$0xff] %v3430
        %3461 = vst [vmem:[#allocation2 + $0x48] sm:$0xff] %v3432
        %3462 = vst [vmem:[#allocation2 + $0x50] sm:$0xff] %v3436
        %3463 = vst [vmem:[#allocation2 + $0x58] sm:$0xff] %v3438
        %3464 = vst [vmem:[#allocation2 + $0x60] sm:$0xff] %v3442
        %3465 = vst [vmem:[#allocation2 + $0x68] sm:$0xff] %v3444
        %3466 = vst [vmem:[#allocation2 + $0x70] sm:$0xff] %v3448
        %3467 = vst [vmem:[#allocation2 + $0x78] sm:$0xff] %v3450
        %v3468 = vld [vmem:[#allocation2] sm:$0xff]
        %v3469 = vld [vmem:[#allocation2 + $0x8] sm:$0xff]
        %v3470 = vld [vmem:[%s8] sm:$0xff]
        %v3471 = vld [vmem:[%s8 + $0x8] sm:$0xff]
        %v3472 = vld [vmem:[%s8 + $0x10] sm:$0xff]
        %v3473 = vld [vmem:[%s8 + $0x18] sm:$0xff]
        %v3474 = vld [vmem:[%s8 + $0x20] sm:$0xff]
        %v3475 = vld [vmem:[%s8 + $0x28] sm:$0xff]
        %v3476 = vld [vmem:[%s8 + $0x30] sm:$0xff]
        %v3477 = vld [vmem:[%s8 + $0x38] sm:$0xff]
        %v3478 = vld [vmem:[%s8 + $0x40] sm:$0xff]
        %v3479 = vld [vmem:[%s8 + $0x48] sm:$0xff]
        %v3480 = vld [vmem:[%s8 + $0x50] sm:$0xff]
        %v3481 = vld [vmem:[%s8 + $0x58] sm:$0xff]
        %v3482 = vld [vmem:[%s8 + $0x60] sm:$0xff]
        %v3483 = vld [vmem:[%s8 + $0x68] sm:$0xff]
        %v3484 = vld [vmem:[%s8 + $0x70] sm:$0xff]
        %v3485 = vld [vmem:[%s8 + $0x78] sm:$0xff]
        %v3486 = vsel %vm3033, 0.0, 0
        %3488 = vmatprep.subr.mxu0 %v3471
        %3489 = vmatpush1.msra.mxu0 %v3470
        %3490 = vmatprep.subr.mxu0 %v3473
        %3491 = vmatpush1.msra.mxu0 %v3472
        %3492 = vmatprep.subr.mxu0 %v3475
        %3493 = vmatpush1.msra.mxu0 %v3474
        %3494 = vmatprep.subr.mxu0 %v3477
        %3495 = vmatpush1.msra.mxu0 %v3476
        %3496 = vmatprep.subr.mxu0 %v3479
        %3497 = vmatpush1.msra.mxu0 %v3478
        %3498 = vmatprep.subr.mxu0 %v3481
        %3499 = vmatpush1.msra.mxu0 %v3480
        %3500 = vmatprep.subr.mxu0 %v3483
        %3501 = vmatpush1.msra.mxu0 %v3482
        %3502 = vmatprep.subr.mxu0 %v3485
        %3503 = vmatpush1.msra.mxu0 %v3484
        %3504 = vmatprep.subr.mxu0 0.0
        %3505 = vmatpush1.msra.mxu0 0.0
        %3506 = vmatprep.subr.mxu0 0.0
        %3507 = vmatpush1.msra.mxu0 0.0
        %3508 = vmatprep.subr.mxu0 0.0
        %3509 = vmatpush1.msra.mxu0 0.0
        %3510 = vmatprep.subr.mxu0 0.0
        %3511 = vmatpush1.msra.mxu0 0.0
        %3512 = vmatprep.subr.mxu0 0.0
        %3513 = vmatpush1.msra.mxu0 0.0
        %3514 = vmatprep.subr.mxu0 0.0
        %3515 = vmatpush1.msra.mxu0 0.0
        %3516 = vmatprep.subr.mxu0 0.0
        %3517 = vmatpush1.msra.mxu0 0.0
        %3518 = vmatprep.subr.mxu0 0.0
        %3519 = vmatpush1.msra.mxu0 0.0
        %3520 = vmatprep.subr.mxu0 0.0
        %3521 = vmatpush1.msra.mxu0 0.0
        %3522 = vmatprep.subr.mxu0 0.0
        %3523 = vmatpush1.msra.mxu0 0.0
        %3524 = vmatprep.subr.mxu0 0.0
        %3525 = vmatpush1.msra.mxu0 0.0
        %3526 = vmatprep.subr.mxu0 0.0
        %3527 = vmatpush1.msra.mxu0 0.0
        %3528 = vmatprep.subr.mxu0 0.0
        %3529 = vmatpush1.msra.mxu0 0.0
        %3530 = vmatprep.subr.mxu0 0.0
        %3531 = vmatpush1.msra.mxu0 0.0
        %3532 = vmatprep.subr.mxu0 0.0
        %3533 = vmatpush1.msra.mxu0 0.0
        %3534 = vmatprep.subr.mxu0 0.0
        %3535 = vmatpush1.msra.mxu0 0.0
        %3536 = vmatprep.subr.mxu0 0.0
        %3537 = vmatpush1.msra.mxu0 0.0
        %3538 = vmatprep.subr.mxu0 0.0
        %3539 = vmatpush1.msra.mxu0 0.0
        %3540 = vmatprep.subr.mxu0 0.0
        %3541 = vmatpush1.msra.mxu0 0.0
        %3542 = vmatprep.subr.mxu0 0.0
        %3543 = vmatpush1.msra.mxu0 0.0
        %3544 = vmatprep.subr.mxu0 0.0
        %3545 = vmatpush1.msra.mxu0 0.0
        %3546 = vmatprep.subr.mxu0 0.0
        %3547 = vmatpush1.msra.mxu0 0.0
        %3548 = vmatprep.subr.mxu0 0.0
        %3549 = vmatpush1.msra.mxu0 0.0
        %3550 = vmatprep.subr.mxu0 0.0
        %3551 = vmatpush1.msra.mxu0 0.0
        %3552 = vmatprep.mubr.f32.mxu0 0.0
        %3553 = vmatmul.mubr.f32.gmra.mrb[0].mxu0 %v3486
        %v3554 = vpop.f32.mrb[0].mxu0
        %v3555 = vadd.f32 0.0, %v3554
        %v3556 = vpop.f32.mrb[0].mxu0
        %v3557 = vadd.f32 0.0, %v3556
        %3558 = vdwg.mxu0
        %v3559 = vadd.f32 %v3468, %v3555
        %v3560 = vadd.f32 %v3469, %v3557
        %v3561 = vxor.u32 %v3559, 2147483648
        %v3562 = vmul.f32 %v3561, 1.442695
        %v3563 = vpow.pop %v3562
        %v3564 = vadd.f32 %v3563, 1.0
        %v3565 = vrcp.pop %v3564
        %v3566 = vmul.f32 1.0, %v3565
        %v3567 = vtanh.pop %v3560
        %v3568 = vxor.u32 %v3560, 2147483648
        %v3569 = vmul.f32 %v3568, 1.442695
        %v3570 = vpow.pop %v3569
        %v3571 = vadd.f32 %v3570, 1.0
        %v3572 = vrcp.pop %v3571
        %v3573 = vmul.f32 1.0, %v3572
        %v3574 = vmul.f32 %v3566, 0.0
        %v3575 = vmul.f32 %v3566, %v3567
        %3577 = vrot.lane.b32.xlu0 %v3575, 64
        %v3578 = vpop.permute.xlu0 %3577
        %v3580 = vadd.f32 %v3574, %v3578
        %v3581 = vtanh.pop %v3580
        %v3582 = vmul.f32 %v3573, %v3581
        %3584 = vrot.lane.b32.xlu0 %v3582, 64
        %v3585 = vpop.permute.xlu0 %3584
        %3587 = vst.msk [vmem:[#allocation3] sm:$0xff] %vm3033, %v3585
        %v3588 = vld [vmem:[#allocation2 + $0x10] sm:$0xff]
        %v3589 = vld [vmem:[#allocation2 + $0x18] sm:$0xff]
        %v3590 = vld [vmem:[%s8] sm:$0xff]
        %v3591 = vld [vmem:[%s8 + $0x8] sm:$0xff]
        %v3592 = vld [vmem:[%s8 + $0x10] sm:$0xff]
        %v3593 = vld [vmem:[%s8 + $0x18] sm:$0xff]
        %v3594 = vld [vmem:[%s8 + $0x20] sm:$0xff]
        %v3595 = vld [vmem:[%s8 + $0x28] sm:$0xff]
        %v3596 = vld [vmem:[%s8 + $0x30] sm:$0xff]
        %v3597 = vld [vmem:[%s8 + $0x38] sm:$0xff]
        %v3598 = vld [vmem:[%s8 + $0x40] sm:$0xff]
        %v3599 = vld [vmem:[%s8 + $0x48] sm:$0xff]
        %v3600 = vld [vmem:[%s8 + $0x50] sm:$0xff]
        %v3601 = vld [vmem:[%s8 + $0x58] sm:$0xff]
        %v3602 = vld [vmem:[%s8 + $0x60] sm:$0xff]
        %v3603 = vld [vmem:[%s8 + $0x68] sm:$0xff]
        %v3604 = vld [vmem:[%s8 + $0x70] sm:$0xff]
        %v3605 = vld [vmem:[%s8 + $0x78] sm:$0xff]
        %v3606 = vsel %vm3033, %v3585, 0
        %3608 = vmatprep.subr.mxu0 %v3591
        %3609 = vmatpush1.msra.mxu0 %v3590
        %3610 = vmatprep.subr.mxu0 %v3593
        %3611 = vmatpush1.msra.mxu0 %v3592
        %3612 = vmatprep.subr.mxu0 %v3595
        %3613 = vmatpush1.msra.mxu0 %v3594
        %3614 = vmatprep.subr.mxu0 %v3597
        %3615 = vmatpush1.msra.mxu0 %v3596
        %3616 = vmatprep.subr.mxu0 %v3599
        %3617 = vmatpush1.msra.mxu0 %v3598
        %3618 = vmatprep.subr.mxu0 %v3601
        %3619 = vmatpush1.msra.mxu0 %v3600
        %3620 = vmatprep.subr.mxu0 %v3603
        %3621 = vmatpush1.msra.mxu0 %v3602
        %3622 = vmatprep.subr.mxu0 %v3605
        %3623 = vmatpush1.msra.mxu0 %v3604
        %3624 = vmatprep.subr.mxu0 0.0
        %3625 = vmatpush1.msra.mxu0 0.0
        %3626 = vmatprep.subr.mxu0 0.0
        %3627 = vmatpush1.msra.mxu0 0.0
        %3628 = vmatprep.subr.mxu0 0.0
        %3629 = vmatpush1.msra.mxu0 0.0
        %3630 = vmatprep.subr.mxu0 0.0
        %3631 = vmatpush1.msra.mxu0 0.0
        %3632 = vmatprep.subr.mxu0 0.0
        %3633 = vmatpush1.msra.mxu0 0.0
        %3634 = vmatprep.subr.mxu0 0.0
        %3635 = vmatpush1.msra.mxu0 0.0
        %3636 = vmatprep.subr.mxu0 0.0
        %3637 = vmatpush1.msra.mxu0 0.0
        %3638 = vmatprep.subr.mxu0 0.0
        %3639 = vmatpush1.msra.mxu0 0.0
        %3640 = vmatprep.subr.mxu0 0.0
        %3641 = vmatpush1.msra.mxu0 0.0
        %3642 = vmatprep.subr.mxu0 0.0
        %3643 = vmatpush1.msra.mxu0 0.0
        %3644 = vmatprep.subr.mxu0 0.0
        %3645 = vmatpush1.msra.mxu0 0.0
        %3646 = vmatprep.subr.mxu0 0.0
        %3647 = vmatpush1.msra.mxu0 0.0
        %3648 = vmatprep.subr.mxu0 0.0
        %3649 = vmatpush1.msra.mxu0 0.0
        %3650 = vmatprep.subr.mxu0 0.0
        %3651 = vmatpush1.msra.mxu0 0.0
        %3652 = vmatprep.subr.mxu0 0.0
        %3653 = vmatpush1.msra.mxu0 0.0
        %3654 = vmatprep.subr.mxu0 0.0
        %3655 = vmatpush1.msra.mxu0 0.0
        %3656 = vmatprep.subr.mxu0 0.0
        %3657 = vmatpush1.msra.mxu0 0.0
        %3658 = vmatprep.subr.mxu0 0.0
        %3659 = vmatpush1.msra.mxu0 0.0
        %3660 = vmatprep.subr.mxu0 0.0
        %3661 = vmatpush1.msra.mxu0 0.0
        %3662 = vmatprep.subr.mxu0 0.0
        %3663 = vmatpush1.msra.mxu0 0.0
        %3664 = vmatprep.subr.mxu0 0.0
        %3665 = vmatpush1.msra.mxu0 0.0
        %3666 = vmatprep.subr.mxu0 0.0
        %3667 = vmatpush1.msra.mxu0 0.0
        %3668 = vmatprep.subr.mxu0 0.0
        %3669 = vmatpush1.msra.mxu0 0.0
        %3670 = vmatprep.subr.mxu0 0.0
        %3671 = vmatpush1.msra.mxu0 0.0
        %3672 = vmatprep.mubr.f32.mxu0 0.0
        %3673 = vmatmul.mubr.f32.gmra.mrb[0].mxu0 %v3606
        %v3674 = vpop.f32.mrb[0].mxu0
        %v3675 = vadd.f32 0.0, %v3674
        %v3676 = vpop.f32.mrb[0].mxu0
        %v3677 = vadd.f32 0.0, %v3676
        %3678 = vdwg.mxu0
        %v3679 = vadd.f32 %v3588, %v3675
        %v3680 = vadd.f32 %v3589, %v3677
        %v3681 = vxor.u32 %v3679, 2147483648
        %v3682 = vmul.f32 %v3681, 1.442695
        %v3683 = vpow.pop %v3682
        %v3684 = vadd.f32 %v3683, 1.0
        %v3685 = vrcp.pop %v3684
        %v3686 = vmul.f32 1.0, %v3685
        %v3687 = vtanh.pop %v3680
        %v3688 = vxor.u32 %v3680, 2147483648
        %v3689 = vmul.f32 %v3688, 1.442695
        %v3690 = vpow.pop %v3689
        %v3691 = vadd.f32 %v3690, 1.0
        %v3692 = vrcp.pop %v3691
        %v3693 = vmul.f32 1.0, %v3692
        %v3694 = vmul.f32 %v3686, %v3580
        %v3695 = vmul.f32 %v3686, %v3687
        %3697 = vrot.lane.b32.xlu0 %v3695, 64
        %v3698 = vpop.permute.xlu0 %3697
        %v3700 = vadd.f32 %v3694, %v3698
        %v3701 = vtanh.pop %v3700
        %v3702 = vmul.f32 %v3693, %v3701
        %3704 = vrot.lane.b32.xlu0 %v3702, 64
        %v3705 = vpop.permute.xlu0 %3704
        %3707 = vst.msk [vmem:[#allocation3 + $0x8] sm:$0xff] %vm3033, %v3705
        %v3708 = vld [vmem:[#allocation2 + $0x20] sm:$0xff]
        %v3709 = vld [vmem:[#allocation2 + $0x28] sm:$0xff]
        %v3710 = vld [vmem:[%s8] sm:$0xff]
        %v3711 = vld [vmem:[%s8 + $0x8] sm:$0xff]
        %v3712 = vld [vmem:[%s8 + $0x10] sm:$0xff]
        %v3713 = vld [vmem:[%s8 + $0x18] sm:$0xff]
        %v3714 = vld [vmem:[%s8 + $0x20] sm:$0xff]
        %v3715 = vld [vmem:[%s8 + $0x28] sm:$0xff]
        %v3716 = vld [vmem:[%s8 + $0x30] sm:$0xff]
        %v3717 = vld [vmem:[%s8 + $0x38] sm:$0xff]
        %v3718 = vld [vmem:[%s8 + $0x40] sm:$0xff]
        %v3719 = vld [vmem:[%s8 + $0x48] sm:$0xff]
        %v3720 = vld [vmem:[%s8 + $0x50] sm:$0xff]
        %v3721 = vld [vmem:[%s8 + $0x58] sm:$0xff]
        %v3722 = vld [vmem:[%s8 + $0x60] sm:$0xff]
        %v3723 = vld [vmem:[%s8 + $0x68] sm:$0xff]
        %v3724 = vld [vmem:[%s8 + $0x70] sm:$0xff]
        %v3725 = vld [vmem:[%s8 + $0x78] sm:$0xff]
        %v3726 = vsel %vm3033, %v3705, 0
        %3728 = vmatprep.subr.mxu0 %v3711
        %3729 = vmatpush1.msra.mxu0 %v3710
        %3730 = vmatprep.subr.mxu0 %v3713
        %3731 = vmatpush1.msra.mxu0 %v3712
        %3732 = vmatprep.subr.mxu0 %v3715
        %3733 = vmatpush1.msra.mxu0 %v3714
        %3734 = vmatprep.subr.mxu0 %v3717
        %3735 = vmatpush1.msra.mxu0 %v3716
        %3736 = vmatprep.subr.mxu0 %v3719
        %3737 = vmatpush1.msra.mxu0 %v3718
        %3738 = vmatprep.subr.mxu0 %v3721
        %3739 = vmatpush1.msra.mxu0 %v3720
        %3740 = vmatprep.subr.mxu0 %v3723
        %3741 = vmatpush1.msra.mxu0 %v3722
        %3742 = vmatprep.subr.mxu0 %v3725
        %3743 = vmatpush1.msra.mxu0 %v3724
        %3744 = vmatprep.subr.mxu0 0.0
        %3745 = vmatpush1.msra.mxu0 0.0
        %3746 = vmatprep.subr.mxu0 0.0
        %3747 = vmatpush1.msra.mxu0 0.0
        %3748 = vmatprep.subr.mxu0 0.0
        %3749 = vmatpush1.msra.mxu0 0.0
        %3750 = vmatprep.subr.mxu0 0.0
        %3751 = vmatpush1.msra.mxu0 0.0
        %3752 = vmatprep.subr.mxu0 0.0
        %3753 = vmatpush1.msra.mxu0 0.0
        %3754 = vmatprep.subr.mxu0 0.0
        %3755 = vmatpush1.msra.mxu0 0.0
        %3756 = vmatprep.subr.mxu0 0.0
        %3757 = vmatpush1.msra.mxu0 0.0
        %3758 = vmatprep.subr.mxu0 0.0
        %3759 = vmatpush1.msra.mxu0 0.0
        %3760 = vmatprep.subr.mxu0 0.0
        %3761 = vmatpush1.msra.mxu0 0.0
        %3762 = vmatprep.subr.mxu0 0.0
        %3763 = vmatpush1.msra.mxu0 0.0
        %3764 = vmatprep.subr.mxu0 0.0
        %3765 = vmatpush1.msra.mxu0 0.0
        %3766 = vmatprep.subr.mxu0 0.0
        %3767 = vmatpush1.msra.mxu0 0.0
        %3768 = vmatprep.subr.mxu0 0.0
        %3769 = vmatpush1.msra.mxu0 0.0
        %3770 = vmatprep.subr.mxu0 0.0
        %3771 = vmatpush1.msra.mxu0 0.0
        %3772 = vmatprep.subr.mxu0 0.0
        %3773 = vmatpush1.msra.mxu0 0.0
        %3774 = vmatprep.subr.mxu0 0.0
        %3775 = vmatpush1.msra.mxu0 0.0
        %3776 = vmatprep.subr.mxu0 0.0
        %3777 = vmatpush1.msra.mxu0 0.0
        %3778 = vmatprep.subr.mxu0 0.0
        %3779 = vmatpush1.msra.mxu0 0.0
        %3780 = vmatprep.subr.mxu0 0.0
        %3781 = vmatpush1.msra.mxu0 0.0
        %3782 = vmatprep.subr.mxu0 0.0
        %3783 = vmatpush1.msra.mxu0 0.0
        %3784 = vmatprep.subr.mxu0 0.0
        %3785 = vmatpush1.msra.mxu0 0.0
        %3786 = vmatprep.subr.mxu0 0.0
        %3787 = vmatpush1.msra.mxu0 0.0
        %3788 = vmatprep.subr.mxu0 0.0
        %3789 = vmatpush1.msra.mxu0 0.0
        %3790 = vmatprep.subr.mxu0 0.0
        %3791 = vmatpush1.msra.mxu0 0.0
        %3792 = vmatprep.mubr.f32.mxu0 0.0
        %3793 = vmatmul.mubr.f32.gmra.mrb[0].mxu0 %v3726
        %v3794 = vpop.f32.mrb[0].mxu0
        %v3795 = vadd.f32 0.0, %v3794
        %v3796 = vpop.f32.mrb[0].mxu0
        %v3797 = vadd.f32 0.0, %v3796
        %3798 = vdwg.mxu0
        %v3799 = vadd.f32 %v3708, %v3795
        %v3800 = vadd.f32 %v3709, %v3797
        %v3801 = vxor.u32 %v3799, 2147483648
        %v3802 = vmul.f32 %v3801, 1.442695
        %v3803 = vpow.pop %v3802
        %v3804 = vadd.f32 %v3803, 1.0
        %v3805 = vrcp.pop %v3804
        %v3806 = vmul.f32 1.0, %v3805
        %v3807 = vtanh.pop %v3800
        %v3808 = vxor.u32 %v3800, 2147483648
        %v3809 = vmul.f32 %v3808, 1.442695
        %v3810 = vpow.pop %v3809
        %v3811 = vadd.f32 %v3810, 1.0
        %v3812 = vrcp.pop %v3811
        %v3813 = vmul.f32 1.0, %v3812
        %v3814 = vmul.f32 %v3806, %v3700
        %v3815 = vmul.f32 %v3806, %v3807
        %3817 = vrot.lane.b32.xlu0 %v3815, 64
        %v3818 = vpop.permute.xlu0 %3817
        %v3820 = vadd.f32 %v3814, %v3818
        %v3821 = vtanh.pop %v3820
        %v3822 = vmul.f32 %v3813, %v3821
        %3824 = vrot.lane.b32.xlu0 %v3822, 64
        %v3825 = vpop.permute.xlu0 %3824
        %3827 = vst.msk [vmem:[#allocation3 + $0x10] sm:$0xff] %vm3033, %v3825
        %v3828 = vld [vmem:[#allocation2 + $0x30] sm:$0xff]
        %v3829 = vld [vmem:[#allocation2 + $0x38] sm:$0xff]
        %v3830 = vld [vmem:[%s8] sm:$0xff]
        %v3831 = vld [vmem:[%s8 + $0x8] sm:$0xff]
        %v3832 = vld [vmem:[%s8 + $0x10] sm:$0xff]
        %v3833 = vld [vmem:[%s8 + $0x18] sm:$0xff]
        %v3834 = vld [vmem:[%s8 + $0x20] sm:$0xff]
        %v3835 = vld [vmem:[%s8 + $0x28] sm:$0xff]
        %v3836 = vld [vmem:[%s8 + $0x30] sm:$0xff]
        %v3837 = vld [vmem:[%s8 + $0x38] sm:$0xff]
        %v3838 = vld [vmem:[%s8 + $0x40] sm:$0xff]
        %v3839 = vld [vmem:[%s8 + $0x48] sm:$0xff]
        %v3840 = vld [vmem:[%s8 + $0x50] sm:$0xff]
        %v3841 = vld [vmem:[%s8 + $0x58] sm:$0xff]
        %v3842 = vld [vmem:[%s8 + $0x60] sm:$0xff]
        %v3843 = vld [vmem:[%s8 + $0x68] sm:$0xff]
        %v3844 = vld [vmem:[%s8 + $0x70] sm:$0xff]
        %v3845 = vld [vmem:[%s8 + $0x78] sm:$0xff]
        %v3846 = vsel %vm3033, %v3825, 0
        %3848 = vmatprep.subr.mxu0 %v3831
        %3849 = vmatpush1.msra.mxu0 %v3830
        %3850 = vmatprep.subr.mxu0 %v3833
        %3851 = vmatpush1.msra.mxu0 %v3832
        %3852 = vmatprep.subr.mxu0 %v3835
        %3853 = vmatpush1.msra.mxu0 %v3834
        %3854 = vmatprep.subr.mxu0 %v3837
        %3855 = vmatpush1.msra.mxu0 %v3836
        %3856 = vmatprep.subr.mxu0 %v3839
        %3857 = vmatpush1.msra.mxu0 %v3838
        %3858 = vmatprep.subr.mxu0 %v3841
        %3859 = vmatpush1.msra.mxu0 %v3840
        %3860 = vmatprep.subr.mxu0 %v3843
        %3861 = vmatpush1.msra.mxu0 %v3842
        %3862 = vmatprep.subr.mxu0 %v3845
        %3863 = vmatpush1.msra.mxu0 %v3844
        %3864 = vmatprep.subr.mxu0 0.0
        %3865 = vmatpush1.msra.mxu0 0.0
        %3866 = vmatprep.subr.mxu0 0.0
        %3867 = vmatpush1.msra.mxu0 0.0
        %3868 = vmatprep.subr.mxu0 0.0
        %3869 = vmatpush1.msra.mxu0 0.0
        %3870 = vmatprep.subr.mxu0 0.0
        %3871 = vmatpush1.msra.mxu0 0.0
        %3872 = vmatprep.subr.mxu0 0.0
        %3873 = vmatpush1.msra.mxu0 0.0
        %3874 = vmatprep.subr.mxu0 0.0
        %3875 = vmatpush1.msra.mxu0 0.0
        %3876 = vmatprep.subr.mxu0 0.0
        %3877 = vmatpush1.msra.mxu0 0.0
        %3878 = vmatprep.subr.mxu0 0.0
        %3879 = vmatpush1.msra.mxu0 0.0
        %3880 = vmatprep.subr.mxu0 0.0
        %3881 = vmatpush1.msra.mxu0 0.0
        %3882 = vmatprep.subr.mxu0 0.0
        %3883 = vmatpush1.msra.mxu0 0.0
        %3884 = vmatprep.subr.mxu0 0.0
        %3885 = vmatpush1.msra.mxu0 0.0
        %3886 = vmatprep.subr.mxu0 0.0
        %3887 = vmatpush1.msra.mxu0 0.0
        %3888 = vmatprep.subr.mxu0 0.0
        %3889 = vmatpush1.msra.mxu0 0.0
        %3890 = vmatprep.subr.mxu0 0.0
        %3891 = vmatpush1.msra.mxu0 0.0
        %3892 = vmatprep.subr.mxu0 0.0
        %3893 = vmatpush1.msra.mxu0 0.0
        %3894 = vmatprep.subr.mxu0 0.0
        %3895 = vmatpush1.msra.mxu0 0.0
        %3896 = vmatprep.subr.mxu0 0.0
        %3897 = vmatpush1.msra.mxu0 0.0
        %3898 = vmatprep.subr.mxu0 0.0
        %3899 = vmatpush1.msra.mxu0 0.0
        %3900 = vmatprep.subr.mxu0 0.0
        %3901 = vmatpush1.msra.mxu0 0.0
        %3902 = vmatprep.subr.mxu0 0.0
        %3903 = vmatpush1.msra.mxu0 0.0
        %3904 = vmatprep.subr.mxu0 0.0
        %3905 = vmatpush1.msra.mxu0 0.0
        %3906 = vmatprep.subr.mxu0 0.0
        %3907 = vmatpush1.msra.mxu0 0.0
        %3908 = vmatprep.subr.mxu0 0.0
        %3909 = vmatpush1.msra.mxu0 0.0
        %3910 = vmatprep.subr.mxu0 0.0
        %3911 = vmatpush1.msra.mxu0 0.0
        %3912 = vmatprep.mubr.f32.mxu0 0.0
        %3913 = vmatmul.mubr.f32.gmra.mrb[0].mxu0 %v3846
        %v3914 = vpop.f32.mrb[0].mxu0
        %v3915 = vadd.f32 0.0, %v3914
        %v3916 = vpop.f32.mrb[0].mxu0
        %v3917 = vadd.f32 0.0, %v3916
        %3918 = vdwg.mxu0
        %v3919 = vadd.f32 %v3828, %v3915
        %v3920 = vadd.f32 %v3829, %v3917
        %v3921 = vxor.u32 %v3919, 2147483648
        %v3922 = vmul.f32 %v3921, 1.442695
        %v3923 = vpow.pop %v3922
        %v3924 = vadd.f32 %v3923, 1.0
        %v3925 = vrcp.pop %v3924
        %v3926 = vmul.f32 1.0, %v3925
        %v3927 = vtanh.pop %v3920
        %v3928 = vxor.u32 %v3920, 2147483648
        %v3929 = vmul.f32 %v3928, 1.442695
        %v3930 = vpow.pop %v3929
        %v3931 = vadd.f32 %v3930, 1.0
        %v3932 = vrcp.pop %v3931
        %v3933 = vmul.f32 1.0, %v3932
        %v3934 = vmul.f32 %v3926, %v3820
        %v3935 = vmul.f32 %v3926, %v3927
        %3937 = vrot.lane.b32.xlu0 %v3935, 64
        %v3938 = vpop.permute.xlu0 %3937
        %v3940 = vadd.f32 %v3934, %v3938
        %v3941 = vtanh.pop %v3940
        %v3942 = vmul.f32 %v3933, %v3941
        %3944 = vrot.lane.b32.xlu0 %v3942, 64
        %v3945 = vpop.permute.xlu0 %3944
        %3947 = vst.msk [vmem:[#allocation3 + $0x18] sm:$0xff] %vm3033, %v3945
        %v3948 = vld [vmem:[#allocation2 + $0x40] sm:$0xff]
        %v3949 = vld [vmem:[#allocation2 + $0x48] sm:$0xff]
        %v3950 = vld [vmem:[%s8] sm:$0xff]
        %v3951 = vld [vmem:[%s8 + $0x8] sm:$0xff]
        %v3952 = vld [vmem:[%s8 + $0x10] sm:$0xff]
        %v3953 = vld [vmem:[%s8 + $0x18] sm:$0xff]
        %v3954 = vld [vmem:[%s8 + $0x20] sm:$0xff]
        %v3955 = vld [vmem:[%s8 + $0x28] sm:$0xff]
        %v3956 = vld [vmem:[%s8 + $0x30] sm:$0xff]
        %v3957 = vld [vmem:[%s8 + $0x38] sm:$0xff]
        %v3958 = vld [vmem:[%s8 + $0x40] sm:$0xff]
        %v3959 = vld [vmem:[%s8 + $0x48] sm:$0xff]
        %v3960 = vld [vmem:[%s8 + $0x50] sm:$0xff]
        %v3961 = vld [vmem:[%s8 + $0x58] sm:$0xff]
        %v3962 = vld [vmem:[%s8 + $0x60] sm:$0xff]
        %v3963 = vld [vmem:[%s8 + $0x68] sm:$0xff]
        %v3964 = vld [vmem:[%s8 + $0x70] sm:$0xff]
        %v3965 = vld [vmem:[%s8 + $0x78] sm:$0xff]
        %v3966 = vsel %vm3033, %v3945, 0
        %3968 = vmatprep.subr.mxu0 %v3951
        %3969 = vmatpush1.msra.mxu0 %v3950
        %3970 = vmatprep.subr.mxu0 %v3953
        %3971 = vmatpush1.msra.mxu0 %v3952
        %3972 = vmatprep.subr.mxu0 %v3955
        %3973 = vmatpush1.msra.mxu0 %v3954
        %3974 = vmatprep.subr.mxu0 %v3957
        %3975 = vmatpush1.msra.mxu0 %v3956
        %3976 = vmatprep.subr.mxu0 %v3959
        %3977 = vmatpush1.msra.mxu0 %v3958
        %3978 = vmatprep.subr.mxu0 %v3961
        %3979 = vmatpush1.msra.mxu0 %v3960
        %3980 = vmatprep.subr.mxu0 %v3963
        %3981 = vmatpush1.msra.mxu0 %v3962
        %3982 = vmatprep.subr.mxu0 %v3965
        %3983 = vmatpush1.msra.mxu0 %v3964
        %3984 = vmatprep.subr.mxu0 0.0
        %3985 = vmatpush1.msra.mxu0 0.0
        %3986 = vmatprep.subr.mxu0 0.0
        %3987 = vmatpush1.msra.mxu0 0.0
        %3988 = vmatprep.subr.mxu0 0.0
        %3989 = vmatpush1.msra.mxu0 0.0
        %3990 = vmatprep.subr.mxu0 0.0
        %3991 = vmatpush1.msra.mxu0 0.0
        %3992 = vmatprep.subr.mxu0 0.0
        %3993 = vmatpush1.msra.mxu0 0.0
        %3994 = vmatprep.subr.mxu0 0.0
        %3995 = vmatpush1.msra.mxu0 0.0
        %3996 = vmatprep.subr.mxu0 0.0
        %3997 = vmatpush1.msra.mxu0 0.0
        %3998 = vmatprep.subr.mxu0 0.0
        %3999 = vmatpush1.msra.mxu0 0.0
        %4000 = vmatprep.subr.mxu0 0.0
        %4001 = vmatpush1.msra.mxu0 0.0
        %4002 = vmatprep.subr.mxu0 0.0
        %4003 = vmatpush1.msra.mxu0 0.0
        %4004 = vmatprep.subr.mxu0 0.0
        %4005 = vmatpush1.msra.mxu0 0.0
        %4006 = vmatprep.subr.mxu0 0.0
        %4007 = vmatpush1.msra.mxu0 0.0
        %4008 = vmatprep.subr.mxu0 0.0
        %4009 = vmatpush1.msra.mxu0 0.0
        %4010 = vmatprep.subr.mxu0 0.0
        %4011 = vmatpush1.msra.mxu0 0.0
        %4012 = vmatprep.subr.mxu0 0.0
        %4013 = vmatpush1.msra.mxu0 0.0
        %4014 = vmatprep.subr.mxu0 0.0
        %4015 = vmatpush1.msra.mxu0 0.0
        %4016 = vmatprep.subr.mxu0 0.0
        %4017 = vmatpush1.msra.mxu0 0.0
        %4018 = vmatprep.subr.mxu0 0.0
        %4019 = vmatpush1.msra.mxu0 0.0
        %4020 = vmatprep.subr.mxu0 0.0
        %4021 = vmatpush1.msra.mxu0 0.0
        %4022 = vmatprep.subr.mxu0 0.0
        %4023 = vmatpush1.msra.mxu0 0.0
        %4024 = vmatprep.subr.mxu0 0.0
        %4025 = vmatpush1.msra.mxu0 0.0
        %4026 = vmatprep.subr.mxu0 0.0
        %4027 = vmatpush1.msra.mxu0 0.0
        %4028 = vmatprep.subr.mxu0 0.0
        %4029 = vmatpush1.msra.mxu0 0.0
        %4030 = vmatprep.subr.mxu0 0.0
        %4031 = vmatpush1.msra.mxu0 0.0
        %4032 = vmatprep.mubr.f32.mxu0 0.0
        %4033 = vmatmul.mubr.f32.gmra.mrb[0].mxu0 %v3966
        %v4034 = vpop.f32.mrb[0].mxu0
        %v4035 = vadd.f32 0.0, %v4034
        %v4036 = vpop.f32.mrb[0].mxu0
        %v4037 = vadd.f32 0.0, %v4036
        %4038 = vdwg.mxu0
        %v4039 = vadd.f32 %v3948, %v4035
        %v4040 = vadd.f32 %v3949, %v4037
        %v4041 = vxor.u32 %v4039, 2147483648
        %v4042 = vmul.f32 %v4041, 1.442695
        %v4043 = vpow.pop %v4042
        %v4044 = vadd.f32 %v4043, 1.0
        %v4045 = vrcp.pop %v4044
        %v4046 = vmul.f32 1.0, %v4045
        %v4047 = vtanh.pop %v4040
        %v4048 = vxor.u32 %v4040, 2147483648
        %v4049 = vmul.f32 %v4048, 1.442695
        %v4050 = vpow.pop %v4049
        %v4051 = vadd.f32 %v4050, 1.0
        %v4052 = vrcp.pop %v4051
        %v4053 = vmul.f32 1.0, %v4052
        %v4054 = vmul.f32 %v4046, %v3940
        %v4055 = vmul.f32 %v4046, %v4047
        %4057 = vrot.lane.b32.xlu0 %v4055, 64
        %v4058 = vpop.permute.xlu0 %4057
        %v4060 = vadd.f32 %v4054, %v4058
        %v4061 = vtanh.pop %v4060
        %v4062 = vmul.f32 %v4053, %v4061
        %4064 = vrot.lane.b32.xlu0 %v4062, 64
        %v4065 = vpop.permute.xlu0 %4064
        %4067 = vst.msk [vmem:[#allocation3 + $0x20] sm:$0xff] %vm3033, %v4065
        %v4068 = vld [vmem:[#allocation2 + $0x50] sm:$0xff]
        %v4069 = vld [vmem:[#allocation2 + $0x58] sm:$0xff]
        %v4070 = vld [vmem:[%s8] sm:$0xff]
        %v4071 = vld [vmem:[%s8 + $0x8] sm:$0xff]
        %v4072 = vld [vmem:[%s8 + $0x10] sm:$0xff]
        %v4073 = vld [vmem:[%s8 + $0x18] sm:$0xff]
        %v4074 = vld [vmem:[%s8 + $0x20] sm:$0xff]
        %v4075 = vld [vmem:[%s8 + $0x28] sm:$0xff]
        %v4076 = vld [vmem:[%s8 + $0x30] sm:$0xff]
        %v4077 = vld [vmem:[%s8 + $0x38] sm:$0xff]
        %v4078 = vld [vmem:[%s8 + $0x40] sm:$0xff]
        %v4079 = vld [vmem:[%s8 + $0x48] sm:$0xff]
        %v4080 = vld [vmem:[%s8 + $0x50] sm:$0xff]
        %v4081 = vld [vmem:[%s8 + $0x58] sm:$0xff]
        %v4082 = vld [vmem:[%s8 + $0x60] sm:$0xff]
        %v4083 = vld [vmem:[%s8 + $0x68] sm:$0xff]
        %v4084 = vld [vmem:[%s8 + $0x70] sm:$0xff]
        %v4085 = vld [vmem:[%s8 + $0x78] sm:$0xff]
        %v4086 = vsel %vm3033, %v4065, 0
        %4088 = vmatprep.subr.mxu0 %v4071
        %4089 = vmatpush1.msra.mxu0 %v4070
        %4090 = vmatprep.subr.mxu0 %v4073
        %4091 = vmatpush1.msra.mxu0 %v4072
        %4092 = vmatprep.subr.mxu0 %v4075
        %4093 = vmatpush1.msra.mxu0 %v4074
        %4094 = vmatprep.subr.mxu0 %v4077
        %4095 = vmatpush1.msra.mxu0 %v4076
        %4096 = vmatprep.subr.mxu0 %v4079
        %4097 = vmatpush1.msra.mxu0 %v4078
        %4098 = vmatprep.subr.mxu0 %v4081
        %4099 = vmatpush1.msra.mxu0 %v4080
        %4100 = vmatprep.subr.mxu0 %v4083
        %4101 = vmatpush1.msra.mxu0 %v4082
        %4102 = vmatprep.subr.mxu0 %v4085
        %4103 = vmatpush1.msra.mxu0 %v4084
        %4104 = vmatprep.subr.mxu0 0.0
        %4105 = vmatpush1.msra.mxu0 0.0
        %4106 = vmatprep.subr.mxu0 0.0
        %4107 = vmatpush1.msra.mxu0 0.0
        %4108 = vmatprep.subr.mxu0 0.0
        %4109 = vmatpush1.msra.mxu0 0.0
        %4110 = vmatprep.subr.mxu0 0.0
        %4111 = vmatpush1.msra.mxu0 0.0
        %4112 = vmatprep.subr.mxu0 0.0
        %4113 = vmatpush1.msra.mxu0 0.0
        %4114 = vmatprep.subr.mxu0 0.0
        %4115 = vmatpush1.msra.mxu0 0.0
        %4116 = vmatprep.subr.mxu0 0.0
        %4117 = vmatpush1.msra.mxu0 0.0
        %4118 = vmatprep.subr.mxu0 0.0
        %4119 = vmatpush1.msra.mxu0 0.0
        %4120 = vmatprep.subr.mxu0 0.0
        %4121 = vmatpush1.msra.mxu0 0.0
        %4122 = vmatprep.subr.mxu0 0.0
        %4123 = vmatpush1.msra.mxu0 0.0
        %4124 = vmatprep.subr.mxu0 0.0
        %4125 = vmatpush1.msra.mxu0 0.0
        %4126 = vmatprep.subr.mxu0 0.0
        %4127 = vmatpush1.msra.mxu0 0.0
        %4128 = vmatprep.subr.mxu0 0.0
        %4129 = vmatpush1.msra.mxu0 0.0
        %4130 = vmatprep.subr.mxu0 0.0
        %4131 = vmatpush1.msra.mxu0 0.0
        %4132 = vmatprep.subr.mxu0 0.0
        %4133 = vmatpush1.msra.mxu0 0.0
        %4134 = vmatprep.subr.mxu0 0.0
        %4135 = vmatpush1.msra.mxu0 0.0
        %4136 = vmatprep.subr.mxu0 0.0
        %4137 = vmatpush1.msra.mxu0 0.0
        %4138 = vmatprep.subr.mxu0 0.0
        %4139 = vmatpush1.msra.mxu0 0.0
        %4140 = vmatprep.subr.mxu0 0.0
        %4141 = vmatpush1.msra.mxu0 0.0
        %4142 = vmatprep.subr.mxu0 0.0
        %4143 = vmatpush1.msra.mxu0 0.0
        %4144 = vmatprep.subr.mxu0 0.0
        %4145 = vmatpush1.msra.mxu0 0.0
        %4146 = vmatprep.subr.mxu0 0.0
        %4147 = vmatpush1.msra.mxu0 0.0
        %4148 = vmatprep.subr.mxu0 0.0
        %4149 = vmatpush1.msra.mxu0 0.0
        %4150 = vmatprep.subr.mxu0 0.0
        %4151 = vmatpush1.msra.mxu0 0.0
        %4152 = vmatprep.mubr.f32.mxu0 0.0
        %4153 = vmatmul.mubr.f32.gmra.mrb[0].mxu0 %v4086
        %v4154 = vpop.f32.mrb[0].mxu0
        %v4155 = vadd.f32 0.0, %v4154
        %v4156 = vpop.f32.mrb[0].mxu0
        %v4157 = vadd.f32 0.0, %v4156
        %4158 = vdwg.mxu0
        %v4159 = vadd.f32 %v4068, %v4155
        %v4160 = vadd.f32 %v4069, %v4157
        %v4161 = vxor.u32 %v4159, 2147483648
        %v4162 = vmul.f32 %v4161, 1.442695
        %v4163 = vpow.pop %v4162
        %v4164 = vadd.f32 %v4163, 1.0
        %v4165 = vrcp.pop %v4164
        %v4166 = vmul.f32 1.0, %v4165
        %v4167 = vtanh.pop %v4160
        %v4168 = vxor.u32 %v4160, 2147483648
        %v4169 = vmul.f32 %v4168, 1.442695
        %v4170 = vpow.pop %v4169
        %v4171 = vadd.f32 %v4170, 1.0
        %v4172 = vrcp.pop %v4171
        %v4173 = vmul.f32 1.0, %v4172
        %v4174 = vmul.f32 %v4166, %v4060
        %v4175 = vmul.f32 %v4166, %v4167
        %4177 = vrot.lane.b32.xlu0 %v4175, 64
        %v4178 = vpop.permute.xlu0 %4177
        %v4180 = vadd.f32 %v4174, %v4178
        %v4181 = vtanh.pop %v4180
        %v4182 = vmul.f32 %v4173, %v4181
        %4184 = vrot.lane.b32.xlu0 %v4182, 64
        %v4185 = vpop.permute.xlu0 %4184
        %4187 = vst.msk [vmem:[#allocation3 + $0x28] sm:$0xff] %vm3033, %v4185
        %v4188 = vld [vmem:[#allocation2 + $0x60] sm:$0xff]
        %v4189 = vld [vmem:[#allocation2 + $0x68] sm:$0xff]
        %v4190 = vld [vmem:[%s8] sm:$0xff]
        %v4191 = vld [vmem:[%s8 + $0x8] sm:$0xff]
        %v4192 = vld [vmem:[%s8 + $0x10] sm:$0xff]
        %v4193 = vld [vmem:[%s8 + $0x18] sm:$0xff]
        %v4194 = vld [vmem:[%s8 + $0x20] sm:$0xff]
        %v4195 = vld [vmem:[%s8 + $0x28] sm:$0xff]
        %v4196 = vld [vmem:[%s8 + $0x30] sm:$0xff]
        %v4197 = vld [vmem:[%s8 + $0x38] sm:$0xff]
        %v4198 = vld [vmem:[%s8 + $0x40] sm:$0xff]
        %v4199 = vld [vmem:[%s8 + $0x48] sm:$0xff]
        %v4200 = vld [vmem:[%s8 + $0x50] sm:$0xff]
        %v4201 = vld [vmem:[%s8 + $0x58] sm:$0xff]
        %v4202 = vld [vmem:[%s8 + $0x60] sm:$0xff]
        %v4203 = vld [vmem:[%s8 + $0x68] sm:$0xff]
        %v4204 = vld [vmem:[%s8 + $0x70] sm:$0xff]
        %v4205 = vld [vmem:[%s8 + $0x78] sm:$0xff]
        %v4206 = vsel %vm3033, %v4185, 0
        %4208 = vmatprep.subr.mxu0 %v4191
        %4209 = vmatpush1.msra.mxu0 %v4190
        %4210 = vmatprep.subr.mxu0 %v4193
        %4211 = vmatpush1.msra.mxu0 %v4192
        %4212 = vmatprep.subr.mxu0 %v4195
        %4213 = vmatpush1.msra.mxu0 %v4194
        %4214 = vmatprep.subr.mxu0 %v4197
        %4215 = vmatpush1.msra.mxu0 %v4196
        %4216 = vmatprep.subr.mxu0 %v4199
        %4217 = vmatpush1.msra.mxu0 %v4198
        %4218 = vmatprep.subr.mxu0 %v4201
        %4219 = vmatpush1.msra.mxu0 %v4200
        %4220 = vmatprep.subr.mxu0 %v4203
        %4221 = vmatpush1.msra.mxu0 %v4202
        %4222 = vmatprep.subr.mxu0 %v4205
        %4223 = vmatpush1.msra.mxu0 %v4204
        %4224 = vmatprep.subr.mxu0 0.0
        %4225 = vmatpush1.msra.mxu0 0.0
        %4226 = vmatprep.subr.mxu0 0.0
        %4227 = vmatpush1.msra.mxu0 0.0
        %4228 = vmatprep.subr.mxu0 0.0
        %4229 = vmatpush1.msra.mxu0 0.0
        %4230 = vmatprep.subr.mxu0 0.0
        %4231 = vmatpush1.msra.mxu0 0.0
        %4232 = vmatprep.subr.mxu0 0.0
        %4233 = vmatpush1.msra.mxu0 0.0
        %4234 = vmatprep.subr.mxu0 0.0
        %4235 = vmatpush1.msra.mxu0 0.0
        %4236 = vmatprep.subr.mxu0 0.0
        %4237 = vmatpush1.msra.mxu0 0.0
        %4238 = vmatprep.subr.mxu0 0.0
        %4239 = vmatpush1.msra.mxu0 0.0
        %4240 = vmatprep.subr.mxu0 0.0
        %4241 = vmatpush1.msra.mxu0 0.0
        %4242 = vmatprep.subr.mxu0 0.0
        %4243 = vmatpush1.msra.mxu0 0.0
        %4244 = vmatprep.subr.mxu0 0.0
        %4245 = vmatpush1.msra.mxu0 0.0
        %4246 = vmatprep.subr.mxu0 0.0
        %4247 = vmatpush1.msra.mxu0 0.0
        %4248 = vmatprep.subr.mxu0 0.0
        %4249 = vmatpush1.msra.mxu0 0.0
        %4250 = vmatprep.subr.mxu0 0.0
        %4251 = vmatpush1.msra.mxu0 0.0
        %4252 = vmatprep.subr.mxu0 0.0
        %4253 = vmatpush1.msra.mxu0 0.0
        %4254 = vmatprep.subr.mxu0 0.0
        %4255 = vmatpush1.msra.mxu0 0.0
        %4256 = vmatprep.subr.mxu0 0.0
        %4257 = vmatpush1.msra.mxu0 0.0
        %4258 = vmatprep.subr.mxu0 0.0
        %4259 = vmatpush1.msra.mxu0 0.0
        %4260 = vmatprep.subr.mxu0 0.0
        %4261 = vmatpush1.msra.mxu0 0.0
        %4262 = vmatprep.subr.mxu0 0.0
        %4263 = vmatpush1.msra.mxu0 0.0
        %4264 = vmatprep.subr.mxu0 0.0
        %4265 = vmatpush1.msra.mxu0 0.0
        %4266 = vmatprep.subr.mxu0 0.0
        %4267 = vmatpush1.msra.mxu0 0.0
        %4268 = vmatprep.subr.mxu0 0.0
        %4269 = vmatpush1.msra.mxu0 0.0
        %4270 = vmatprep.subr.mxu0 0.0
        %4271 = vmatpush1.msra.mxu0 0.0
        %4272 = vmatprep.mubr.f32.mxu0 0.0
        %4273 = vmatmul.mubr.f32.gmra.mrb[0].mxu0 %v4206
        %v4274 = vpop.f32.mrb[0].mxu0
        %v4275 = vadd.f32 0.0, %v4274
        %v4276 = vpop.f32.mrb[0].mxu0
        %v4277 = vadd.f32 0.0, %v4276
        %4278 = vdwg.mxu0
        %v4279 = vadd.f32 %v4188, %v4275
        %v4280 = vadd.f32 %v4189, %v4277
        %v4281 = vxor.u32 %v4279, 2147483648
        %v4282 = vmul.f32 %v4281, 1.442695
        %v4283 = vpow.pop %v4282
        %v4284 = vadd.f32 %v4283, 1.0
        %v4285 = vrcp.pop %v4284
        %v4286 = vmul.f32 1.0, %v4285
        %v4287 = vtanh.pop %v4280
        %v4288 = vxor.u32 %v4280, 2147483648
        %v4289 = vmul.f32 %v4288, 1.442695
        %v4290 = vpow.pop %v4289
        %v4291 = vadd.f32 %v4290, 1.0
        %v4292 = vrcp.pop %v4291
        %v4293 = vmul.f32 1.0, %v4292
        %v4294 = vmul.f32 %v4286, %v4180
        %v4295 = vmul.f32 %v4286, %v4287
        %4297 = vrot.lane.b32.xlu0 %v4295, 64
        %v4298 = vpop.permute.xlu0 %4297
        %v4300 = vadd.f32 %v4294, %v4298
        %v4301 = vtanh.pop %v4300
        %v4302 = vmul.f32 %v4293, %v4301
        %4304 = vrot.lane.b32.xlu0 %v4302, 64
        %v4305 = vpop.permute.xlu0 %4304
        %4307 = vst.msk [vmem:[#allocation3 + $0x30] sm:$0xff] %vm3033, %v4305
        %v4308 = vld [vmem:[#allocation2 + $0x70] sm:$0xff]
        %v4309 = vld [vmem:[#allocation2 + $0x78] sm:$0xff]
        %v4310 = vld [vmem:[%s8] sm:$0xff]
        %v4311 = vld [vmem:[%s8 + $0x8] sm:$0xff]
        %v4312 = vld [vmem:[%s8 + $0x10] sm:$0xff]
        %v4313 = vld [vmem:[%s8 + $0x18] sm:$0xff]
        %v4314 = vld [vmem:[%s8 + $0x20] sm:$0xff]
        %v4315 = vld [vmem:[%s8 + $0x28] sm:$0xff]
        %v4316 = vld [vmem:[%s8 + $0x30] sm:$0xff]
        %v4317 = vld [vmem:[%s8 + $0x38] sm:$0xff]
        %v4318 = vld [vmem:[%s8 + $0x40] sm:$0xff]
        %v4319 = vld [vmem:[%s8 + $0x48] sm:$0xff]
        %v4320 = vld [vmem:[%s8 + $0x50] sm:$0xff]
        %v4321 = vld [vmem:[%s8 + $0x58] sm:$0xff]
        %v4322 = vld [vmem:[%s8 + $0x60] sm:$0xff]
        %v4323 = vld [vmem:[%s8 + $0x68] sm:$0xff]
        %v4324 = vld [vmem:[%s8 + $0x70] sm:$0xff]
        %v4325 = vld [vmem:[%s8 + $0x78] sm:$0xff]
        %v4326 = vsel %vm3033, %v4305, 0
        %4328 = vmatprep.subr.mxu0 %v4311
        %4329 = vmatpush1.msra.mxu0 %v4310
        %4330 = vmatprep.subr.mxu0 %v4313
        %4331 = vmatpush1.msra.mxu0 %v4312
        %4332 = vmatprep.subr.mxu0 %v4315
        %4333 = vmatpush1.msra.mxu0 %v4314
        %4334 = vmatprep.subr.mxu0 %v4317
        %4335 = vmatpush1.msra.mxu0 %v4316
        %4336 = vmatprep.subr.mxu0 %v4319
        %4337 = vmatpush1.msra.mxu0 %v4318
        %4338 = vmatprep.subr.mxu0 %v4321
        %4339 = vmatpush1.msra.mxu0 %v4320
        %4340 = vmatprep.subr.mxu0 %v4323
        %4341 = vmatpush1.msra.mxu0 %v4322
        %4342 = vmatprep.subr.mxu0 %v4325
        %4343 = vmatpush1.msra.mxu0 %v4324
        %4344 = vmatprep.subr.mxu0 0.0
        %4345 = vmatpush1.msra.mxu0 0.0
        %4346 = vmatprep.subr.mxu0 0.0
        %4347 = vmatpush1.msra.mxu0 0.0
        %4348 = vmatprep.subr.mxu0 0.0
        %4349 = vmatpush1.msra.mxu0 0.0
        %4350 = vmatprep.subr.mxu0 0.0
        %4351 = vmatpush1.msra.mxu0 0.0
        %4352 = vmatprep.subr.mxu0 0.0
        %4353 = vmatpush1.msra.mxu0 0.0
        %4354 = vmatprep.subr.mxu0 0.0
        %4355 = vmatpush1.msra.mxu0 0.0
        %4356 = vmatprep.subr.mxu0 0.0
        %4357 = vmatpush1.msra.mxu0 0.0
        %4358 = vmatprep.subr.mxu0 0.0
        %4359 = vmatpush1.msra.mxu0 0.0
        %4360 = vmatprep.subr.mxu0 0.0
        %4361 = vmatpush1.msra.mxu0 0.0
        %4362 = vmatprep.subr.mxu0 0.0
        %4363 = vmatpush1.msra.mxu0 0.0
        %4364 = vmatprep.subr.mxu0 0.0
        %4365 = vmatpush1.msra.mxu0 0.0
        %4366 = vmatprep.subr.mxu0 0.0
        %4367 = vmatpush1.msra.mxu0 0.0
        %4368 = vmatprep.subr.mxu0 0.0
        %4369 = vmatpush1.msra.mxu0 0.0
        %4370 = vmatprep.subr.mxu0 0.0
        %4371 = vmatpush1.msra.mxu0 0.0
        %4372 = vmatprep.subr.mxu0 0.0
        %4373 = vmatpush1.msra.mxu0 0.0
        %4374 = vmatprep.subr.mxu0 0.0
        %4375 = vmatpush1.msra.mxu0 0.0
        %4376 = vmatprep.subr.mxu0 0.0
        %4377 = vmatpush1.msra.mxu0 0.0
        %4378 = vmatprep.subr.mxu0 0.0
        %4379 = vmatpush1.msra.mxu0 0.0
        %4380 = vmatprep.subr.mxu0 0.0
        %4381 = vmatpush1.msra.mxu0 0.0
        %4382 = vmatprep.subr.mxu0 0.0
        %4383 = vmatpush1.msra.mxu0 0.0
        %4384 = vmatprep.subr.mxu0 0.0
        %4385 = vmatpush1.msra.mxu0 0.0
        %4386 = vmatprep.subr.mxu0 0.0
        %4387 = vmatpush1.msra.mxu0 0.0
        %4388 = vmatprep.subr.mxu0 0.0
        %4389 = vmatpush1.msra.mxu0 0.0
        %4390 = vmatprep.subr.mxu0 0.0
        %4391 = vmatpush1.msra.mxu0 0.0
        %4392 = vmatprep.mubr.f32.mxu0 0.0
        %4393 = vmatmul.mubr.f32.gmra.mrb[0].mxu0 %v4326
        %v4394 = vpop.f32.mrb[0].mxu0
        %v4395 = vadd.f32 0.0, %v4394
        %v4396 = vpop.f32.mrb[0].mxu0
        %v4397 = vadd.f32 0.0, %v4396
        %4398 = vdwg.mxu0
        %v4399 = vadd.f32 %v4308, %v4395
        %v4400 = vadd.f32 %v4309, %v4397
        %v4401 = vxor.u32 %v4399, 2147483648
        %v4402 = vmul.f32 %v4401, 1.442695
        %v4403 = vpow.pop %v4402
        %v4404 = vadd.f32 %v4403, 1.0
        %v4405 = vrcp.pop %v4404
        %v4406 = vmul.f32 1.0, %v4405
        %v4407 = vtanh.pop %v4400
        %v4408 = vxor.u32 %v4400, 2147483648
        %v4409 = vmul.f32 %v4408, 1.442695
        %v4410 = vpow.pop %v4409
        %v4411 = vadd.f32 %v4410, 1.0
        %v4412 = vrcp.pop %v4411
        %v4413 = vmul.f32 1.0, %v4412
        %v4414 = vmul.f32 %v4406, %v4300
        %v4415 = vmul.f32 %v4406, %v4407
        %4417 = vrot.lane.b32.xlu0 %v4415, 64
        %v4418 = vpop.permute.xlu0 %4417
        %v4420 = vadd.f32 %v4414, %v4418
        %v4421 = vtanh.pop %v4420
        %v4422 = vmul.f32 %v4413, %v4421
        %4424 = vrot.lane.b32.xlu0 %v4422, 64
        %v4425 = vpop.permute.xlu0 %4424
        %4427 = vst.msk [vmem:[#allocation3 + $0x38] sm:$0xff] %vm3033, %v4425
        %v4428 = vld [vmem:[#allocation3] sm:$0xff]
        %v4429 = vld [vmem:[#allocation3 + $0x8] sm:$0xff]
        %v4430 = vld [vmem:[#allocation3 + $0x10] sm:$0xff]
        %v4431 = vld [vmem:[#allocation3 + $0x18] sm:$0xff]
        %v4432 = vld [vmem:[#allocation3 + $0x20] sm:$0xff]
        %v4433 = vld [vmem:[#allocation3 + $0x28] sm:$0xff]
        %v4434 = vld [vmem:[#allocation3 + $0x30] sm:$0xff]
        %v4435 = vld [vmem:[#allocation3 + $0x38] sm:$0xff]
        %v4436 = vld [vmem:[%s10] sm:$0xff]
        %v4437 = vld [vmem:[%s10 + $0x8] sm:$0xff]
        %v4438 = vld [vmem:[%s10 + $0x10] sm:$0xff]
        %v4439 = vld [vmem:[%s10 + $0x18] sm:$0xff]
        %v4440 = vld [vmem:[%s10 + $0x20] sm:$0xff]
        %v4441 = vld [vmem:[%s10 + $0x28] sm:$0xff]
        %v4442 = vld [vmem:[%s10 + $0x30] sm:$0xff]
        %v4443 = vld [vmem:[%s10 + $0x38] sm:$0xff]
        %v4444 = vld [vmem:[%s10 + $0x40] sm:$0xff]
        %v4445 = vld [vmem:[%s10 + $0x48] sm:$0xff]
        %v4446 = vld [vmem:[%s10 + $0x50] sm:$0xff]
        %v4447 = vld [vmem:[%s10 + $0x58] sm:$0xff]
        %v4448 = vld [vmem:[%s10 + $0x60] sm:$0xff]
        %v4449 = vld [vmem:[%s10 + $0x68] sm:$0xff]
        %v4450 = vld [vmem:[%s10 + $0x70] sm:$0xff]
        %v4451 = vld [vmem:[%s10 + $0x78] sm:$0xff]
        %v4452 = vld [vmem:[%s12] sm:$0x3]
        %v4454 = vlaneseq
        %v4455 = vshrl.u32 %v4454, 7
        %v4456 = vsub.s32 0, %v4455
        %v4457 = vrot.slane %v4452, %v4456
        %v4458 = vlaneseq
        %v4459 = vshrl.u32 %v4458, 7
        %v4460 = vsub.s32 1, %v4459
        %v4461 = vrot.slane %v4452, %v4460
        %v4465 = vsel %vm3033, %v4428, 0
        %v4468 = vsel %vm3033, %v4429, 0
        %v4471 = vsel %vm3033, %v4430, 0
        %v4474 = vsel %vm3033, %v4431, 0
        %v4477 = vsel %vm3033, %v4432, 0
        %v4480 = vsel %vm3033, %v4433, 0
        %v4483 = vsel %vm3033, %v4434, 0
        %v4486 = vsel %vm3033, %v4435, 0
        %4488 = vmatprep.subr.mxu0 %v4437
        %4489 = vmatpush1.msra.mxu0 %v4436
        %4490 = vmatprep.subr.mxu0 %v4439
        %4491 = vmatpush1.msra.mxu0 %v4438
        %4492 = vmatprep.subr.mxu0 %v4441
        %4493 = vmatpush1.msra.mxu0 %v4440
        %4494 = vmatprep.subr.mxu0 %v4443
        %4495 = vmatpush1.msra.mxu0 %v4442
        %4496 = vmatprep.subr.mxu0 %v4445
        %4497 = vmatpush1.msra.mxu0 %v4444
        %4498 = vmatprep.subr.mxu0 %v4447
        %4499 = vmatpush1.msra.mxu0 %v4446
        %4500 = vmatprep.subr.mxu0 %v4449
        %4501 = vmatpush1.msra.mxu0 %v4448
        %4502 = vmatprep.subr.mxu0 %v4451
        %4503 = vmatpush1.msra.mxu0 %v4450
        %4504 = vmatprep.subr.mxu0 0.0
        %4505 = vmatpush1.msra.mxu0 0.0
        %4506 = vmatprep.subr.mxu0 0.0
        %4507 = vmatpush1.msra.mxu0 0.0
        %4508 = vmatprep.subr.mxu0 0.0
        %4509 = vmatpush1.msra.mxu0 0.0
        %4510 = vmatprep.subr.mxu0 0.0
        %4511 = vmatpush1.msra.mxu0 0.0
        %4512 = vmatprep.subr.mxu0 0.0
        %4513 = vmatpush1.msra.mxu0 0.0
        %4514 = vmatprep.subr.mxu0 0.0
        %4515 = vmatpush1.msra.mxu0 0.0
        %4516 = vmatprep.subr.mxu0 0.0
        %4517 = vmatpush1.msra.mxu0 0.0
        %4518 = vmatprep.subr.mxu0 0.0
        %4519 = vmatpush1.msra.mxu0 0.0
        %4520 = vmatprep.subr.mxu0 0.0
        %4521 = vmatpush1.msra.mxu0 0.0
        %4522 = vmatprep.subr.mxu0 0.0
        %4523 = vmatpush1.msra.mxu0 0.0
        %4524 = vmatprep.subr.mxu0 0.0
        %4525 = vmatpush1.msra.mxu0 0.0
        %4526 = vmatprep.subr.mxu0 0.0
        %4527 = vmatpush1.msra.mxu0 0.0
        %4528 = vmatprep.subr.mxu0 0.0
        %4529 = vmatpush1.msra.mxu0 0.0
        %4530 = vmatprep.subr.mxu0 0.0
        %4531 = vmatpush1.msra.mxu0 0.0
        %4532 = vmatprep.subr.mxu0 0.0
        %4533 = vmatpush1.msra.mxu0 0.0
        %4534 = vmatprep.subr.mxu0 0.0
        %4535 = vmatpush1.msra.mxu0 0.0
        %4536 = vmatprep.subr.mxu0 0.0
        %4537 = vmatpush1.msra.mxu0 0.0
        %4538 = vmatprep.subr.mxu0 0.0
        %4539 = vmatpush1.msra.mxu0 0.0
        %4540 = vmatprep.subr.mxu0 0.0
        %4541 = vmatpush1.msra.mxu0 0.0
        %4542 = vmatprep.subr.mxu0 0.0
        %4543 = vmatpush1.msra.mxu0 0.0
        %4544 = vmatprep.subr.mxu0 0.0
        %4545 = vmatpush1.msra.mxu0 0.0
        %4546 = vmatprep.subr.mxu0 0.0
        %4547 = vmatpush1.msra.mxu0 0.0
        %4548 = vmatprep.subr.mxu0 0.0
        %4549 = vmatpush1.msra.mxu0 0.0
        %4550 = vmatprep.subr.mxu0 0.0
        %4551 = vmatpush1.msra.mxu0 0.0
        %4552 = vmatprep.mubr.f32.mxu0 0.0
        %4553 = vmatmul.mubr.f32.gmra.mrb[0].mxu0 %v4465
        %v4554 = vpop.f32.mrb[0].mxu0
        %v4555 = vadd.f32 %v4457, %v4554
        %v4556 = vpop.f32.mrb[0].mxu0
        %v4557 = vadd.f32 %v4461, %v4556
        %4558 = vmatprep.mubr.f32.mxu0 0.0
        %4559 = vmatmul.mubr.f32.gmra.mrb[0].mxu0 %v4468
        %v4560 = vpop.f32.mrb[0].mxu0
        %v4561 = vadd.f32 %v4457, %v4560
        %v4562 = vpop.f32.mrb[0].mxu0
        %v4563 = vadd.f32 %v4461, %v4562
        %4564 = vmatprep.mubr.f32.mxu0 0.0
        %4565 = vmatmul.mubr.f32.gmra.mrb[0].mxu0 %v4471
        %v4566 = vpop.f32.mrb[0].mxu0
        %v4567 = vadd.f32 %v4457, %v4566
        %v4568 = vpop.f32.mrb[0].mxu0
        %v4569 = vadd.f32 %v4461, %v4568
        %4570 = vmatprep.mubr.f32.mxu0 0.0
        %4571 = vmatmul.mubr.f32.gmra.mrb[0].mxu0 %v4474
        %v4572 = vpop.f32.mrb[0].mxu0
        %v4573 = vadd.f32 %v4457, %v4572
        %v4574 = vpop.f32.mrb[0].mxu0
        %v4575 = vadd.f32 %v4461, %v4574
        %4576 = vmatprep.mubr.f32.mxu0 0.0
        %4577 = vmatmul.mubr.f32.gmra.mrb[0].mxu0 %v4477
        %v4578 = vpop.f32.mrb[0].mxu0
        %v4579 = vadd.f32 %v4457, %v4578
        %v4580 = vpop.f32.mrb[0].mxu0
        %v4581 = vadd.f32 %v4461, %v4580
        %4582 = vmatprep.mubr.f32.mxu0 0.0
        %4583 = vmatmul.mubr.f32.gmra.mrb[0].mxu0 %v4480
        %v4584 = vpop.f32.mrb[0].mxu0
        %v4585 = vadd.f32 %v4457, %v4584
        %v4586 = vpop.f32.mrb[0].mxu0
        %v4587 = vadd.f32 %v4461, %v4586
        %4588 = vmatprep.mubr.f32.mxu0 0.0
        %4589 = vmatmul.mubr.f32.gmra.mrb[0].mxu0 %v4483
        %v4590 = vpop.f32.mrb[0].mxu0
        %v4591 = vadd.f32 %v4457, %v4590
        %v4592 = vpop.f32.mrb[0].mxu0
        %v4593 = vadd.f32 %v4461, %v4592
        %4594 = vmatprep.mubr.f32.mxu0 0.0
        %4595 = vmatmul.mubr.f32.gmra.mrb[0].mxu0 %v4486
        %v4596 = vpop.f32.mrb[0].mxu0
        %v4597 = vadd.f32 %v4457, %v4596
        %v4598 = vpop.f32.mrb[0].mxu0
        %v4599 = vadd.f32 %v4461, %v4598
        %4600 = vdwg.mxu0
        %4601 = vst [vmem:[#allocation2] sm:$0xff] %v4555
        %4602 = vst [vmem:[#allocation2 + $0x8] sm:$0xff] %v4557
        %4603 = vst [vmem:[#allocation2 + $0x10] sm:$0xff] %v4561
        %4604 = vst [vmem:[#allocation2 + $0x18] sm:$0xff] %v4563
        %4605 = vst [vmem:[#allocation2 + $0x20] sm:$0xff] %v4567
        %4606 = vst [vmem:[#allocation2 + $0x28] sm:$0xff] %v4569
        %4607 = vst [vmem:[#allocation2 + $0x30] sm:$0xff] %v4573
        %4608 = vst [vmem:[#allocation2 + $0x38] sm:$0xff] %v4575
        %4609 = vst [vmem:[#allocation2 + $0x40] sm:$0xff] %v4579
        %4610 = vst [vmem:[#allocation2 + $0x48] sm:$0xff] %v4581
        %4611 = vst [vmem:[#allocation2 + $0x50] sm:$0xff] %v4585
        %4612 = vst [vmem:[#allocation2 + $0x58] sm:$0xff] %v4587
        %4613 = vst [vmem:[#allocation2 + $0x60] sm:$0xff] %v4591
        %4614 = vst [vmem:[#allocation2 + $0x68] sm:$0xff] %v4593
        %4615 = vst [vmem:[#allocation2 + $0x70] sm:$0xff] %v4597
        %4616 = vst [vmem:[#allocation2 + $0x78] sm:$0xff] %v4599
        %v4617 = vld [vmem:[#allocation2] sm:$0xff]
        %v4618 = vld [vmem:[#allocation2 + $0x8] sm:$0xff]
        %v4619 = vld [vmem:[%s11] sm:$0xff]
        %v4620 = vld [vmem:[%s11 + $0x8] sm:$0xff]
        %v4621 = vld [vmem:[%s11 + $0x10] sm:$0xff]
        %v4622 = vld [vmem:[%s11 + $0x18] sm:$0xff]
        %v4623 = vld [vmem:[%s11 + $0x20] sm:$0xff]
        %v4624 = vld [vmem:[%s11 + $0x28] sm:$0xff]
        %v4625 = vld [vmem:[%s11 + $0x30] sm:$0xff]
        %v4626 = vld [vmem:[%s11 + $0x38] sm:$0xff]
        %v4627 = vld [vmem:[%s11 + $0x40] sm:$0xff]
        %v4628 = vld [vmem:[%s11 + $0x48] sm:$0xff]
        %v4629 = vld [vmem:[%s11 + $0x50] sm:$0xff]
        %v4630 = vld [vmem:[%s11 + $0x58] sm:$0xff]
        %v4631 = vld [vmem:[%s11 + $0x60] sm:$0xff]
        %v4632 = vld [vmem:[%s11 + $0x68] sm:$0xff]
        %v4633 = vld [vmem:[%s11 + $0x70] sm:$0xff]
        %v4634 = vld [vmem:[%s11 + $0x78] sm:$0xff]
        %4635 = vmatprep.subr.mxu0 %v4620
        %4636 = vmatpush1.msra.mxu0 %v4619
        %4637 = vmatprep.subr.mxu0 %v4622
        %4638 = vmatpush1.msra.mxu0 %v4621
        %4639 = vmatprep.subr.mxu0 %v4624
        %4640 = vmatpush1.msra.mxu0 %v4623
        %4641 = vmatprep.subr.mxu0 %v4626
        %4642 = vmatpush1.msra.mxu0 %v4625
        %4643 = vmatprep.subr.mxu0 %v4628
        %4644 = vmatpush1.msra.mxu0 %v4627
        %4645 = vmatprep.subr.mxu0 %v4630
        %4646 = vmatpush1.msra.mxu0 %v4629
        %4647 = vmatprep.subr.mxu0 %v4632
        %4648 = vmatpush1.msra.mxu0 %v4631
        %4649 = vmatprep.subr.mxu0 %v4634
        %4650 = vmatpush1.msra.mxu0 %v4633
        %4651 = vmatprep.subr.mxu0 0.0
        %4652 = vmatpush1.msra.mxu0 0.0
        %4653 = vmatprep.subr.mxu0 0.0
        %4654 = vmatpush1.msra.mxu0 0.0
        %4655 = vmatprep.subr.mxu0 0.0
        %4656 = vmatpush1.msra.mxu0 0.0
        %4657 = vmatprep.subr.mxu0 0.0
        %4658 = vmatpush1.msra.mxu0 0.0
        %4659 = vmatprep.subr.mxu0 0.0
        %4660 = vmatpush1.msra.mxu0 0.0
        %4661 = vmatprep.subr.mxu0 0.0
        %4662 = vmatpush1.msra.mxu0 0.0
        %4663 = vmatprep.subr.mxu0 0.0
        %4664 = vmatpush1.msra.mxu0 0.0
        %4665 = vmatprep.subr.mxu0 0.0
        %4666 = vmatpush1.msra.mxu0 0.0
        %4667 = vmatprep.subr.mxu0 0.0
        %4668 = vmatpush1.msra.mxu0 0.0
        %4669 = vmatprep.subr.mxu0 0.0
        %4670 = vmatpush1.msra.mxu0 0.0
        %4671 = vmatprep.subr.mxu0 0.0
        %4672 = vmatpush1.msra.mxu0 0.0
        %4673 = vmatprep.subr.mxu0 0.0
        %4674 = vmatpush1.msra.mxu0 0.0
        %4675 = vmatprep.subr.mxu0 0.0
        %4676 = vmatpush1.msra.mxu0 0.0
        %4677 = vmatprep.subr.mxu0 0.0
        %4678 = vmatpush1.msra.mxu0 0.0
        %4679 = vmatprep.subr.mxu0 0.0
        %4680 = vmatpush1.msra.mxu0 0.0
        %4681 = vmatprep.subr.mxu0 0.0
        %4682 = vmatpush1.msra.mxu0 0.0
        %4683 = vmatprep.subr.mxu0 0.0
        %4684 = vmatpush1.msra.mxu0 0.0
        %4685 = vmatprep.subr.mxu0 0.0
        %4686 = vmatpush1.msra.mxu0 0.0
        %4687 = vmatprep.subr.mxu0 0.0
        %4688 = vmatpush1.msra.mxu0 0.0
        %4689 = vmatprep.subr.mxu0 0.0
        %4690 = vmatpush1.msra.mxu0 0.0
        %4691 = vmatprep.subr.mxu0 0.0
        %4692 = vmatpush1.msra.mxu0 0.0
        %4693 = vmatprep.subr.mxu0 0.0
        %4694 = vmatpush1.msra.mxu0 0.0
        %4695 = vmatprep.subr.mxu0 0.0
        %4696 = vmatpush1.msra.mxu0 0.0
        %4697 = vmatprep.subr.mxu0 0.0
        %4698 = vmatpush1.msra.mxu0 0.0
        %4699 = vmatprep.mubr.f32.mxu0 0.0
        %4700 = vmatmul.mubr.f32.gmra.mrb[0].mxu0 %v3486
        %v4701 = vpop.f32.mrb[0].mxu0
        %v4702 = vadd.f32 0.0, %v4701
        %v4703 = vpop.f32.mrb[0].mxu0
        %v4704 = vadd.f32 0.0, %v4703
        %4705 = vdwg.mxu0
        %v4706 = vadd.f32 %v4617, %v4702
        %v4707 = vadd.f32 %v4618, %v4704
        %v4708 = vxor.u32 %v4706, 2147483648
        %v4709 = vmul.f32 %v4708, 1.442695
        %v4710 = vpow.pop %v4709
        %v4711 = vadd.f32 %v4710, 1.0
        %v4712 = vrcp.pop %v4711
        %v4713 = vmul.f32 1.0, %v4712
        %v4714 = vtanh.pop %v4707
        %v4715 = vxor.u32 %v4707, 2147483648
        %v4716 = vmul.f32 %v4715, 1.442695
        %v4717 = vpow.pop %v4716
        %v4718 = vadd.f32 %v4717, 1.0
        %v4719 = vrcp.pop %v4718
        %v4720 = vmul.f32 1.0, %v4719
        %v4721 = vmul.f32 %v4713, 0.0
        %v4722 = vmul.f32 %v4713, %v4714
        %4724 = vrot.lane.b32.xlu0 %v4722, 64
        %v4725 = vpop.permute.xlu0 %4724
        %v4727 = vadd.f32 %v4721, %v4725
        %v4728 = vtanh.pop %v4727
        %v4729 = vmul.f32 %v4720, %v4728
        %v4730 = vld [vmem:[#allocation2 + $0x10] sm:$0xff]
        %v4731 = vld [vmem:[#allocation2 + $0x18] sm:$0xff]
        %4733 = vrot.lane.b32.xlu0 %v4729, 64
        %v4734 = vpop.permute.xlu0 %4733
        %v4735 = vsel %vm3033, %v4734, 0
        %4737 = vmatprep.subr.mxu0 %v4620
        %4738 = vmatpush1.msra.mxu0 %v4619
        %4739 = vmatprep.subr.mxu0 %v4622
        %4740 = vmatpush1.msra.mxu0 %v4621
        %4741 = vmatprep.subr.mxu0 %v4624
        %4742 = vmatpush1.msra.mxu0 %v4623
        %4743 = vmatprep.subr.mxu0 %v4626
        %4744 = vmatpush1.msra.mxu0 %v4625
        %4745 = vmatprep.subr.mxu0 %v4628
        %4746 = vmatpush1.msra.mxu0 %v4627
        %4747 = vmatprep.subr.mxu0 %v4630
        %4748 = vmatpush1.msra.mxu0 %v4629
        %4749 = vmatprep.subr.mxu0 %v4632
        %4750 = vmatpush1.msra.mxu0 %v4631
        %4751 = vmatprep.subr.mxu0 %v4634
        %4752 = vmatpush1.msra.mxu0 %v4633
        %4753 = vmatprep.subr.mxu0 0.0
        %4754 = vmatpush1.msra.mxu0 0.0
        %4755 = vmatprep.subr.mxu0 0.0
        %4756 = vmatpush1.msra.mxu0 0.0
        %4757 = vmatprep.subr.mxu0 0.0
        %4758 = vmatpush1.msra.mxu0 0.0
        %4759 = vmatprep.subr.mxu0 0.0
        %4760 = vmatpush1.msra.mxu0 0.0
        %4761 = vmatprep.subr.mxu0 0.0
        %4762 = vmatpush1.msra.mxu0 0.0
        %4763 = vmatprep.subr.mxu0 0.0
        %4764 = vmatpush1.msra.mxu0 0.0
        %4765 = vmatprep.subr.mxu0 0.0
        %4766 = vmatpush1.msra.mxu0 0.0
        %4767 = vmatprep.subr.mxu0 0.0
        %4768 = vmatpush1.msra.mxu0 0.0
        %4769 = vmatprep.subr.mxu0 0.0
        %4770 = vmatpush1.msra.mxu0 0.0
        %4771 = vmatprep.subr.mxu0 0.0
        %4772 = vmatpush1.msra.mxu0 0.0
        %4773 = vmatprep.subr.mxu0 0.0
        %4774 = vmatpush1.msra.mxu0 0.0
        %4775 = vmatprep.subr.mxu0 0.0
        %4776 = vmatpush1.msra.mxu0 0.0
        %4777 = vmatprep.subr.mxu0 0.0
        %4778 = vmatpush1.msra.mxu0 0.0
        %4779 = vmatprep.subr.mxu0 0.0
        %4780 = vmatpush1.msra.mxu0 0.0
        %4781 = vmatprep.subr.mxu0 0.0
        %4782 = vmatpush1.msra.mxu0 0.0
        %4783 = vmatprep.subr.mxu0 0.0
        %4784 = vmatpush1.msra.mxu0 0.0
        %4785 = vmatprep.subr.mxu0 0.0
        %4786 = vmatpush1.msra.mxu0 0.0
        %4787 = vmatprep.subr.mxu0 0.0
        %4788 = vmatpush1.msra.mxu0 0.0
        %4789 = vmatprep.subr.mxu0 0.0
        %4790 = vmatpush1.msra.mxu0 0.0
        %4791 = vmatprep.subr.mxu0 0.0
        %4792 = vmatpush1.msra.mxu0 0.0
        %4793 = vmatprep.subr.mxu0 0.0
        %4794 = vmatpush1.msra.mxu0 0.0
        %4795 = vmatprep.subr.mxu0 0.0
        %4796 = vmatpush1.msra.mxu0 0.0
        %4797 = vmatprep.subr.mxu0 0.0
        %4798 = vmatpush1.msra.mxu0 0.0
        %4799 = vmatprep.subr.mxu0 0.0
        %4800 = vmatpush1.msra.mxu0 0.0
        %4801 = vmatprep.mubr.f32.mxu0 0.0
        %4802 = vmatmul.mubr.f32.gmra.mrb[0].mxu0 %v4735
        %v4803 = vpop.f32.mrb[0].mxu0
        %v4804 = vadd.f32 0.0, %v4803
        %v4805 = vpop.f32.mrb[0].mxu0
        %v4806 = vadd.f32 0.0, %v4805
        %4807 = vdwg.mxu0
        %v4808 = vadd.f32 %v4730, %v4804
        %v4809 = vadd.f32 %v4731, %v4806
        %v4810 = vxor.u32 %v4808, 2147483648
        %v4811 = vmul.f32 %v4810, 1.442695
        %v4812 = vpow.pop %v4811
        %v4813 = vadd.f32 %v4812, 1.0
        %v4814 = vrcp.pop %v4813
        %v4815 = vmul.f32 1.0, %v4814
        %v4816 = vtanh.pop %v4809
        %v4817 = vxor.u32 %v4809, 2147483648
        %v4818 = vmul.f32 %v4817, 1.442695
        %v4819 = vpow.pop %v4818
        %v4820 = vadd.f32 %v4819, 1.0
        %v4821 = vrcp.pop %v4820
        %v4822 = vmul.f32 1.0, %v4821
        %v4823 = vmul.f32 %v4815, %v4727
        %v4824 = vmul.f32 %v4815, %v4816
        %4826 = vrot.lane.b32.xlu0 %v4824, 64
        %v4827 = vpop.permute.xlu0 %4826
        %v4829 = vadd.f32 %v4823, %v4827
        %v4830 = vtanh.pop %v4829
        %v4831 = vmul.f32 %v4822, %v4830
        %v4832 = vld [vmem:[#allocation2 + $0x20] sm:$0xff]
        %v4833 = vld [vmem:[#allocation2 + $0x28] sm:$0xff]
        %4835 = vrot.lane.b32.xlu0 %v4831, 64
        %v4836 = vpop.permute.xlu0 %4835
        %v4837 = vsel %vm3033, %v4836, 0
        %4839 = vmatprep.subr.mxu0 %v4620
        %4840 = vmatpush1.msra.mxu0 %v4619
        %4841 = vmatprep.subr.mxu0 %v4622
        %4842 = vmatpush1.msra.mxu0 %v4621
        %4843 = vmatprep.subr.mxu0 %v4624
        %4844 = vmatpush1.msra.mxu0 %v4623
        %4845 = vmatprep.subr.mxu0 %v4626
        %4846 = vmatpush1.msra.mxu0 %v4625
        %4847 = vmatprep.subr.mxu0 %v4628
        %4848 = vmatpush1.msra.mxu0 %v4627
        %4849 = vmatprep.subr.mxu0 %v4630
        %4850 = vmatpush1.msra.mxu0 %v4629
        %4851 = vmatprep.subr.mxu0 %v4632
        %4852 = vmatpush1.msra.mxu0 %v4631
        %4853 = vmatprep.subr.mxu0 %v4634
        %4854 = vmatpush1.msra.mxu0 %v4633
        %4855 = vmatprep.subr.mxu0 0.0
        %4856 = vmatpush1.msra.mxu0 0.0
        %4857 = vmatprep.subr.mxu0 0.0
        %4858 = vmatpush1.msra.mxu0 0.0
        %4859 = vmatprep.subr.mxu0 0.0
        %4860 = vmatpush1.msra.mxu0 0.0
        %4861 = vmatprep.subr.mxu0 0.0
        %4862 = vmatpush1.msra.mxu0 0.0
        %4863 = vmatprep.subr.mxu0 0.0
        %4864 = vmatpush1.msra.mxu0 0.0
        %4865 = vmatprep.subr.mxu0 0.0
        %4866 = vmatpush1.msra.mxu0 0.0
        %4867 = vmatprep.subr.mxu0 0.0
        %4868 = vmatpush1.msra.mxu0 0.0
        %4869 = vmatprep.subr.mxu0 0.0
        %4870 = vmatpush1.msra.mxu0 0.0
        %4871 = vmatprep.subr.mxu0 0.0
        %4872 = vmatpush1.msra.mxu0 0.0
        %4873 = vmatprep.subr.mxu0 0.0
        %4874 = vmatpush1.msra.mxu0 0.0
        %4875 = vmatprep.subr.mxu0 0.0
        %4876 = vmatpush1.msra.mxu0 0.0
        %4877 = vmatprep.subr.mxu0 0.0
        %4878 = vmatpush1.msra.mxu0 0.0
        %4879 = vmatprep.subr.mxu0 0.0
        %4880 = vmatpush1.msra.mxu0 0.0
        %4881 = vmatprep.subr.mxu0 0.0
        %4882 = vmatpush1.msra.mxu0 0.0
        %4883 = vmatprep.subr.mxu0 0.0
        %4884 = vmatpush1.msra.mxu0 0.0
        %4885 = vmatprep.subr.mxu0 0.0
        %4886 = vmatpush1.msra.mxu0 0.0
        %4887 = vmatprep.subr.mxu0 0.0
        %4888 = vmatpush1.msra.mxu0 0.0
        %4889 = vmatprep.subr.mxu0 0.0
        %4890 = vmatpush1.msra.mxu0 0.0
        %4891 = vmatprep.subr.mxu0 0.0
        %4892 = vmatpush1.msra.mxu0 0.0
        %4893 = vmatprep.subr.mxu0 0.0
        %4894 = vmatpush1.msra.mxu0 0.0
        %4895 = vmatprep.subr.mxu0 0.0
        %4896 = vmatpush1.msra.mxu0 0.0
        %4897 = vmatprep.subr.mxu0 0.0
        %4898 = vmatpush1.msra.mxu0 0.0
        %4899 = vmatprep.subr.mxu0 0.0
        %4900 = vmatpush1.msra.mxu0 0.0
        %4901 = vmatprep.subr.mxu0 0.0
        %4902 = vmatpush1.msra.mxu0 0.0
        %4903 = vmatprep.mubr.f32.mxu0 0.0
        %4904 = vmatmul.mubr.f32.gmra.mrb[0].mxu0 %v4837
        %v4905 = vpop.f32.mrb[0].mxu0
        %v4906 = vadd.f32 0.0, %v4905
        %v4907 = vpop.f32.mrb[0].mxu0
        %v4908 = vadd.f32 0.0, %v4907
        %4909 = vdwg.mxu0
        %v4910 = vadd.f32 %v4832, %v4906
        %v4911 = vadd.f32 %v4833, %v4908
        %v4912 = vxor.u32 %v4910, 2147483648
        %v4913 = vmul.f32 %v4912, 1.442695
        %v4914 = vpow.pop %v4913
        %v4915 = vadd.f32 %v4914, 1.0
        %v4916 = vrcp.pop %v4915
        %v4917 = vmul.f32 1.0, %v4916
        %v4918 = vtanh.pop %v4911
        %v4919 = vxor.u32 %v4911, 2147483648
        %v4920 = vmul.f32 %v4919, 1.442695
        %v4921 = vpow.pop %v4920
        %v4922 = vadd.f32 %v4921, 1.0
        %v4923 = vrcp.pop %v4922
        %v4924 = vmul.f32 1.0, %v4923
        %v4925 = vmul.f32 %v4917, %v4829
        %v4926 = vmul.f32 %v4917, %v4918
        %4928 = vrot.lane.b32.xlu0 %v4926, 64
        %v4929 = vpop.permute.xlu0 %4928
        %v4931 = vadd.f32 %v4925, %v4929
        %v4932 = vtanh.pop %v4931
        %v4933 = vmul.f32 %v4924, %v4932
        %v4934 = vld [vmem:[#allocation2 + $0x30] sm:$0xff]
        %v4935 = vld [vmem:[#allocation2 + $0x38] sm:$0xff]
        %4937 = vrot.lane.b32.xlu0 %v4933, 64
        %v4938 = vpop.permute.xlu0 %4937
        %v4939 = vsel %vm3033, %v4938, 0
        %4941 = vmatprep.subr.mxu0 %v4620
        %4942 = vmatpush1.msra.mxu0 %v4619
        %4943 = vmatprep.subr.mxu0 %v4622
        %4944 = vmatpush1.msra.mxu0 %v4621
        %4945 = vmatprep.subr.mxu0 %v4624
        %4946 = vmatpush1.msra.mxu0 %v4623
        %4947 = vmatprep.subr.mxu0 %v4626
        %4948 = vmatpush1.msra.mxu0 %v4625
        %4949 = vmatprep.subr.mxu0 %v4628
        %4950 = vmatpush1.msra.mxu0 %v4627
        %4951 = vmatprep.subr.mxu0 %v4630
        %4952 = vmatpush1.msra.mxu0 %v4629
        %4953 = vmatprep.subr.mxu0 %v4632
        %4954 = vmatpush1.msra.mxu0 %v4631
        %4955 = vmatprep.subr.mxu0 %v4634
        %4956 = vmatpush1.msra.mxu0 %v4633
        %4957 = vmatprep.subr.mxu0 0.0
        %4958 = vmatpush1.msra.mxu0 0.0
        %4959 = vmatprep.subr.mxu0 0.0
        %4960 = vmatpush1.msra.mxu0 0.0
        %4961 = vmatprep.subr.mxu0 0.0
        %4962 = vmatpush1.msra.mxu0 0.0
        %4963 = vmatprep.subr.mxu0 0.0
        %4964 = vmatpush1.msra.mxu0 0.0
        %4965 = vmatprep.subr.mxu0 0.0
        %4966 = vmatpush1.msra.mxu0 0.0
        %4967 = vmatprep.subr.mxu0 0.0
        %4968 = vmatpush1.msra.mxu0 0.0
        %4969 = vmatprep.subr.mxu0 0.0
        %4970 = vmatpush1.msra.mxu0 0.0
        %4971 = vmatprep.subr.mxu0 0.0
        %4972 = vmatpush1.msra.mxu0 0.0
        %4973 = vmatprep.subr.mxu0 0.0
        %4974 = vmatpush1.msra.mxu0 0.0
        %4975 = vmatprep.subr.mxu0 0.0
        %4976 = vmatpush1.msra.mxu0 0.0
        %4977 = vmatprep.subr.mxu0 0.0
        %4978 = vmatpush1.msra.mxu0 0.0
        %4979 = vmatprep.subr.mxu0 0.0
        %4980 = vmatpush1.msra.mxu0 0.0
        %4981 = vmatprep.subr.mxu0 0.0
        %4982 = vmatpush1.msra.mxu0 0.0
        %4983 = vmatprep.subr.mxu0 0.0
        %4984 = vmatpush1.msra.mxu0 0.0
        %4985 = vmatprep.subr.mxu0 0.0
        %4986 = vmatpush1.msra.mxu0 0.0
        %4987 = vmatprep.subr.mxu0 0.0
        %4988 = vmatpush1.msra.mxu0 0.0
        %4989 = vmatprep.subr.mxu0 0.0
        %4990 = vmatpush1.msra.mxu0 0.0
        %4991 = vmatprep.subr.mxu0 0.0
        %4992 = vmatpush1.msra.mxu0 0.0
        %4993 = vmatprep.subr.mxu0 0.0
        %4994 = vmatpush1.msra.mxu0 0.0
        %4995 = vmatprep.subr.mxu0 0.0
        %4996 = vmatpush1.msra.mxu0 0.0
        %4997 = vmatprep.subr.mxu0 0.0
        %4998 = vmatpush1.msra.mxu0 0.0
        %4999 = vmatprep.subr.mxu0 0.0
        %5000 = vmatpush1.msra.mxu0 0.0
        %5001 = vmatprep.subr.mxu0 0.0
        %5002 = vmatpush1.msra.mxu0 0.0
        %5003 = vmatprep.subr.mxu0 0.0
        %5004 = vmatpush1.msra.mxu0 0.0
        %5005 = vmatprep.mubr.f32.mxu0 0.0
        %5006 = vmatmul.mubr.f32.gmra.mrb[0].mxu0 %v4939
        %v5007 = vpop.f32.mrb[0].mxu0
        %v5008 = vadd.f32 0.0, %v5007
        %v5009 = vpop.f32.mrb[0].mxu0
        %v5010 = vadd.f32 0.0, %v5009
        %5011 = vdwg.mxu0
        %v5012 = vadd.f32 %v4934, %v5008
        %v5013 = vadd.f32 %v4935, %v5010
        %v5014 = vxor.u32 %v5012, 2147483648
        %v5015 = vmul.f32 %v5014, 1.442695
        %v5016 = vpow.pop %v5015
        %v5017 = vadd.f32 %v5016, 1.0
        %v5018 = vrcp.pop %v5017
        %v5019 = vmul.f32 1.0, %v5018
        %v5020 = vtanh.pop %v5013
        %v5021 = vxor.u32 %v5013, 2147483648
        %v5022 = vmul.f32 %v5021, 1.442695
        %v5023 = vpow.pop %v5022
        %v5024 = vadd.f32 %v5023, 1.0
        %v5025 = vrcp.pop %v5024
        %v5026 = vmul.f32 1.0, %v5025
        %v5027 = vmul.f32 %v5019, %v4931
        %v5028 = vmul.f32 %v5019, %v5020
        %5030 = vrot.lane.b32.xlu0 %v5028, 64
        %v5031 = vpop.permute.xlu0 %5030
        %v5033 = vadd.f32 %v5027, %v5031
        %v5034 = vtanh.pop %v5033
        %v5035 = vmul.f32 %v5026, %v5034
        %v5036 = vld [vmem:[#allocation2 + $0x40] sm:$0xff]
        %v5037 = vld [vmem:[#allocation2 + $0x48] sm:$0xff]
        %5039 = vrot.lane.b32.xlu0 %v5035, 64
        %v5040 = vpop.permute.xlu0 %5039
        %v5041 = vsel %vm3033, %v5040, 0
        %5043 = vmatprep.subr.mxu0 %v4620
        %5044 = vmatpush1.msra.mxu0 %v4619
        %5045 = vmatprep.subr.mxu0 %v4622
        %5046 = vmatpush1.msra.mxu0 %v4621
        %5047 = vmatprep.subr.mxu0 %v4624
        %5048 = vmatpush1.msra.mxu0 %v4623
        %5049 = vmatprep.subr.mxu0 %v4626
        %5050 = vmatpush1.msra.mxu0 %v4625
        %5051 = vmatprep.subr.mxu0 %v4628
        %5052 = vmatpush1.msra.mxu0 %v4627
        %5053 = vmatprep.subr.mxu0 %v4630
        %5054 = vmatpush1.msra.mxu0 %v4629
        %5055 = vmatprep.subr.mxu0 %v4632
        %5056 = vmatpush1.msra.mxu0 %v4631
        %5057 = vmatprep.subr.mxu0 %v4634
        %5058 = vmatpush1.msra.mxu0 %v4633
        %5059 = vmatprep.subr.mxu0 0.0
        %5060 = vmatpush1.msra.mxu0 0.0
        %5061 = vmatprep.subr.mxu0 0.0
        %5062 = vmatpush1.msra.mxu0 0.0
        %5063 = vmatprep.subr.mxu0 0.0
        %5064 = vmatpush1.msra.mxu0 0.0
        %5065 = vmatprep.subr.mxu0 0.0
        %5066 = vmatpush1.msra.mxu0 0.0
        %5067 = vmatprep.subr.mxu0 0.0
        %5068 = vmatpush1.msra.mxu0 0.0
        %5069 = vmatprep.subr.mxu0 0.0
        %5070 = vmatpush1.msra.mxu0 0.0
        %5071 = vmatprep.subr.mxu0 0.0
        %5072 = vmatpush1.msra.mxu0 0.0
        %5073 = vmatprep.subr.mxu0 0.0
        %5074 = vmatpush1.msra.mxu0 0.0
        %5075 = vmatprep.subr.mxu0 0.0
        %5076 = vmatpush1.msra.mxu0 0.0
        %5077 = vmatprep.subr.mxu0 0.0
        %5078 = vmatpush1.msra.mxu0 0.0
        %5079 = vmatprep.subr.mxu0 0.0
        %5080 = vmatpush1.msra.mxu0 0.0
        %5081 = vmatprep.subr.mxu0 0.0
        %5082 = vmatpush1.msra.mxu0 0.0
        %5083 = vmatprep.subr.mxu0 0.0
        %5084 = vmatpush1.msra.mxu0 0.0
        %5085 = vmatprep.subr.mxu0 0.0
        %5086 = vmatpush1.msra.mxu0 0.0
        %5087 = vmatprep.subr.mxu0 0.0
        %5088 = vmatpush1.msra.mxu0 0.0
        %5089 = vmatprep.subr.mxu0 0.0
        %5090 = vmatpush1.msra.mxu0 0.0
        %5091 = vmatprep.subr.mxu0 0.0
        %5092 = vmatpush1.msra.mxu0 0.0
        %5093 = vmatprep.subr.mxu0 0.0
        %5094 = vmatpush1.msra.mxu0 0.0
        %5095 = vmatprep.subr.mxu0 0.0
        %5096 = vmatpush1.msra.mxu0 0.0
        %5097 = vmatprep.subr.mxu0 0.0
        %5098 = vmatpush1.msra.mxu0 0.0
        %5099 = vmatprep.subr.mxu0 0.0
        %5100 = vmatpush1.msra.mxu0 0.0
        %5101 = vmatprep.subr.mxu0 0.0
        %5102 = vmatpush1.msra.mxu0 0.0
        %5103 = vmatprep.subr.mxu0 0.0
        %5104 = vmatpush1.msra.mxu0 0.0
        %5105 = vmatprep.subr.mxu0 0.0
        %5106 = vmatpush1.msra.mxu0 0.0
        %5107 = vmatprep.mubr.f32.mxu0 0.0
        %5108 = vmatmul.mubr.f32.gmra.mrb[0].mxu0 %v5041
        %v5109 = vpop.f32.mrb[0].mxu0
        %v5110 = vadd.f32 0.0, %v5109
        %v5111 = vpop.f32.mrb[0].mxu0
        %v5112 = vadd.f32 0.0, %v5111
        %5113 = vdwg.mxu0
        %v5114 = vadd.f32 %v5036, %v5110
        %v5115 = vadd.f32 %v5037, %v5112
        %v5116 = vxor.u32 %v5114, 2147483648
        %v5117 = vmul.f32 %v5116, 1.442695
        %v5118 = vpow.pop %v5117
        %v5119 = vadd.f32 %v5118, 1.0
        %v5120 = vrcp.pop %v5119
        %v5121 = vmul.f32 1.0, %v5120
        %v5122 = vtanh.pop %v5115
        %v5123 = vxor.u32 %v5115, 2147483648
        %v5124 = vmul.f32 %v5123, 1.442695
        %v5125 = vpow.pop %v5124
        %v5126 = vadd.f32 %v5125, 1.0
        %v5127 = vrcp.pop %v5126
        %v5128 = vmul.f32 1.0, %v5127
        %v5129 = vmul.f32 %v5121, %v5033
        %v5130 = vmul.f32 %v5121, %v5122
        %5132 = vrot.lane.b32.xlu0 %v5130, 64
        %v5133 = vpop.permute.xlu0 %5132
        %v5135 = vadd.f32 %v5129, %v5133
        %v5136 = vtanh.pop %v5135
        %v5137 = vmul.f32 %v5128, %v5136
        %v5138 = vld [vmem:[#allocation2 + $0x50] sm:$0xff]
        %v5139 = vld [vmem:[#allocation2 + $0x58] sm:$0xff]
        %5141 = vrot.lane.b32.xlu0 %v5137, 64
        %v5142 = vpop.permute.xlu0 %5141
        %v5143 = vsel %vm3033, %v5142, 0
        %5145 = vmatprep.subr.mxu0 %v4620
        %5146 = vmatpush1.msra.mxu0 %v4619
        %5147 = vmatprep.subr.mxu0 %v4622
        %5148 = vmatpush1.msra.mxu0 %v4621
        %5149 = vmatprep.subr.mxu0 %v4624
        %5150 = vmatpush1.msra.mxu0 %v4623
        %5151 = vmatprep.subr.mxu0 %v4626
        %5152 = vmatpush1.msra.mxu0 %v4625
        %5153 = vmatprep.subr.mxu0 %v4628
        %5154 = vmatpush1.msra.mxu0 %v4627
        %5155 = vmatprep.subr.mxu0 %v4630
        %5156 = vmatpush1.msra.mxu0 %v4629
        %5157 = vmatprep.subr.mxu0 %v4632
        %5158 = vmatpush1.msra.mxu0 %v4631
        %5159 = vmatprep.subr.mxu0 %v4634
        %5160 = vmatpush1.msra.mxu0 %v4633
        %5161 = vmatprep.subr.mxu0 0.0
        %5162 = vmatpush1.msra.mxu0 0.0
        %5163 = vmatprep.subr.mxu0 0.0
        %5164 = vmatpush1.msra.mxu0 0.0
        %5165 = vmatprep.subr.mxu0 0.0
        %5166 = vmatpush1.msra.mxu0 0.0
        %5167 = vmatprep.subr.mxu0 0.0
        %5168 = vmatpush1.msra.mxu0 0.0
        %5169 = vmatprep.subr.mxu0 0.0
        %5170 = vmatpush1.msra.mxu0 0.0
        %5171 = vmatprep.subr.mxu0 0.0
        %5172 = vmatpush1.msra.mxu0 0.0
        %5173 = vmatprep.subr.mxu0 0.0
        %5174 = vmatpush1.msra.mxu0 0.0
        %5175 = vmatprep.subr.mxu0 0.0
        %5176 = vmatpush1.msra.mxu0 0.0
        %5177 = vmatprep.subr.mxu0 0.0
        %5178 = vmatpush1.msra.mxu0 0.0
        %5179 = vmatprep.subr.mxu0 0.0
        %5180 = vmatpush1.msra.mxu0 0.0
        %5181 = vmatprep.subr.mxu0 0.0
        %5182 = vmatpush1.msra.mxu0 0.0
        %5183 = vmatprep.subr.mxu0 0.0
        %5184 = vmatpush1.msra.mxu0 0.0
        %5185 = vmatprep.subr.mxu0 0.0
        %5186 = vmatpush1.msra.mxu0 0.0
        %5187 = vmatprep.subr.mxu0 0.0
        %5188 = vmatpush1.msra.mxu0 0.0
        %5189 = vmatprep.subr.mxu0 0.0
        %5190 = vmatpush1.msra.mxu0 0.0
        %5191 = vmatprep.subr.mxu0 0.0
        %5192 = vmatpush1.msra.mxu0 0.0
        %5193 = vmatprep.subr.mxu0 0.0
        %5194 = vmatpush1.msra.mxu0 0.0
        %5195 = vmatprep.subr.mxu0 0.0
        %5196 = vmatpush1.msra.mxu0 0.0
        %5197 = vmatprep.subr.mxu0 0.0
        %5198 = vmatpush1.msra.mxu0 0.0
        %5199 = vmatprep.subr.mxu0 0.0
        %5200 = vmatpush1.msra.mxu0 0.0
        %5201 = vmatprep.subr.mxu0 0.0
        %5202 = vmatpush1.msra.mxu0 0.0
        %5203 = vmatprep.subr.mxu0 0.0
        %5204 = vmatpush1.msra.mxu0 0.0
        %5205 = vmatprep.subr.mxu0 0.0
        %5206 = vmatpush1.msra.mxu0 0.0
        %5207 = vmatprep.subr.mxu0 0.0
        %5208 = vmatpush1.msra.mxu0 0.0
        %5209 = vmatprep.mubr.f32.mxu0 0.0
        %5210 = vmatmul.mubr.f32.gmra.mrb[0].mxu0 %v5143
        %v5211 = vpop.f32.mrb[0].mxu0
        %v5212 = vadd.f32 0.0, %v5211
        %v5213 = vpop.f32.mrb[0].mxu0
        %v5214 = vadd.f32 0.0, %v5213
        %5215 = vdwg.mxu0
        %v5216 = vadd.f32 %v5138, %v5212
        %v5217 = vadd.f32 %v5139, %v5214
        %v5218 = vxor.u32 %v5216, 2147483648
        %v5219 = vmul.f32 %v5218, 1.442695
        %v5220 = vpow.pop %v5219
        %v5221 = vadd.f32 %v5220, 1.0
        %v5222 = vrcp.pop %v5221
        %v5223 = vmul.f32 1.0, %v5222
        %v5224 = vtanh.pop %v5217
        %v5225 = vxor.u32 %v5217, 2147483648
        %v5226 = vmul.f32 %v5225, 1.442695
        %v5227 = vpow.pop %v5226
        %v5228 = vadd.f32 %v5227, 1.0
        %v5229 = vrcp.pop %v5228
        %v5230 = vmul.f32 1.0, %v5229
        %v5231 = vmul.f32 %v5223, %v5135
        %v5232 = vmul.f32 %v5223, %v5224
        %5234 = vrot.lane.b32.xlu0 %v5232, 64
        %v5235 = vpop.permute.xlu0 %5234
        %v5237 = vadd.f32 %v5231, %v5235
        %v5238 = vtanh.pop %v5237
        %v5239 = vmul.f32 %v5230, %v5238
        %v5240 = vld [vmem:[#allocation2 + $0x60] sm:$0xff]
        %v5241 = vld [vmem:[#allocation2 + $0x68] sm:$0xff]
        %5243 = vrot.lane.b32.xlu0 %v5239, 64
        %v5244 = vpop.permute.xlu0 %5243
        %v5245 = vsel %vm3033, %v5244, 0
        %5247 = vmatprep.subr.mxu0 %v4620
        %5248 = vmatpush1.msra.mxu0 %v4619
        %5249 = vmatprep.subr.mxu0 %v4622
        %5250 = vmatpush1.msra.mxu0 %v4621
        %5251 = vmatprep.subr.mxu0 %v4624
        %5252 = vmatpush1.msra.mxu0 %v4623
        %5253 = vmatprep.subr.mxu0 %v4626
        %5254 = vmatpush1.msra.mxu0 %v4625
        %5255 = vmatprep.subr.mxu0 %v4628
        %5256 = vmatpush1.msra.mxu0 %v4627
        %5257 = vmatprep.subr.mxu0 %v4630
        %5258 = vmatpush1.msra.mxu0 %v4629
        %5259 = vmatprep.subr.mxu0 %v4632
        %5260 = vmatpush1.msra.mxu0 %v4631
        %5261 = vmatprep.subr.mxu0 %v4634
        %5262 = vmatpush1.msra.mxu0 %v4633
        %5263 = vmatprep.subr.mxu0 0.0
        %5264 = vmatpush1.msra.mxu0 0.0
        %5265 = vmatprep.subr.mxu0 0.0
        %5266 = vmatpush1.msra.mxu0 0.0
        %5267 = vmatprep.subr.mxu0 0.0
        %5268 = vmatpush1.msra.mxu0 0.0
        %5269 = vmatprep.subr.mxu0 0.0
        %5270 = vmatpush1.msra.mxu0 0.0
        %5271 = vmatprep.subr.mxu0 0.0
        %5272 = vmatpush1.msra.mxu0 0.0
        %5273 = vmatprep.subr.mxu0 0.0
        %5274 = vmatpush1.msra.mxu0 0.0
        %5275 = vmatprep.subr.mxu0 0.0
        %5276 = vmatpush1.msra.mxu0 0.0
        %5277 = vmatprep.subr.mxu0 0.0
        %5278 = vmatpush1.msra.mxu0 0.0
        %5279 = vmatprep.subr.mxu0 0.0
        %5280 = vmatpush1.msra.mxu0 0.0
        %5281 = vmatprep.subr.mxu0 0.0
        %5282 = vmatpush1.msra.mxu0 0.0
        %5283 = vmatprep.subr.mxu0 0.0
        %5284 = vmatpush1.msra.mxu0 0.0
        %5285 = vmatprep.subr.mxu0 0.0
        %5286 = vmatpush1.msra.mxu0 0.0
        %5287 = vmatprep.subr.mxu0 0.0
        %5288 = vmatpush1.msra.mxu0 0.0
        %5289 = vmatprep.subr.mxu0 0.0
        %5290 = vmatpush1.msra.mxu0 0.0
        %5291 = vmatprep.subr.mxu0 0.0
        %5292 = vmatpush1.msra.mxu0 0.0
        %5293 = vmatprep.subr.mxu0 0.0
        %5294 = vmatpush1.msra.mxu0 0.0
        %5295 = vmatprep.subr.mxu0 0.0
        %5296 = vmatpush1.msra.mxu0 0.0
        %5297 = vmatprep.subr.mxu0 0.0
        %5298 = vmatpush1.msra.mxu0 0.0
        %5299 = vmatprep.subr.mxu0 0.0
        %5300 = vmatpush1.msra.mxu0 0.0
        %5301 = vmatprep.subr.mxu0 0.0
        %5302 = vmatpush1.msra.mxu0 0.0
        %5303 = vmatprep.subr.mxu0 0.0
        %5304 = vmatpush1.msra.mxu0 0.0
        %5305 = vmatprep.subr.mxu0 0.0
        %5306 = vmatpush1.msra.mxu0 0.0
        %5307 = vmatprep.subr.mxu0 0.0
        %5308 = vmatpush1.msra.mxu0 0.0
        %5309 = vmatprep.subr.mxu0 0.0
        %5310 = vmatpush1.msra.mxu0 0.0
        %5311 = vmatprep.mubr.f32.mxu0 0.0
        %5312 = vmatmul.mubr.f32.gmra.mrb[0].mxu0 %v5245
        %v5313 = vpop.f32.mrb[0].mxu0
        %v5314 = vadd.f32 0.0, %v5313
        %v5315 = vpop.f32.mrb[0].mxu0
        %v5316 = vadd.f32 0.0, %v5315
        %5317 = vdwg.mxu0
        %v5318 = vadd.f32 %v5240, %v5314
        %v5319 = vadd.f32 %v5241, %v5316
        %v5320 = vxor.u32 %v5318, 2147483648
        %v5321 = vmul.f32 %v5320, 1.442695
        %v5322 = vpow.pop %v5321
        %v5323 = vadd.f32 %v5322, 1.0
        %v5324 = vrcp.pop %v5323
        %v5325 = vmul.f32 1.0, %v5324
        %v5326 = vtanh.pop %v5319
        %v5327 = vxor.u32 %v5319, 2147483648
        %v5328 = vmul.f32 %v5327, 1.442695
        %v5329 = vpow.pop %v5328
        %v5330 = vadd.f32 %v5329, 1.0
        %v5331 = vrcp.pop %v5330
        %v5332 = vmul.f32 1.0, %v5331
        %v5333 = vmul.f32 %v5325, %v5237
        %v5334 = vmul.f32 %v5325, %v5326
        %5336 = vrot.lane.b32.xlu0 %v5334, 64
        %v5337 = vpop.permute.xlu0 %5336
        %v5339 = vadd.f32 %v5333, %v5337
        %v5340 = vtanh.pop %v5339
        %v5341 = vmul.f32 %v5332, %v5340
        %v5342 = vld [vmem:[#allocation2 + $0x70] sm:$0xff]
        %v5343 = vld [vmem:[#allocation2 + $0x78] sm:$0xff]
        %5345 = vrot.lane.b32.xlu0 %v5341, 64
        %v5346 = vpop.permute.xlu0 %5345
        %v5347 = vsel %vm3033, %v5346, 0
        %5349 = vmatprep.subr.mxu0 %v4620
        %5350 = vmatpush1.msra.mxu0 %v4619
        %5351 = vmatprep.subr.mxu0 %v4622
        %5352 = vmatpush1.msra.mxu0 %v4621
        %5353 = vmatprep.subr.mxu0 %v4624
        %5354 = vmatpush1.msra.mxu0 %v4623
        %5355 = vmatprep.subr.mxu0 %v4626
        %5356 = vmatpush1.msra.mxu0 %v4625
        %5357 = vmatprep.subr.mxu0 %v4628
        %5358 = vmatpush1.msra.mxu0 %v4627
        %5359 = vmatprep.subr.mxu0 %v4630
        %5360 = vmatpush1.msra.mxu0 %v4629
        %5361 = vmatprep.subr.mxu0 %v4632
        %5362 = vmatpush1.msra.mxu0 %v4631
        %5363 = vmatprep.subr.mxu0 %v4634
        %5364 = vmatpush1.msra.mxu0 %v4633
        %5365 = vmatprep.subr.mxu0 0.0
        %5366 = vmatpush1.msra.mxu0 0.0
        %5367 = vmatprep.subr.mxu0 0.0
        %5368 = vmatpush1.msra.mxu0 0.0
        %5369 = vmatprep.subr.mxu0 0.0
        %5370 = vmatpush1.msra.mxu0 0.0
        %5371 = vmatprep.subr.mxu0 0.0
        %5372 = vmatpush1.msra.mxu0 0.0
        %5373 = vmatprep.subr.mxu0 0.0
        %5374 = vmatpush1.msra.mxu0 0.0
        %5375 = vmatprep.subr.mxu0 0.0
        %5376 = vmatpush1.msra.mxu0 0.0
        %5377 = vmatprep.subr.mxu0 0.0
        %5378 = vmatpush1.msra.mxu0 0.0
        %5379 = vmatprep.subr.mxu0 0.0
        %5380 = vmatpush1.msra.mxu0 0.0
        %5381 = vmatprep.subr.mxu0 0.0
        %5382 = vmatpush1.msra.mxu0 0.0
        %5383 = vmatprep.subr.mxu0 0.0
        %5384 = vmatpush1.msra.mxu0 0.0
        %5385 = vmatprep.subr.mxu0 0.0
        %5386 = vmatpush1.msra.mxu0 0.0
        %5387 = vmatprep.subr.mxu0 0.0
        %5388 = vmatpush1.msra.mxu0 0.0
        %5389 = vmatprep.subr.mxu0 0.0
        %5390 = vmatpush1.msra.mxu0 0.0
        %5391 = vmatprep.subr.mxu0 0.0
        %5392 = vmatpush1.msra.mxu0 0.0
        %5393 = vmatprep.subr.mxu0 0.0
        %5394 = vmatpush1.msra.mxu0 0.0
        %5395 = vmatprep.subr.mxu0 0.0
        %5396 = vmatpush1.msra.mxu0 0.0
        %5397 = vmatprep.subr.mxu0 0.0
        %5398 = vmatpush1.msra.mxu0 0.0
        %5399 = vmatprep.subr.mxu0 0.0
        %5400 = vmatpush1.msra.mxu0 0.0
        %5401 = vmatprep.subr.mxu0 0.0
        %5402 = vmatpush1.msra.mxu0 0.0
        %5403 = vmatprep.subr.mxu0 0.0
        %5404 = vmatpush1.msra.mxu0 0.0
        %5405 = vmatprep.subr.mxu0 0.0
        %5406 = vmatpush1.msra.mxu0 0.0
        %5407 = vmatprep.subr.mxu0 0.0
        %5408 = vmatpush1.msra.mxu0 0.0
        %5409 = vmatprep.subr.mxu0 0.0
        %5410 = vmatpush1.msra.mxu0 0.0
        %5411 = vmatprep.subr.mxu0 0.0
        %5412 = vmatpush1.msra.mxu0 0.0
        %5413 = vmatprep.mubr.f32.mxu0 0.0
        %5414 = vmatmul.mubr.f32.gmra.mrb[0].mxu0 %v5347
        %v5415 = vpop.f32.mrb[0].mxu0
        %v5416 = vadd.f32 0.0, %v5415
        %v5417 = vpop.f32.mrb[0].mxu0
        %v5418 = vadd.f32 0.0, %v5417
        %5419 = vdwg.mxu0
        %v5420 = vadd.f32 %v5342, %v5416
        %v5421 = vadd.f32 %v5343, %v5418
        %v5422 = vxor.u32 %v5420, 2147483648
        %v5423 = vmul.f32 %v5422, 1.442695
        %v5424 = vpow.pop %v5423
        %v5425 = vadd.f32 %v5424, 1.0
        %v5426 = vrcp.pop %v5425
        %v5427 = vmul.f32 1.0, %v5426
        %v5428 = vtanh.pop %v5421
        %v5429 = vxor.u32 %v5421, 2147483648
        %v5430 = vmul.f32 %v5429, 1.442695
        %v5431 = vpow.pop %v5430
        %v5432 = vadd.f32 %v5431, 1.0
        %v5433 = vrcp.pop %v5432
        %v5434 = vmul.f32 1.0, %v5433
        %v5435 = vmul.f32 %v5427, %v5339
        %v5436 = vmul.f32 %v5427, %v5428
        %5438 = vrot.lane.b32.xlu0 %v5436, 64
        %v5439 = vpop.permute.xlu0 %5438
        %v5441 = vadd.f32 %v5435, %v5439
        %v5442 = vtanh.pop %v5441
        %v5443 = vmul.f32 %v5434, %v5442
        %v5444 = vld [vmem:[%s13] sm:$0xff]
        %v5445 = vld [vmem:[%s13 + $0x8] sm:$0xff]
        %v5446 = vld [vmem:[%s13 + $0x10] sm:$0xff]
        %v5447 = vld [vmem:[%s13 + $0x18] sm:$0xff]
        %v5448 = vld [vmem:[%s13 + $0x20] sm:$0xff]
        %v5449 = vld [vmem:[%s13 + $0x28] sm:$0xff]
        %v5450 = vld [vmem:[%s13 + $0x30] sm:$0xff]
        %v5451 = vld [vmem:[%s13 + $0x38] sm:$0xff]
        %v5452 = vld [vmem:[%s14] sm:$0x1]
        %v5454 = vlaneseq
        %v5455 = vshrl.u32 %v5454, 7
        %v5456 = vsub.s32 0, %v5455
        %v5457 = vrot.slane %v5452, %v5456
        %5460 = vrot.lane.b32.xlu0 %v5443, 64
        %v5461 = vpop.permute.xlu0 %5460
        %v5462 = vsel %vm3033, %v5461, 0
        %5464 = vmatprep.subr.mxu0 0.0
        %5465 = vmatpush1.msra.mxu0 %v5444
        %5466 = vmatprep.subr.mxu0 0.0
        %5467 = vmatpush1.msra.mxu0 %v5445
        %5468 = vmatprep.subr.mxu0 0.0
        %5469 = vmatpush1.msra.mxu0 %v5446
        %5470 = vmatprep.subr.mxu0 0.0
        %5471 = vmatpush1.msra.mxu0 %v5447
        %5472 = vmatprep.subr.mxu0 0.0
        %5473 = vmatpush1.msra.mxu0 %v5448
        %5474 = vmatprep.subr.mxu0 0.0
        %5475 = vmatpush1.msra.mxu0 %v5449
        %5476 = vmatprep.subr.mxu0 0.0
        %5477 = vmatpush1.msra.mxu0 %v5450
        %5478 = vmatprep.subr.mxu0 0.0
        %5479 = vmatpush1.msra.mxu0 %v5451
        %5480 = vmatprep.subr.mxu0 0.0
        %5481 = vmatpush1.msra.mxu0 0.0
        %5482 = vmatprep.subr.mxu0 0.0
        %5483 = vmatpush1.msra.mxu0 0.0
        %5484 = vmatprep.subr.mxu0 0.0
        %5485 = vmatpush1.msra.mxu0 0.0
        %5486 = vmatprep.subr.mxu0 0.0
        %5487 = vmatpush1.msra.mxu0 0.0
        %5488 = vmatprep.subr.mxu0 0.0
        %5489 = vmatpush1.msra.mxu0 0.0
        %5490 = vmatprep.subr.mxu0 0.0
        %5491 = vmatpush1.msra.mxu0 0.0
        %5492 = vmatprep.subr.mxu0 0.0
        %5493 = vmatpush1.msra.mxu0 0.0
        %5494 = vmatprep.subr.mxu0 0.0
        %5495 = vmatpush1.msra.mxu0 0.0
        %5496 = vmatprep.subr.mxu0 0.0
        %5497 = vmatpush1.msra.mxu0 0.0
        %5498 = vmatprep.subr.mxu0 0.0
        %5499 = vmatpush1.msra.mxu0 0.0
        %5500 = vmatprep.subr.mxu0 0.0
        %5501 = vmatpush1.msra.mxu0 0.0
        %5502 = vmatprep.subr.mxu0 0.0
        %5503 = vmatpush1.msra.mxu0 0.0
        %5504 = vmatprep.subr.mxu0 0.0
        %5505 = vmatpush1.msra.mxu0 0.0
        %5506 = vmatprep.subr.mxu0 0.0
        %5507 = vmatpush1.msra.mxu0 0.0
        %5508 = vmatprep.subr.mxu0 0.0
        %5509 = vmatpush1.msra.mxu0 0.0
        %5510 = vmatprep.subr.mxu0 0.0
        %5511 = vmatpush1.msra.mxu0 0.0
        %5512 = vmatprep.subr.mxu0 0.0
        %5513 = vmatpush1.msra.mxu0 0.0
        %5514 = vmatprep.subr.mxu0 0.0
        %5515 = vmatpush1.msra.mxu0 0.0
        %5516 = vmatprep.subr.mxu0 0.0
        %5517 = vmatpush1.msra.mxu0 0.0
        %5518 = vmatprep.subr.mxu0 0.0
        %5519 = vmatpush1.msra.mxu0 0.0
        %5520 = vmatprep.subr.mxu0 0.0
        %5521 = vmatpush1.msra.mxu0 0.0
        %5522 = vmatprep.subr.mxu0 0.0
        %5523 = vmatpush1.msra.mxu0 0.0
        %5524 = vmatprep.subr.mxu0 0.0
        %5525 = vmatpush1.msra.mxu0 0.0
        %5526 = vmatprep.subr.mxu0 0.0
        %5527 = vmatpush1.msra.mxu0 0.0
        %5528 = vmatprep.mubr.f32.mxu0 0.0
        %5529 = vmatmul.mubr.f32.gmra.mrb[0].mxu0 %v5462
        %v5530 = vpop.f32.mrb[0].mxu0
        %v5531 = vadd.f32 %v5457, %v5530
        %v5532 = vpop.f32.mrb[0].mxu0
        %5533 = vdwg.mxu0
        %v5534 = vmax.f32 %v5531, 0.0
        %v5535 = vld [vmem:[%s15] sm:$0xff]
        %v5536 = vld [vmem:[%s15 + $0x8] sm:$0xff]
        %v5537 = vld [vmem:[%s15 + $0x10] sm:$0xf]
        %v5538 = vld [vmem:[%s16] sm:$0x1]
        %v5540 = vlaneseq
        %v5541 = vshrl.u32 %v5540, 7
        %v5542 = vsub.s32 0, %v5541
        %v5543 = vrot.slane %v5538, %v5542
        %vm5545 = vcmask 162816
        %v5547 = vsel %vm5545, %v5534, 0
        %vm5549 = vcmask 1043456
        %v5551 = vsel %vm5549, %v5537, 0
        %5553 = vmatprep.subr.mxu0 0.0
        %5554 = vmatpush1.msra.mxu0 %v5535
        %5555 = vmatprep.subr.mxu0 0.0
        %5556 = vmatpush1.msra.mxu0 %v5536
        %5557 = vmatprep.subr.mxu0 0.0
        %5558 = vmatpush1.msra.mxu0 %v5551
        %5559 = vmatprep.subr.mxu0 0.0
        %5560 = vmatpush1.msra.mxu0 0.0
        %5561 = vmatprep.subr.mxu0 0.0
        %5562 = vmatpush1.msra.mxu0 0.0
        %5563 = vmatprep.subr.mxu0 0.0
        %5564 = vmatpush1.msra.mxu0 0.0
        %5565 = vmatprep.subr.mxu0 0.0
        %5566 = vmatpush1.msra.mxu0 0.0
        %5567 = vmatprep.subr.mxu0 0.0
        %5568 = vmatpush1.msra.mxu0 0.0
        %5569 = vmatprep.subr.mxu0 0.0
        %5570 = vmatpush1.msra.mxu0 0.0
        %5571 = vmatprep.subr.mxu0 0.0
        %5572 = vmatpush1.msra.mxu0 0.0
        %5573 = vmatprep.subr.mxu0 0.0
        %5574 = vmatpush1.msra.mxu0 0.0
        %5575 = vmatprep.subr.mxu0 0.0
        %5576 = vmatpush1.msra.mxu0 0.0
        %5577 = vmatprep.subr.mxu0 0.0
        %5578 = vmatpush1.msra.mxu0 0.0
        %5579 = vmatprep.subr.mxu0 0.0
        %5580 = vmatpush1.msra.mxu0 0.0
        %5581 = vmatprep.subr.mxu0 0.0
        %5582 = vmatpush1.msra.mxu0 0.0
        %5583 = vmatprep.subr.mxu0 0.0
        %5584 = vmatpush1.msra.mxu0 0.0
        %5585 = vmatprep.subr.mxu0 0.0
        %5586 = vmatpush1.msra.mxu0 0.0
        %5587 = vmatprep.subr.mxu0 0.0
        %5588 = vmatpush1.msra.mxu0 0.0
        %5589 = vmatprep.subr.mxu0 0.0
        %5590 = vmatpush1.msra.mxu0 0.0
        %5591 = vmatprep.subr.mxu0 0.0
        %5592 = vmatpush1.msra.mxu0 0.0
        %5593 = vmatprep.subr.mxu0 0.0
        %5594 = vmatpush1.msra.mxu0 0.0
        %5595 = vmatprep.subr.mxu0 0.0
        %5596 = vmatpush1.msra.mxu0 0.0
        %5597 = vmatprep.subr.mxu0 0.0
        %5598 = vmatpush1.msra.mxu0 0.0
        %5599 = vmatprep.subr.mxu0 0.0
        %5600 = vmatpush1.msra.mxu0 0.0
        %5601 = vmatprep.subr.mxu0 0.0
        %5602 = vmatpush1.msra.mxu0 0.0
        %5603 = vmatprep.subr.mxu0 0.0
        %5604 = vmatpush1.msra.mxu0 0.0
        %5605 = vmatprep.subr.mxu0 0.0
        %5606 = vmatpush1.msra.mxu0 0.0
        %5607 = vmatprep.subr.mxu0 0.0
        %5608 = vmatpush1.msra.mxu0 0.0
        %5609 = vmatprep.subr.mxu0 0.0
        %5610 = vmatpush1.msra.mxu0 0.0
        %5611 = vmatprep.subr.mxu0 0.0
        %5612 = vmatpush1.msra.mxu0 0.0
        %5613 = vmatprep.subr.mxu0 0.0
        %5614 = vmatpush1.msra.mxu0 0.0
        %5615 = vmatprep.subr.mxu0 0.0
        %5616 = vmatpush1.msra.mxu0 0.0
        %5617 = vmatprep.mubr.f32.mxu0 0.0
        %5618 = vmatmul.mubr.f32.gmra.mrb[0].mxu0 %v5547
        %v5619 = vpop.f32.mrb[0].mxu0
        %v5620 = vadd.f32 %v5543, %v5619
        %v5621 = vpop.f32.mrb[0].mxu0
        %5622 = vdwg.mxu0
        %vm5623 = vcmask 31744
        %5624 = vst.msk [vmem:[%s832] sm:$0xff] %vm5623, %v5620
        %p5625 = scmp.lt.s32.totalorder %s28, 1
        %s5626 = scalar_select %p5625, %s28, 1
        %s5627 = smul.addr %s5626, 8
        %s5628 = scalar_lea.vmem %s17, %s5627
        // Predicated region
        $region127: #{_lambda_.1} parent=121 // pred_check
          %p5629 = pneg %p408
        $region128: #{_lambda_.1} parent=121 // pred_check_branch
          %5631 = sbr.rel (%p5629) target = $region130
        $region129: #{_lambda_.1} parent=121 // pred_region
          _
        $region130: #{_lambda_.1} parent=121 // pred_fallthru
          _
      $region122: #{_lambda_.1} parent=5 // pred_fallthru
        _
      %p5632 = scmp.le.s32.totalorder 2, %s23
      // Predicated region
      $region131: #{_lambda_.1} parent=5 // pred_check
        %p5633 = pneg %p5632
      $region132: #{_lambda_.1} parent=5 // pred_check_branch
        %5635 = sbr.rel (%p5633) target = $region134
      $region133: #{_lambda_.1} parent=5 // pred_region
        %s5636 = ssub.s32 %s23, 2
        // Predicated region
        $region135: #{_lambda_.1} parent=133 // pred_check
          %p5637 = pneg %p414
        $region136: #{_lambda_.1} parent=133 // pred_check_branch
          %5639 = sbr.rel (%p5637) target = $region138
        $region137: #{_lambda_.1} parent=133 // pred_region
          %p5640 = scmp.lt.s32.totalorder %s29, 1
          %s5641 = scalar_select %p5640, %s29, 1
          %s5642 = smul.addr %s5641, 8
          %s5643 = scalar_lea.vmem %s17, %s5642
        $region138: #{_lambda_.1} parent=133 // pred_fallthru
          _
      $region134: #{_lambda_.1} parent=5 // pred_fallthru
        _
    $region6: #{_lambda_.1} parent=1 // loop_footer
      %s27 = sadd.s32 1, %s23
    $region7: #{_lambda_.1} parent=1 // loop_footer_branch
      %22 = sbr.rel target = $region3
    $region8: #{_lambda_.1} parent=1 // loop_exit
      _

</llo_original>
